<compile_context>
chip_gen: v7x
topology: tpu7x:2x2x1
jax: 0.10.0
libtpu: 0.0.40
codegen_flags: <defaults>
</compile_context>

<pallas_src>
import functools

import jax
import jax.numpy as jnp
from jax.experimental import pallas as pl
from jax.experimental.pallas import tpu as pltpu

# ----- scaled-down SEDANet dimensions (2048 -> 64 feature channels) -----
PATCH   = 8            # backbone output stride (ResNeXt w/ dilation => /8)
C_IMG   = 3
C_FEAT  = 64           # stands in for the 2048-channel backbone output
INTER   = C_FEAT // 4  # DANetHead inter_channels
C_Q     = INTER // 8   # PAM query/key channels
N_CLASS = 8
BN_EPS  = 1e-5


# =========================== fused Pallas kernel ===========================

def _sedanet_head_kernel(x_ref, p_ref, ws_ref, bs_ref,
                         w5a_ref, t5a_ref, w5c_ref, t5c_ref,
                         w51_ref, t51_ref, w52_ref, t52_ref,
                         wqkv_ref, bqkv_ref, wseg_ref, bseg_ref,
                         up_ref, gsa_ref, gsc_ref, o_ref):
    f32 = jnp.float32
    n = x_ref.shape[1]                        # number of spatial positions (h*w)

    # ----- backbone stand-in: per-patch linear projection -----
    feat = (jnp.dot(x_ref[0], ws_ref[...], preferred_element_type=f32)
            + bs_ref[...])                                            # (N, C_FEAT)

    def conv3x3_bn_relu(inp, w_ref, shift_ref):
        # inp: (N, Cin).  w_ref: (9, Cin, Cout) with BN scale already folded in.
        # One (9N, N) 0/1 shift-matrix matmul builds all 9 zero-padded taps.
        taps = jnp.dot(p_ref[...], inp, preferred_element_type=f32)   # (9N, Cin)
        acc = jnp.dot(taps[0:n], w_ref[0], preferred_element_type=f32)
        for t in range(1, 9):
            acc = acc + jnp.dot(taps[t * n:(t + 1) * n], w_ref[t],
                                preferred_element_type=f32)
        return jnp.maximum(acc + shift_ref[...], 0.0)                 # (N, Cout)

    # ----- PAM branch: conv5a -> position attention -> conv51 -----
    feat1 = conv3x3_bn_relu(feat, w5a_ref, t5a_ref)                   # (N, C)
    c = feat1.shape[1]
    cq = (wqkv_ref.shape[1] - c) // 2
    qkv = (jnp.dot(feat1, wqkv_ref[...], preferred_element_type=f32)
           + bqkv_ref[...])                                           # (N, C+2Cq)
    v = qkv[:, :c]
    q = qkv[:, c:c + cq]
    k = qkv[:, c + cq:]
    energy = jax.lax.dot_general(q, k, (((1,), (1,)), ((), ())),
                                 preferred_element_type=f32)          # (N, N)
    m = jnp.max(energy, axis=-1, keepdims=True)
    e = jnp.exp(energy - m)
    att = e / jnp.sum(e, axis=-1, keepdims=True)
    sa_feat = gsa_ref[0] * jnp.dot(att, v, preferred_element_type=f32) + feat1
    sa_conv = conv3x3_bn_relu(sa_feat, w51_ref, t51_ref)

    # ----- CAM branch: conv5c -> channel attention -> conv52 -----
    feat2 = conv3x3_bn_relu(feat, w5c_ref, t5c_ref)
    cen = jax.lax.dot_general(feat2, feat2, (((0,), (0,)), ((), ())),
                              preferred_element_type=f32)             # (C, C)
    cen = jnp.max(cen, axis=-1, keepdims=True) - cen
    ce = jnp.exp(cen - jnp.max(cen, axis=-1, keepdims=True))
    catt = ce / jnp.sum(ce, axis=-1, keepdims=True)
    cam_out = jax.lax.dot_general(feat2, catt, (((1,), (1,)), ((), ())),
                                  preferred_element_type=f32)         # (N, C)
    sc_feat = gsc_ref[0] * cam_out + feat2
    sc_conv = conv3x3_bn_relu(sc_feat, w52_ref, t52_ref)

    # ----- seg 1x1 conv (Dropout2d == identity at eval) + bilinear upsample -----
    coarse = (jnp.dot(sa_conv + sc_conv, wseg_ref[...],
                      preferred_element_type=f32) + bseg_ref[...])    # (N, ncls)
    # align_corners=True bilinear upsample fused as one matmul with kron(Ah,Aw)^T;
    # output written lane-dense as (ncls, H*W).
    o_ref[0] = jax.lax.dot_general(coarse, up_ref[...],
                                   (((0,), (0,)), ((), ())),
                                   preferred_element_type=f32)        # (ncls, H*W)


# =========================== host-side helpers / glue ===========================

def _const_spec(shape):
    nd = len(shape)
    return pl.BlockSpec(tuple(shape), lambda b, _nd=nd: (0,) * _nd)


def _patchify(x_img):
    B, C, H, W = x_img.shape
    h, w = H // PATCH, W // PATCH
    x = x_img.transpose(0, 2, 3, 1).reshape(B, h, PATCH, w, PATCH, C)
    x = x.transpose(0, 1, 3, 2, 4, 5).reshape(B, h * w, PATCH * PATCH * C)
    return x                                                          # (B, N, 192)


def _interp_matrix(out_size, in_size):
    # align_corners=True bilinear interpolation matrix (out_size, in_size)
    pos = jnp.arange(out_size, dtype=jnp.float32) * (in_size - 1) / (out_size - 1)
    lo = jnp.clip(jnp.floor(pos).astype(jnp.int32), 0, in_size - 2)
    frac = pos - lo.astype(jnp.float32)
    rows = jnp.arange(out_size)
    a = jnp.zeros((out_size, in_size), jnp.float32)
    a = a.at[rows, lo].add(1.0 - frac)
    a = a.at[rows, lo + 1].add(frac)
    return a


def _shift_mats(h, w):
    # (9*N, N) stacked 0/1 matrices: row block t selects the (dy, dx) neighbour of
    # every spatial position; zero rows encode the 3x3 conv's zero padding.
    n = h * w
    ys, xs = jnp.meshgrid(jnp.arange(h), jnp.arange(w), indexing='ij')
    ys, xs = ys.reshape(-1), xs.reshape(-1)
    mats = []
    for dy in (-1, 0, 1):
        for dx in (-1, 0, 1):
            yy, xx = ys + dy, xs + dx
            valid = ((yy >= 0) & (yy < h) & (xx >= 0) & (xx < w)).astype(jnp.float32)
            src = jnp.clip(yy, 0, h - 1) * w + jnp.clip(xx, 0, w - 1)
            mats.append(jnp.zeros((n, n), jnp.float32)
                        .at[jnp.arange(n), src].set(valid))
    return jnp.concatenate(mats, axis=0)                              # (9N, N)


def _im2col_taps(x_bnc, h, w):
    # used only by the pure-JAX reference
    B, N, C = x_bnc.shape
    xhw = x_bnc.reshape(B, h, w, C)
    xp = jnp.pad(xhw, ((0, 0), (1, 1), (1, 1), (0, 0)))
    taps = [xp[:, dy:dy + h, dx:dx + w, :].reshape(B, N, C)
            for dy in range(3) for dx in range(3)]
    return jnp.stack(taps, axis=1)                                    # (B, 9, N, C)


@jax.jit
def sedanet_forward(x_img, p):
    # TODO(synk): SegNet's backbone is a pretrained ResNeXt101-32x8d loaded from a
    # checkpoint (and SegNet.att1 / ChannelSpatialSELayer is declared but never used
    # in forward); replaced here by a deterministic stride-8 patchify + linear
    # projection producing the x4 feature map the DANet head consumes.
    B, _, H_img, W_img = x_img.shape
    h, w = H_img // PATCH, W_img // PATCH
    n = h * w
    hw = H_img * W_img
    patches = _patchify(x_img)                                        # (B, N, 192)

    # host-side prepared constants: shift/upsample matrices, BN-scale folding,
    # fused q/k/v weight.
    shift = _shift_mats(h, w)                                         # (9N, N)
    up_t = jnp.kron(_interp_matrix(H_img, h),
                    _interp_matrix(W_img, w)).T                       # (N, H*W)
    w5a = p['w5a'] * p['s5a']
    w5c = p['w5c'] * p['s5c']
    w51 = p['w51'] * p['s51']
    w52 = p['w52'] * p['s52']
    wqkv = jnp.concatenate([p['wv'], p['wq'], p['wk']], axis=1)       # (C, C+2Cq)
    bqkv = jnp.concatenate([p['bv'], p['bq'], p['bk']], axis=1)

    smem = pl.BlockSpec(memory_space=pltpu.MemorySpace.SMEM)
    out = pl.pallas_call(
        _sedanet_head_kernel,
        grid=(B,),
        in_specs=[
            pl.BlockSpec((1, n, patches.shape[-1]), lambda b: (b, 0, 0)),
            _const_spec(shift.shape),
            _const_spec(p['w_stem'].shape), _const_spec(p['b_stem'].shape),
            _const_spec(w5a.shape), _const_spec(p['t5a'].shape),
            _const_spec(w5c.shape), _const_spec(p['t5c'].shape),
            _const_spec(w51.shape), _const_spec(p['t51'].shape),
            _const_spec(w52.shape), _const_spec(p['t52'].shape),
            _const_spec(wqkv.shape), _const_spec(bqkv.shape),
            _const_spec(p['w_seg'].shape), _const_spec(p['b_seg'].shape),
            _const_spec(up_t.shape),
            smem, smem,
        ],
        out_specs=pl.BlockSpec((1, N_CLASS, hw), lambda b: (b, 0, 0)),
        out_shape=jax.ShapeDtypeStruct((B, N_CLASS, hw), jnp.float32),
        compiler_params=pltpu.CompilerParams(
            dimension_semantics=("parallel",),
            vmem_limit_bytes=32 * 1024 * 1024),
    )(patches, shift, p['w_stem'], p['b_stem'],
      w5a, p['t5a'], w5c, p['t5c'], w51, p['t51'], w52, p['t52'],
      wqkv, bqkv, p['w_seg'], p['b_seg'], up_t,
      p['gamma_sa'], p['gamma_sc'])
    return out.reshape(B, N_CLASS, H_img, W_img)


# =========================== pure-JAX reference ===========================

def reference_forward(x_img, p):
    hp = functools.partial(jnp.einsum, precision=jax.lax.Precision.HIGHEST)
    B, _, H_img, W_img = x_img.shape
    h, w = H_img // PATCH, W_img // PATCH
    patches = _patchify(x_img)
    feat = hp('bnk,kd->bnd', patches, p['w_stem']) + p['b_stem']

    def conv(x, wgt, s, t):
        taps = _im2col_taps(x, h, w)
        y = hp('btnc,tcd->bnd', taps, wgt)
        return jnp.maximum(y * s + t, 0.0)

    feat1 = conv(feat, p['w5a'], p['s5a'], p['t5a'])
    q = hp('bnc,cd->bnd', feat1, p['wq']) + p['bq']
    k = hp('bnc,cd->bnd', feat1, p['wk']) + p['bk']
    v = hp('bnc,cd->bnd', feat1, p['wv']) + p['bv']
    att = jax.nn.softmax(hp('bnd,bmd->bnm', q, k), axis=-1)
    sa = p['gamma_sa'][0] * hp('bnm,bmc->bnc', att, v) + feat1
    sa_conv = conv(sa, p['w51'], p['s51'], p['t51'])

    feat2 = conv(feat, p['w5c'], p['s5c'], p['t5c'])
    energy = hp('bnc,bnd->bcd', feat2, feat2)
    energy = jnp.max(energy, axis=-1, keepdims=True) - energy
    att_c = jax.nn.softmax(energy, axis=-1)
    sc = p['gamma_sc'][0] * hp('bnd,bcd->bnc', feat2, att_c) + feat2
    sc_conv = conv(sc, p['w52'], p['s52'], p['t52'])

    coarse = hp('bnc,cd->bnd', sa_conv + sc_conv, p['w_seg']) + p['b_seg']
    coarse = coarse.reshape(B, h, w, N_CLASS).transpose(0, 3, 1, 2)
    ah = _interp_matrix(H_img, h)
    aw = _interp_matrix(W_img, w)
    return hp('Hh,bchw,Ww->bcHW', ah, coarse, aw)


# =========================== deterministic parameter init ===========================

def init_params(key):
    ks = jax.random.split(key, 24)

    def nrm(k, shape, s=0.1):
        return (s * jax.random.normal(k, shape)).astype(jnp.float32)

    def bn(k1, k2, c):
        # eval-mode BN folded: scale = gamma/sqrt(var+eps), shift = beta - mean*scale
        gamma = 1.0 + nrm(k1, (1, c), 0.05)
        beta = nrm(k2, (1, c), 0.05)
        mean = jnp.zeros((1, c), jnp.float32)
        var = jnp.ones((1, c), jnp.float32)
        scale = gamma / jnp.sqrt(var + BN_EPS)
        return scale, beta - mean * scale

    s5a, t5a = bn(ks[3], ks[4], INTER)
    s5c, t5c = bn(ks[6], ks[7], INTER)
    s51, t51 = bn(ks[9], ks[10], INTER)
    s52, t52 = bn(ks[12], ks[13], INTER)

    return dict(
        w_stem=nrm(ks[0], (PATCH * PATCH * C_IMG, C_FEAT), 0.05),
        b_stem=nrm(ks[1], (1, C_FEAT), 0.01),
        w5a=nrm(ks[2], (9, C_FEAT, INTER)), s5a=s5a, t5a=t5a,
        w5c=nrm(ks[5], (9, C_FEAT, INTER)), s5c=s5c, t5c=t5c,
        w51=nrm(ks[8], (9, INTER, INTER)), s51=s51, t51=t51,
        w52=nrm(ks[11], (9, INTER, INTER)), s52=s52, t52=t52,
        wq=nrm(ks[14], (INTER, C_Q)), bq=nrm(ks[15], (1, C_Q), 0.01),
        wk=nrm(ks[16], (INTER, C_Q)), bk=nrm(ks[17], (1, C_Q), 0.01),
        wv=nrm(ks[18], (INTER, INTER)), bv=nrm(ks[19], (1, INTER), 0.01),
        # PyTorch initializes gamma to 0 (attention branch off); use 0.1 so the
        # attention paths actually influence the output here.
        gamma_sa=jnp.full((1,), 0.1, jnp.float32),
        gamma_sc=jnp.full((1,), 0.1, jnp.float32),
        w_seg=nrm(ks[20], (INTER, N_CLASS)), b_seg=nrm(ks[21], (1, N_CLASS), 0.01),
    )


if __name__ == "__main__":
    key = jax.random.PRNGKey(0)
    k_img, k_par = jax.random.split(key)
    params = init_params(k_par)
    x = jax.random.normal(k_img, (2, C_IMG, 64, 64), dtype=jnp.float32)

    out = jax.block_until_ready(sedanet_forward(x, params))
    assert out.shape == (2, N_CLASS, 64, 64), out.shape

    ref = jax.block_until_ready(reference_forward(x, params))
    max_err = float(jnp.max(jnp.abs(out - ref)))
    assert jnp.allclose(out, ref, rtol=1e-2, atol=1e-2), f"max abs err {max_err}"

    print("KERNEL_OK")
</pallas_src>

<mosaic_0001>
module attributes {stable_mosaic.version = 11 : i64} {
  func.func private @main(%arg0: i32) attributes {dimension_semantics = [#tpu.dimension_semantics<core_parallel>], iteration_bounds = array<i64: 2>, tpu.core_type = #tpu.core_type<sc_scalar_subcore>, window_params = []} {
    return
  }
}

module attributes {stable_mosaic.version = 11 : i64} {
  func.func private @main(%arg0: i32) attributes {dimension_semantics = [#tpu.dimension_semantics<core_parallel>], iteration_bounds = array<i64: 2>, tpu.core_type = #tpu.core_type<sc_scalar_subcore>, window_params = []} {
    return
  }
}

module attributes {stable_mosaic.version = 11 : i64} {
  func.func @_sedanet_head_kernel(%arg0: i32, %arg1: memref<1x64x192xf32, #tpu.memory_space<vmem>>, %arg2: memref<576x64xf32, #tpu.memory_space<vmem>>, %arg3: memref<192x64xf32, #tpu.memory_space<vmem>>, %arg4: memref<1x64xf32, #tpu.memory_space<vmem>>, %arg5: memref<9x64x16xf32, #tpu.memory_space<vmem>>, %arg6: memref<1x16xf32, #tpu.memory_space<vmem>>, %arg7: memref<9x64x16xf32, #tpu.memory_space<vmem>>, %arg8: memref<1x16xf32, #tpu.memory_space<vmem>>, %arg9: memref<9x16x16xf32, #tpu.memory_space<vmem>>, %arg10: memref<1x16xf32, #tpu.memory_space<vmem>>, %arg11: memref<9x16x16xf32, #tpu.memory_space<vmem>>, %arg12: memref<1x16xf32, #tpu.memory_space<vmem>>, %arg13: memref<16x20xf32, #tpu.memory_space<vmem>>, %arg14: memref<1x20xf32, #tpu.memory_space<vmem>>, %arg15: memref<16x8xf32, #tpu.memory_space<vmem>>, %arg16: memref<1x8xf32, #tpu.memory_space<vmem>>, %arg17: memref<64x4096xf32, #tpu.memory_space<vmem>>, %arg18: memref<1xf32, #tpu.memory_space<smem>>, %arg19: memref<1xf32, #tpu.memory_space<smem>>, %arg20: memref<1x8x4096xf32, #tpu.memory_space<vmem>>) attributes {dimension_semantics = [#tpu.dimension_semantics<parallel>], iteration_bounds = array<i64: 2>, scalar_prefetch = 0 : i64, scratch_operands = 0 : i64, tpu.core_type = #tpu.core_type<tc>, window_params = [{transform_indices = @transform_0, window_bounds = array<i64: 1, 64, 192>}, {pipeline_mode = #tpu.pipeline_mode<synchronous>, transform_indices = @transform_1, window_bounds = array<i64: 576, 64>}, {pipeline_mode = #tpu.pipeline_mode<synchronous>, transform_indices = @transform_2, window_bounds = array<i64: 192, 64>}, {pipeline_mode = #tpu.pipeline_mode<synchronous>, transform_indices = @transform_3, window_bounds = array<i64: 1, 64>}, {pipeline_mode = #tpu.pipeline_mode<synchronous>, transform_indices = @transform_4, window_bounds = array<i64: 9, 64, 16>}, {pipeline_mode = #tpu.pipeline_mode<synchronous>, transform_indices = @transform_5, window_bounds = array<i64: 1, 16>}, {pipeline_mode = #tpu.pipeline_mode<synchronous>, transform_indices = @transform_6, window_bounds = array<i64: 9, 64, 16>}, {pipeline_mode = #tpu.pipeline_mode<synchronous>, transform_indices = @transform_7, window_bounds = array<i64: 1, 16>}, {pipeline_mode = #tpu.pipeline_mode<synchronous>, transform_indices = @transform_8, window_bounds = array<i64: 9, 16, 16>}, {pipeline_mode = #tpu.pipeline_mode<synchronous>, transform_indices = @transform_9, window_bounds = array<i64: 1, 16>}, {pipeline_mode = #tpu.pipeline_mode<synchronous>, transform_indices = @transform_10, window_bounds = array<i64: 9, 16, 16>}, {pipeline_mode = #tpu.pipeline_mode<synchronous>, transform_indices = @transform_11, window_bounds = array<i64: 1, 16>}, {pipeline_mode = #tpu.pipeline_mode<synchronous>, transform_indices = @transform_12, window_bounds = array<i64: 16, 20>}, {pipeline_mode = #tpu.pipeline_mode<synchronous>, transform_indices = @transform_13, window_bounds = array<i64: 1, 20>}, {pipeline_mode = #tpu.pipeline_mode<synchronous>, transform_indices = @transform_14, window_bounds = array<i64: 16, 8>}, {pipeline_mode = #tpu.pipeline_mode<synchronous>, transform_indices = @transform_15, window_bounds = array<i64: 1, 8>}, {pipeline_mode = #tpu.pipeline_mode<synchronous>, transform_indices = @transform_16, window_bounds = array<i64: 64, 4096>}, {transform_indices = @transform_17, window_bounds = array<i64: 1>}, {transform_indices = @transform_18, window_bounds = array<i64: 1>}, {transform_indices = @transform_19, window_bounds = array<i64: 1, 8, 4096>}]} {
    %c0 = arith.constant 0 : index
    %c0_0 = arith.constant 0 : index
    %c0_1 = arith.constant 0 : index
    %0 = vector.load %arg1[%c0, %c0_0, %c0_1] : memref<1x64x192xf32, #tpu.memory_space<vmem>>, vector<1x64x192xf32>
    %1 = vector.shape_cast %0 : vector<1x64x192xf32> to vector<64x192xf32>
    %c0_2 = arith.constant 0 : index
    %c0_3 = arith.constant 0 : index
    %2 = vector.load %arg3[%c0_2, %c0_3] : memref<192x64xf32, #tpu.memory_space<vmem>>, vector<192x64xf32>
    %cst = arith.constant dense<0.000000e+00> : vector<64x64xf32>
    %3 = tpu.matmul %1, %2, %cst {dimension_numbers = #tpu.dot_dimension_numbers<[1], [0], [0], [1], [0, 0, 1, 1], [], []>} : vector<64x192xf32>, vector<192x64xf32>, vector<64x64xf32> -> vector<64x64xf32>
    %c0_4 = arith.constant 0 : index
    %c0_5 = arith.constant 0 : index
    %4 = vector.load %arg4[%c0_4, %c0_5] : memref<1x64xf32, #tpu.memory_space<vmem>>, vector<1x64xf32>
    %5 = vector.broadcast %4 : vector<1x64xf32> to vector<64x64xf32>
    %6 = arith.addf %3, %5 : vector<64x64xf32>
    %c0_6 = arith.constant 0 : index
    %c0_7 = arith.constant 0 : index
    %7 = vector.load %arg2[%c0_6, %c0_7] : memref<576x64xf32, #tpu.memory_space<vmem>>, vector<576x64xf32>
    %cst_8 = arith.constant dense<0.000000e+00> : vector<576x64xf32>
    %8 = tpu.matmul %7, %6, %cst_8 {dimension_numbers = #tpu.dot_dimension_numbers<[1], [0], [0], [1], [0, 0, 1, 1], [], []>} : vector<576x64xf32>, vector<64x64xf32>, vector<576x64xf32> -> vector<576x64xf32>
    %9 = vector.extract_strided_slice %8 {offsets = [0, 0], sizes = [64, 64], strides = [1, 1]} : vector<576x64xf32> to vector<64x64xf32>
    %c0_9 = arith.constant 0 : index
    %c0_10 = arith.constant 0 : index
    %c0_11 = arith.constant 0 : index
    %10 = vector.load %arg5[%c0_9, %c0_10, %c0_11] : memref<9x64x16xf32, #tpu.memory_space<vmem>>, vector<1x64x16xf32>
    %11 = vector.shape_cast %10 : vector<1x64x16xf32> to vector<64x16xf32>
    %cst_12 = arith.constant dense<0.000000e+00> : vector<64x16xf32>
    %12 = tpu.matmul %9, %11, %cst_12 {dimension_numbers = #tpu.dot_dimension_numbers<[1], [0], [0], [1], [0, 0, 1, 1], [], []>} : vector<64x64xf32>, vector<64x16xf32>, vector<64x16xf32> -> vector<64x16xf32>
    %13 = vector.extract_strided_slice %8 {offsets = [64, 0], sizes = [64, 64], strides = [1, 1]} : vector<576x64xf32> to vector<64x64xf32>
    %c1 = arith.constant 1 : index
    %c0_13 = arith.constant 0 : index
    %c0_14 = arith.constant 0 : index
    %14 = vector.load %arg5[%c1, %c0_13, %c0_14] : memref<9x64x16xf32, #tpu.memory_space<vmem>>, vector<1x64x16xf32>
    %15 = vector.shape_cast %14 : vector<1x64x16xf32> to vector<64x16xf32>
    %cst_15 = arith.constant dense<0.000000e+00> : vector<64x16xf32>
    %16 = tpu.matmul %13, %15, %cst_15 {dimension_numbers = #tpu.dot_dimension_numbers<[1], [0], [0], [1], [0, 0, 1, 1], [], []>} : vector<64x64xf32>, vector<64x16xf32>, vector<64x16xf32> -> vector<64x16xf32>
    %17 = arith.addf %12, %16 : vector<64x16xf32>
    %18 = vector.extract_strided_slice %8 {offsets = [128, 0], sizes = [64, 64], strides = [1, 1]} : vector<576x64xf32> to vector<64x64xf32>
    %c2 = arith.constant 2 : index
    %c0_16 = arith.constant 0 : index
    %c0_17 = arith.constant 0 : index
    %19 = vector.load %arg5[%c2, %c0_16, %c0_17] : memref<9x64x16xf32, #tpu.memory_space<vmem>>, vector<1x64x16xf32>
    %20 = vector.shape_cast %19 : vector<1x64x16xf32> to vector<64x16xf32>
    %cst_18 = arith.constant dense<0.000000e+00> : vector<64x16xf32>
    %21 = tpu.matmul %18, %20, %cst_18 {dimension_numbers = #tpu.dot_dimension_numbers<[1], [0], [0], [1], [0, 0, 1, 1], [], []>} : vector<64x64xf32>, vector<64x16xf32>, vector<64x16xf32> -> vector<64x16xf32>
    %22 = arith.addf %17, %21 : vector<64x16xf32>
    %23 = vector.extract_strided_slice %8 {offsets = [192, 0], sizes = [64, 64], strides = [1, 1]} : vector<576x64xf32> to vector<64x64xf32>
    %c3 = arith.constant 3 : index
    %c0_19 = arith.constant 0 : index
    %c0_20 = arith.constant 0 : index
    %24 = vector.load %arg5[%c3, %c0_19, %c0_20] : memref<9x64x16xf32, #tpu.memory_space<vmem>>, vector<1x64x16xf32>
    %25 = vector.shape_cast %24 : vector<1x64x16xf32> to vector<64x16xf32>
    %cst_21 = arith.constant dense<0.000000e+00> : vector<64x16xf32>
    %26 = tpu.matmul %23, %25, %cst_21 {dimension_numbers = #tpu.dot_dimension_numbers<[1], [0], [0], [1], [0, 0, 1, 1], [], []>} : vector<64x64xf32>, vector<64x16xf32>, vector<64x16xf32> -> vector<64x16xf32>
    %27 = arith.addf %22, %26 : vector<64x16xf32>
    %28 = vector.extract_strided_slice %8 {offsets = [256, 0], sizes = [64, 64], strides = [1, 1]} : vector<576x64xf32> to vector<64x64xf32>
    %c4 = arith.constant 4 : index
    %c0_22 = arith.constant 0 : index
    %c0_23 = arith.constant 0 : index
    %29 = vector.load %arg5[%c4, %c0_22, %c0_23] : memref<9x64x16xf32, #tpu.memory_space<vmem>>, vector<1x64x16xf32>
    %30 = vector.shape_cast %29 : vector<1x64x16xf32> to vector<64x16xf32>
    %cst_24 = arith.constant dense<0.000000e+00> : vector<64x16xf32>
    %31 = tpu.matmul %28, %30, %cst_24 {dimension_numbers = #tpu.dot_dimension_numbers<[1], [0], [0], [1], [0, 0, 1, 1], [], []>} : vector<64x64xf32>, vector<64x16xf32>, vector<64x16xf32> -> vector<64x16xf32>
    %32 = arith.addf %27, %31 : vector<64x16xf32>
    %33 = vector.extract_strided_slice %8 {offsets = [320, 0], sizes = [64, 64], strides = [1, 1]} : vector<576x64xf32> to vector<64x64xf32>
    %c5 = arith.constant 5 : index
    %c0_25 = arith.constant 0 : index
    %c0_26 = arith.constant 0 : index
    %34 = vector.load %arg5[%c5, %c0_25, %c0_26] : memref<9x64x16xf32, #tpu.memory_space<vmem>>, vector<1x64x16xf32>
    %35 = vector.shape_cast %34 : vector<1x64x16xf32> to vector<64x16xf32>
    %cst_27 = arith.constant dense<0.000000e+00> : vector<64x16xf32>
    %36 = tpu.matmul %33, %35, %cst_27 {dimension_numbers = #tpu.dot_dimension_numbers<[1], [0], [0], [1], [0, 0, 1, 1], [], []>} : vector<64x64xf32>, vector<64x16xf32>, vector<64x16xf32> -> vector<64x16xf32>
    %37 = arith.addf %32, %36 : vector<64x16xf32>
    %38 = vector.extract_strided_slice %8 {offsets = [384, 0], sizes = [64, 64], strides = [1, 1]} : vector<576x64xf32> to vector<64x64xf32>
    %c6 = arith.constant 6 : index
    %c0_28 = arith.constant 0 : index
    %c0_29 = arith.constant 0 : index
    %39 = vector.load %arg5[%c6, %c0_28, %c0_29] : memref<9x64x16xf32, #tpu.memory_space<vmem>>, vector<1x64x16xf32>
    %40 = vector.shape_cast %39 : vector<1x64x16xf32> to vector<64x16xf32>
    %cst_30 = arith.constant dense<0.000000e+00> : vector<64x16xf32>
    %41 = tpu.matmul %38, %40, %cst_30 {dimension_numbers = #tpu.dot_dimension_numbers<[1], [0], [0], [1], [0, 0, 1, 1], [], []>} : vector<64x64xf32>, vector<64x16xf32>, vector<64x16xf32> -> vector<64x16xf32>
    %42 = arith.addf %37, %41 : vector<64x16xf32>
    %43 = vector.extract_strided_slice %8 {offsets = [448, 0], sizes = [64, 64], strides = [1, 1]} : vector<576x64xf32> to vector<64x64xf32>
    %c7 = arith.constant 7 : index
    %c0_31 = arith.constant 0 : index
    %c0_32 = arith.constant 0 : index
    %44 = vector.load %arg5[%c7, %c0_31, %c0_32] : memref<9x64x16xf32, #tpu.memory_space<vmem>>, vector<1x64x16xf32>
    %45 = vector.shape_cast %44 : vector<1x64x16xf32> to vector<64x16xf32>
    %cst_33 = arith.constant dense<0.000000e+00> : vector<64x16xf32>
    %46 = tpu.matmul %43, %45, %cst_33 {dimension_numbers = #tpu.dot_dimension_numbers<[1], [0], [0], [1], [0, 0, 1, 1], [], []>} : vector<64x64xf32>, vector<64x16xf32>, vector<64x16xf32> -> vector<64x16xf32>
    %47 = arith.addf %42, %46 : vector<64x16xf32>
    %48 = vector.extract_strided_slice %8 {offsets = [512, 0], sizes = [64, 64], strides = [1, 1]} : vector<576x64xf32> to vector<64x64xf32>
    %c8 = arith.constant 8 : index
    %c0_34 = arith.constant 0 : index
    %c0_35 = arith.constant 0 : index
    %49 = vector.load %arg5[%c8, %c0_34, %c0_35] : memref<9x64x16xf32, #tpu.memory_space<vmem>>, vector<1x64x16xf32>
    %50 = vector.shape_cast %49 : vector<1x64x16xf32> to vector<64x16xf32>
    %cst_36 = arith.constant dense<0.000000e+00> : vector<64x16xf32>
    %51 = tpu.matmul %48, %50, %cst_36 {dimension_numbers = #tpu.dot_dimension_numbers<[1], [0], [0], [1], [0, 0, 1, 1], [], []>} : vector<64x64xf32>, vector<64x16xf32>, vector<64x16xf32> -> vector<64x16xf32>
    %52 = arith.addf %47, %51 : vector<64x16xf32>
    %c0_37 = arith.constant 0 : index
    %c0_38 = arith.constant 0 : index
    %53 = vector.load %arg6[%c0_37, %c0_38] : memref<1x16xf32, #tpu.memory_space<vmem>>, vector<1x16xf32>
    %54 = vector.broadcast %53 : vector<1x16xf32> to vector<64x16xf32>
    %55 = arith.addf %52, %54 : vector<64x16xf32>
    %cst_39 = arith.constant 0.000000e+00 : f32
    %56 = vector.broadcast %cst_39 : f32 to vector<64x16xf32>
    %57 = arith.maximumf %55, %56 : vector<64x16xf32>
    %c0_40 = arith.constant 0 : index
    %c0_41 = arith.constant 0 : index
    %58 = vector.load %arg13[%c0_40, %c0_41] : memref<16x20xf32, #tpu.memory_space<vmem>>, vector<16x20xf32>
    %cst_42 = arith.constant dense<0.000000e+00> : vector<64x20xf32>
    %59 = tpu.matmul %57, %58, %cst_42 {dimension_numbers = #tpu.dot_dimension_numbers<[1], [0], [0], [1], [0, 0, 1, 1], [], []>} : vector<64x16xf32>, vector<16x20xf32>, vector<64x20xf32> -> vector<64x20xf32>
    %c0_43 = arith.constant 0 : index
    %c0_44 = arith.constant 0 : index
    %60 = vector.load %arg14[%c0_43, %c0_44] : memref<1x20xf32, #tpu.memory_space<vmem>>, vector<1x20xf32>
    %61 = vector.broadcast %60 : vector<1x20xf32> to vector<64x20xf32>
    %62 = arith.addf %59, %61 : vector<64x20xf32>
    %63 = vector.extract_strided_slice %62 {offsets = [0, 0], sizes = [64, 16], strides = [1, 1]} : vector<64x20xf32> to vector<64x16xf32>
    %64 = vector.extract_strided_slice %62 {offsets = [0, 16], sizes = [64, 2], strides = [1, 1]} : vector<64x20xf32> to vector<64x2xf32>
    %65 = vector.extract_strided_slice %62 {offsets = [0, 18], sizes = [64, 2], strides = [1, 1]} : vector<64x20xf32> to vector<64x2xf32>
    %cst_45 = arith.constant dense<0.000000e+00> : vector<64x64xf32>
    %66 = tpu.matmul %64, %65, %cst_45 {dimension_numbers = #tpu.dot_dimension_numbers<[1], [1], [0], [0], [0, 0, 1, 0], [], []>} : vector<64x2xf32>, vector<64x2xf32>, vector<64x64xf32> -> vector<64x64xf32>
    %cst_46 = arith.constant dense<0xFF800000> : vector<64xf32>
    %67 = vector.multi_reduction <maximumf>, %66, %cst_46 [1] : vector<64x64xf32> to vector<64xf32>
    %68 = vector.shape_cast %67 : vector<64xf32> to vector<64x1xf32>
    %69 = vector.broadcast %68 : vector<64x1xf32> to vector<64x64xf32>
    %70 = arith.subf %66, %69 : vector<64x64xf32>
    %71 = math.exp %70 : vector<64x64xf32>
    %cst_47 = arith.constant dense<0.000000e+00> : vector<64xf32>
    %72 = vector.multi_reduction <add>, %71, %cst_47 [1] : vector<64x64xf32> to vector<64xf32>
    %73 = vector.shape_cast %72 : vector<64xf32> to vector<64x1xf32>
    %74 = vector.broadcast %73 : vector<64x1xf32> to vector<64x64xf32>
    %75 = arith.divf %71, %74 : vector<64x64xf32>
    %c0_48 = arith.constant 0 : index
    %76 = memref.load %arg18[%c0_48] : memref<1xf32, #tpu.memory_space<smem>>
    %cst_49 = arith.constant dense<0.000000e+00> : vector<64x16xf32>
    %77 = tpu.matmul %75, %63, %cst_49 {dimension_numbers = #tpu.dot_dimension_numbers<[1], [0], [0], [1], [0, 0, 1, 1], [], []>} : vector<64x64xf32>, vector<64x16xf32>, vector<64x16xf32> -> vector<64x16xf32>
    %78 = vector.broadcast %76 : f32 to vector<64x16xf32>
    %79 = arith.mulf %78, %77 : vector<64x16xf32>
    %80 = arith.addf %79, %57 : vector<64x16xf32>
    %c0_50 = arith.constant 0 : index
    %c0_51 = arith.constant 0 : index
    %81 = vector.load %arg2[%c0_50, %c0_51] : memref<576x64xf32, #tpu.memory_space<vmem>>, vector<576x64xf32>
    %cst_52 = arith.constant dense<0.000000e+00> : vector<576x16xf32>
    %82 = tpu.matmul %81, %80, %cst_52 {dimension_numbers = #tpu.dot_dimension_numbers<[1], [0], [0], [1], [0, 0, 1, 1], [], []>} : vector<576x64xf32>, vector<64x16xf32>, vector<576x16xf32> -> vector<576x16xf32>
    %83 = vector.extract_strided_slice %82 {offsets = [0, 0], sizes = [64, 16], strides = [1, 1]} : vector<576x16xf32> to vector<64x16xf32>
    %c0_53 = arith.constant 0 : index
    %c0_54 = arith.constant 0 : index
    %c0_55 = arith.constant 0 : index
    %84 = vector.load %arg9[%c0_53, %c0_54, %c0_55] : memref<9x16x16xf32, #tpu.memory_space<vmem>>, vector<1x16x16xf32>
    %85 = vector.shape_cast %84 : vector<1x16x16xf32> to vector<16x16xf32>
    %cst_56 = arith.constant dense<0.000000e+00> : vector<64x16xf32>
    %86 = tpu.matmul %83, %85, %cst_56 {dimension_numbers = #tpu.dot_dimension_numbers<[1], [0], [0], [1], [0, 0, 1, 1], [], []>} : vector<64x16xf32>, vector<16x16xf32>, vector<64x16xf32> -> vector<64x16xf32>
    %87 = vector.extract_strided_slice %82 {offsets = [64, 0], sizes = [64, 16], strides = [1, 1]} : vector<576x16xf32> to vector<64x16xf32>
    %c1_57 = arith.constant 1 : index
    %c0_58 = arith.constant 0 : index
    %c0_59 = arith.constant 0 : index
    %88 = vector.load %arg9[%c1_57, %c0_58, %c0_59] : memref<9x16x16xf32, #tpu.memory_space<vmem>>, vector<1x16x16xf32>
    %89 = vector.shape_cast %88 : vector<1x16x16xf32> to vector<16x16xf32>
    %cst_60 = arith.constant dense<0.000000e+00> : vector<64x16xf32>
    %90 = tpu.matmul %87, %89, %cst_60 {dimension_numbers = #tpu.dot_dimension_numbers<[1], [0], [0], [1], [0, 0, 1, 1], [], []>} : vector<64x16xf32>, vector<16x16xf32>, vector<64x16xf32> -> vector<64x16xf32>
    %91 = arith.addf %86, %90 : vector<64x16xf32>
    %92 = vector.extract_strided_slice %82 {offsets = [128, 0], sizes = [64, 16], strides = [1, 1]} : vector<576x16xf32> to vector<64x16xf32>
    %c2_61 = arith.constant 2 : index
    %c0_62 = arith.constant 0 : index
    %c0_63 = arith.constant 0 : index
    %93 = vector.load %arg9[%c2_61, %c0_62, %c0_63] : memref<9x16x16xf32, #tpu.memory_space<vmem>>, vector<1x16x16xf32>
    %94 = vector.shape_cast %93 : vector<1x16x16xf32> to vector<16x16xf32>
    %cst_64 = arith.constant dense<0.000000e+00> : vector<64x16xf32>
    %95 = tpu.matmul %92, %94, %cst_64 {dimension_numbers = #tpu.dot_dimension_numbers<[1], [0], [0], [1], [0, 0, 1, 1], [], []>} : vector<64x16xf32>, vector<16x16xf32>, vector<64x16xf32> -> vector<64x16xf32>
    %96 = arith.addf %91, %95 : vector<64x16xf32>
    %97 = vector.extract_strided_slice %82 {offsets = [192, 0], sizes = [64, 16], strides = [1, 1]} : vector<576x16xf32> to vector<64x16xf32>
    %c3_65 = arith.constant 3 : index
    %c0_66 = arith.constant 0 : index
    %c0_67 = arith.constant 0 : index
    %98 = vector.load %arg9[%c3_65, %c0_66, %c0_67] : memref<9x16x16xf32, #tpu.memory_space<vmem>>, vector<1x16x16xf32>
    %99 = vector.shape_cast %98 : vector<1x16x16xf32> to vector<16x16xf32>
    %cst_68 = arith.constant dense<0.000000e+00> : vector<64x16xf32>
    %100 = tpu.matmul %97, %99, %cst_68 {dimension_numbers = #tpu.dot_dimension_numbers<[1], [0], [0], [1], [0, 0, 1, 1], [], []>} : vector<64x16xf32>, vector<16x16xf32>, vector<64x16xf32> -> vector<64x16xf32>
    %101 = arith.addf %96, %100 : vector<64x16xf32>
    %102 = vector.extract_strided_slice %82 {offsets = [256, 0], sizes = [64, 16], strides = [1, 1]} : vector<576x16xf32> to vector<64x16xf32>
    %c4_69 = arith.constant 4 : index
    %c0_70 = arith.constant 0 : index
    %c0_71 = arith.constant 0 : index
    %103 = vector.load %arg9[%c4_69, %c0_70, %c0_71] : memref<9x16x16xf32, #tpu.memory_space<vmem>>, vector<1x16x16xf32>
    %104 = vector.shape_cast %103 : vector<1x16x16xf32> to vector<16x16xf32>
    %cst_72 = arith.constant dense<0.000000e+00> : vector<64x16xf32>
    %105 = tpu.matmul %102, %104, %cst_72 {dimension_numbers = #tpu.dot_dimension_numbers<[1], [0], [0], [1], [0, 0, 1, 1], [], []>} : vector<64x16xf32>, vector<16x16xf32>, vector<64x16xf32> -> vector<64x16xf32>
    %106 = arith.addf %101, %105 : vector<64x16xf32>
    %107 = vector.extract_strided_slice %82 {offsets = [320, 0], sizes = [64, 16], strides = [1, 1]} : vector<576x16xf32> to vector<64x16xf32>
    %c5_73 = arith.constant 5 : index
    %c0_74 = arith.constant 0 : index
    %c0_75 = arith.constant 0 : index
    %108 = vector.load %arg9[%c5_73, %c0_74, %c0_75] : memref<9x16x16xf32, #tpu.memory_space<vmem>>, vector<1x16x16xf32>
    %109 = vector.shape_cast %108 : vector<1x16x16xf32> to vector<16x16xf32>
    %cst_76 = arith.constant dense<0.000000e+00> : vector<64x16xf32>
    %110 = tpu.matmul %107, %109, %cst_76 {dimension_numbers = #tpu.dot_dimension_numbers<[1], [0], [0], [1], [0, 0, 1, 1], [], []>} : vector<64x16xf32>, vector<16x16xf32>, vector<64x16xf32> -> vector<64x16xf32>
    %111 = arith.addf %106, %110 : vector<64x16xf32>
    %112 = vector.extract_strided_slice %82 {offsets = [384, 0], sizes = [64, 16], strides = [1, 1]} : vector<576x16xf32> to vector<64x16xf32>
    %c6_77 = arith.constant 6 : index
    %c0_78 = arith.constant 0 : index
    %c0_79 = arith.constant 0 : index
    %113 = vector.load %arg9[%c6_77, %c0_78, %c0_79] : memref<9x16x16xf32, #tpu.memory_space<vmem>>, vector<1x16x16xf32>
    %114 = vector.shape_cast %113 : vector<1x16x16xf32> to vector<16x16xf32>
    %cst_80 = arith.constant dense<0.000000e+00> : vector<64x16xf32>
    %115 = tpu.matmul %112, %114, %cst_80 {dimension_numbers = #tpu.dot_dimension_numbers<[1], [0], [0], [1], [0, 0, 1, 1], [], []>} : vector<64x16xf32>, vector<16x16xf32>, vector<64x16xf32> -> vector<64x16xf32>
    %116 = arith.addf %111, %115 : vector<64x16xf32>
    %117 = vector.extract_strided_slice %82 {offsets = [448, 0], sizes = [64, 16], strides = [1, 1]} : vector<576x16xf32> to vector<64x16xf32>
    %c7_81 = arith.constant 7 : index
    %c0_82 = arith.constant 0 : index
    %c0_83 = arith.constant 0 : index
    %118 = vector.load %arg9[%c7_81, %c0_82, %c0_83] : memref<9x16x16xf32, #tpu.memory_space<vmem>>, vector<1x16x16xf32>
    %119 = vector.shape_cast %118 : vector<1x16x16xf32> to vector<16x16xf32>
    %cst_84 = arith.constant dense<0.000000e+00> : vector<64x16xf32>
    %120 = tpu.matmul %117, %119, %cst_84 {dimension_numbers = #tpu.dot_dimension_numbers<[1], [0], [0], [1], [0, 0, 1, 1], [], []>} : vector<64x16xf32>, vector<16x16xf32>, vector<64x16xf32> -> vector<64x16xf32>
    %121 = arith.addf %116, %120 : vector<64x16xf32>
    %122 = vector.extract_strided_slice %82 {offsets = [512, 0], sizes = [64, 16], strides = [1, 1]} : vector<576x16xf32> to vector<64x16xf32>
    %c8_85 = arith.constant 8 : index
    %c0_86 = arith.constant 0 : index
    %c0_87 = arith.constant 0 : index
    %123 = vector.load %arg9[%c8_85, %c0_86, %c0_87] : memref<9x16x16xf32, #tpu.memory_space<vmem>>, vector<1x16x16xf32>
    %124 = vector.shape_cast %123 : vector<1x16x16xf32> to vector<16x16xf32>
    %cst_88 = arith.constant dense<0.000000e+00> : vector<64x16xf32>
    %125 = tpu.matmul %122, %124, %cst_88 {dimension_numbers = #tpu.dot_dimension_numbers<[1], [0], [0], [1], [0, 0, 1, 1], [], []>} : vector<64x16xf32>, vector<16x16xf32>, vector<64x16xf32> -> vector<64x16xf32>
    %126 = arith.addf %121, %125 : vector<64x16xf32>
    %c0_89 = arith.constant 0 : index
    %c0_90 = arith.constant 0 : index
    %127 = vector.load %arg10[%c0_89, %c0_90] : memref<1x16xf32, #tpu.memory_space<vmem>>, vector<1x16xf32>
    %128 = vector.broadcast %127 : vector<1x16xf32> to vector<64x16xf32>
    %129 = arith.addf %126, %128 : vector<64x16xf32>
    %cst_91 = arith.constant 0.000000e+00 : f32
    %130 = vector.broadcast %cst_91 : f32 to vector<64x16xf32>
    %131 = arith.maximumf %129, %130 : vector<64x16xf32>
    %c0_92 = arith.constant 0 : index
    %c0_93 = arith.constant 0 : index
    %132 = vector.load %arg2[%c0_92, %c0_93] : memref<576x64xf32, #tpu.memory_space<vmem>>, vector<576x64xf32>
    %cst_94 = arith.constant dense<0.000000e+00> : vector<576x64xf32>
    %133 = tpu.matmul %132, %6, %cst_94 {dimension_numbers = #tpu.dot_dimension_numbers<[1], [0], [0], [1], [0, 0, 1, 1], [], []>} : vector<576x64xf32>, vector<64x64xf32>, vector<576x64xf32> -> vector<576x64xf32>
    %134 = vector.extract_strided_slice %133 {offsets = [0, 0], sizes = [64, 64], strides = [1, 1]} : vector<576x64xf32> to vector<64x64xf32>
    %c0_95 = arith.constant 0 : index
    %c0_96 = arith.constant 0 : index
    %c0_97 = arith.constant 0 : index
    %135 = vector.load %arg7[%c0_95, %c0_96, %c0_97] : memref<9x64x16xf32, #tpu.memory_space<vmem>>, vector<1x64x16xf32>
    %136 = vector.shape_cast %135 : vector<1x64x16xf32> to vector<64x16xf32>
    %cst_98 = arith.constant dense<0.000000e+00> : vector<64x16xf32>
    %137 = tpu.matmul %134, %136, %cst_98 {dimension_numbers = #tpu.dot_dimension_numbers<[1], [0], [0], [1], [0, 0, 1, 1], [], []>} : vector<64x64xf32>, vector<64x16xf32>, vector<64x16xf32> -> vector<64x16xf32>
    %138 = vector.extract_strided_slice %133 {offsets = [64, 0], sizes = [64, 64], strides = [1, 1]} : vector<576x64xf32> to vector<64x64xf32>
    %c1_99 = arith.constant 1 : index
    %c0_100 = arith.constant 0 : index
    %c0_101 = arith.constant 0 : index
    %139 = vector.load %arg7[%c1_99, %c0_100, %c0_101] : memref<9x64x16xf32, #tpu.memory_space<vmem>>, vector<1x64x16xf32>
    %140 = vector.shape_cast %139 : vector<1x64x16xf32> to vector<64x16xf32>
    %cst_102 = arith.constant dense<0.000000e+00> : vector<64x16xf32>
    %141 = tpu.matmul %138, %140, %cst_102 {dimension_numbers = #tpu.dot_dimension_numbers<[1], [0], [0], [1], [0, 0, 1, 1], [], []>} : vector<64x64xf32>, vector<64x16xf32>, vector<64x16xf32> -> vector<64x16xf32>
    %142 = arith.addf %137, %141 : vector<64x16xf32>
    %143 = vector.extract_strided_slice %133 {offsets = [128, 0], sizes = [64, 64], strides = [1, 1]} : vector<576x64xf32> to vector<64x64xf32>
    %c2_103 = arith.constant 2 : index
    %c0_104 = arith.constant 0 : index
    %c0_105 = arith.constant 0 : index
    %144 = vector.load %arg7[%c2_103, %c0_104, %c0_105] : memref<9x64x16xf32, #tpu.memory_space<vmem>>, vector<1x64x16xf32>
    %145 = vector.shape_cast %144 : vector<1x64x16xf32> to vector<64x16xf32>
    %cst_106 = arith.constant dense<0.000000e+00> : vector<64x16xf32>
    %146 = tpu.matmul %143, %145, %cst_106 {dimension_numbers = #tpu.dot_dimension_numbers<[1], [0], [0], [1], [0, 0, 1, 1], [], []>} : vector<64x64xf32>, vector<64x16xf32>, vector<64x16xf32> -> vector<64x16xf32>
    %147 = arith.addf %142, %146 : vector<64x16xf32>
    %148 = vector.extract_strided_slice %133 {offsets = [192, 0], sizes = [64, 64], strides = [1, 1]} : vector<576x64xf32> to vector<64x64xf32>
    %c3_107 = arith.constant 3 : index
    %c0_108 = arith.constant 0 : index
    %c0_109 = arith.constant 0 : index
    %149 = vector.load %arg7[%c3_107, %c0_108, %c0_109] : memref<9x64x16xf32, #tpu.memory_space<vmem>>, vector<1x64x16xf32>
    %150 = vector.shape_cast %149 : vector<1x64x16xf32> to vector<64x16xf32>
    %cst_110 = arith.constant dense<0.000000e+00> : vector<64x16xf32>
    %151 = tpu.matmul %148, %150, %cst_110 {dimension_numbers = #tpu.dot_dimension_numbers<[1], [0], [0], [1], [0, 0, 1, 1], [], []>} : vector<64x64xf32>, vector<64x16xf32>, vector<64x16xf32> -> vector<64x16xf32>
    %152 = arith.addf %147, %151 : vector<64x16xf32>
    %153 = vector.extract_strided_slice %133 {offsets = [256, 0], sizes = [64, 64], strides = [1, 1]} : vector<576x64xf32> to vector<64x64xf32>
    %c4_111 = arith.constant 4 : index
    %c0_112 = arith.constant 0 : index
    %c0_113 = arith.constant 0 : index
    %154 = vector.load %arg7[%c4_111, %c0_112, %c0_113] : memref<9x64x16xf32, #tpu.memory_space<vmem>>, vector<1x64x16xf32>
    %155 = vector.shape_cast %154 : vector<1x64x16xf32> to vector<64x16xf32>
    %cst_114 = arith.constant dense<0.000000e+00> : vector<64x16xf32>
    %156 = tpu.matmul %153, %155, %cst_114 {dimension_numbers = #tpu.dot_dimension_numbers<[1], [0], [0], [1], [0, 0, 1, 1], [], []>} : vector<64x64xf32>, vector<64x16xf32>, vector<64x16xf32> -> vector<64x16xf32>
    %157 = arith.addf %152, %156 : vector<64x16xf32>
    %158 = vector.extract_strided_slice %133 {offsets = [320, 0], sizes = [64, 64], strides = [1, 1]} : vector<576x64xf32> to vector<64x64xf32>
    %c5_115 = arith.constant 5 : index
    %c0_116 = arith.constant 0 : index
    %c0_117 = arith.constant 0 : index
    %159 = vector.load %arg7[%c5_115, %c0_116, %c0_117] : memref<9x64x16xf32, #tpu.memory_space<vmem>>, vector<1x64x16xf32>
    %160 = vector.shape_cast %159 : vector<1x64x16xf32> to vector<64x16xf32>
    %cst_118 = arith.constant dense<0.000000e+00> : vector<64x16xf32>
    %161 = tpu.matmul %158, %160, %cst_118 {dimension_numbers = #tpu.dot_dimension_numbers<[1], [0], [0], [1], [0, 0, 1, 1], [], []>} : vector<64x64xf32>, vector<64x16xf32>, vector<64x16xf32> -> vector<64x16xf32>
    %162 = arith.addf %157, %161 : vector<64x16xf32>
    %163 = vector.extract_strided_slice %133 {offsets = [384, 0], sizes = [64, 64], strides = [1, 1]} : vector<576x64xf32> to vector<64x64xf32>
    %c6_119 = arith.constant 6 : index
    %c0_120 = arith.constant 0 : index
    %c0_121 = arith.constant 0 : index
    %164 = vector.load %arg7[%c6_119, %c0_120, %c0_121] : memref<9x64x16xf32, #tpu.memory_space<vmem>>, vector<1x64x16xf32>
    %165 = vector.shape_cast %164 : vector<1x64x16xf32> to vector<64x16xf32>
    %cst_122 = arith.constant dense<0.000000e+00> : vector<64x16xf32>
    %166 = tpu.matmul %163, %165, %cst_122 {dimension_numbers = #tpu.dot_dimension_numbers<[1], [0], [0], [1], [0, 0, 1, 1], [], []>} : vector<64x64xf32>, vector<64x16xf32>, vector<64x16xf32> -> vector<64x16xf32>
    %167 = arith.addf %162, %166 : vector<64x16xf32>
    %168 = vector.extract_strided_slice %133 {offsets = [448, 0], sizes = [64, 64], strides = [1, 1]} : vector<576x64xf32> to vector<64x64xf32>
    %c7_123 = arith.constant 7 : index
    %c0_124 = arith.constant 0 : index
    %c0_125 = arith.constant 0 : index
    %169 = vector.load %arg7[%c7_123, %c0_124, %c0_125] : memref<9x64x16xf32, #tpu.memory_space<vmem>>, vector<1x64x16xf32>
    %170 = vector.shape_cast %169 : vector<1x64x16xf32> to vector<64x16xf32>
    %cst_126 = arith.constant dense<0.000000e+00> : vector<64x16xf32>
    %171 = tpu.matmul %168, %170, %cst_126 {dimension_numbers = #tpu.dot_dimension_numbers<[1], [0], [0], [1], [0, 0, 1, 1], [], []>} : vector<64x64xf32>, vector<64x16xf32>, vector<64x16xf32> -> vector<64x16xf32>
    %172 = arith.addf %167, %171 : vector<64x16xf32>
    %173 = vector.extract_strided_slice %133 {offsets = [512, 0], sizes = [64, 64], strides = [1, 1]} : vector<576x64xf32> to vector<64x64xf32>
    %c8_127 = arith.constant 8 : index
    %c0_128 = arith.constant 0 : index
    %c0_129 = arith.constant 0 : index
    %174 = vector.load %arg7[%c8_127, %c0_128, %c0_129] : memref<9x64x16xf32, #tpu.memory_space<vmem>>, vector<1x64x16xf32>
    %175 = vector.shape_cast %174 : vector<1x64x16xf32> to vector<64x16xf32>
    %cst_130 = arith.constant dense<0.000000e+00> : vector<64x16xf32>
    %176 = tpu.matmul %173, %175, %cst_130 {dimension_numbers = #tpu.dot_dimension_numbers<[1], [0], [0], [1], [0, 0, 1, 1], [], []>} : vector<64x64xf32>, vector<64x16xf32>, vector<64x16xf32> -> vector<64x16xf32>
    %177 = arith.addf %172, %176 : vector<64x16xf32>
    %c0_131 = arith.constant 0 : index
    %c0_132 = arith.constant 0 : index
    %178 = vector.load %arg8[%c0_131, %c0_132] : memref<1x16xf32, #tpu.memory_space<vmem>>, vector<1x16xf32>
    %179 = vector.broadcast %178 : vector<1x16xf32> to vector<64x16xf32>
    %180 = arith.addf %177, %179 : vector<64x16xf32>
    %cst_133 = arith.constant 0.000000e+00 : f32
    %181 = vector.broadcast %cst_133 : f32 to vector<64x16xf32>
    %182 = arith.maximumf %180, %181 : vector<64x16xf32>
    %cst_134 = arith.constant dense<0.000000e+00> : vector<16x16xf32>
    %183 = tpu.matmul %182, %182, %cst_134 {dimension_numbers = #tpu.dot_dimension_numbers<[0], [0], [1], [1], [0, 1, 1, 1], [], []>} : vector<64x16xf32>, vector<64x16xf32>, vector<16x16xf32> -> vector<16x16xf32>
    %cst_135 = arith.constant dense<0xFF800000> : vector<16xf32>
    %184 = vector.multi_reduction <maximumf>, %183, %cst_135 [1] : vector<16x16xf32> to vector<16xf32>
    %185 = vector.shape_cast %184 : vector<16xf32> to vector<16x1xf32>
    %186 = vector.broadcast %185 : vector<16x1xf32> to vector<16x16xf32>
    %187 = arith.subf %186, %183 : vector<16x16xf32>
    %cst_136 = arith.constant dense<0xFF800000> : vector<16xf32>
    %188 = vector.multi_reduction <maximumf>, %187, %cst_136 [1] : vector<16x16xf32> to vector<16xf32>
    %189 = vector.shape_cast %188 : vector<16xf32> to vector<16x1xf32>
    %190 = vector.broadcast %189 : vector<16x1xf32> to vector<16x16xf32>
    %191 = arith.subf %187, %190 : vector<16x16xf32>
    %192 = math.exp %191 : vector<16x16xf32>
    %cst_137 = arith.constant dense<0.000000e+00> : vector<16xf32>
    %193 = vector.multi_reduction <add>, %192, %cst_137 [1] : vector<16x16xf32> to vector<16xf32>
    %194 = vector.shape_cast %193 : vector<16xf32> to vector<16x1xf32>
    %195 = vector.broadcast %194 : vector<16x1xf32> to vector<16x16xf32>
    %196 = arith.divf %192, %195 : vector<16x16xf32>
    %cst_138 = arith.constant dense<0.000000e+00> : vector<64x16xf32>
    %197 = tpu.matmul %182, %196, %cst_138 {dimension_numbers = #tpu.dot_dimension_numbers<[1], [1], [0], [0], [0, 0, 1, 0], [], []>} : vector<64x16xf32>, vector<16x16xf32>, vector<64x16xf32> -> vector<64x16xf32>
    %c0_139 = arith.constant 0 : index
    %198 = memref.load %arg19[%c0_139] : memref<1xf32, #tpu.memory_space<smem>>
    %199 = vector.broadcast %198 : f32 to vector<64x16xf32>
    %200 = arith.mulf %199, %197 : vector<64x16xf32>
    %201 = arith.addf %200, %182 : vector<64x16xf32>
    %c0_140 = arith.constant 0 : index
    %c0_141 = arith.constant 0 : index
    %202 = vector.load %arg2[%c0_140, %c0_141] : memref<576x64xf32, #tpu.memory_space<vmem>>, vector<576x64xf32>
    %cst_142 = arith.constant dense<0.000000e+00> : vector<576x16xf32>
    %203 = tpu.matmul %202, %201, %cst_142 {dimension_numbers = #tpu.dot_dimension_numbers<[1], [0], [0], [1], [0, 0, 1, 1], [], []>} : vector<576x64xf32>, vector<64x16xf32>, vector<576x16xf32> -> vector<576x16xf32>
    %204 = vector.extract_strided_slice %203 {offsets = [0, 0], sizes = [64, 16], strides = [1, 1]} : vector<576x16xf32> to vector<64x16xf32>
    %c0_143 = arith.constant 0 : index
    %c0_144 = arith.constant 0 : index
    %c0_145 = arith.constant 0 : index
    %205 = vector.load %arg11[%c0_143, %c0_144, %c0_145] : memref<9x16x16xf32, #tpu.memory_space<vmem>>, vector<1x16x16xf32>
    %206 = vector.shape_cast %205 : vector<1x16x16xf32> to vector<16x16xf32>
    %cst_146 = arith.constant dense<0.000000e+00> : vector<64x16xf32>
    %207 = tpu.matmul %204, %206, %cst_146 {dimension_numbers = #tpu.dot_dimension_numbers<[1], [0], [0], [1], [0, 0, 1, 1], [], []>} : vector<64x16xf32>, vector<16x16xf32>, vector<64x16xf32> -> vector<64x16xf32>
    %208 = vector.extract_strided_slice %203 {offsets = [64, 0], sizes = [64, 16], strides = [1, 1]} : vector<576x16xf32> to vector<64x16xf32>
    %c1_147 = arith.constant 1 : index
    %c0_148 = arith.constant 0 : index
    %c0_149 = arith.constant 0 : index
    %209 = vector.load %arg11[%c1_147, %c0_148, %c0_149] : memref<9x16x16xf32, #tpu.memory_space<vmem>>, vector<1x16x16xf32>
    %210 = vector.shape_cast %209 : vector<1x16x16xf32> to vector<16x16xf32>
    %cst_150 = arith.constant dense<0.000000e+00> : vector<64x16xf32>
    %211 = tpu.matmul %208, %210, %cst_150 {dimension_numbers = #tpu.dot_dimension_numbers<[1], [0], [0], [1], [0, 0, 1, 1], [], []>} : vector<64x16xf32>, vector<16x16xf32>, vector<64x16xf32> -> vector<64x16xf32>
    %212 = arith.addf %207, %211 : vector<64x16xf32>
    %213 = vector.extract_strided_slice %203 {offsets = [128, 0], sizes = [64, 16], strides = [1, 1]} : vector<576x16xf32> to vector<64x16xf32>
    %c2_151 = arith.constant 2 : index
    %c0_152 = arith.constant 0 : index
    %c0_153 = arith.constant 0 : index
    %214 = vector.load %arg11[%c2_151, %c0_152, %c0_153] : memref<9x16x16xf32, #tpu.memory_space<vmem>>, vector<1x16x16xf32>
    %215 = vector.shape_cast %214 : vector<1x16x16xf32> to vector<16x16xf32>
    %cst_154 = arith.constant dense<0.000000e+00> : vector<64x16xf32>
    %216 = tpu.matmul %213, %215, %cst_154 {dimension_numbers = #tpu.dot_dimension_numbers<[1], [0], [0], [1], [0, 0, 1, 1], [], []>} : vector<64x16xf32>, vector<16x16xf32>, vector<64x16xf32> -> vector<64x16xf32>
    %217 = arith.addf %212, %216 : vector<64x16xf32>
    %218 = vector.extract_strided_slice %203 {offsets = [192, 0], sizes = [64, 16], strides = [1, 1]} : vector<576x16xf32> to vector<64x16xf32>
    %c3_155 = arith.constant 3 : index
    %c0_156 = arith.constant 0 : index
    %c0_157 = arith.constant 0 : index
    %219 = vector.load %arg11[%c3_155, %c0_156, %c0_157] : memref<9x16x16xf32, #tpu.memory_space<vmem>>, vector<1x16x16xf32>
    %220 = vector.shape_cast %219 : vector<1x16x16xf32> to vector<16x16xf32>
    %cst_158 = arith.constant dense<0.000000e+00> : vector<64x16xf32>
    %221 = tpu.matmul %218, %220, %cst_158 {dimension_numbers = #tpu.dot_dimension_numbers<[1], [0], [0], [1], [0, 0, 1, 1], [], []>} : vector<64x16xf32>, vector<16x16xf32>, vector<64x16xf32> -> vector<64x16xf32>
    %222 = arith.addf %217, %221 : vector<64x16xf32>
    %223 = vector.extract_strided_slice %203 {offsets = [256, 0], sizes = [64, 16], strides = [1, 1]} : vector<576x16xf32> to vector<64x16xf32>
    %c4_159 = arith.constant 4 : index
    %c0_160 = arith.constant 0 : index
    %c0_161 = arith.constant 0 : index
    %224 = vector.load %arg11[%c4_159, %c0_160, %c0_161] : memref<9x16x16xf32, #tpu.memory_space<vmem>>, vector<1x16x16xf32>
    %225 = vector.shape_cast %224 : vector<1x16x16xf32> to vector<16x16xf32>
    %cst_162 = arith.constant dense<0.000000e+00> : vector<64x16xf32>
    %226 = tpu.matmul %223, %225, %cst_162 {dimension_numbers = #tpu.dot_dimension_numbers<[1], [0], [0], [1], [0, 0, 1, 1], [], []>} : vector<64x16xf32>, vector<16x16xf32>, vector<64x16xf32> -> vector<64x16xf32>
    %227 = arith.addf %222, %226 : vector<64x16xf32>
    %228 = vector.extract_strided_slice %203 {offsets = [320, 0], sizes = [64, 16], strides = [1, 1]} : vector<576x16xf32> to vector<64x16xf32>
    %c5_163 = arith.constant 5 : index
    %c0_164 = arith.constant 0 : index
    %c0_165 = arith.constant 0 : index
    %229 = vector.load %arg11[%c5_163, %c0_164, %c0_165] : memref<9x16x16xf32, #tpu.memory_space<vmem>>, vector<1x16x16xf32>
    %230 = vector.shape_cast %229 : vector<1x16x16xf32> to vector<16x16xf32>
    %cst_166 = arith.constant dense<0.000000e+00> : vector<64x16xf32>
    %231 = tpu.matmul %228, %230, %cst_166 {dimension_numbers = #tpu.dot_dimension_numbers<[1], [0], [0], [1], [0, 0, 1, 1], [], []>} : vector<64x16xf32>, vector<16x16xf32>, vector<64x16xf32> -> vector<64x16xf32>
    %232 = arith.addf %227, %231 : vector<64x16xf32>
    %233 = vector.extract_strided_slice %203 {offsets = [384, 0], sizes = [64, 16], strides = [1, 1]} : vector<576x16xf32> to vector<64x16xf32>
    %c6_167 = arith.constant 6 : index
    %c0_168 = arith.constant 0 : index
    %c0_169 = arith.constant 0 : index
    %234 = vector.load %arg11[%c6_167, %c0_168, %c0_169] : memref<9x16x16xf32, #tpu.memory_space<vmem>>, vector<1x16x16xf32>
    %235 = vector.shape_cast %234 : vector<1x16x16xf32> to vector<16x16xf32>
    %cst_170 = arith.constant dense<0.000000e+00> : vector<64x16xf32>
    %236 = tpu.matmul %233, %235, %cst_170 {dimension_numbers = #tpu.dot_dimension_numbers<[1], [0], [0], [1], [0, 0, 1, 1], [], []>} : vector<64x16xf32>, vector<16x16xf32>, vector<64x16xf32> -> vector<64x16xf32>
    %237 = arith.addf %232, %236 : vector<64x16xf32>
    %238 = vector.extract_strided_slice %203 {offsets = [448, 0], sizes = [64, 16], strides = [1, 1]} : vector<576x16xf32> to vector<64x16xf32>
    %c7_171 = arith.constant 7 : index
    %c0_172 = arith.constant 0 : index
    %c0_173 = arith.constant 0 : index
    %239 = vector.load %arg11[%c7_171, %c0_172, %c0_173] : memref<9x16x16xf32, #tpu.memory_space<vmem>>, vector<1x16x16xf32>
    %240 = vector.shape_cast %239 : vector<1x16x16xf32> to vector<16x16xf32>
    %cst_174 = arith.constant dense<0.000000e+00> : vector<64x16xf32>
    %241 = tpu.matmul %238, %240, %cst_174 {dimension_numbers = #tpu.dot_dimension_numbers<[1], [0], [0], [1], [0, 0, 1, 1], [], []>} : vector<64x16xf32>, vector<16x16xf32>, vector<64x16xf32> -> vector<64x16xf32>
    %242 = arith.addf %237, %241 : vector<64x16xf32>
    %243 = vector.extract_strided_slice %203 {offsets = [512, 0], sizes = [64, 16], strides = [1, 1]} : vector<576x16xf32> to vector<64x16xf32>
    %c8_175 = arith.constant 8 : index
    %c0_176 = arith.constant 0 : index
    %c0_177 = arith.constant 0 : index
    %244 = vector.load %arg11[%c8_175, %c0_176, %c0_177] : memref<9x16x16xf32, #tpu.memory_space<vmem>>, vector<1x16x16xf32>
    %245 = vector.shape_cast %244 : vector<1x16x16xf32> to vector<16x16xf32>
    %cst_178 = arith.constant dense<0.000000e+00> : vector<64x16xf32>
    %246 = tpu.matmul %243, %245, %cst_178 {dimension_numbers = #tpu.dot_dimension_numbers<[1], [0], [0], [1], [0, 0, 1, 1], [], []>} : vector<64x16xf32>, vector<16x16xf32>, vector<64x16xf32> -> vector<64x16xf32>
    %247 = arith.addf %242, %246 : vector<64x16xf32>
    %c0_179 = arith.constant 0 : index
    %c0_180 = arith.constant 0 : index
    %248 = vector.load %arg12[%c0_179, %c0_180] : memref<1x16xf32, #tpu.memory_space<vmem>>, vector<1x16xf32>
    %249 = vector.broadcast %248 : vector<1x16xf32> to vector<64x16xf32>
    %250 = arith.addf %247, %249 : vector<64x16xf32>
    %cst_181 = arith.constant 0.000000e+00 : f32
    %251 = vector.broadcast %cst_181 : f32 to vector<64x16xf32>
    %252 = arith.maximumf %250, %251 : vector<64x16xf32>
    %253 = arith.addf %131, %252 : vector<64x16xf32>
    %c0_182 = arith.constant 0 : index
    %c0_183 = arith.constant 0 : index
    %254 = vector.load %arg15[%c0_182, %c0_183] : memref<16x8xf32, #tpu.memory_space<vmem>>, vector<16x8xf32>
    %cst_184 = arith.constant dense<0.000000e+00> : vector<64x8xf32>
    %255 = tpu.matmul %253, %254, %cst_184 {dimension_numbers = #tpu.dot_dimension_numbers<[1], [0], [0], [1], [0, 0, 1, 1], [], []>} : vector<64x16xf32>, vector<16x8xf32>, vector<64x8xf32> -> vector<64x8xf32>
    %c0_185 = arith.constant 0 : index
    %c0_186 = arith.constant 0 : index
    %256 = vector.load %arg16[%c0_185, %c0_186] : memref<1x8xf32, #tpu.memory_space<vmem>>, vector<1x8xf32>
    %257 = vector.broadcast %256 : vector<1x8xf32> to vector<64x8xf32>
    %258 = arith.addf %255, %257 : vector<64x8xf32>
    %c0_187 = arith.constant 0 : index
    %c0_188 = arith.constant 0 : index
    %259 = vector.load %arg17[%c0_187, %c0_188] : memref<64x4096xf32, #tpu.memory_space<vmem>>, vector<64x4096xf32>
    %cst_189 = arith.constant dense<0.000000e+00> : vector<8x4096xf32>
    %260 = tpu.matmul %258, %259, %cst_189 {dimension_numbers = #tpu.dot_dimension_numbers<[0], [0], [1], [1], [0, 1, 1, 1], [], []>} : vector<64x8xf32>, vector<64x4096xf32>, vector<8x4096xf32> -> vector<8x4096xf32>
    %c0_190 = arith.constant 0 : index
    %c0_191 = arith.constant 0 : index
    %c0_192 = arith.constant 0 : index
    %261 = vector.load %arg20[%c0_190, %c0_191, %c0_192] : memref<1x8x4096xf32, #tpu.memory_space<vmem>>, vector<1x8x4096xf32>
    %262 = vector.shape_cast %261 : vector<1x8x4096xf32> to vector<8x4096xf32>
    %263 = vector.shape_cast %260 : vector<8x4096xf32> to vector<1x8x4096xf32>
    tpu.vector_store %arg20[%c0_190, %c0_191, %c0_192], %263 {strides = array<i32>} : memref<1x8x4096xf32, #tpu.memory_space<vmem>>, vector<1x8x4096xf32>,
    return
  }
  func.func @transform_0(%arg0: i32) -> (i32, i32, i32) {
    %c0_i32 = arith.constant 0 : i32
    %c0_i32_0 = arith.constant 0 : i32
    %c0_i32_1 = arith.constant 0 : i32
    return %arg0, %c0_i32, %c0_i32_0 : i32, i32, i32
  }
  func.func @transform_1(%arg0: i32) -> (i32, i32) {
    %c0_i32 = arith.constant 0 : i32
    %c0_i32_0 = arith.constant 0 : i32
    %c0_i32_1 = arith.constant 0 : i32
    return %c0_i32, %c0_i32_0 : i32, i32
  }
  func.func @transform_2(%arg0: i32) -> (i32, i32) {
    %c0_i32 = arith.constant 0 : i32
    %c0_i32_0 = arith.constant 0 : i32
    %c0_i32_1 = arith.constant 0 : i32
    return %c0_i32, %c0_i32_0 : i32, i32
  }
  func.func @transform_3(%arg0: i32) -> (i32, i32) {
    %c0_i32 = arith.constant 0 : i32
    %c0_i32_0 = arith.constant 0 : i32
    %c0_i32_1 = arith.constant 0 : i32
    return %c0_i32, %c0_i32_0 : i32, i32
  }
  func.func @transform_4(%arg0: i32) -> (i32, i32, i32) {
    %c0_i32 = arith.constant 0 : i32
    %c0_i32_0 = arith.constant 0 : i32
    %c0_i32_1 = arith.constant 0 : i32
    %c0_i32_2 = arith.constant 0 : i32
    return %c0_i32, %c0_i32_0, %c0_i32_1 : i32, i32, i32
  }
  func.func @transform_5(%arg0: i32) -> (i32, i32) {
    %c0_i32 = arith.constant 0 : i32
    %c0_i32_0 = arith.constant 0 : i32
    %c0_i32_1 = arith.constant 0 : i32
    return %c0_i32, %c0_i32_0 : i32, i32
  }
  func.func @transform_6(%arg0: i32) -> (i32, i32, i32) {
    %c0_i32 = arith.constant 0 : i32
    %c0_i32_0 = arith.constant 0 : i32
    %c0_i32_1 = arith.constant 0 : i32
    %c0_i32_2 = arith.constant 0 : i32
    return %c0_i32, %c0_i32_0, %c0_i32_1 : i32, i32, i32
  }
  func.func @transform_7(%arg0: i32) -> (i32, i32) {
    %c0_i32 = arith.constant 0 : i32
    %c0_i32_0 = arith.constant 0 : i32
    %c0_i32_1 = arith.constant 0 : i32
    return %c0_i32, %c0_i32_0 : i32, i32
  }
  func.func @transform_8(%arg0: i32) -> (i32, i32, i32) {
    %c0_i32 = arith.constant 0 : i32
    %c0_i32_0 = arith.constant 0 : i32
    %c0_i32_1 = arith.constant 0 : i32
    %c0_i32_2 = arith.constant 0 : i32
    return %c0_i32, %c0_i32_0, %c0_i32_1 : i32, i32, i32
  }
  func.func @transform_9(%arg0: i32) -> (i32, i32) {
    %c0_i32 = arith.constant 0 : i32
    %c0_i32_0 = arith.constant 0 : i32
    %c0_i32_1 = arith.constant 0 : i32
    return %c0_i32, %c0_i32_0 : i32, i32
  }
  func.func @transform_10(%arg0: i32) -> (i32, i32, i32) {
    %c0_i32 = arith.constant 0 : i32
    %c0_i32_0 = arith.constant 0 : i32
    %c0_i32_1 = arith.constant 0 : i32
    %c0_i32_2 = arith.constant 0 : i32
    return %c0_i32, %c0_i32_0, %c0_i32_1 : i32, i32, i32
  }
  func.func @transform_11(%arg0: i32) -> (i32, i32) {
    %c0_i32 = arith.constant 0 : i32
    %c0_i32_0 = arith.constant 0 : i32
    %c0_i32_1 = arith.constant 0 : i32
    return %c0_i32, %c0_i32_0 : i32, i32
  }
  func.func @transform_12(%arg0: i32) -> (i32, i32) {
    %c0_i32 = arith.constant 0 : i32
    %c0_i32_0 = arith.constant 0 : i32
    %c0_i32_1 = arith.constant 0 : i32
    return %c0_i32, %c0_i32_0 : i32, i32
  }
  func.func @transform_13(%arg0: i32) -> (i32, i32) {
    %c0_i32 = arith.constant 0 : i32
    %c0_i32_0 = arith.constant 0 : i32
    %c0_i32_1 = arith.constant 0 : i32
    return %c0_i32, %c0_i32_0 : i32, i32
  }
  func.func @transform_14(%arg0: i32) -> (i32, i32) {
    %c0_i32 = arith.constant 0 : i32
    %c0_i32_0 = arith.constant 0 : i32
    %c0_i32_1 = arith.constant 0 : i32
    return %c0_i32, %c0_i32_0 : i32, i32
  }
  func.func @transform_15(%arg0: i32) -> (i32, i32) {
    %c0_i32 = arith.constant 0 : i32
    %c0_i32_0 = arith.constant 0 : i32
    %c0_i32_1 = arith.constant 0 : i32
    return %c0_i32, %c0_i32_0 : i32, i32
  }
  func.func @transform_16(%arg0: i32) -> (i32, i32) {
    %c0_i32 = arith.constant 0 : i32
    %c0_i32_0 = arith.constant 0 : i32
    %c0_i32_1 = arith.constant 0 : i32
    return %c0_i32, %c0_i32_0 : i32, i32
  }
  func.func @transform_17(%arg0: i32) -> i32 {
    %c0_i32 = arith.constant 0 : i32
    %c0_i32_0 = arith.constant 0 : i32
    return %c0_i32 : i32
  }
  func.func @transform_18(%arg0: i32) -> i32 {
    %c0_i32 = arith.constant 0 : i32
    %c0_i32_0 = arith.constant 0 : i32
    return %c0_i32 : i32
  }
  func.func @transform_19(%arg0: i32) -> (i32, i32, i32) {
    %c0_i32 = arith.constant 0 : i32
    %c0_i32_0 = arith.constant 0 : i32
    %c0_i32_1 = arith.constant 0 : i32
    return %arg0, %c0_i32, %c0_i32_0 : i32, i32, i32
  }
}

</mosaic_0001>

<llo_original>
// kernel: sedanet_forward.1
$region0: #{sedanet_forward.1}
  #allocation0 [shape = 'u32[]', space=smem, size = 0x4, offset = 0x4, fixed_abs, tag = 'smem constant byte address 0x4 - core index']
  #allocation1 [shape = 'u32[144,128]{1,0:T(1,128)}', space=vmem, size = 0x12000, scoped, tag = 'internal scratch']
  #allocation2 [shape = 'f32[1]{0:T(128)S(6)}', space=smem, size = 0x200, scoped, tag = 'scoped memory for sedanet_forward.1']
  #allocation3 [shape = 'f32[1]{0:T(128)S(6)}', space=smem, size = 0x200, scoped, tag = 'scoped memory for sedanet_forward.1']
  %s0 = inlined_call_operand.vmem [shape: f32[2,64,192], index: 0, kind: input, shape index: {}]
  %s1 = inlined_call_operand.vmem [shape: f32[576,64], index: 1, kind: input, shape index: {}]
  %s2 = inlined_call_operand.vmem [shape: f32[192,64], index: 2, kind: input, shape index: {}]
  %s3 = inlined_call_operand.vmem [shape: f32[1,64], index: 3, kind: input, shape index: {}]
  %s4 = inlined_call_operand.vmem [shape: f32[9,64,16], index: 4, kind: input, shape index: {}]
  %s5 = inlined_call_operand.vmem [shape: f32[1,16], index: 5, kind: input, shape index: {}]
  %s6 = inlined_call_operand.vmem [shape: f32[9,64,16], index: 6, kind: input, shape index: {}]
  %s7 = inlined_call_operand.vmem [shape: f32[1,16], index: 7, kind: input, shape index: {}]
  %s8 = inlined_call_operand.vmem [shape: f32[9,16,16], index: 8, kind: input, shape index: {}]
  %s9 = inlined_call_operand.vmem [shape: f32[1,16], index: 9, kind: input, shape index: {}]
  %s10 = inlined_call_operand.vmem [shape: f32[9,16,16], index: 10, kind: input, shape index: {}]
  %s11 = inlined_call_operand.vmem [shape: f32[1,16], index: 11, kind: input, shape index: {}]
  %s12 = inlined_call_operand.vmem [shape: f32[16,20], index: 12, kind: input, shape index: {}]
  %s13 = inlined_call_operand.vmem [shape: f32[1,20], index: 13, kind: input, shape index: {}]
  %s14 = inlined_call_operand.vmem [shape: f32[16,8], index: 14, kind: input, shape index: {}]
  %s15 = inlined_call_operand.vmem [shape: f32[1,8], index: 15, kind: input, shape index: {}]
  %s16 = inlined_call_operand.vmem [shape: f32[64,4096], index: 16, kind: input, shape index: {}]
  %s17 = inlined_call_operand.<no memory space> [shape: f32[1], index: 17, kind: input, shape index: {}]
  %s18 = inlined_call_operand.<no memory space> [shape: f32[1], index: 18, kind: input, shape index: {}]
  %s19 = inlined_call_operand.vmem [shape: f32[2,8,4096], index: 19, kind: output, shape index: {}]
  %s20 = sld [smem:[#allocation0]]
  $region109: #{sedanet_forward.1} parent=0
    _
  %s22 = ssub.s32 1, %s20
  %s23 = scalar_select 0, %s22, %s20
  %24 = sst [smem:[#allocation2]] %s17
  %25 = sst [smem:[#allocation3]] %s18
  loop: start=0, step=1, limit=4
  $region2: #{sedanet_forward.1} parent=0 // loop_pre_header
    _
  $region3: #{sedanet_forward.1} parent=0 // loop_header
    %s27 = sphi 0, %s31
    %p28 = scmp.ge.s32.totalorder %s27, 4
    %s37 = sphi 0, %s39
    %s40 = sphi 0, %s37
    %s41 = sphi 0, %s40
    %s57 = sphi 0, %s41
    %s61 = sphi 0, %s61
    %s63 = sphi 0, %s61
    %s64 = sphi 0, %s63
    %s78 = sphi 0, %s64
    %s82 = sphi 0, %s82
    %s84 = sphi 0, %s82
    %s85 = sphi 0, %s84
    %s99 = sphi 0, %s85
    %s103 = sphi 0, %s103
    %s105 = sphi 0, %s103
    %s106 = sphi 0, %s105
    %s120 = sphi 0, %s106
    %s124 = sphi 0, %s124
    %s126 = sphi 0, %s124
    %s127 = sphi 0, %s126
    %s141 = sphi 0, %s127
    %s145 = sphi 0, %s145
    %s147 = sphi 0, %s145
    %s148 = sphi 0, %s147
    %s162 = sphi 0, %s148
    %s166 = sphi 0, %s166
    %s168 = sphi 0, %s166
    %s169 = sphi 0, %s168
    %s183 = sphi 0, %s169
    %s187 = sphi 0, %s187
    %s189 = sphi 0, %s187
    %s190 = sphi 0, %s189
    %s204 = sphi 0, %s190
    %s208 = sphi 0, %s208
    %s210 = sphi 0, %s208
    %s211 = sphi 0, %s210
    %s225 = sphi 0, %s211
    %s229 = sphi 0, %s229
    %s231 = sphi 0, %s229
    %s232 = sphi 0, %s231
    %s246 = sphi 0, %s232
    %s250 = sphi 0, %s250
    %s252 = sphi 0, %s250
    %s253 = sphi 0, %s252
    %s267 = sphi 0, %s253
    %s271 = sphi 0, %s271
    %s273 = sphi 0, %s271
    %s274 = sphi 0, %s273
    %s288 = sphi 0, %s274
    %s292 = sphi 0, %s292
    %s294 = sphi 0, %s292
    %s295 = sphi 0, %s294
    %s309 = sphi 0, %s295
    %s313 = sphi 0, %s313
    %s315 = sphi 0, %s313
    %s316 = sphi 0, %s315
    %s330 = sphi 0, %s316
    %s334 = sphi 0, %s334
    %s336 = sphi 0, %s334
    %s337 = sphi 0, %s336
    %s351 = sphi 0, %s337
    %s355 = sphi 0, %s355
    %s357 = sphi 0, %s355
    %s358 = sphi 0, %s357
    %s372 = sphi 0, %s358
    %s376 = sphi 0, %s376
    %s378 = sphi 0, %s376
    %s379 = sphi 0, %s378
    %s393 = sphi 0, %s379
    %s397 = sphi 0, %s397
    %s399 = sphi 0, %s397
    %s400 = sphi 0, %s399
    %s414 = sphi 0, %s400
    %s418 = sphi 0, %s418
    %s420 = sphi 0, %s418
    %s421 = sphi 0, %s420
    %s435 = sphi 0, %s421
    %s441 = sphi 0, %s443
    %s444 = sphi 0, %s441
    %s445 = sphi 0, %s444
    %s461 = sphi 0, %s445
  $region4: #{sedanet_forward.1} parent=0 // loop_header_branch
    %30 = sbr.rel (%p28) target = $region8
  $region5: #{sedanet_forward.1} parent=0 // loop_body
    %s32 = ssub.s32 %s27, 1
    %s33 = ssub.s32 %s27, 2
    %s34 = sadd.s32 %s27, 1
    %s35 = ssub.s32 %s27, %s34
    %p36 = scmp.eq.s32.totalorder %s35, 0
    %s38 = sadd.s32 %s37, 1
    %s39 = scalar_select %p36, %s37, %s38
    %p42 = pneg %p36
    %p43 = scmp.eq.s32.totalorder %s27, 1
    %p44 = por %p42, %p43
    %p45 = scmp.ne.s32.totalorder %s37, %s40
    %p46 = scmp.eq.s32.totalorder %s27, 0
    %p47 = por %p45, %p46
    %p48 = scmp.ne.s32.totalorder %s37, %s40
    %p49 = scmp.eq.s32.totalorder %s32, 1
    %p50 = por %p48, %p49
    %p51 = scmp.ne.s32.totalorder %s40, %s41
    %p52 = scmp.eq.s32.totalorder %s32, 0
    %p53 = por %p51, %p52
    %p54 = scmp.ne.s32.totalorder %s40, %s41
    %p55 = scmp.eq.s32.totalorder %s33, 1
    %p56 = por %p54, %p55
    %p58 = scmp.ne.s32.totalorder %s41, %s57
    %p59 = scmp.eq.s32.totalorder %s33, 0
    %p60 = por %p58, %p59
    %s62 = sadd.s32 %s61, 1
    %p65 = scmp.eq.s32.totalorder %s27, 1
    %p66 = scmp.ne.s32.totalorder %s61, %s63
    %p67 = scmp.eq.s32.totalorder %s27, 0
    %p68 = por %p66, %p67
    %p69 = scmp.ne.s32.totalorder %s61, %s63
    %p70 = scmp.eq.s32.totalorder %s32, 1
    %p71 = por %p69, %p70
    %p72 = scmp.ne.s32.totalorder %s63, %s64
    %p73 = scmp.eq.s32.totalorder %s32, 0
    %p74 = por %p72, %p73
    %p75 = scmp.ne.s32.totalorder %s63, %s64
    %p76 = scmp.eq.s32.totalorder %s33, 1
    %p77 = por %p75, %p76
    %p79 = scmp.ne.s32.totalorder %s64, %s78
    %p80 = scmp.eq.s32.totalorder %s33, 0
    %p81 = por %p79, %p80
    %s83 = sadd.s32 %s82, 1
    %p86 = scmp.eq.s32.totalorder %s27, 1
    %p87 = scmp.ne.s32.totalorder %s82, %s84
    %p88 = scmp.eq.s32.totalorder %s27, 0
    %p89 = por %p87, %p88
    %p90 = scmp.ne.s32.totalorder %s82, %s84
    %p91 = scmp.eq.s32.totalorder %s32, 1
    %p92 = por %p90, %p91
    %p93 = scmp.ne.s32.totalorder %s84, %s85
    %p94 = scmp.eq.s32.totalorder %s32, 0
    %p95 = por %p93, %p94
    %p96 = scmp.ne.s32.totalorder %s84, %s85
    %p97 = scmp.eq.s32.totalorder %s33, 1
    %p98 = por %p96, %p97
    %p100 = scmp.ne.s32.totalorder %s85, %s99
    %p101 = scmp.eq.s32.totalorder %s33, 0
    %p102 = por %p100, %p101
    %s104 = sadd.s32 %s103, 1
    %p107 = scmp.eq.s32.totalorder %s27, 1
    %p108 = scmp.ne.s32.totalorder %s103, %s105
    %p109 = scmp.eq.s32.totalorder %s27, 0
    %p110 = por %p108, %p109
    %p111 = scmp.ne.s32.totalorder %s103, %s105
    %p112 = scmp.eq.s32.totalorder %s32, 1
    %p113 = por %p111, %p112
    %p114 = scmp.ne.s32.totalorder %s105, %s106
    %p115 = scmp.eq.s32.totalorder %s32, 0
    %p116 = por %p114, %p115
    %p117 = scmp.ne.s32.totalorder %s105, %s106
    %p118 = scmp.eq.s32.totalorder %s33, 1
    %p119 = por %p117, %p118
    %p121 = scmp.ne.s32.totalorder %s106, %s120
    %p122 = scmp.eq.s32.totalorder %s33, 0
    %p123 = por %p121, %p122
    %s125 = sadd.s32 %s124, 1
    %p128 = scmp.eq.s32.totalorder %s27, 1
    %p129 = scmp.ne.s32.totalorder %s124, %s126
    %p130 = scmp.eq.s32.totalorder %s27, 0
    %p131 = por %p129, %p130
    %p132 = scmp.ne.s32.totalorder %s124, %s126
    %p133 = scmp.eq.s32.totalorder %s32, 1
    %p134 = por %p132, %p133
    %p135 = scmp.ne.s32.totalorder %s126, %s127
    %p136 = scmp.eq.s32.totalorder %s32, 0
    %p137 = por %p135, %p136
    %p138 = scmp.ne.s32.totalorder %s126, %s127
    %p139 = scmp.eq.s32.totalorder %s33, 1
    %p140 = por %p138, %p139
    %p142 = scmp.ne.s32.totalorder %s127, %s141
    %p143 = scmp.eq.s32.totalorder %s33, 0
    %p144 = por %p142, %p143
    %s146 = sadd.s32 %s145, 1
    %p149 = scmp.eq.s32.totalorder %s27, 1
    %p150 = scmp.ne.s32.totalorder %s145, %s147
    %p151 = scmp.eq.s32.totalorder %s27, 0
    %p152 = por %p150, %p151
    %p153 = scmp.ne.s32.totalorder %s145, %s147
    %p154 = scmp.eq.s32.totalorder %s32, 1
    %p155 = por %p153, %p154
    %p156 = scmp.ne.s32.totalorder %s147, %s148
    %p157 = scmp.eq.s32.totalorder %s32, 0
    %p158 = por %p156, %p157
    %p159 = scmp.ne.s32.totalorder %s147, %s148
    %p160 = scmp.eq.s32.totalorder %s33, 1
    %p161 = por %p159, %p160
    %p163 = scmp.ne.s32.totalorder %s148, %s162
    %p164 = scmp.eq.s32.totalorder %s33, 0
    %p165 = por %p163, %p164
    %s167 = sadd.s32 %s166, 1
    %p170 = scmp.eq.s32.totalorder %s27, 1
    %p171 = scmp.ne.s32.totalorder %s166, %s168
    %p172 = scmp.eq.s32.totalorder %s27, 0
    %p173 = por %p171, %p172
    %p174 = scmp.ne.s32.totalorder %s166, %s168
    %p175 = scmp.eq.s32.totalorder %s32, 1
    %p176 = por %p174, %p175
    %p177 = scmp.ne.s32.totalorder %s168, %s169
    %p178 = scmp.eq.s32.totalorder %s32, 0
    %p179 = por %p177, %p178
    %p180 = scmp.ne.s32.totalorder %s168, %s169
    %p181 = scmp.eq.s32.totalorder %s33, 1
    %p182 = por %p180, %p181
    %p184 = scmp.ne.s32.totalorder %s169, %s183
    %p185 = scmp.eq.s32.totalorder %s33, 0
    %p186 = por %p184, %p185
    %s188 = sadd.s32 %s187, 1
    %p191 = scmp.eq.s32.totalorder %s27, 1
    %p192 = scmp.ne.s32.totalorder %s187, %s189
    %p193 = scmp.eq.s32.totalorder %s27, 0
    %p194 = por %p192, %p193
    %p195 = scmp.ne.s32.totalorder %s187, %s189
    %p196 = scmp.eq.s32.totalorder %s32, 1
    %p197 = por %p195, %p196
    %p198 = scmp.ne.s32.totalorder %s189, %s190
    %p199 = scmp.eq.s32.totalorder %s32, 0
    %p200 = por %p198, %p199
    %p201 = scmp.ne.s32.totalorder %s189, %s190
    %p202 = scmp.eq.s32.totalorder %s33, 1
    %p203 = por %p201, %p202
    %p205 = scmp.ne.s32.totalorder %s190, %s204
    %p206 = scmp.eq.s32.totalorder %s33, 0
    %p207 = por %p205, %p206
    %s209 = sadd.s32 %s208, 1
    %p212 = scmp.eq.s32.totalorder %s27, 1
    %p213 = scmp.ne.s32.totalorder %s208, %s210
    %p214 = scmp.eq.s32.totalorder %s27, 0
    %p215 = por %p213, %p214
    %p216 = scmp.ne.s32.totalorder %s208, %s210
    %p217 = scmp.eq.s32.totalorder %s32, 1
    %p218 = por %p216, %p217
    %p219 = scmp.ne.s32.totalorder %s210, %s211
    %p220 = scmp.eq.s32.totalorder %s32, 0
    %p221 = por %p219, %p220
    %p222 = scmp.ne.s32.totalorder %s210, %s211
    %p223 = scmp.eq.s32.totalorder %s33, 1
    %p224 = por %p222, %p223
    %p226 = scmp.ne.s32.totalorder %s211, %s225
    %p227 = scmp.eq.s32.totalorder %s33, 0
    %p228 = por %p226, %p227
    %s230 = sadd.s32 %s229, 1
    %p233 = scmp.eq.s32.totalorder %s27, 1
    %p234 = scmp.ne.s32.totalorder %s229, %s231
    %p235 = scmp.eq.s32.totalorder %s27, 0
    %p236 = por %p234, %p235
    %p237 = scmp.ne.s32.totalorder %s229, %s231
    %p238 = scmp.eq.s32.totalorder %s32, 1
    %p239 = por %p237, %p238
    %p240 = scmp.ne.s32.totalorder %s231, %s232
    %p241 = scmp.eq.s32.totalorder %s32, 0
    %p242 = por %p240, %p241
    %p243 = scmp.ne.s32.totalorder %s231, %s232
    %p244 = scmp.eq.s32.totalorder %s33, 1
    %p245 = por %p243, %p244
    %p247 = scmp.ne.s32.totalorder %s232, %s246
    %p248 = scmp.eq.s32.totalorder %s33, 0
    %p249 = por %p247, %p248
    %s251 = sadd.s32 %s250, 1
    %p254 = scmp.eq.s32.totalorder %s27, 1
    %p255 = scmp.ne.s32.totalorder %s250, %s252
    %p256 = scmp.eq.s32.totalorder %s27, 0
    %p257 = por %p255, %p256
    %p258 = scmp.ne.s32.totalorder %s250, %s252
    %p259 = scmp.eq.s32.totalorder %s32, 1
    %p260 = por %p258, %p259
    %p261 = scmp.ne.s32.totalorder %s252, %s253
    %p262 = scmp.eq.s32.totalorder %s32, 0
    %p263 = por %p261, %p262
    %p264 = scmp.ne.s32.totalorder %s252, %s253
    %p265 = scmp.eq.s32.totalorder %s33, 1
    %p266 = por %p264, %p265
    %p268 = scmp.ne.s32.totalorder %s253, %s267
    %p269 = scmp.eq.s32.totalorder %s33, 0
    %p270 = por %p268, %p269
    %s272 = sadd.s32 %s271, 1
    %p275 = scmp.eq.s32.totalorder %s27, 1
    %p276 = scmp.ne.s32.totalorder %s271, %s273
    %p277 = scmp.eq.s32.totalorder %s27, 0
    %p278 = por %p276, %p277
    %p279 = scmp.ne.s32.totalorder %s271, %s273
    %p280 = scmp.eq.s32.totalorder %s32, 1
    %p281 = por %p279, %p280
    %p282 = scmp.ne.s32.totalorder %s273, %s274
    %p283 = scmp.eq.s32.totalorder %s32, 0
    %p284 = por %p282, %p283
    %p285 = scmp.ne.s32.totalorder %s273, %s274
    %p286 = scmp.eq.s32.totalorder %s33, 1
    %p287 = por %p285, %p286
    %p289 = scmp.ne.s32.totalorder %s274, %s288
    %p290 = scmp.eq.s32.totalorder %s33, 0
    %p291 = por %p289, %p290
    %s293 = sadd.s32 %s292, 1
    %p296 = scmp.eq.s32.totalorder %s27, 1
    %p297 = scmp.ne.s32.totalorder %s292, %s294
    %p298 = scmp.eq.s32.totalorder %s27, 0
    %p299 = por %p297, %p298
    %p300 = scmp.ne.s32.totalorder %s292, %s294
    %p301 = scmp.eq.s32.totalorder %s32, 1
    %p302 = por %p300, %p301
    %p303 = scmp.ne.s32.totalorder %s294, %s295
    %p304 = scmp.eq.s32.totalorder %s32, 0
    %p305 = por %p303, %p304
    %p306 = scmp.ne.s32.totalorder %s294, %s295
    %p307 = scmp.eq.s32.totalorder %s33, 1
    %p308 = por %p306, %p307
    %p310 = scmp.ne.s32.totalorder %s295, %s309
    %p311 = scmp.eq.s32.totalorder %s33, 0
    %p312 = por %p310, %p311
    %s314 = sadd.s32 %s313, 1
    %p317 = scmp.eq.s32.totalorder %s27, 1
    %p318 = scmp.ne.s32.totalorder %s313, %s315
    %p319 = scmp.eq.s32.totalorder %s27, 0
    %p320 = por %p318, %p319
    %p321 = scmp.ne.s32.totalorder %s313, %s315
    %p322 = scmp.eq.s32.totalorder %s32, 1
    %p323 = por %p321, %p322
    %p324 = scmp.ne.s32.totalorder %s315, %s316
    %p325 = scmp.eq.s32.totalorder %s32, 0
    %p326 = por %p324, %p325
    %p327 = scmp.ne.s32.totalorder %s315, %s316
    %p328 = scmp.eq.s32.totalorder %s33, 1
    %p329 = por %p327, %p328
    %p331 = scmp.ne.s32.totalorder %s316, %s330
    %p332 = scmp.eq.s32.totalorder %s33, 0
    %p333 = por %p331, %p332
    %s335 = sadd.s32 %s334, 1
    %p338 = scmp.eq.s32.totalorder %s27, 1
    %p339 = scmp.ne.s32.totalorder %s334, %s336
    %p340 = scmp.eq.s32.totalorder %s27, 0
    %p341 = por %p339, %p340
    %p342 = scmp.ne.s32.totalorder %s334, %s336
    %p343 = scmp.eq.s32.totalorder %s32, 1
    %p344 = por %p342, %p343
    %p345 = scmp.ne.s32.totalorder %s336, %s337
    %p346 = scmp.eq.s32.totalorder %s32, 0
    %p347 = por %p345, %p346
    %p348 = scmp.ne.s32.totalorder %s336, %s337
    %p349 = scmp.eq.s32.totalorder %s33, 1
    %p350 = por %p348, %p349
    %p352 = scmp.ne.s32.totalorder %s337, %s351
    %p353 = scmp.eq.s32.totalorder %s33, 0
    %p354 = por %p352, %p353
    %s356 = sadd.s32 %s355, 1
    %p359 = scmp.eq.s32.totalorder %s27, 1
    %p360 = scmp.ne.s32.totalorder %s355, %s357
    %p361 = scmp.eq.s32.totalorder %s27, 0
    %p362 = por %p360, %p361
    %p363 = scmp.ne.s32.totalorder %s355, %s357
    %p364 = scmp.eq.s32.totalorder %s32, 1
    %p365 = por %p363, %p364
    %p366 = scmp.ne.s32.totalorder %s357, %s358
    %p367 = scmp.eq.s32.totalorder %s32, 0
    %p368 = por %p366, %p367
    %p369 = scmp.ne.s32.totalorder %s357, %s358
    %p370 = scmp.eq.s32.totalorder %s33, 1
    %p371 = por %p369, %p370
    %p373 = scmp.ne.s32.totalorder %s358, %s372
    %p374 = scmp.eq.s32.totalorder %s33, 0
    %p375 = por %p373, %p374
    %s377 = sadd.s32 %s376, 1
    %p380 = scmp.eq.s32.totalorder %s27, 1
    %p381 = scmp.ne.s32.totalorder %s376, %s378
    %p382 = scmp.eq.s32.totalorder %s27, 0
    %p383 = por %p381, %p382
    %p384 = scmp.ne.s32.totalorder %s376, %s378
    %p385 = scmp.eq.s32.totalorder %s32, 1
    %p386 = por %p384, %p385
    %p387 = scmp.ne.s32.totalorder %s378, %s379
    %p388 = scmp.eq.s32.totalorder %s32, 0
    %p389 = por %p387, %p388
    %p390 = scmp.ne.s32.totalorder %s378, %s379
    %p391 = scmp.eq.s32.totalorder %s33, 1
    %p392 = por %p390, %p391
    %p394 = scmp.ne.s32.totalorder %s379, %s393
    %p395 = scmp.eq.s32.totalorder %s33, 0
    %p396 = por %p394, %p395
    %s398 = sadd.s32 %s397, 1
    %p401 = scmp.eq.s32.totalorder %s27, 1
    %p402 = scmp.ne.s32.totalorder %s397, %s399
    %p403 = scmp.eq.s32.totalorder %s27, 0
    %p404 = por %p402, %p403
    %p405 = scmp.ne.s32.totalorder %s397, %s399
    %p406 = scmp.eq.s32.totalorder %s32, 1
    %p407 = por %p405, %p406
    %p408 = scmp.ne.s32.totalorder %s399, %s400
    %p409 = scmp.eq.s32.totalorder %s32, 0
    %p410 = por %p408, %p409
    %p411 = scmp.ne.s32.totalorder %s399, %s400
    %p412 = scmp.eq.s32.totalorder %s33, 1
    %p413 = por %p411, %p412
    %p415 = scmp.ne.s32.totalorder %s400, %s414
    %p416 = scmp.eq.s32.totalorder %s33, 0
    %p417 = por %p415, %p416
    %s419 = sadd.s32 %s418, 1
    %p422 = scmp.eq.s32.totalorder %s27, 1
    %p423 = scmp.ne.s32.totalorder %s418, %s420
    %p424 = scmp.eq.s32.totalorder %s27, 0
    %p425 = por %p423, %p424
    %p426 = scmp.ne.s32.totalorder %s418, %s420
    %p427 = scmp.eq.s32.totalorder %s32, 1
    %p428 = por %p426, %p427
    %p429 = scmp.ne.s32.totalorder %s420, %s421
    %p430 = scmp.eq.s32.totalorder %s32, 0
    %p431 = por %p429, %p430
    %p432 = scmp.ne.s32.totalorder %s420, %s421
    %p433 = scmp.eq.s32.totalorder %s33, 1
    %p434 = por %p432, %p433
    %p436 = scmp.ne.s32.totalorder %s421, %s435
    %p437 = scmp.eq.s32.totalorder %s33, 0
    %p438 = por %p436, %p437
    %s439 = ssub.s32 %s27, %s34
    %p440 = scmp.eq.s32.totalorder %s439, 0
    %s442 = sadd.s32 %s441, 1
    %s443 = scalar_select %p440, %s441, %s442
    %p446 = pneg %p440
    %p447 = scmp.eq.s32.totalorder %s27, 1
    %p448 = por %p446, %p447
    %p449 = scmp.ne.s32.totalorder %s441, %s444
    %p450 = scmp.eq.s32.totalorder %s27, 0
    %p451 = por %p449, %p450
    %p452 = scmp.ne.s32.totalorder %s441, %s444
    %p453 = scmp.eq.s32.totalorder %s32, 1
    %p454 = por %p452, %p453
    %p455 = scmp.ne.s32.totalorder %s444, %s445
    %p456 = scmp.eq.s32.totalorder %s32, 0
    %p457 = por %p455, %p456
    %p458 = scmp.ne.s32.totalorder %s444, %s445
    %p459 = scmp.eq.s32.totalorder %s33, 1
    %p460 = por %p458, %p459
    %p462 = scmp.ne.s32.totalorder %s445, %s461
    %p463 = scmp.eq.s32.totalorder %s33, 0
    %p464 = por %p462, %p463
    %p465 = scmp.le.s32.totalorder 1, %s27
    %p466 = scmp.lt.s32.totalorder %s27, 3
    %p467 = pnand %p465, %p466
    %p468 = pneg %p467
    // Predicated region
    $region9: #{sedanet_forward.1} parent=5 // pred_check
      _
    $region10: #{sedanet_forward.1} parent=5 // pred_check_branch
      %470 = sbr.rel (%p467) target = $region12
    $region11: #{sedanet_forward.1} parent=5 // pred_region
      %s471 = ssub.s32 %s27, 1
      // Predicated region
      $region13: #{sedanet_forward.1} parent=11 // pred_check
        %p472 = pneg %p74
      $region14: #{sedanet_forward.1} parent=11 // pred_check_branch
        %474 = sbr.rel (%p472) target = $region16
      $region15: #{sedanet_forward.1} parent=11 // pred_region
        _
      $region16: #{sedanet_forward.1} parent=11 // pred_fallthru
        _
      // Predicated region
      $region17: #{sedanet_forward.1} parent=11 // pred_check
        %p475 = pneg %p95
      $region18: #{sedanet_forward.1} parent=11 // pred_check_branch
        %477 = sbr.rel (%p475) target = $region20
      $region19: #{sedanet_forward.1} parent=11 // pred_region
        _
      $region20: #{sedanet_forward.1} parent=11 // pred_fallthru
        _
      // Predicated region
      $region21: #{sedanet_forward.1} parent=11 // pred_check
        %p478 = pneg %p116
      $region22: #{sedanet_forward.1} parent=11 // pred_check_branch
        %480 = sbr.rel (%p478) target = $region24
      $region23: #{sedanet_forward.1} parent=11 // pred_region
        _
      $region24: #{sedanet_forward.1} parent=11 // pred_fallthru
        _
      // Predicated region
      $region25: #{sedanet_forward.1} parent=11 // pred_check
        %p481 = pneg %p137
      $region26: #{sedanet_forward.1} parent=11 // pred_check_branch
        %483 = sbr.rel (%p481) target = $region28
      $region27: #{sedanet_forward.1} parent=11 // pred_region
        _
      $region28: #{sedanet_forward.1} parent=11 // pred_fallthru
        _
      // Predicated region
      $region29: #{sedanet_forward.1} parent=11 // pred_check
        %p484 = pneg %p158
      $region30: #{sedanet_forward.1} parent=11 // pred_check_branch
        %486 = sbr.rel (%p484) target = $region32
      $region31: #{sedanet_forward.1} parent=11 // pred_region
        _
      $region32: #{sedanet_forward.1} parent=11 // pred_fallthru
        _
      // Predicated region
      $region33: #{sedanet_forward.1} parent=11 // pred_check
        %p487 = pneg %p179
      $region34: #{sedanet_forward.1} parent=11 // pred_check_branch
        %489 = sbr.rel (%p487) target = $region36
      $region35: #{sedanet_forward.1} parent=11 // pred_region
        _
      $region36: #{sedanet_forward.1} parent=11 // pred_fallthru
        _
      // Predicated region
      $region37: #{sedanet_forward.1} parent=11 // pred_check
        %p490 = pneg %p200
      $region38: #{sedanet_forward.1} parent=11 // pred_check_branch
        %492 = sbr.rel (%p490) target = $region40
      $region39: #{sedanet_forward.1} parent=11 // pred_region
        _
      $region40: #{sedanet_forward.1} parent=11 // pred_fallthru
        _
      // Predicated region
      $region41: #{sedanet_forward.1} parent=11 // pred_check
        %p493 = pneg %p221
      $region42: #{sedanet_forward.1} parent=11 // pred_check_branch
        %495 = sbr.rel (%p493) target = $region44
      $region43: #{sedanet_forward.1} parent=11 // pred_region
        _
      $region44: #{sedanet_forward.1} parent=11 // pred_fallthru
        _
      // Predicated region
      $region45: #{sedanet_forward.1} parent=11 // pred_check
        %p496 = pneg %p242
      $region46: #{sedanet_forward.1} parent=11 // pred_check_branch
        %498 = sbr.rel (%p496) target = $region48
      $region47: #{sedanet_forward.1} parent=11 // pred_region
        _
      $region48: #{sedanet_forward.1} parent=11 // pred_fallthru
        _
      // Predicated region
      $region49: #{sedanet_forward.1} parent=11 // pred_check
        %p499 = pneg %p263
      $region50: #{sedanet_forward.1} parent=11 // pred_check_branch
        %501 = sbr.rel (%p499) target = $region52
      $region51: #{sedanet_forward.1} parent=11 // pred_region
        _
      $region52: #{sedanet_forward.1} parent=11 // pred_fallthru
        _
      // Predicated region
      $region53: #{sedanet_forward.1} parent=11 // pred_check
        %p502 = pneg %p284
      $region54: #{sedanet_forward.1} parent=11 // pred_check_branch
        %504 = sbr.rel (%p502) target = $region56
      $region55: #{sedanet_forward.1} parent=11 // pred_region
        _
      $region56: #{sedanet_forward.1} parent=11 // pred_fallthru
        _
      // Predicated region
      $region57: #{sedanet_forward.1} parent=11 // pred_check
        %p505 = pneg %p305
      $region58: #{sedanet_forward.1} parent=11 // pred_check_branch
        %507 = sbr.rel (%p505) target = $region60
      $region59: #{sedanet_forward.1} parent=11 // pred_region
        _
      $region60: #{sedanet_forward.1} parent=11 // pred_fallthru
        _
      // Predicated region
      $region61: #{sedanet_forward.1} parent=11 // pred_check
        %p508 = pneg %p326
      $region62: #{sedanet_forward.1} parent=11 // pred_check_branch
        %510 = sbr.rel (%p508) target = $region64
      $region63: #{sedanet_forward.1} parent=11 // pred_region
        _
      $region64: #{sedanet_forward.1} parent=11 // pred_fallthru
        _
      // Predicated region
      $region65: #{sedanet_forward.1} parent=11 // pred_check
        %p511 = pneg %p347
      $region66: #{sedanet_forward.1} parent=11 // pred_check_branch
        %513 = sbr.rel (%p511) target = $region68
      $region67: #{sedanet_forward.1} parent=11 // pred_region
        _
      $region68: #{sedanet_forward.1} parent=11 // pred_fallthru
        _
      // Predicated region
      $region69: #{sedanet_forward.1} parent=11 // pred_check
        %p514 = pneg %p368
      $region70: #{sedanet_forward.1} parent=11 // pred_check_branch
        %516 = sbr.rel (%p514) target = $region72
      $region71: #{sedanet_forward.1} parent=11 // pred_region
        _
      $region72: #{sedanet_forward.1} parent=11 // pred_fallthru
        _
      // Predicated region
      $region73: #{sedanet_forward.1} parent=11 // pred_check
        %p517 = pneg %p389
      $region74: #{sedanet_forward.1} parent=11 // pred_check_branch
        %519 = sbr.rel (%p517) target = $region76
      $region75: #{sedanet_forward.1} parent=11 // pred_region
        _
      $region76: #{sedanet_forward.1} parent=11 // pred_fallthru
        _
      // Predicated region
      $region77: #{sedanet_forward.1} parent=11 // pred_check
        %p520 = pneg %p410
      $region78: #{sedanet_forward.1} parent=11 // pred_check_branch
        %522 = sbr.rel (%p520) target = $region80
      $region79: #{sedanet_forward.1} parent=11 // pred_region
        _
      $region80: #{sedanet_forward.1} parent=11 // pred_fallthru
        _
      // Predicated region
      $region81: #{sedanet_forward.1} parent=11 // pred_check
        %p523 = pneg %p431
      $region82: #{sedanet_forward.1} parent=11 // pred_check_branch
        %525 = sbr.rel (%p523) target = $region84
      $region83: #{sedanet_forward.1} parent=11 // pred_region
        _
      $region84: #{sedanet_forward.1} parent=11 // pred_fallthru
        _
    $region12: #{sedanet_forward.1} parent=5 // pred_fallthru
      _
    %p526 = scmp.lt.s32.totalorder %s27, 2
    // Predicated region
    $region85: #{sedanet_forward.1} parent=5 // pred_check
      %p527 = pneg %p526
    $region86: #{sedanet_forward.1} parent=5 // pred_check_branch
      %529 = sbr.rel (%p527) target = $region88
    $region87: #{sedanet_forward.1} parent=5 // pred_region
      // Predicated region
      $region89: #{sedanet_forward.1} parent=87 // pred_check
        %p530 = pneg %p47
      $region90: #{sedanet_forward.1} parent=87 // pred_check_branch
        %532 = sbr.rel (%p530) target = $region92
      $region91: #{sedanet_forward.1} parent=87 // pred_region
        %p533 = scmp.lt.s32.totalorder %s27, 1
        %s534 = scalar_select %p533, %s27, 1
        %s535 = smul.addr %s534, 16
        %s536 = smul.addr %s535, 8
        %s537 = scalar_lea.vmem %s0, %s536
      $region92: #{sedanet_forward.1} parent=87 // pred_fallthru
        _
    $region88: #{sedanet_forward.1} parent=5 // pred_fallthru
      _
    %p538 = scmp.le.s32.totalorder 1, %s27
    %p539 = scmp.lt.s32.totalorder %s27, 3
    %p540 = pnand %p538, %p539
    %p541 = pneg %p540
    // Predicated region
    $region93: #{sedanet_forward.1} parent=5 // pred_check
      _
    $region94: #{sedanet_forward.1} parent=5 // pred_check_branch
      %543 = sbr.rel (%p540) target = $region96
    $region95: #{sedanet_forward.1} parent=5 // pred_region
      %s544 = ssub.s32 %s27, 1
      %p545 = scmp.lt.s32.totalorder %s32, 1
      %s546 = scalar_select %p545, %s32, 1
      %s547 = smul.addr %s546, 16
      %s548 = smul.addr %s547, 8
      %s549 = scalar_lea.vmem %s0, %s548
      %p550 = pneg %p53
      %p551 = pneg %p50
      %p552 = pneg %p74
      %p553 = pneg %p71
      %p554 = pneg %p95
      %p555 = pneg %p92
      %p556 = pneg %p116
      %p557 = pneg %p113
      %p558 = pneg %p137
      %p559 = pneg %p134
      %p560 = pneg %p158
      %p561 = pneg %p155
      %p562 = pneg %p179
      %p563 = pneg %p176
      %p564 = pneg %p200
      %p565 = pneg %p197
      %p566 = pneg %p221
      %p567 = pneg %p218
      %p568 = pneg %p242
      %p569 = pneg %p239
      %p570 = pneg %p263
      %p571 = pneg %p260
      %p572 = pneg %p284
      %p573 = pneg %p281
      %p574 = pneg %p305
      %p575 = pneg %p302
      %p576 = pneg %p326
      %p577 = pneg %p323
      %p578 = pneg %p347
      %p579 = pneg %p344
      %p580 = pneg %p368
      %p581 = pneg %p365
      %p582 = pneg %p389
      %p583 = pneg %p386
      %p584 = pneg %p410
      %p585 = pneg %p407
      %p586 = pneg %p431
      %p587 = pneg %p428
      %p588 = pneg %p457
      %p589 = pneg %p454
      %p590 = scmp.lt.s32.totalorder %s32, 1
      %s591 = scalar_select %p590, %s32, 1
      %s592 = smul.addr %s591, 32
      %s593 = smul.addr %s592, 8
      %s594 = scalar_lea.vmem %s19, %s593
      %p595 = scmp.lt.s32.totalorder %s32, 1
      %s596 = scalar_select %p595, %s32, 1
      %s597 = smul.addr %s596, 16
      %s598 = smul.addr %s597, 8
      %s599 = scalar_lea.vmem %s0, %s598
      %p600 = scmp.lt.s32.totalorder %s32, 1
      %s601 = scalar_select %p600, %s32, 1
      %s602 = smul.addr %s601, 32
      %s603 = smul.addr %s602, 8
      %s604 = scalar_lea.vmem %s19, %s603
      %v605 = vld [vmem:[%s599] sm:$0xff]
      %v606 = vld [vmem:[%s599 + $0x8] sm:$0xff]
      %v607 = vld [vmem:[%s599 + $0x10] sm:$0xff]
      %v608 = vld [vmem:[%s599 + $0x18] sm:$0xff]
      %v609 = vld [vmem:[%s599 + $0x20] sm:$0xff]
      %v610 = vld [vmem:[%s599 + $0x28] sm:$0xff]
      %v611 = vld [vmem:[%s599 + $0x30] sm:$0xff]
      %v612 = vld [vmem:[%s599 + $0x38] sm:$0xff]
      %v613 = vld [vmem:[%s599 + $0x40] sm:$0xff]
      %v614 = vld [vmem:[%s599 + $0x48] sm:$0xff]
      %v615 = vld [vmem:[%s599 + $0x50] sm:$0xff]
      %v616 = vld [vmem:[%s599 + $0x58] sm:$0xff]
      %v617 = vld [vmem:[%s599 + $0x60] sm:$0xff]
      %v618 = vld [vmem:[%s599 + $0x68] sm:$0xff]
      %v619 = vld [vmem:[%s599 + $0x70] sm:$0xff]
      %v620 = vld [vmem:[%s599 + $0x78] sm:$0xff]
      %v621 = vld [vmem:[%s2] sm:$0xff]
      %v622 = vld [vmem:[%s2 + $0x8] sm:$0xff]
      %v623 = vld [vmem:[%s2 + $0x10] sm:$0xff]
      %v624 = vld [vmem:[%s2 + $0x18] sm:$0xff]
      %v625 = vld [vmem:[%s2 + $0x20] sm:$0xff]
      %v626 = vld [vmem:[%s2 + $0x28] sm:$0xff]
      %v627 = vld [vmem:[%s2 + $0x30] sm:$0xff]
      %v628 = vld [vmem:[%s2 + $0x38] sm:$0xff]
      %v629 = vld [vmem:[%s2 + $0x40] sm:$0xff]
      %v630 = vld [vmem:[%s2 + $0x48] sm:$0xff]
      %v631 = vld [vmem:[%s2 + $0x50] sm:$0xff]
      %v632 = vld [vmem:[%s2 + $0x58] sm:$0xff]
      %v633 = vld [vmem:[%s2 + $0x60] sm:$0xff]
      %v634 = vld [vmem:[%s2 + $0x68] sm:$0xff]
      %v635 = vld [vmem:[%s2 + $0x70] sm:$0xff]
      %v636 = vld [vmem:[%s2 + $0x78] sm:$0xff]
      %v637 = vld [vmem:[%s2 + $0x80] sm:$0xff]
      %v638 = vld [vmem:[%s2 + $0x88] sm:$0xff]
      %v639 = vld [vmem:[%s2 + $0x90] sm:$0xff]
      %v640 = vld [vmem:[%s2 + $0x98] sm:$0xff]
      %v641 = vld [vmem:[%s2 + $0xa0] sm:$0xff]
      %v642 = vld [vmem:[%s2 + $0xa8] sm:$0xff]
      %v643 = vld [vmem:[%s2 + $0xb0] sm:$0xff]
      %v644 = vld [vmem:[%s2 + $0xb8] sm:$0xff]
      %v645 = vld [vmem:[%s3] sm:$0x1]
      %v647 = vlaneseq
      %v648 = vshrl.u32 %v647, 7
      %v649 = vsub.s32 0, %v648
      %v650 = vrot.slane %v645, %v649
      %vm652 = vcmask 523264
      %v654 = vsel %vm652, %v606, 0
      %v657 = vsel %vm652, %v608, 0
      %v660 = vsel %vm652, %v610, 0
      %v663 = vsel %vm652, %v612, 0
      %v666 = vsel %vm652, %v614, 0
      %v669 = vsel %vm652, %v616, 0
      %v672 = vsel %vm652, %v618, 0
      %v675 = vsel %vm652, %v620, 0
      %677 = vmatprep.subr.mxu0 0.0
      %678 = vmatpush1.msra.mxu0 %v621
      %679 = vmatprep.subr.mxu0 0.0
      %680 = vmatpush1.msra.mxu0 %v622
      %681 = vmatprep.subr.mxu0 0.0
      %682 = vmatpush1.msra.mxu0 %v623
      %683 = vmatprep.subr.mxu0 0.0
      %684 = vmatpush1.msra.mxu0 %v624
      %685 = vmatprep.subr.mxu0 0.0
      %686 = vmatpush1.msra.mxu0 %v625
      %687 = vmatprep.subr.mxu0 0.0
      %688 = vmatpush1.msra.mxu0 %v626
      %689 = vmatprep.subr.mxu0 0.0
      %690 = vmatpush1.msra.mxu0 %v627
      %691 = vmatprep.subr.mxu0 0.0
      %692 = vmatpush1.msra.mxu0 %v628
      %693 = vmatprep.subr.mxu0 0.0
      %694 = vmatpush1.msra.mxu0 %v629
      %695 = vmatprep.subr.mxu0 0.0
      %696 = vmatpush1.msra.mxu0 %v630
      %697 = vmatprep.subr.mxu0 0.0
      %698 = vmatpush1.msra.mxu0 %v631
      %699 = vmatprep.subr.mxu0 0.0
      %700 = vmatpush1.msra.mxu0 %v632
      %701 = vmatprep.subr.mxu0 0.0
      %702 = vmatpush1.msra.mxu0 %v633
      %703 = vmatprep.subr.mxu0 0.0
      %704 = vmatpush1.msra.mxu0 %v634
      %705 = vmatprep.subr.mxu0 0.0
      %706 = vmatpush1.msra.mxu0 %v635
      %707 = vmatprep.subr.mxu0 0.0
      %708 = vmatpush1.msra.mxu0 %v636
      %709 = vmatprep.subr.mxu0 0.0
      %710 = vmatpush1.msra.mxu0 %v637
      %711 = vmatprep.subr.mxu0 0.0
      %712 = vmatpush1.msra.mxu0 %v638
      %713 = vmatprep.subr.mxu0 0.0
      %714 = vmatpush1.msra.mxu0 %v639
      %715 = vmatprep.subr.mxu0 0.0
      %716 = vmatpush1.msra.mxu0 %v640
      %717 = vmatprep.subr.mxu0 0.0
      %718 = vmatpush1.msra.mxu0 %v641
      %719 = vmatprep.subr.mxu0 0.0
      %720 = vmatpush1.msra.mxu0 %v642
      %721 = vmatprep.subr.mxu0 0.0
      %722 = vmatpush1.msra.mxu0 %v643
      %723 = vmatprep.subr.mxu0 0.0
      %724 = vmatpush1.msra.mxu0 %v644
      %725 = vmatprep.subr.mxu0 0.0
      %726 = vmatpush1.msra.mxu0 0.0
      %727 = vmatprep.subr.mxu0 0.0
      %728 = vmatpush1.msra.mxu0 0.0
      %729 = vmatprep.subr.mxu0 0.0
      %730 = vmatpush1.msra.mxu0 0.0
      %731 = vmatprep.subr.mxu0 0.0
      %732 = vmatpush1.msra.mxu0 0.0
      %733 = vmatprep.subr.mxu0 0.0
      %734 = vmatpush1.msra.mxu0 0.0
      %735 = vmatprep.subr.mxu0 0.0
      %736 = vmatpush1.msra.mxu0 0.0
      %737 = vmatprep.subr.mxu0 0.0
      %738 = vmatpush1.msra.mxu0 0.0
      %739 = vmatprep.subr.mxu0 0.0
      %740 = vmatpush1.msra.mxu0 0.0
      %741 = vmatprep.mubr.f32.mxu0 %v654
      %742 = vmatmul.mubr.f32.gmra.mrb[0].mxu0 %v605
      %v743 = vpop.f32.mrb[0].mxu0
      %v744 = vadd.f32 %v650, %v743
      %v745 = vpop.f32.mrb[0].mxu0
      %746 = vmatprep.mubr.f32.mxu0 %v657
      %747 = vmatmul.mubr.f32.gmra.mrb[0].mxu0 %v607
      %v748 = vpop.f32.mrb[0].mxu0
      %v749 = vadd.f32 %v650, %v748
      %v750 = vpop.f32.mrb[0].mxu0
      %751 = vmatprep.mubr.f32.mxu0 %v660
      %752 = vmatmul.mubr.f32.gmra.mrb[0].mxu0 %v609
      %v753 = vpop.f32.mrb[0].mxu0
      %v754 = vadd.f32 %v650, %v753
      %v755 = vpop.f32.mrb[0].mxu0
      %756 = vmatprep.mubr.f32.mxu0 %v663
      %757 = vmatmul.mubr.f32.gmra.mrb[0].mxu0 %v611
      %v758 = vpop.f32.mrb[0].mxu0
      %v759 = vadd.f32 %v650, %v758
      %v760 = vpop.f32.mrb[0].mxu0
      %761 = vmatprep.mubr.f32.mxu0 %v666
      %762 = vmatmul.mubr.f32.gmra.mrb[0].mxu0 %v613
      %v763 = vpop.f32.mrb[0].mxu0
      %v764 = vadd.f32 %v650, %v763
      %v765 = vpop.f32.mrb[0].mxu0
      %766 = vmatprep.mubr.f32.mxu0 %v669
      %767 = vmatmul.mubr.f32.gmra.mrb[0].mxu0 %v615
      %v768 = vpop.f32.mrb[0].mxu0
      %v769 = vadd.f32 %v650, %v768
      %v770 = vpop.f32.mrb[0].mxu0
      %771 = vmatprep.mubr.f32.mxu0 %v672
      %772 = vmatmul.mubr.f32.gmra.mrb[0].mxu0 %v617
      %v773 = vpop.f32.mrb[0].mxu0
      %v774 = vadd.f32 %v650, %v773
      %v775 = vpop.f32.mrb[0].mxu0
      %776 = vmatprep.mubr.f32.mxu0 %v675
      %777 = vmatmul.mubr.f32.gmra.mrb[0].mxu0 %v619
      %v778 = vpop.f32.mrb[0].mxu0
      %v779 = vadd.f32 %v650, %v778
      %v780 = vpop.f32.mrb[0].mxu0
      %781 = vdwg.mxu0
      %v782 = vld [vmem:[%s1] sm:$0xff]
      %v783 = vld [vmem:[%s1 + $0x8] sm:$0xff]
      %v784 = vld [vmem:[%s1 + $0x10] sm:$0xff]
      %v785 = vld [vmem:[%s1 + $0x18] sm:$0xff]
      %v786 = vld [vmem:[%s1 + $0x20] sm:$0xff]
      %v787 = vld [vmem:[%s1 + $0x28] sm:$0xff]
      %v788 = vld [vmem:[%s1 + $0x30] sm:$0xff]
      %v789 = vld [vmem:[%s1 + $0x38] sm:$0xff]
      %v790 = vld [vmem:[%s1 + $0x40] sm:$0xff]
      %v791 = vld [vmem:[%s1 + $0x48] sm:$0xff]
      %v792 = vld [vmem:[%s1 + $0x50] sm:$0xff]
      %v793 = vld [vmem:[%s1 + $0x58] sm:$0xff]
      %v794 = vld [vmem:[%s1 + $0x60] sm:$0xff]
      %v795 = vld [vmem:[%s1 + $0x68] sm:$0xff]
      %v796 = vld [vmem:[%s1 + $0x70] sm:$0xff]
      %v797 = vld [vmem:[%s1 + $0x78] sm:$0xff]
      %v798 = vld [vmem:[%s1 + $0x80] sm:$0xff]
      %v799 = vld [vmem:[%s1 + $0x88] sm:$0xff]
      %v800 = vld [vmem:[%s1 + $0x90] sm:$0xff]
      %v801 = vld [vmem:[%s1 + $0x98] sm:$0xff]
      %v802 = vld [vmem:[%s1 + $0xa0] sm:$0xff]
      %v803 = vld [vmem:[%s1 + $0xa8] sm:$0xff]
      %v804 = vld [vmem:[%s1 + $0xb0] sm:$0xff]
      %v805 = vld [vmem:[%s1 + $0xb8] sm:$0xff]
      %v806 = vld [vmem:[%s1 + $0xc0] sm:$0xff]
      %v807 = vld [vmem:[%s1 + $0xc8] sm:$0xff]
      %v808 = vld [vmem:[%s1 + $0xd0] sm:$0xff]
      %v809 = vld [vmem:[%s1 + $0xd8] sm:$0xff]
      %v810 = vld [vmem:[%s1 + $0xe0] sm:$0xff]
      %v811 = vld [vmem:[%s1 + $0xe8] sm:$0xff]
      %v812 = vld [vmem:[%s1 + $0xf0] sm:$0xff]
      %v813 = vld [vmem:[%s1 + $0xf8] sm:$0xff]
      %v814 = vld [vmem:[%s1 + $0x100] sm:$0xff]
      %v815 = vld [vmem:[%s1 + $0x108] sm:$0xff]
      %v816 = vld [vmem:[%s1 + $0x110] sm:$0xff]
      %v817 = vld [vmem:[%s1 + $0x118] sm:$0xff]
      %v818 = vld [vmem:[%s1 + $0x120] sm:$0xff]
      %v819 = vld [vmem:[%s1 + $0x128] sm:$0xff]
      %v820 = vld [vmem:[%s1 + $0x130] sm:$0xff]
      %v821 = vld [vmem:[%s1 + $0x138] sm:$0xff]
      %v822 = vld [vmem:[%s1 + $0x140] sm:$0xff]
      %v823 = vld [vmem:[%s1 + $0x148] sm:$0xff]
      %v824 = vld [vmem:[%s1 + $0x150] sm:$0xff]
      %v825 = vld [vmem:[%s1 + $0x158] sm:$0xff]
      %v826 = vld [vmem:[%s1 + $0x160] sm:$0xff]
      %v827 = vld [vmem:[%s1 + $0x168] sm:$0xff]
      %v828 = vld [vmem:[%s1 + $0x170] sm:$0xff]
      %v829 = vld [vmem:[%s1 + $0x178] sm:$0xff]
      %v830 = vld [vmem:[%s1 + $0x180] sm:$0xff]
      %v831 = vld [vmem:[%s1 + $0x188] sm:$0xff]
      %v832 = vld [vmem:[%s1 + $0x190] sm:$0xff]
      %v833 = vld [vmem:[%s1 + $0x198] sm:$0xff]
      %v834 = vld [vmem:[%s1 + $0x1a0] sm:$0xff]
      %v835 = vld [vmem:[%s1 + $0x1a8] sm:$0xff]
      %v836 = vld [vmem:[%s1 + $0x1b0] sm:$0xff]
      %v837 = vld [vmem:[%s1 + $0x1b8] sm:$0xff]
      %v838 = vld [vmem:[%s1 + $0x1c0] sm:$0xff]
      %v839 = vld [vmem:[%s1 + $0x1c8] sm:$0xff]
      %v840 = vld [vmem:[%s1 + $0x1d0] sm:$0xff]
      %v841 = vld [vmem:[%s1 + $0x1d8] sm:$0xff]
      %v842 = vld [vmem:[%s1 + $0x1e0] sm:$0xff]
      %v843 = vld [vmem:[%s1 + $0x1e8] sm:$0xff]
      %v844 = vld [vmem:[%s1 + $0x1f0] sm:$0xff]
      %v845 = vld [vmem:[%s1 + $0x1f8] sm:$0xff]
      %v846 = vld [vmem:[%s1 + $0x200] sm:$0xff]
      %v847 = vld [vmem:[%s1 + $0x208] sm:$0xff]
      %v848 = vld [vmem:[%s1 + $0x210] sm:$0xff]
      %v849 = vld [vmem:[%s1 + $0x218] sm:$0xff]
      %v850 = vld [vmem:[%s1 + $0x220] sm:$0xff]
      %v851 = vld [vmem:[%s1 + $0x228] sm:$0xff]
      %v852 = vld [vmem:[%s1 + $0x230] sm:$0xff]
      %v853 = vld [vmem:[%s1 + $0x238] sm:$0xff]
      %v855 = vsel %vm652, %v782, 0
      %v858 = vsel %vm652, %v783, 0
      %v861 = vsel %vm652, %v784, 0
      %v864 = vsel %vm652, %v785, 0
      %v867 = vsel %vm652, %v786, 0
      %v870 = vsel %vm652, %v787, 0
      %v873 = vsel %vm652, %v788, 0
      %v876 = vsel %vm652, %v789, 0
      %v879 = vsel %vm652, %v790, 0
      %v882 = vsel %vm652, %v791, 0
      %v885 = vsel %vm652, %v792, 0
      %v888 = vsel %vm652, %v793, 0
      %v891 = vsel %vm652, %v794, 0
      %v894 = vsel %vm652, %v795, 0
      %v897 = vsel %vm652, %v796, 0
      %v900 = vsel %vm652, %v797, 0
      %v903 = vsel %vm652, %v798, 0
      %v906 = vsel %vm652, %v799, 0
      %v909 = vsel %vm652, %v800, 0
      %v912 = vsel %vm652, %v801, 0
      %v915 = vsel %vm652, %v802, 0
      %v918 = vsel %vm652, %v803, 0
      %v921 = vsel %vm652, %v804, 0
      %v924 = vsel %vm652, %v805, 0
      %v927 = vsel %vm652, %v806, 0
      %v930 = vsel %vm652, %v807, 0
      %v933 = vsel %vm652, %v808, 0
      %v936 = vsel %vm652, %v809, 0
      %v939 = vsel %vm652, %v810, 0
      %v942 = vsel %vm652, %v811, 0
      %v945 = vsel %vm652, %v812, 0
      %v948 = vsel %vm652, %v813, 0
      %v951 = vsel %vm652, %v814, 0
      %v954 = vsel %vm652, %v815, 0
      %v957 = vsel %vm652, %v816, 0
      %v960 = vsel %vm652, %v817, 0
      %v963 = vsel %vm652, %v818, 0
      %v966 = vsel %vm652, %v819, 0
      %v969 = vsel %vm652, %v820, 0
      %v972 = vsel %vm652, %v821, 0
      %v975 = vsel %vm652, %v822, 0
      %v978 = vsel %vm652, %v823, 0
      %v981 = vsel %vm652, %v824, 0
      %v984 = vsel %vm652, %v825, 0
      %v987 = vsel %vm652, %v826, 0
      %v990 = vsel %vm652, %v827, 0
      %v993 = vsel %vm652, %v828, 0
      %v996 = vsel %vm652, %v829, 0
      %v999 = vsel %vm652, %v830, 0
      %v1002 = vsel %vm652, %v831, 0
      %v1005 = vsel %vm652, %v832, 0
      %v1008 = vsel %vm652, %v833, 0
      %v1011 = vsel %vm652, %v834, 0
      %v1014 = vsel %vm652, %v835, 0
      %v1017 = vsel %vm652, %v836, 0
      %v1020 = vsel %vm652, %v837, 0
      %v1023 = vsel %vm652, %v838, 0
      %v1026 = vsel %vm652, %v839, 0
      %v1029 = vsel %vm652, %v840, 0
      %v1032 = vsel %vm652, %v841, 0
      %v1035 = vsel %vm652, %v842, 0
      %v1038 = vsel %vm652, %v843, 0
      %v1041 = vsel %vm652, %v844, 0
      %v1044 = vsel %vm652, %v845, 0
      %v1047 = vsel %vm652, %v846, 0
      %v1050 = vsel %vm652, %v847, 0
      %v1053 = vsel %vm652, %v848, 0
      %v1056 = vsel %vm652, %v849, 0
      %v1059 = vsel %vm652, %v850, 0
      %v1062 = vsel %vm652, %v851, 0
      %v1065 = vsel %vm652, %v852, 0
      %v1068 = vsel %vm652, %v853, 0
      %1070 = vmatprep.subr.mxu0 0.0
      %1071 = vmatpush1.msra.mxu0 %v744
      %1072 = vmatprep.subr.mxu0 0.0
      %1073 = vmatpush1.msra.mxu0 %v749
      %1074 = vmatprep.subr.mxu0 0.0
      %1075 = vmatpush1.msra.mxu0 %v754
      %1076 = vmatprep.subr.mxu0 0.0
      %1077 = vmatpush1.msra.mxu0 %v759
      %1078 = vmatprep.subr.mxu0 0.0
      %1079 = vmatpush1.msra.mxu0 %v764
      %1080 = vmatprep.subr.mxu0 0.0
      %1081 = vmatpush1.msra.mxu0 %v769
      %1082 = vmatprep.subr.mxu0 0.0
      %1083 = vmatpush1.msra.mxu0 %v774
      %1084 = vmatprep.subr.mxu0 0.0
      %1085 = vmatpush1.msra.mxu0 %v779
      %1086 = vmatprep.subr.mxu0 0.0
      %1087 = vmatpush1.msra.mxu0 0.0
      %1088 = vmatprep.subr.mxu0 0.0
      %1089 = vmatpush1.msra.mxu0 0.0
      %1090 = vmatprep.subr.mxu0 0.0
      %1091 = vmatpush1.msra.mxu0 0.0
      %1092 = vmatprep.subr.mxu0 0.0
      %1093 = vmatpush1.msra.mxu0 0.0
      %1094 = vmatprep.subr.mxu0 0.0
      %1095 = vmatpush1.msra.mxu0 0.0
      %1096 = vmatprep.subr.mxu0 0.0
      %1097 = vmatpush1.msra.mxu0 0.0
      %1098 = vmatprep.subr.mxu0 0.0
      %1099 = vmatpush1.msra.mxu0 0.0
      %1100 = vmatprep.subr.mxu0 0.0
      %1101 = vmatpush1.msra.mxu0 0.0
      %1102 = vmatprep.subr.mxu0 0.0
      %1103 = vmatpush1.msra.mxu0 0.0
      %1104 = vmatprep.subr.mxu0 0.0
      %1105 = vmatpush1.msra.mxu0 0.0
      %1106 = vmatprep.subr.mxu0 0.0
      %1107 = vmatpush1.msra.mxu0 0.0
      %1108 = vmatprep.subr.mxu0 0.0
      %1109 = vmatpush1.msra.mxu0 0.0
      %1110 = vmatprep.subr.mxu0 0.0
      %1111 = vmatpush1.msra.mxu0 0.0
      %1112 = vmatprep.subr.mxu0 0.0
      %1113 = vmatpush1.msra.mxu0 0.0
      %1114 = vmatprep.subr.mxu0 0.0
      %1115 = vmatpush1.msra.mxu0 0.0
      %1116 = vmatprep.subr.mxu0 0.0
      %1117 = vmatpush1.msra.mxu0 0.0
      %1118 = vmatprep.subr.mxu0 0.0
      %1119 = vmatpush1.msra.mxu0 0.0
      %1120 = vmatprep.subr.mxu0 0.0
      %1121 = vmatpush1.msra.mxu0 0.0
      %1122 = vmatprep.subr.mxu0 0.0
      %1123 = vmatpush1.msra.mxu0 0.0
      %1124 = vmatprep.subr.mxu0 0.0
      %1125 = vmatpush1.msra.mxu0 0.0
      %1126 = vmatprep.subr.mxu0 0.0
      %1127 = vmatpush1.msra.mxu0 0.0
      %1128 = vmatprep.subr.mxu0 0.0
      %1129 = vmatpush1.msra.mxu0 0.0
      %1130 = vmatprep.subr.mxu0 0.0
      %1131 = vmatpush1.msra.mxu0 0.0
      %1132 = vmatprep.subr.mxu0 0.0
      %1133 = vmatpush1.msra.mxu0 0.0
      %1134 = vmatprep.mubr.f32.mxu0 0.0
      %1135 = vmatmul.mubr.f32.gmra.mrb[0].mxu0 %v855
      %v1136 = vpop.f32.mrb[0].mxu0
      %v1137 = vadd.f32 0.0, %v1136
      %v1138 = vpop.f32.mrb[0].mxu0
      %1139 = vmatprep.mubr.f32.mxu0 0.0
      %1140 = vmatmul.mubr.f32.gmra.mrb[0].mxu0 %v858
      %v1141 = vpop.f32.mrb[0].mxu0
      %v1142 = vadd.f32 0.0, %v1141
      %v1143 = vpop.f32.mrb[0].mxu0
      %1144 = vmatprep.mubr.f32.mxu0 0.0
      %1145 = vmatmul.mubr.f32.gmra.mrb[0].mxu0 %v861
      %v1146 = vpop.f32.mrb[0].mxu0
      %v1147 = vadd.f32 0.0, %v1146
      %v1148 = vpop.f32.mrb[0].mxu0
      %1149 = vmatprep.mubr.f32.mxu0 0.0
      %1150 = vmatmul.mubr.f32.gmra.mrb[0].mxu0 %v864
      %v1151 = vpop.f32.mrb[0].mxu0
      %v1152 = vadd.f32 0.0, %v1151
      %v1153 = vpop.f32.mrb[0].mxu0
      %1154 = vmatprep.mubr.f32.mxu0 0.0
      %1155 = vmatmul.mubr.f32.gmra.mrb[0].mxu0 %v867
      %v1156 = vpop.f32.mrb[0].mxu0
      %v1157 = vadd.f32 0.0, %v1156
      %v1158 = vpop.f32.mrb[0].mxu0
      %1159 = vmatprep.mubr.f32.mxu0 0.0
      %1160 = vmatmul.mubr.f32.gmra.mrb[0].mxu0 %v870
      %v1161 = vpop.f32.mrb[0].mxu0
      %v1162 = vadd.f32 0.0, %v1161
      %v1163 = vpop.f32.mrb[0].mxu0
      %1164 = vmatprep.mubr.f32.mxu0 0.0
      %1165 = vmatmul.mubr.f32.gmra.mrb[0].mxu0 %v873
      %v1166 = vpop.f32.mrb[0].mxu0
      %v1167 = vadd.f32 0.0, %v1166
      %v1168 = vpop.f32.mrb[0].mxu0
      %1169 = vmatprep.mubr.f32.mxu0 0.0
      %1170 = vmatmul.mubr.f32.gmra.mrb[0].mxu0 %v876
      %v1171 = vpop.f32.mrb[0].mxu0
      %v1172 = vadd.f32 0.0, %v1171
      %v1173 = vpop.f32.mrb[0].mxu0
      %1174 = vmatprep.mubr.f32.mxu0 0.0
      %1175 = vmatmul.mubr.f32.gmra.mrb[0].mxu0 %v879
      %v1176 = vpop.f32.mrb[0].mxu0
      %v1177 = vadd.f32 0.0, %v1176
      %v1178 = vpop.f32.mrb[0].mxu0
      %1179 = vmatprep.mubr.f32.mxu0 0.0
      %1180 = vmatmul.mubr.f32.gmra.mrb[0].mxu0 %v882
      %v1181 = vpop.f32.mrb[0].mxu0
      %v1182 = vadd.f32 0.0, %v1181
      %v1183 = vpop.f32.mrb[0].mxu0
      %1184 = vmatprep.mubr.f32.mxu0 0.0
      %1185 = vmatmul.mubr.f32.gmra.mrb[0].mxu0 %v885
      %v1186 = vpop.f32.mrb[0].mxu0
      %v1187 = vadd.f32 0.0, %v1186
      %v1188 = vpop.f32.mrb[0].mxu0
      %1189 = vmatprep.mubr.f32.mxu0 0.0
      %1190 = vmatmul.mubr.f32.gmra.mrb[0].mxu0 %v888
      %v1191 = vpop.f32.mrb[0].mxu0
      %v1192 = vadd.f32 0.0, %v1191
      %v1193 = vpop.f32.mrb[0].mxu0
      %1194 = vmatprep.mubr.f32.mxu0 0.0
      %1195 = vmatmul.mubr.f32.gmra.mrb[0].mxu0 %v891
      %v1196 = vpop.f32.mrb[0].mxu0
      %v1197 = vadd.f32 0.0, %v1196
      %v1198 = vpop.f32.mrb[0].mxu0
      %1199 = vmatprep.mubr.f32.mxu0 0.0
      %1200 = vmatmul.mubr.f32.gmra.mrb[0].mxu0 %v894
      %v1201 = vpop.f32.mrb[0].mxu0
      %v1202 = vadd.f32 0.0, %v1201
      %v1203 = vpop.f32.mrb[0].mxu0
      %1204 = vmatprep.mubr.f32.mxu0 0.0
      %1205 = vmatmul.mubr.f32.gmra.mrb[0].mxu0 %v897
      %v1206 = vpop.f32.mrb[0].mxu0
      %v1207 = vadd.f32 0.0, %v1206
      %v1208 = vpop.f32.mrb[0].mxu0
      %1209 = vmatprep.mubr.f32.mxu0 0.0
      %1210 = vmatmul.mubr.f32.gmra.mrb[0].mxu0 %v900
      %v1211 = vpop.f32.mrb[0].mxu0
      %v1212 = vadd.f32 0.0, %v1211
      %v1213 = vpop.f32.mrb[0].mxu0
      %1214 = vmatprep.mubr.f32.mxu0 0.0
      %1215 = vmatmul.mubr.f32.gmra.mrb[0].mxu0 %v903
      %v1216 = vpop.f32.mrb[0].mxu0
      %v1217 = vadd.f32 0.0, %v1216
      %v1218 = vpop.f32.mrb[0].mxu0
      %1219 = vmatprep.mubr.f32.mxu0 0.0
      %1220 = vmatmul.mubr.f32.gmra.mrb[0].mxu0 %v906
      %v1221 = vpop.f32.mrb[0].mxu0
      %v1222 = vadd.f32 0.0, %v1221
      %v1223 = vpop.f32.mrb[0].mxu0
      %1224 = vmatprep.mubr.f32.mxu0 0.0
      %1225 = vmatmul.mubr.f32.gmra.mrb[0].mxu0 %v909
      %v1226 = vpop.f32.mrb[0].mxu0
      %v1227 = vadd.f32 0.0, %v1226
      %v1228 = vpop.f32.mrb[0].mxu0
      %1229 = vmatprep.mubr.f32.mxu0 0.0
      %1230 = vmatmul.mubr.f32.gmra.mrb[0].mxu0 %v912
      %v1231 = vpop.f32.mrb[0].mxu0
      %v1232 = vadd.f32 0.0, %v1231
      %v1233 = vpop.f32.mrb[0].mxu0
      %1234 = vmatprep.mubr.f32.mxu0 0.0
      %1235 = vmatmul.mubr.f32.gmra.mrb[0].mxu0 %v915
      %v1236 = vpop.f32.mrb[0].mxu0
      %v1237 = vadd.f32 0.0, %v1236
      %v1238 = vpop.f32.mrb[0].mxu0
      %1239 = vmatprep.mubr.f32.mxu0 0.0
      %1240 = vmatmul.mubr.f32.gmra.mrb[0].mxu0 %v918
      %v1241 = vpop.f32.mrb[0].mxu0
      %v1242 = vadd.f32 0.0, %v1241
      %v1243 = vpop.f32.mrb[0].mxu0
      %1244 = vmatprep.mubr.f32.mxu0 0.0
      %1245 = vmatmul.mubr.f32.gmra.mrb[0].mxu0 %v921
      %v1246 = vpop.f32.mrb[0].mxu0
      %v1247 = vadd.f32 0.0, %v1246
      %v1248 = vpop.f32.mrb[0].mxu0
      %1249 = vmatprep.mubr.f32.mxu0 0.0
      %1250 = vmatmul.mubr.f32.gmra.mrb[0].mxu0 %v924
      %v1251 = vpop.f32.mrb[0].mxu0
      %v1252 = vadd.f32 0.0, %v1251
      %v1253 = vpop.f32.mrb[0].mxu0
      %1254 = vmatprep.mubr.f32.mxu0 0.0
      %1255 = vmatmul.mubr.f32.gmra.mrb[0].mxu0 %v927
      %v1256 = vpop.f32.mrb[0].mxu0
      %v1257 = vadd.f32 0.0, %v1256
      %v1258 = vpop.f32.mrb[0].mxu0
      %1259 = vmatprep.mubr.f32.mxu0 0.0
      %1260 = vmatmul.mubr.f32.gmra.mrb[0].mxu0 %v930
      %v1261 = vpop.f32.mrb[0].mxu0
      %v1262 = vadd.f32 0.0, %v1261
      %v1263 = vpop.f32.mrb[0].mxu0
      %1264 = vmatprep.mubr.f32.mxu0 0.0
      %1265 = vmatmul.mubr.f32.gmra.mrb[0].mxu0 %v933
      %v1266 = vpop.f32.mrb[0].mxu0
      %v1267 = vadd.f32 0.0, %v1266
      %v1268 = vpop.f32.mrb[0].mxu0
      %1269 = vmatprep.mubr.f32.mxu0 0.0
      %1270 = vmatmul.mubr.f32.gmra.mrb[0].mxu0 %v936
      %v1271 = vpop.f32.mrb[0].mxu0
      %v1272 = vadd.f32 0.0, %v1271
      %v1273 = vpop.f32.mrb[0].mxu0
      %1274 = vmatprep.mubr.f32.mxu0 0.0
      %1275 = vmatmul.mubr.f32.gmra.mrb[0].mxu0 %v939
      %v1276 = vpop.f32.mrb[0].mxu0
      %v1277 = vadd.f32 0.0, %v1276
      %v1278 = vpop.f32.mrb[0].mxu0
      %1279 = vmatprep.mubr.f32.mxu0 0.0
      %1280 = vmatmul.mubr.f32.gmra.mrb[0].mxu0 %v942
      %v1281 = vpop.f32.mrb[0].mxu0
      %v1282 = vadd.f32 0.0, %v1281
      %v1283 = vpop.f32.mrb[0].mxu0
      %1284 = vmatprep.mubr.f32.mxu0 0.0
      %1285 = vmatmul.mubr.f32.gmra.mrb[0].mxu0 %v945
      %v1286 = vpop.f32.mrb[0].mxu0
      %v1287 = vadd.f32 0.0, %v1286
      %v1288 = vpop.f32.mrb[0].mxu0
      %1289 = vmatprep.mubr.f32.mxu0 0.0
      %1290 = vmatmul.mubr.f32.gmra.mrb[0].mxu0 %v948
      %v1291 = vpop.f32.mrb[0].mxu0
      %v1292 = vadd.f32 0.0, %v1291
      %v1293 = vpop.f32.mrb[0].mxu0
      %1294 = vmatprep.mubr.f32.mxu0 0.0
      %1295 = vmatmul.mubr.f32.gmra.mrb[0].mxu0 %v951
      %v1296 = vpop.f32.mrb[0].mxu0
      %v1297 = vadd.f32 0.0, %v1296
      %v1298 = vpop.f32.mrb[0].mxu0
      %1299 = vmatprep.mubr.f32.mxu0 0.0
      %1300 = vmatmul.mubr.f32.gmra.mrb[0].mxu0 %v954
      %v1301 = vpop.f32.mrb[0].mxu0
      %v1302 = vadd.f32 0.0, %v1301
      %v1303 = vpop.f32.mrb[0].mxu0
      %1304 = vmatprep.mubr.f32.mxu0 0.0
      %1305 = vmatmul.mubr.f32.gmra.mrb[0].mxu0 %v957
      %v1306 = vpop.f32.mrb[0].mxu0
      %v1307 = vadd.f32 0.0, %v1306
      %v1308 = vpop.f32.mrb[0].mxu0
      %1309 = vmatprep.mubr.f32.mxu0 0.0
      %1310 = vmatmul.mubr.f32.gmra.mrb[0].mxu0 %v960
      %v1311 = vpop.f32.mrb[0].mxu0
      %v1312 = vadd.f32 0.0, %v1311
      %v1313 = vpop.f32.mrb[0].mxu0
      %1314 = vmatprep.mubr.f32.mxu0 0.0
      %1315 = vmatmul.mubr.f32.gmra.mrb[0].mxu0 %v963
      %v1316 = vpop.f32.mrb[0].mxu0
      %v1317 = vadd.f32 0.0, %v1316
      %v1318 = vpop.f32.mrb[0].mxu0
      %1319 = vmatprep.mubr.f32.mxu0 0.0
      %1320 = vmatmul.mubr.f32.gmra.mrb[0].mxu0 %v966
      %v1321 = vpop.f32.mrb[0].mxu0
      %v1322 = vadd.f32 0.0, %v1321
      %v1323 = vpop.f32.mrb[0].mxu0
      %1324 = vmatprep.mubr.f32.mxu0 0.0
      %1325 = vmatmul.mubr.f32.gmra.mrb[0].mxu0 %v969
      %v1326 = vpop.f32.mrb[0].mxu0
      %v1327 = vadd.f32 0.0, %v1326
      %v1328 = vpop.f32.mrb[0].mxu0
      %1329 = vmatprep.mubr.f32.mxu0 0.0
      %1330 = vmatmul.mubr.f32.gmra.mrb[0].mxu0 %v972
      %v1331 = vpop.f32.mrb[0].mxu0
      %v1332 = vadd.f32 0.0, %v1331
      %v1333 = vpop.f32.mrb[0].mxu0
      %1334 = vmatprep.mubr.f32.mxu0 0.0
      %1335 = vmatmul.mubr.f32.gmra.mrb[0].mxu0 %v975
      %v1336 = vpop.f32.mrb[0].mxu0
      %v1337 = vadd.f32 0.0, %v1336
      %v1338 = vpop.f32.mrb[0].mxu0
      %1339 = vmatprep.mubr.f32.mxu0 0.0
      %1340 = vmatmul.mubr.f32.gmra.mrb[0].mxu0 %v978
      %v1341 = vpop.f32.mrb[0].mxu0
      %v1342 = vadd.f32 0.0, %v1341
      %v1343 = vpop.f32.mrb[0].mxu0
      %1344 = vmatprep.mubr.f32.mxu0 0.0
      %1345 = vmatmul.mubr.f32.gmra.mrb[0].mxu0 %v981
      %v1346 = vpop.f32.mrb[0].mxu0
      %v1347 = vadd.f32 0.0, %v1346
      %v1348 = vpop.f32.mrb[0].mxu0
      %1349 = vmatprep.mubr.f32.mxu0 0.0
      %1350 = vmatmul.mubr.f32.gmra.mrb[0].mxu0 %v984
      %v1351 = vpop.f32.mrb[0].mxu0
      %v1352 = vadd.f32 0.0, %v1351
      %v1353 = vpop.f32.mrb[0].mxu0
      %1354 = vmatprep.mubr.f32.mxu0 0.0
      %1355 = vmatmul.mubr.f32.gmra.mrb[0].mxu0 %v987
      %v1356 = vpop.f32.mrb[0].mxu0
      %v1357 = vadd.f32 0.0, %v1356
      %v1358 = vpop.f32.mrb[0].mxu0
      %1359 = vmatprep.mubr.f32.mxu0 0.0
      %1360 = vmatmul.mubr.f32.gmra.mrb[0].mxu0 %v990
      %v1361 = vpop.f32.mrb[0].mxu0
      %v1362 = vadd.f32 0.0, %v1361
      %v1363 = vpop.f32.mrb[0].mxu0
      %1364 = vmatprep.mubr.f32.mxu0 0.0
      %1365 = vmatmul.mubr.f32.gmra.mrb[0].mxu0 %v993
      %v1366 = vpop.f32.mrb[0].mxu0
      %v1367 = vadd.f32 0.0, %v1366
      %v1368 = vpop.f32.mrb[0].mxu0
      %1369 = vmatprep.mubr.f32.mxu0 0.0
      %1370 = vmatmul.mubr.f32.gmra.mrb[0].mxu0 %v996
      %v1371 = vpop.f32.mrb[0].mxu0
      %v1372 = vadd.f32 0.0, %v1371
      %v1373 = vpop.f32.mrb[0].mxu0
      %1374 = vmatprep.mubr.f32.mxu0 0.0
      %1375 = vmatmul.mubr.f32.gmra.mrb[0].mxu0 %v999
      %v1376 = vpop.f32.mrb[0].mxu0
      %v1377 = vadd.f32 0.0, %v1376
      %v1378 = vpop.f32.mrb[0].mxu0
      %1379 = vmatprep.mubr.f32.mxu0 0.0
      %1380 = vmatmul.mubr.f32.gmra.mrb[0].mxu0 %v1002
      %v1381 = vpop.f32.mrb[0].mxu0
      %v1382 = vadd.f32 0.0, %v1381
      %v1383 = vpop.f32.mrb[0].mxu0
      %1384 = vmatprep.mubr.f32.mxu0 0.0
      %1385 = vmatmul.mubr.f32.gmra.mrb[0].mxu0 %v1005
      %v1386 = vpop.f32.mrb[0].mxu0
      %v1387 = vadd.f32 0.0, %v1386
      %v1388 = vpop.f32.mrb[0].mxu0
      %1389 = vmatprep.mubr.f32.mxu0 0.0
      %1390 = vmatmul.mubr.f32.gmra.mrb[0].mxu0 %v1008
      %v1391 = vpop.f32.mrb[0].mxu0
      %v1392 = vadd.f32 0.0, %v1391
      %v1393 = vpop.f32.mrb[0].mxu0
      %1394 = vmatprep.mubr.f32.mxu0 0.0
      %1395 = vmatmul.mubr.f32.gmra.mrb[0].mxu0 %v1011
      %v1396 = vpop.f32.mrb[0].mxu0
      %v1397 = vadd.f32 0.0, %v1396
      %v1398 = vpop.f32.mrb[0].mxu0
      %1399 = vmatprep.mubr.f32.mxu0 0.0
      %1400 = vmatmul.mubr.f32.gmra.mrb[0].mxu0 %v1014
      %v1401 = vpop.f32.mrb[0].mxu0
      %v1402 = vadd.f32 0.0, %v1401
      %v1403 = vpop.f32.mrb[0].mxu0
      %1404 = vmatprep.mubr.f32.mxu0 0.0
      %1405 = vmatmul.mubr.f32.gmra.mrb[0].mxu0 %v1017
      %v1406 = vpop.f32.mrb[0].mxu0
      %v1407 = vadd.f32 0.0, %v1406
      %v1408 = vpop.f32.mrb[0].mxu0
      %1409 = vmatprep.mubr.f32.mxu0 0.0
      %1410 = vmatmul.mubr.f32.gmra.mrb[0].mxu0 %v1020
      %v1411 = vpop.f32.mrb[0].mxu0
      %v1412 = vadd.f32 0.0, %v1411
      %v1413 = vpop.f32.mrb[0].mxu0
      %1414 = vmatprep.mubr.f32.mxu0 0.0
      %1415 = vmatmul.mubr.f32.gmra.mrb[0].mxu0 %v1023
      %v1416 = vpop.f32.mrb[0].mxu0
      %v1417 = vadd.f32 0.0, %v1416
      %v1418 = vpop.f32.mrb[0].mxu0
      %1419 = vmatprep.mubr.f32.mxu0 0.0
      %1420 = vmatmul.mubr.f32.gmra.mrb[0].mxu0 %v1026
      %v1421 = vpop.f32.mrb[0].mxu0
      %v1422 = vadd.f32 0.0, %v1421
      %v1423 = vpop.f32.mrb[0].mxu0
      %1424 = vmatprep.mubr.f32.mxu0 0.0
      %1425 = vmatmul.mubr.f32.gmra.mrb[0].mxu0 %v1029
      %v1426 = vpop.f32.mrb[0].mxu0
      %v1427 = vadd.f32 0.0, %v1426
      %v1428 = vpop.f32.mrb[0].mxu0
      %1429 = vmatprep.mubr.f32.mxu0 0.0
      %1430 = vmatmul.mubr.f32.gmra.mrb[0].mxu0 %v1032
      %v1431 = vpop.f32.mrb[0].mxu0
      %v1432 = vadd.f32 0.0, %v1431
      %v1433 = vpop.f32.mrb[0].mxu0
      %1434 = vmatprep.mubr.f32.mxu0 0.0
      %1435 = vmatmul.mubr.f32.gmra.mrb[0].mxu0 %v1035
      %v1436 = vpop.f32.mrb[0].mxu0
      %v1437 = vadd.f32 0.0, %v1436
      %v1438 = vpop.f32.mrb[0].mxu0
      %1439 = vmatprep.mubr.f32.mxu0 0.0
      %1440 = vmatmul.mubr.f32.gmra.mrb[0].mxu0 %v1038
      %v1441 = vpop.f32.mrb[0].mxu0
      %v1442 = vadd.f32 0.0, %v1441
      %v1443 = vpop.f32.mrb[0].mxu0
      %1444 = vmatprep.mubr.f32.mxu0 0.0
      %1445 = vmatmul.mubr.f32.gmra.mrb[0].mxu0 %v1041
      %v1446 = vpop.f32.mrb[0].mxu0
      %v1447 = vadd.f32 0.0, %v1446
      %v1448 = vpop.f32.mrb[0].mxu0
      %1449 = vmatprep.mubr.f32.mxu0 0.0
      %1450 = vmatmul.mubr.f32.gmra.mrb[0].mxu0 %v1044
      %v1451 = vpop.f32.mrb[0].mxu0
      %v1452 = vadd.f32 0.0, %v1451
      %v1453 = vpop.f32.mrb[0].mxu0
      %1454 = vmatprep.mubr.f32.mxu0 0.0
      %1455 = vmatmul.mubr.f32.gmra.mrb[0].mxu0 %v1047
      %v1456 = vpop.f32.mrb[0].mxu0
      %v1457 = vadd.f32 0.0, %v1456
      %v1458 = vpop.f32.mrb[0].mxu0
      %1459 = vmatprep.mubr.f32.mxu0 0.0
      %1460 = vmatmul.mubr.f32.gmra.mrb[0].mxu0 %v1050
      %v1461 = vpop.f32.mrb[0].mxu0
      %v1462 = vadd.f32 0.0, %v1461
      %v1463 = vpop.f32.mrb[0].mxu0
      %1464 = vmatprep.mubr.f32.mxu0 0.0
      %1465 = vmatmul.mubr.f32.gmra.mrb[0].mxu0 %v1053
      %v1466 = vpop.f32.mrb[0].mxu0
      %v1467 = vadd.f32 0.0, %v1466
      %v1468 = vpop.f32.mrb[0].mxu0
      %1469 = vmatprep.mubr.f32.mxu0 0.0
      %1470 = vmatmul.mubr.f32.gmra.mrb[0].mxu0 %v1056
      %v1471 = vpop.f32.mrb[0].mxu0
      %v1472 = vadd.f32 0.0, %v1471
      %v1473 = vpop.f32.mrb[0].mxu0
      %1474 = vmatprep.mubr.f32.mxu0 0.0
      %1475 = vmatmul.mubr.f32.gmra.mrb[0].mxu0 %v1059
      %v1476 = vpop.f32.mrb[0].mxu0
      %v1477 = vadd.f32 0.0, %v1476
      %v1478 = vpop.f32.mrb[0].mxu0
      %1479 = vmatprep.mubr.f32.mxu0 0.0
      %1480 = vmatmul.mubr.f32.gmra.mrb[0].mxu0 %v1062
      %v1481 = vpop.f32.mrb[0].mxu0
      %v1482 = vadd.f32 0.0, %v1481
      %v1483 = vpop.f32.mrb[0].mxu0
      %1484 = vmatprep.mubr.f32.mxu0 0.0
      %1485 = vmatmul.mubr.f32.gmra.mrb[0].mxu0 %v1065
      %v1486 = vpop.f32.mrb[0].mxu0
      %v1487 = vadd.f32 0.0, %v1486
      %v1488 = vpop.f32.mrb[0].mxu0
      %1489 = vmatprep.mubr.f32.mxu0 0.0
      %1490 = vmatmul.mubr.f32.gmra.mrb[0].mxu0 %v1068
      %v1491 = vpop.f32.mrb[0].mxu0
      %v1492 = vadd.f32 0.0, %v1491
      %v1493 = vpop.f32.mrb[0].mxu0
      %1494 = vdwg.mxu0
      %v1495 = vld [vmem:[%s4] sm:$0xff]
      %v1496 = vld [vmem:[%s4 + $0x8] sm:$0xff]
      %v1497 = vld [vmem:[%s4 + $0x10] sm:$0xff]
      %v1498 = vld [vmem:[%s4 + $0x18] sm:$0xff]
      %v1499 = vld [vmem:[%s4 + $0x20] sm:$0xff]
      %v1500 = vld [vmem:[%s4 + $0x28] sm:$0xff]
      %v1501 = vld [vmem:[%s4 + $0x30] sm:$0xff]
      %v1502 = vld [vmem:[%s4 + $0x38] sm:$0xff]
      %s1503 = scalar_lea.vmem %s4, 64
      %v1504 = vld [vmem:[%s1503] sm:$0xff]
      %v1505 = vld [vmem:[%s1503 + $0x8] sm:$0xff]
      %v1506 = vld [vmem:[%s1503 + $0x10] sm:$0xff]
      %v1507 = vld [vmem:[%s1503 + $0x18] sm:$0xff]
      %v1508 = vld [vmem:[%s1503 + $0x20] sm:$0xff]
      %v1509 = vld [vmem:[%s1503 + $0x28] sm:$0xff]
      %v1510 = vld [vmem:[%s1503 + $0x30] sm:$0xff]
      %v1511 = vld [vmem:[%s1503 + $0x38] sm:$0xff]
      %v1513 = vsel %vm652, %v1177, 0
      %v1516 = vsel %vm652, %v1182, 0
      %v1519 = vsel %vm652, %v1187, 0
      %v1522 = vsel %vm652, %v1192, 0
      %v1525 = vsel %vm652, %v1197, 0
      %v1528 = vsel %vm652, %v1202, 0
      %v1531 = vsel %vm652, %v1207, 0
      %v1534 = vsel %vm652, %v1212, 0
      %1536 = vmatprep.subr.mxu0 0.0
      %1537 = vmatpush1.msra.mxu0 %v1504
      %1538 = vmatprep.subr.mxu0 0.0
      %1539 = vmatpush1.msra.mxu0 %v1505
      %1540 = vmatprep.subr.mxu0 0.0
      %1541 = vmatpush1.msra.mxu0 %v1506
      %1542 = vmatprep.subr.mxu0 0.0
      %1543 = vmatpush1.msra.mxu0 %v1507
      %1544 = vmatprep.subr.mxu0 0.0
      %1545 = vmatpush1.msra.mxu0 %v1508
      %1546 = vmatprep.subr.mxu0 0.0
      %1547 = vmatpush1.msra.mxu0 %v1509
      %1548 = vmatprep.subr.mxu0 0.0
      %1549 = vmatpush1.msra.mxu0 %v1510
      %1550 = vmatprep.subr.mxu0 0.0
      %1551 = vmatpush1.msra.mxu0 %v1511
      %1552 = vmatprep.subr.mxu0 0.0
      %1553 = vmatpush1.msra.mxu0 0.0
      %1554 = vmatprep.subr.mxu0 0.0
      %1555 = vmatpush1.msra.mxu0 0.0
      %1556 = vmatprep.subr.mxu0 0.0
      %1557 = vmatpush1.msra.mxu0 0.0
      %1558 = vmatprep.subr.mxu0 0.0
      %1559 = vmatpush1.msra.mxu0 0.0
      %1560 = vmatprep.subr.mxu0 0.0
      %1561 = vmatpush1.msra.mxu0 0.0
      %1562 = vmatprep.subr.mxu0 0.0
      %1563 = vmatpush1.msra.mxu0 0.0
      %1564 = vmatprep.subr.mxu0 0.0
      %1565 = vmatpush1.msra.mxu0 0.0
      %1566 = vmatprep.subr.mxu0 0.0
      %1567 = vmatpush1.msra.mxu0 0.0
      %1568 = vmatprep.subr.mxu0 0.0
      %1569 = vmatpush1.msra.mxu0 0.0
      %1570 = vmatprep.subr.mxu0 0.0
      %1571 = vmatpush1.msra.mxu0 0.0
      %1572 = vmatprep.subr.mxu0 0.0
      %1573 = vmatpush1.msra.mxu0 0.0
      %1574 = vmatprep.subr.mxu0 0.0
      %1575 = vmatpush1.msra.mxu0 0.0
      %1576 = vmatprep.subr.mxu0 0.0
      %1577 = vmatpush1.msra.mxu0 0.0
      %1578 = vmatprep.subr.mxu0 0.0
      %1579 = vmatpush1.msra.mxu0 0.0
      %1580 = vmatprep.subr.mxu0 0.0
      %1581 = vmatpush1.msra.mxu0 0.0
      %1582 = vmatprep.subr.mxu0 0.0
      %1583 = vmatpush1.msra.mxu0 0.0
      %1584 = vmatprep.subr.mxu0 0.0
      %1585 = vmatpush1.msra.mxu0 0.0
      %1586 = vmatprep.subr.mxu0 0.0
      %1587 = vmatpush1.msra.mxu0 0.0
      %1588 = vmatprep.subr.mxu0 0.0
      %1589 = vmatpush1.msra.mxu0 0.0
      %1590 = vmatprep.subr.mxu0 0.0
      %1591 = vmatpush1.msra.mxu0 0.0
      %1592 = vmatprep.subr.mxu0 0.0
      %1593 = vmatpush1.msra.mxu0 0.0
      %1594 = vmatprep.subr.mxu0 0.0
      %1595 = vmatpush1.msra.mxu0 0.0
      %1596 = vmatprep.subr.mxu0 0.0
      %1597 = vmatpush1.msra.mxu0 0.0
      %1598 = vmatprep.subr.mxu0 0.0
      %1599 = vmatpush1.msra.mxu0 0.0
      %1600 = vmatprep.mubr.f32.mxu0 0.0
      %1601 = vmatmul.mubr.f32.gmra.mrb[0].mxu0 %v1513
      %v1602 = vpop.f32.mrb[0].mxu0
      %v1603 = vadd.f32 0.0, %v1602
      %v1604 = vpop.f32.mrb[0].mxu0
      %1605 = vmatprep.mubr.f32.mxu0 0.0
      %1606 = vmatmul.mubr.f32.gmra.mrb[0].mxu0 %v1516
      %v1607 = vpop.f32.mrb[0].mxu0
      %v1608 = vadd.f32 0.0, %v1607
      %v1609 = vpop.f32.mrb[0].mxu0
      %1610 = vmatprep.mubr.f32.mxu0 0.0
      %1611 = vmatmul.mubr.f32.gmra.mrb[0].mxu0 %v1519
      %v1612 = vpop.f32.mrb[0].mxu0
      %v1613 = vadd.f32 0.0, %v1612
      %v1614 = vpop.f32.mrb[0].mxu0
      %1615 = vmatprep.mubr.f32.mxu0 0.0
      %1616 = vmatmul.mubr.f32.gmra.mrb[0].mxu0 %v1522
      %v1617 = vpop.f32.mrb[0].mxu0
      %v1618 = vadd.f32 0.0, %v1617
      %v1619 = vpop.f32.mrb[0].mxu0
      %1620 = vmatprep.mubr.f32.mxu0 0.0
      %1621 = vmatmul.mubr.f32.gmra.mrb[0].mxu0 %v1525
      %v1622 = vpop.f32.mrb[0].mxu0
      %v1623 = vadd.f32 0.0, %v1622
      %v1624 = vpop.f32.mrb[0].mxu0
      %1625 = vmatprep.mubr.f32.mxu0 0.0
      %1626 = vmatmul.mubr.f32.gmra.mrb[0].mxu0 %v1528
      %v1627 = vpop.f32.mrb[0].mxu0
      %v1628 = vadd.f32 0.0, %v1627
      %v1629 = vpop.f32.mrb[0].mxu0
      %1630 = vmatprep.mubr.f32.mxu0 0.0
      %1631 = vmatmul.mubr.f32.gmra.mrb[0].mxu0 %v1531
      %v1632 = vpop.f32.mrb[0].mxu0
      %v1633 = vadd.f32 0.0, %v1632
      %v1634 = vpop.f32.mrb[0].mxu0
      %1635 = vmatprep.mubr.f32.mxu0 0.0
      %1636 = vmatmul.mubr.f32.gmra.mrb[0].mxu0 %v1534
      %v1637 = vpop.f32.mrb[0].mxu0
      %v1638 = vadd.f32 0.0, %v1637
      %v1639 = vpop.f32.mrb[0].mxu0
      %1640 = vdwg.mxu0
      %v1642 = vsel %vm652, %v1137, 0
      %v1645 = vsel %vm652, %v1142, 0
      %v1648 = vsel %vm652, %v1147, 0
      %v1651 = vsel %vm652, %v1152, 0
      %v1654 = vsel %vm652, %v1157, 0
      %v1657 = vsel %vm652, %v1162, 0
      %v1660 = vsel %vm652, %v1167, 0
      %v1663 = vsel %vm652, %v1172, 0
      %1665 = vmatprep.subr.mxu0 0.0
      %1666 = vmatpush1.msra.mxu0 %v1495
      %1667 = vmatprep.subr.mxu0 0.0
      %1668 = vmatpush1.msra.mxu0 %v1496
      %1669 = vmatprep.subr.mxu0 0.0
      %1670 = vmatpush1.msra.mxu0 %v1497
      %1671 = vmatprep.subr.mxu0 0.0
      %1672 = vmatpush1.msra.mxu0 %v1498
      %1673 = vmatprep.subr.mxu0 0.0
      %1674 = vmatpush1.msra.mxu0 %v1499
      %1675 = vmatprep.subr.mxu0 0.0
      %1676 = vmatpush1.msra.mxu0 %v1500
      %1677 = vmatprep.subr.mxu0 0.0
      %1678 = vmatpush1.msra.mxu0 %v1501
      %1679 = vmatprep.subr.mxu0 0.0
      %1680 = vmatpush1.msra.mxu0 %v1502
      %1681 = vmatprep.subr.mxu0 0.0
      %1682 = vmatpush1.msra.mxu0 0.0
      %1683 = vmatprep.subr.mxu0 0.0
      %1684 = vmatpush1.msra.mxu0 0.0
      %1685 = vmatprep.subr.mxu0 0.0
      %1686 = vmatpush1.msra.mxu0 0.0
      %1687 = vmatprep.subr.mxu0 0.0
      %1688 = vmatpush1.msra.mxu0 0.0
      %1689 = vmatprep.subr.mxu0 0.0
      %1690 = vmatpush1.msra.mxu0 0.0
      %1691 = vmatprep.subr.mxu0 0.0
      %1692 = vmatpush1.msra.mxu0 0.0
      %1693 = vmatprep.subr.mxu0 0.0
      %1694 = vmatpush1.msra.mxu0 0.0
      %1695 = vmatprep.subr.mxu0 0.0
      %1696 = vmatpush1.msra.mxu0 0.0
      %1697 = vmatprep.subr.mxu0 0.0
      %1698 = vmatpush1.msra.mxu0 0.0
      %1699 = vmatprep.subr.mxu0 0.0
      %1700 = vmatpush1.msra.mxu0 0.0
      %1701 = vmatprep.subr.mxu0 0.0
      %1702 = vmatpush1.msra.mxu0 0.0
      %1703 = vmatprep.subr.mxu0 0.0
      %1704 = vmatpush1.msra.mxu0 0.0
      %1705 = vmatprep.subr.mxu0 0.0
      %1706 = vmatpush1.msra.mxu0 0.0
      %1707 = vmatprep.subr.mxu0 0.0
      %1708 = vmatpush1.msra.mxu0 0.0
      %1709 = vmatprep.subr.mxu0 0.0
      %1710 = vmatpush1.msra.mxu0 0.0
      %1711 = vmatprep.subr.mxu0 0.0
      %1712 = vmatpush1.msra.mxu0 0.0
      %1713 = vmatprep.subr.mxu0 0.0
      %1714 = vmatpush1.msra.mxu0 0.0
      %1715 = vmatprep.subr.mxu0 0.0
      %1716 = vmatpush1.msra.mxu0 0.0
      %1717 = vmatprep.subr.mxu0 0.0
      %1718 = vmatpush1.msra.mxu0 0.0
      %1719 = vmatprep.subr.mxu0 0.0
      %1720 = vmatpush1.msra.mxu0 0.0
      %1721 = vmatprep.subr.mxu0 0.0
      %1722 = vmatpush1.msra.mxu0 0.0
      %1723 = vmatprep.subr.mxu0 0.0
      %1724 = vmatpush1.msra.mxu0 0.0
      %1725 = vmatprep.subr.mxu0 0.0
      %1726 = vmatpush1.msra.mxu0 0.0
      %1727 = vmatprep.subr.mxu0 0.0
      %1728 = vmatpush1.msra.mxu0 0.0
      %1729 = vmatprep.mubr.f32.mxu0 0.0
      %1730 = vmatmul.mubr.f32.gmra.mrb[0].mxu0 %v1642
      %v1731 = vpop.f32.mrb[0].mxu0
      %v1732 = vadd.f32 %v1603, %v1731
      %v1733 = vpop.f32.mrb[0].mxu0
      %1734 = vmatprep.mubr.f32.mxu0 0.0
      %1735 = vmatmul.mubr.f32.gmra.mrb[0].mxu0 %v1645
      %v1736 = vpop.f32.mrb[0].mxu0
      %v1737 = vadd.f32 %v1608, %v1736
      %v1738 = vpop.f32.mrb[0].mxu0
      %1739 = vmatprep.mubr.f32.mxu0 0.0
      %1740 = vmatmul.mubr.f32.gmra.mrb[0].mxu0 %v1648
      %v1741 = vpop.f32.mrb[0].mxu0
      %v1742 = vadd.f32 %v1613, %v1741
      %v1743 = vpop.f32.mrb[0].mxu0
      %1744 = vmatprep.mubr.f32.mxu0 0.0
      %1745 = vmatmul.mubr.f32.gmra.mrb[0].mxu0 %v1651
      %v1746 = vpop.f32.mrb[0].mxu0
      %v1747 = vadd.f32 %v1618, %v1746
      %v1748 = vpop.f32.mrb[0].mxu0
      %1749 = vmatprep.mubr.f32.mxu0 0.0
      %1750 = vmatmul.mubr.f32.gmra.mrb[0].mxu0 %v1654
      %v1751 = vpop.f32.mrb[0].mxu0
      %v1752 = vadd.f32 %v1623, %v1751
      %v1753 = vpop.f32.mrb[0].mxu0
      %1754 = vmatprep.mubr.f32.mxu0 0.0
      %1755 = vmatmul.mubr.f32.gmra.mrb[0].mxu0 %v1657
      %v1756 = vpop.f32.mrb[0].mxu0
      %v1757 = vadd.f32 %v1628, %v1756
      %v1758 = vpop.f32.mrb[0].mxu0
      %1759 = vmatprep.mubr.f32.mxu0 0.0
      %1760 = vmatmul.mubr.f32.gmra.mrb[0].mxu0 %v1660
      %v1761 = vpop.f32.mrb[0].mxu0
      %v1762 = vadd.f32 %v1633, %v1761
      %v1763 = vpop.f32.mrb[0].mxu0
      %1764 = vmatprep.mubr.f32.mxu0 0.0
      %1765 = vmatmul.mubr.f32.gmra.mrb[0].mxu0 %v1663
      %v1766 = vpop.f32.mrb[0].mxu0
      %v1767 = vadd.f32 %v1638, %v1766
      %v1768 = vpop.f32.mrb[0].mxu0
      %1769 = vdwg.mxu0
      %s1770 = scalar_lea.vmem %s4, 128
      %v1771 = vld [vmem:[%s1770] sm:$0xff]
      %v1772 = vld [vmem:[%s1770 + $0x8] sm:$0xff]
      %v1773 = vld [vmem:[%s1770 + $0x10] sm:$0xff]
      %v1774 = vld [vmem:[%s1770 + $0x18] sm:$0xff]
      %v1775 = vld [vmem:[%s1770 + $0x20] sm:$0xff]
      %v1776 = vld [vmem:[%s1770 + $0x28] sm:$0xff]
      %v1777 = vld [vmem:[%s1770 + $0x30] sm:$0xff]
      %v1778 = vld [vmem:[%s1770 + $0x38] sm:$0xff]
      %v1780 = vsel %vm652, %v1217, 0
      %v1783 = vsel %vm652, %v1222, 0
      %v1786 = vsel %vm652, %v1227, 0
      %v1789 = vsel %vm652, %v1232, 0
      %v1792 = vsel %vm652, %v1237, 0
      %v1795 = vsel %vm652, %v1242, 0
      %v1798 = vsel %vm652, %v1247, 0
      %v1801 = vsel %vm652, %v1252, 0
      %1803 = vmatprep.subr.mxu0 0.0
      %1804 = vmatpush1.msra.mxu0 %v1771
      %1805 = vmatprep.subr.mxu0 0.0
      %1806 = vmatpush1.msra.mxu0 %v1772
      %1807 = vmatprep.subr.mxu0 0.0
      %1808 = vmatpush1.msra.mxu0 %v1773
      %1809 = vmatprep.subr.mxu0 0.0
      %1810 = vmatpush1.msra.mxu0 %v1774
      %1811 = vmatprep.subr.mxu0 0.0
      %1812 = vmatpush1.msra.mxu0 %v1775
      %1813 = vmatprep.subr.mxu0 0.0
      %1814 = vmatpush1.msra.mxu0 %v1776
      %1815 = vmatprep.subr.mxu0 0.0
      %1816 = vmatpush1.msra.mxu0 %v1777
      %1817 = vmatprep.subr.mxu0 0.0
      %1818 = vmatpush1.msra.mxu0 %v1778
      %1819 = vmatprep.subr.mxu0 0.0
      %1820 = vmatpush1.msra.mxu0 0.0
      %1821 = vmatprep.subr.mxu0 0.0
      %1822 = vmatpush1.msra.mxu0 0.0
      %1823 = vmatprep.subr.mxu0 0.0
      %1824 = vmatpush1.msra.mxu0 0.0
      %1825 = vmatprep.subr.mxu0 0.0
      %1826 = vmatpush1.msra.mxu0 0.0
      %1827 = vmatprep.subr.mxu0 0.0
      %1828 = vmatpush1.msra.mxu0 0.0
      %1829 = vmatprep.subr.mxu0 0.0
      %1830 = vmatpush1.msra.mxu0 0.0
      %1831 = vmatprep.subr.mxu0 0.0
      %1832 = vmatpush1.msra.mxu0 0.0
      %1833 = vmatprep.subr.mxu0 0.0
      %1834 = vmatpush1.msra.mxu0 0.0
      %1835 = vmatprep.subr.mxu0 0.0
      %1836 = vmatpush1.msra.mxu0 0.0
      %1837 = vmatprep.subr.mxu0 0.0
      %1838 = vmatpush1.msra.mxu0 0.0
      %1839 = vmatprep.subr.mxu0 0.0
      %1840 = vmatpush1.msra.mxu0 0.0
      %1841 = vmatprep.subr.mxu0 0.0
      %1842 = vmatpush1.msra.mxu0 0.0
      %1843 = vmatprep.subr.mxu0 0.0
      %1844 = vmatpush1.msra.mxu0 0.0
      %1845 = vmatprep.subr.mxu0 0.0
      %1846 = vmatpush1.msra.mxu0 0.0
      %1847 = vmatprep.subr.mxu0 0.0
      %1848 = vmatpush1.msra.mxu0 0.0
      %1849 = vmatprep.subr.mxu0 0.0
      %1850 = vmatpush1.msra.mxu0 0.0
      %1851 = vmatprep.subr.mxu0 0.0
      %1852 = vmatpush1.msra.mxu0 0.0
      %1853 = vmatprep.subr.mxu0 0.0
      %1854 = vmatpush1.msra.mxu0 0.0
      %1855 = vmatprep.subr.mxu0 0.0
      %1856 = vmatpush1.msra.mxu0 0.0
      %1857 = vmatprep.subr.mxu0 0.0
      %1858 = vmatpush1.msra.mxu0 0.0
      %1859 = vmatprep.subr.mxu0 0.0
      %1860 = vmatpush1.msra.mxu0 0.0
      %1861 = vmatprep.subr.mxu0 0.0
      %1862 = vmatpush1.msra.mxu0 0.0
      %1863 = vmatprep.subr.mxu0 0.0
      %1864 = vmatpush1.msra.mxu0 0.0
      %1865 = vmatprep.subr.mxu0 0.0
      %1866 = vmatpush1.msra.mxu0 0.0
      %1867 = vmatprep.mubr.f32.mxu0 0.0
      %1868 = vmatmul.mubr.f32.gmra.mrb[0].mxu0 %v1780
      %v1869 = vpop.f32.mrb[0].mxu0
      %v1870 = vadd.f32 0.0, %v1869
      %v1871 = vpop.f32.mrb[0].mxu0
      %1872 = vmatprep.mubr.f32.mxu0 0.0
      %1873 = vmatmul.mubr.f32.gmra.mrb[0].mxu0 %v1783
      %v1874 = vpop.f32.mrb[0].mxu0
      %v1875 = vadd.f32 0.0, %v1874
      %v1876 = vpop.f32.mrb[0].mxu0
      %1877 = vmatprep.mubr.f32.mxu0 0.0
      %1878 = vmatmul.mubr.f32.gmra.mrb[0].mxu0 %v1786
      %v1879 = vpop.f32.mrb[0].mxu0
      %v1880 = vadd.f32 0.0, %v1879
      %v1881 = vpop.f32.mrb[0].mxu0
      %1882 = vmatprep.mubr.f32.mxu0 0.0
      %1883 = vmatmul.mubr.f32.gmra.mrb[0].mxu0 %v1789
      %v1884 = vpop.f32.mrb[0].mxu0
      %v1885 = vadd.f32 0.0, %v1884
      %v1886 = vpop.f32.mrb[0].mxu0
      %1887 = vmatprep.mubr.f32.mxu0 0.0
      %1888 = vmatmul.mubr.f32.gmra.mrb[0].mxu0 %v1792
      %v1889 = vpop.f32.mrb[0].mxu0
      %v1890 = vadd.f32 0.0, %v1889
      %v1891 = vpop.f32.mrb[0].mxu0
      %1892 = vmatprep.mubr.f32.mxu0 0.0
      %1893 = vmatmul.mubr.f32.gmra.mrb[0].mxu0 %v1795
      %v1894 = vpop.f32.mrb[0].mxu0
      %v1895 = vadd.f32 0.0, %v1894
      %v1896 = vpop.f32.mrb[0].mxu0
      %1897 = vmatprep.mubr.f32.mxu0 0.0
      %1898 = vmatmul.mubr.f32.gmra.mrb[0].mxu0 %v1798
      %v1899 = vpop.f32.mrb[0].mxu0
      %v1900 = vadd.f32 0.0, %v1899
      %v1901 = vpop.f32.mrb[0].mxu0
      %1902 = vmatprep.mubr.f32.mxu0 0.0
      %1903 = vmatmul.mubr.f32.gmra.mrb[0].mxu0 %v1801
      %v1904 = vpop.f32.mrb[0].mxu0
      %v1905 = vadd.f32 0.0, %v1904
      %v1906 = vpop.f32.mrb[0].mxu0
      %1907 = vdwg.mxu0
      %v1908 = vadd.f32 %v1732, %v1870
      %v1909 = vadd.f32 %v1737, %v1875
      %v1910 = vadd.f32 %v1742, %v1880
      %v1911 = vadd.f32 %v1747, %v1885
      %v1912 = vadd.f32 %v1752, %v1890
      %v1913 = vadd.f32 %v1757, %v1895
      %v1914 = vadd.f32 %v1762, %v1900
      %v1915 = vadd.f32 %v1767, %v1905
      %s1916 = scalar_lea.vmem %s4, 192
      %v1917 = vld [vmem:[%s1916] sm:$0xff]
      %v1918 = vld [vmem:[%s1916 + $0x8] sm:$0xff]
      %v1919 = vld [vmem:[%s1916 + $0x10] sm:$0xff]
      %v1920 = vld [vmem:[%s1916 + $0x18] sm:$0xff]
      %v1921 = vld [vmem:[%s1916 + $0x20] sm:$0xff]
      %v1922 = vld [vmem:[%s1916 + $0x28] sm:$0xff]
      %v1923 = vld [vmem:[%s1916 + $0x30] sm:$0xff]
      %v1924 = vld [vmem:[%s1916 + $0x38] sm:$0xff]
      %v1926 = vsel %vm652, %v1257, 0
      %v1929 = vsel %vm652, %v1262, 0
      %v1932 = vsel %vm652, %v1267, 0
      %v1935 = vsel %vm652, %v1272, 0
      %v1938 = vsel %vm652, %v1277, 0
      %v1941 = vsel %vm652, %v1282, 0
      %v1944 = vsel %vm652, %v1287, 0
      %v1947 = vsel %vm652, %v1292, 0
      %1949 = vmatprep.subr.mxu0 0.0
      %1950 = vmatpush1.msra.mxu0 %v1917
      %1951 = vmatprep.subr.mxu0 0.0
      %1952 = vmatpush1.msra.mxu0 %v1918
      %1953 = vmatprep.subr.mxu0 0.0
      %1954 = vmatpush1.msra.mxu0 %v1919
      %1955 = vmatprep.subr.mxu0 0.0
      %1956 = vmatpush1.msra.mxu0 %v1920
      %1957 = vmatprep.subr.mxu0 0.0
      %1958 = vmatpush1.msra.mxu0 %v1921
      %1959 = vmatprep.subr.mxu0 0.0
      %1960 = vmatpush1.msra.mxu0 %v1922
      %1961 = vmatprep.subr.mxu0 0.0
      %1962 = vmatpush1.msra.mxu0 %v1923
      %1963 = vmatprep.subr.mxu0 0.0
      %1964 = vmatpush1.msra.mxu0 %v1924
      %1965 = vmatprep.subr.mxu0 0.0
      %1966 = vmatpush1.msra.mxu0 0.0
      %1967 = vmatprep.subr.mxu0 0.0
      %1968 = vmatpush1.msra.mxu0 0.0
      %1969 = vmatprep.subr.mxu0 0.0
      %1970 = vmatpush1.msra.mxu0 0.0
      %1971 = vmatprep.subr.mxu0 0.0
      %1972 = vmatpush1.msra.mxu0 0.0
      %1973 = vmatprep.subr.mxu0 0.0
      %1974 = vmatpush1.msra.mxu0 0.0
      %1975 = vmatprep.subr.mxu0 0.0
      %1976 = vmatpush1.msra.mxu0 0.0
      %1977 = vmatprep.subr.mxu0 0.0
      %1978 = vmatpush1.msra.mxu0 0.0
      %1979 = vmatprep.subr.mxu0 0.0
      %1980 = vmatpush1.msra.mxu0 0.0
      %1981 = vmatprep.subr.mxu0 0.0
      %1982 = vmatpush1.msra.mxu0 0.0
      %1983 = vmatprep.subr.mxu0 0.0
      %1984 = vmatpush1.msra.mxu0 0.0
      %1985 = vmatprep.subr.mxu0 0.0
      %1986 = vmatpush1.msra.mxu0 0.0
      %1987 = vmatprep.subr.mxu0 0.0
      %1988 = vmatpush1.msra.mxu0 0.0
      %1989 = vmatprep.subr.mxu0 0.0
      %1990 = vmatpush1.msra.mxu0 0.0
      %1991 = vmatprep.subr.mxu0 0.0
      %1992 = vmatpush1.msra.mxu0 0.0
      %1993 = vmatprep.subr.mxu0 0.0
      %1994 = vmatpush1.msra.mxu0 0.0
      %1995 = vmatprep.subr.mxu0 0.0
      %1996 = vmatpush1.msra.mxu0 0.0
      %1997 = vmatprep.subr.mxu0 0.0
      %1998 = vmatpush1.msra.mxu0 0.0
      %1999 = vmatprep.subr.mxu0 0.0
      %2000 = vmatpush1.msra.mxu0 0.0
      %2001 = vmatprep.subr.mxu0 0.0
      %2002 = vmatpush1.msra.mxu0 0.0
      %2003 = vmatprep.subr.mxu0 0.0
      %2004 = vmatpush1.msra.mxu0 0.0
      %2005 = vmatprep.subr.mxu0 0.0
      %2006 = vmatpush1.msra.mxu0 0.0
      %2007 = vmatprep.subr.mxu0 0.0
      %2008 = vmatpush1.msra.mxu0 0.0
      %2009 = vmatprep.subr.mxu0 0.0
      %2010 = vmatpush1.msra.mxu0 0.0
      %2011 = vmatprep.subr.mxu0 0.0
      %2012 = vmatpush1.msra.mxu0 0.0
      %2013 = vmatprep.mubr.f32.mxu0 0.0
      %2014 = vmatmul.mubr.f32.gmra.mrb[0].mxu0 %v1926
      %v2015 = vpop.f32.mrb[0].mxu0
      %v2016 = vadd.f32 0.0, %v2015
      %v2017 = vpop.f32.mrb[0].mxu0
      %2018 = vmatprep.mubr.f32.mxu0 0.0
      %2019 = vmatmul.mubr.f32.gmra.mrb[0].mxu0 %v1929
      %v2020 = vpop.f32.mrb[0].mxu0
      %v2021 = vadd.f32 0.0, %v2020
      %v2022 = vpop.f32.mrb[0].mxu0
      %2023 = vmatprep.mubr.f32.mxu0 0.0
      %2024 = vmatmul.mubr.f32.gmra.mrb[0].mxu0 %v1932
      %v2025 = vpop.f32.mrb[0].mxu0
      %v2026 = vadd.f32 0.0, %v2025
      %v2027 = vpop.f32.mrb[0].mxu0
      %2028 = vmatprep.mubr.f32.mxu0 0.0
      %2029 = vmatmul.mubr.f32.gmra.mrb[0].mxu0 %v1935
      %v2030 = vpop.f32.mrb[0].mxu0
      %v2031 = vadd.f32 0.0, %v2030
      %v2032 = vpop.f32.mrb[0].mxu0
      %2033 = vmatprep.mubr.f32.mxu0 0.0
      %2034 = vmatmul.mubr.f32.gmra.mrb[0].mxu0 %v1938
      %v2035 = vpop.f32.mrb[0].mxu0
      %v2036 = vadd.f32 0.0, %v2035
      %v2037 = vpop.f32.mrb[0].mxu0
      %2038 = vmatprep.mubr.f32.mxu0 0.0
      %2039 = vmatmul.mubr.f32.gmra.mrb[0].mxu0 %v1941
      %v2040 = vpop.f32.mrb[0].mxu0
      %v2041 = vadd.f32 0.0, %v2040
      %v2042 = vpop.f32.mrb[0].mxu0
      %2043 = vmatprep.mubr.f32.mxu0 0.0
      %2044 = vmatmul.mubr.f32.gmra.mrb[0].mxu0 %v1944
      %v2045 = vpop.f32.mrb[0].mxu0
      %v2046 = vadd.f32 0.0, %v2045
      %v2047 = vpop.f32.mrb[0].mxu0
      %2048 = vmatprep.mubr.f32.mxu0 0.0
      %2049 = vmatmul.mubr.f32.gmra.mrb[0].mxu0 %v1947
      %v2050 = vpop.f32.mrb[0].mxu0
      %v2051 = vadd.f32 0.0, %v2050
      %v2052 = vpop.f32.mrb[0].mxu0
      %2053 = vdwg.mxu0
      %v2054 = vadd.f32 %v1908, %v2016
      %v2055 = vadd.f32 %v1909, %v2021
      %v2056 = vadd.f32 %v1910, %v2026
      %v2057 = vadd.f32 %v1911, %v2031
      %v2058 = vadd.f32 %v1912, %v2036
      %v2059 = vadd.f32 %v1913, %v2041
      %v2060 = vadd.f32 %v1914, %v2046
      %v2061 = vadd.f32 %v1915, %v2051
      %s2062 = scalar_lea.vmem %s4, 256
      %v2063 = vld [vmem:[%s2062] sm:$0xff]
      %v2064 = vld [vmem:[%s2062 + $0x8] sm:$0xff]
      %v2065 = vld [vmem:[%s2062 + $0x10] sm:$0xff]
      %v2066 = vld [vmem:[%s2062 + $0x18] sm:$0xff]
      %v2067 = vld [vmem:[%s2062 + $0x20] sm:$0xff]
      %v2068 = vld [vmem:[%s2062 + $0x28] sm:$0xff]
      %v2069 = vld [vmem:[%s2062 + $0x30] sm:$0xff]
      %v2070 = vld [vmem:[%s2062 + $0x38] sm:$0xff]
      %v2072 = vsel %vm652, %v1297, 0
      %v2075 = vsel %vm652, %v1302, 0
      %v2078 = vsel %vm652, %v1307, 0
      %v2081 = vsel %vm652, %v1312, 0
      %v2084 = vsel %vm652, %v1317, 0
      %v2087 = vsel %vm652, %v1322, 0
      %v2090 = vsel %vm652, %v1327, 0
      %v2093 = vsel %vm652, %v1332, 0
      %2095 = vmatprep.subr.mxu0 0.0
      %2096 = vmatpush1.msra.mxu0 %v2063
      %2097 = vmatprep.subr.mxu0 0.0
      %2098 = vmatpush1.msra.mxu0 %v2064
      %2099 = vmatprep.subr.mxu0 0.0
      %2100 = vmatpush1.msra.mxu0 %v2065
      %2101 = vmatprep.subr.mxu0 0.0
      %2102 = vmatpush1.msra.mxu0 %v2066
      %2103 = vmatprep.subr.mxu0 0.0
      %2104 = vmatpush1.msra.mxu0 %v2067
      %2105 = vmatprep.subr.mxu0 0.0
      %2106 = vmatpush1.msra.mxu0 %v2068
      %2107 = vmatprep.subr.mxu0 0.0
      %2108 = vmatpush1.msra.mxu0 %v2069
      %2109 = vmatprep.subr.mxu0 0.0
      %2110 = vmatpush1.msra.mxu0 %v2070
      %2111 = vmatprep.subr.mxu0 0.0
      %2112 = vmatpush1.msra.mxu0 0.0
      %2113 = vmatprep.subr.mxu0 0.0
      %2114 = vmatpush1.msra.mxu0 0.0
      %2115 = vmatprep.subr.mxu0 0.0
      %2116 = vmatpush1.msra.mxu0 0.0
      %2117 = vmatprep.subr.mxu0 0.0
      %2118 = vmatpush1.msra.mxu0 0.0
      %2119 = vmatprep.subr.mxu0 0.0
      %2120 = vmatpush1.msra.mxu0 0.0
      %2121 = vmatprep.subr.mxu0 0.0
      %2122 = vmatpush1.msra.mxu0 0.0
      %2123 = vmatprep.subr.mxu0 0.0
      %2124 = vmatpush1.msra.mxu0 0.0
      %2125 = vmatprep.subr.mxu0 0.0
      %2126 = vmatpush1.msra.mxu0 0.0
      %2127 = vmatprep.subr.mxu0 0.0
      %2128 = vmatpush1.msra.mxu0 0.0
      %2129 = vmatprep.subr.mxu0 0.0
      %2130 = vmatpush1.msra.mxu0 0.0
      %2131 = vmatprep.subr.mxu0 0.0
      %2132 = vmatpush1.msra.mxu0 0.0
      %2133 = vmatprep.subr.mxu0 0.0
      %2134 = vmatpush1.msra.mxu0 0.0
      %2135 = vmatprep.subr.mxu0 0.0
      %2136 = vmatpush1.msra.mxu0 0.0
      %2137 = vmatprep.subr.mxu0 0.0
      %2138 = vmatpush1.msra.mxu0 0.0
      %2139 = vmatprep.subr.mxu0 0.0
      %2140 = vmatpush1.msra.mxu0 0.0
      %2141 = vmatprep.subr.mxu0 0.0
      %2142 = vmatpush1.msra.mxu0 0.0
      %2143 = vmatprep.subr.mxu0 0.0
      %2144 = vmatpush1.msra.mxu0 0.0
      %2145 = vmatprep.subr.mxu0 0.0
      %2146 = vmatpush1.msra.mxu0 0.0
      %2147 = vmatprep.subr.mxu0 0.0
      %2148 = vmatpush1.msra.mxu0 0.0
      %2149 = vmatprep.subr.mxu0 0.0
      %2150 = vmatpush1.msra.mxu0 0.0
      %2151 = vmatprep.subr.mxu0 0.0
      %2152 = vmatpush1.msra.mxu0 0.0
      %2153 = vmatprep.subr.mxu0 0.0
      %2154 = vmatpush1.msra.mxu0 0.0
      %2155 = vmatprep.subr.mxu0 0.0
      %2156 = vmatpush1.msra.mxu0 0.0
      %2157 = vmatprep.subr.mxu0 0.0
      %2158 = vmatpush1.msra.mxu0 0.0
      %2159 = vmatprep.mubr.f32.mxu0 0.0
      %2160 = vmatmul.mubr.f32.gmra.mrb[0].mxu0 %v2072
      %v2161 = vpop.f32.mrb[0].mxu0
      %v2162 = vadd.f32 0.0, %v2161
      %v2163 = vpop.f32.mrb[0].mxu0
      %2164 = vmatprep.mubr.f32.mxu0 0.0
      %2165 = vmatmul.mubr.f32.gmra.mrb[0].mxu0 %v2075
      %v2166 = vpop.f32.mrb[0].mxu0
      %v2167 = vadd.f32 0.0, %v2166
      %v2168 = vpop.f32.mrb[0].mxu0
      %2169 = vmatprep.mubr.f32.mxu0 0.0
      %2170 = vmatmul.mubr.f32.gmra.mrb[0].mxu0 %v2078
      %v2171 = vpop.f32.mrb[0].mxu0
      %v2172 = vadd.f32 0.0, %v2171
      %v2173 = vpop.f32.mrb[0].mxu0
      %2174 = vmatprep.mubr.f32.mxu0 0.0
      %2175 = vmatmul.mubr.f32.gmra.mrb[0].mxu0 %v2081
      %v2176 = vpop.f32.mrb[0].mxu0
      %v2177 = vadd.f32 0.0, %v2176
      %v2178 = vpop.f32.mrb[0].mxu0
      %2179 = vmatprep.mubr.f32.mxu0 0.0
      %2180 = vmatmul.mubr.f32.gmra.mrb[0].mxu0 %v2084
      %v2181 = vpop.f32.mrb[0].mxu0
      %v2182 = vadd.f32 0.0, %v2181
      %v2183 = vpop.f32.mrb[0].mxu0
      %2184 = vmatprep.mubr.f32.mxu0 0.0
      %2185 = vmatmul.mubr.f32.gmra.mrb[0].mxu0 %v2087
      %v2186 = vpop.f32.mrb[0].mxu0
      %v2187 = vadd.f32 0.0, %v2186
      %v2188 = vpop.f32.mrb[0].mxu0
      %2189 = vmatprep.mubr.f32.mxu0 0.0
      %2190 = vmatmul.mubr.f32.gmra.mrb[0].mxu0 %v2090
      %v2191 = vpop.f32.mrb[0].mxu0
      %v2192 = vadd.f32 0.0, %v2191
      %v2193 = vpop.f32.mrb[0].mxu0
      %2194 = vmatprep.mubr.f32.mxu0 0.0
      %2195 = vmatmul.mubr.f32.gmra.mrb[0].mxu0 %v2093
      %v2196 = vpop.f32.mrb[0].mxu0
      %v2197 = vadd.f32 0.0, %v2196
      %v2198 = vpop.f32.mrb[0].mxu0
      %2199 = vdwg.mxu0
      %v2200 = vadd.f32 %v2054, %v2162
      %v2201 = vadd.f32 %v2055, %v2167
      %v2202 = vadd.f32 %v2056, %v2172
      %v2203 = vadd.f32 %v2057, %v2177
      %v2204 = vadd.f32 %v2058, %v2182
      %v2205 = vadd.f32 %v2059, %v2187
      %v2206 = vadd.f32 %v2060, %v2192
      %v2207 = vadd.f32 %v2061, %v2197
      %s2208 = scalar_lea.vmem %s4, 320
      %v2209 = vld [vmem:[%s2208] sm:$0xff]
      %v2210 = vld [vmem:[%s2208 + $0x8] sm:$0xff]
      %v2211 = vld [vmem:[%s2208 + $0x10] sm:$0xff]
      %v2212 = vld [vmem:[%s2208 + $0x18] sm:$0xff]
      %v2213 = vld [vmem:[%s2208 + $0x20] sm:$0xff]
      %v2214 = vld [vmem:[%s2208 + $0x28] sm:$0xff]
      %v2215 = vld [vmem:[%s2208 + $0x30] sm:$0xff]
      %v2216 = vld [vmem:[%s2208 + $0x38] sm:$0xff]
      %v2218 = vsel %vm652, %v1337, 0
      %v2221 = vsel %vm652, %v1342, 0
      %v2224 = vsel %vm652, %v1347, 0
      %v2227 = vsel %vm652, %v1352, 0
      %v2230 = vsel %vm652, %v1357, 0
      %v2233 = vsel %vm652, %v1362, 0
      %v2236 = vsel %vm652, %v1367, 0
      %v2239 = vsel %vm652, %v1372, 0
      %2241 = vmatprep.subr.mxu0 0.0
      %2242 = vmatpush1.msra.mxu0 %v2209
      %2243 = vmatprep.subr.mxu0 0.0
      %2244 = vmatpush1.msra.mxu0 %v2210
      %2245 = vmatprep.subr.mxu0 0.0
      %2246 = vmatpush1.msra.mxu0 %v2211
      %2247 = vmatprep.subr.mxu0 0.0
      %2248 = vmatpush1.msra.mxu0 %v2212
      %2249 = vmatprep.subr.mxu0 0.0
      %2250 = vmatpush1.msra.mxu0 %v2213
      %2251 = vmatprep.subr.mxu0 0.0
      %2252 = vmatpush1.msra.mxu0 %v2214
      %2253 = vmatprep.subr.mxu0 0.0
      %2254 = vmatpush1.msra.mxu0 %v2215
      %2255 = vmatprep.subr.mxu0 0.0
      %2256 = vmatpush1.msra.mxu0 %v2216
      %2257 = vmatprep.subr.mxu0 0.0
      %2258 = vmatpush1.msra.mxu0 0.0
      %2259 = vmatprep.subr.mxu0 0.0
      %2260 = vmatpush1.msra.mxu0 0.0
      %2261 = vmatprep.subr.mxu0 0.0
      %2262 = vmatpush1.msra.mxu0 0.0
      %2263 = vmatprep.subr.mxu0 0.0
      %2264 = vmatpush1.msra.mxu0 0.0
      %2265 = vmatprep.subr.mxu0 0.0
      %2266 = vmatpush1.msra.mxu0 0.0
      %2267 = vmatprep.subr.mxu0 0.0
      %2268 = vmatpush1.msra.mxu0 0.0
      %2269 = vmatprep.subr.mxu0 0.0
      %2270 = vmatpush1.msra.mxu0 0.0
      %2271 = vmatprep.subr.mxu0 0.0
      %2272 = vmatpush1.msra.mxu0 0.0
      %2273 = vmatprep.subr.mxu0 0.0
      %2274 = vmatpush1.msra.mxu0 0.0
      %2275 = vmatprep.subr.mxu0 0.0
      %2276 = vmatpush1.msra.mxu0 0.0
      %2277 = vmatprep.subr.mxu0 0.0
      %2278 = vmatpush1.msra.mxu0 0.0
      %2279 = vmatprep.subr.mxu0 0.0
      %2280 = vmatpush1.msra.mxu0 0.0
      %2281 = vmatprep.subr.mxu0 0.0
      %2282 = vmatpush1.msra.mxu0 0.0
      %2283 = vmatprep.subr.mxu0 0.0
      %2284 = vmatpush1.msra.mxu0 0.0
      %2285 = vmatprep.subr.mxu0 0.0
      %2286 = vmatpush1.msra.mxu0 0.0
      %2287 = vmatprep.subr.mxu0 0.0
      %2288 = vmatpush1.msra.mxu0 0.0
      %2289 = vmatprep.subr.mxu0 0.0
      %2290 = vmatpush1.msra.mxu0 0.0
      %2291 = vmatprep.subr.mxu0 0.0
      %2292 = vmatpush1.msra.mxu0 0.0
      %2293 = vmatprep.subr.mxu0 0.0
      %2294 = vmatpush1.msra.mxu0 0.0
      %2295 = vmatprep.subr.mxu0 0.0
      %2296 = vmatpush1.msra.mxu0 0.0
      %2297 = vmatprep.subr.mxu0 0.0
      %2298 = vmatpush1.msra.mxu0 0.0
      %2299 = vmatprep.subr.mxu0 0.0
      %2300 = vmatpush1.msra.mxu0 0.0
      %2301 = vmatprep.subr.mxu0 0.0
      %2302 = vmatpush1.msra.mxu0 0.0
      %2303 = vmatprep.subr.mxu0 0.0
      %2304 = vmatpush1.msra.mxu0 0.0
      %2305 = vmatprep.mubr.f32.mxu0 0.0
      %2306 = vmatmul.mubr.f32.gmra.mrb[0].mxu0 %v2218
      %v2307 = vpop.f32.mrb[0].mxu0
      %v2308 = vadd.f32 0.0, %v2307
      %v2309 = vpop.f32.mrb[0].mxu0
      %2310 = vmatprep.mubr.f32.mxu0 0.0
      %2311 = vmatmul.mubr.f32.gmra.mrb[0].mxu0 %v2221
      %v2312 = vpop.f32.mrb[0].mxu0
      %v2313 = vadd.f32 0.0, %v2312
      %v2314 = vpop.f32.mrb[0].mxu0
      %2315 = vmatprep.mubr.f32.mxu0 0.0
      %2316 = vmatmul.mubr.f32.gmra.mrb[0].mxu0 %v2224
      %v2317 = vpop.f32.mrb[0].mxu0
      %v2318 = vadd.f32 0.0, %v2317
      %v2319 = vpop.f32.mrb[0].mxu0
      %2320 = vmatprep.mubr.f32.mxu0 0.0
      %2321 = vmatmul.mubr.f32.gmra.mrb[0].mxu0 %v2227
      %v2322 = vpop.f32.mrb[0].mxu0
      %v2323 = vadd.f32 0.0, %v2322
      %v2324 = vpop.f32.mrb[0].mxu0
      %2325 = vmatprep.mubr.f32.mxu0 0.0
      %2326 = vmatmul.mubr.f32.gmra.mrb[0].mxu0 %v2230
      %v2327 = vpop.f32.mrb[0].mxu0
      %v2328 = vadd.f32 0.0, %v2327
      %v2329 = vpop.f32.mrb[0].mxu0
      %2330 = vmatprep.mubr.f32.mxu0 0.0
      %2331 = vmatmul.mubr.f32.gmra.mrb[0].mxu0 %v2233
      %v2332 = vpop.f32.mrb[0].mxu0
      %v2333 = vadd.f32 0.0, %v2332
      %v2334 = vpop.f32.mrb[0].mxu0
      %2335 = vmatprep.mubr.f32.mxu0 0.0
      %2336 = vmatmul.mubr.f32.gmra.mrb[0].mxu0 %v2236
      %v2337 = vpop.f32.mrb[0].mxu0
      %v2338 = vadd.f32 0.0, %v2337
      %v2339 = vpop.f32.mrb[0].mxu0
      %2340 = vmatprep.mubr.f32.mxu0 0.0
      %2341 = vmatmul.mubr.f32.gmra.mrb[0].mxu0 %v2239
      %v2342 = vpop.f32.mrb[0].mxu0
      %v2343 = vadd.f32 0.0, %v2342
      %v2344 = vpop.f32.mrb[0].mxu0
      %2345 = vdwg.mxu0
      %v2346 = vadd.f32 %v2200, %v2308
      %v2347 = vadd.f32 %v2201, %v2313
      %v2348 = vadd.f32 %v2202, %v2318
      %v2349 = vadd.f32 %v2203, %v2323
      %v2350 = vadd.f32 %v2204, %v2328
      %v2351 = vadd.f32 %v2205, %v2333
      %v2352 = vadd.f32 %v2206, %v2338
      %v2353 = vadd.f32 %v2207, %v2343
      %s2354 = scalar_lea.vmem %s4, 384
      %v2355 = vld [vmem:[%s2354] sm:$0xff]
      %v2356 = vld [vmem:[%s2354 + $0x8] sm:$0xff]
      %v2357 = vld [vmem:[%s2354 + $0x10] sm:$0xff]
      %v2358 = vld [vmem:[%s2354 + $0x18] sm:$0xff]
      %v2359 = vld [vmem:[%s2354 + $0x20] sm:$0xff]
      %v2360 = vld [vmem:[%s2354 + $0x28] sm:$0xff]
      %v2361 = vld [vmem:[%s2354 + $0x30] sm:$0xff]
      %v2362 = vld [vmem:[%s2354 + $0x38] sm:$0xff]
      %v2364 = vsel %vm652, %v1377, 0
      %v2367 = vsel %vm652, %v1382, 0
      %v2370 = vsel %vm652, %v1387, 0
      %v2373 = vsel %vm652, %v1392, 0
      %v2376 = vsel %vm652, %v1397, 0
      %v2379 = vsel %vm652, %v1402, 0
      %v2382 = vsel %vm652, %v1407, 0
      %v2385 = vsel %vm652, %v1412, 0
      %2387 = vmatprep.subr.mxu0 0.0
      %2388 = vmatpush1.msra.mxu0 %v2355
      %2389 = vmatprep.subr.mxu0 0.0
      %2390 = vmatpush1.msra.mxu0 %v2356
      %2391 = vmatprep.subr.mxu0 0.0
      %2392 = vmatpush1.msra.mxu0 %v2357
      %2393 = vmatprep.subr.mxu0 0.0
      %2394 = vmatpush1.msra.mxu0 %v2358
      %2395 = vmatprep.subr.mxu0 0.0
      %2396 = vmatpush1.msra.mxu0 %v2359
      %2397 = vmatprep.subr.mxu0 0.0
      %2398 = vmatpush1.msra.mxu0 %v2360
      %2399 = vmatprep.subr.mxu0 0.0
      %2400 = vmatpush1.msra.mxu0 %v2361
      %2401 = vmatprep.subr.mxu0 0.0
      %2402 = vmatpush1.msra.mxu0 %v2362
      %2403 = vmatprep.subr.mxu0 0.0
      %2404 = vmatpush1.msra.mxu0 0.0
      %2405 = vmatprep.subr.mxu0 0.0
      %2406 = vmatpush1.msra.mxu0 0.0
      %2407 = vmatprep.subr.mxu0 0.0
      %2408 = vmatpush1.msra.mxu0 0.0
      %2409 = vmatprep.subr.mxu0 0.0
      %2410 = vmatpush1.msra.mxu0 0.0
      %2411 = vmatprep.subr.mxu0 0.0
      %2412 = vmatpush1.msra.mxu0 0.0
      %2413 = vmatprep.subr.mxu0 0.0
      %2414 = vmatpush1.msra.mxu0 0.0
      %2415 = vmatprep.subr.mxu0 0.0
      %2416 = vmatpush1.msra.mxu0 0.0
      %2417 = vmatprep.subr.mxu0 0.0
      %2418 = vmatpush1.msra.mxu0 0.0
      %2419 = vmatprep.subr.mxu0 0.0
      %2420 = vmatpush1.msra.mxu0 0.0
      %2421 = vmatprep.subr.mxu0 0.0
      %2422 = vmatpush1.msra.mxu0 0.0
      %2423 = vmatprep.subr.mxu0 0.0
      %2424 = vmatpush1.msra.mxu0 0.0
      %2425 = vmatprep.subr.mxu0 0.0
      %2426 = vmatpush1.msra.mxu0 0.0
      %2427 = vmatprep.subr.mxu0 0.0
      %2428 = vmatpush1.msra.mxu0 0.0
      %2429 = vmatprep.subr.mxu0 0.0
      %2430 = vmatpush1.msra.mxu0 0.0
      %2431 = vmatprep.subr.mxu0 0.0
      %2432 = vmatpush1.msra.mxu0 0.0
      %2433 = vmatprep.subr.mxu0 0.0
      %2434 = vmatpush1.msra.mxu0 0.0
      %2435 = vmatprep.subr.mxu0 0.0
      %2436 = vmatpush1.msra.mxu0 0.0
      %2437 = vmatprep.subr.mxu0 0.0
      %2438 = vmatpush1.msra.mxu0 0.0
      %2439 = vmatprep.subr.mxu0 0.0
      %2440 = vmatpush1.msra.mxu0 0.0
      %2441 = vmatprep.subr.mxu0 0.0
      %2442 = vmatpush1.msra.mxu0 0.0
      %2443 = vmatprep.subr.mxu0 0.0
      %2444 = vmatpush1.msra.mxu0 0.0
      %2445 = vmatprep.subr.mxu0 0.0
      %2446 = vmatpush1.msra.mxu0 0.0
      %2447 = vmatprep.subr.mxu0 0.0
      %2448 = vmatpush1.msra.mxu0 0.0
      %2449 = vmatprep.subr.mxu0 0.0
      %2450 = vmatpush1.msra.mxu0 0.0
      %2451 = vmatprep.mubr.f32.mxu0 0.0
      %2452 = vmatmul.mubr.f32.gmra.mrb[0].mxu0 %v2364
      %v2453 = vpop.f32.mrb[0].mxu0
      %v2454 = vadd.f32 0.0, %v2453
      %v2455 = vpop.f32.mrb[0].mxu0
      %2456 = vmatprep.mubr.f32.mxu0 0.0
      %2457 = vmatmul.mubr.f32.gmra.mrb[0].mxu0 %v2367
      %v2458 = vpop.f32.mrb[0].mxu0
      %v2459 = vadd.f32 0.0, %v2458
      %v2460 = vpop.f32.mrb[0].mxu0
      %2461 = vmatprep.mubr.f32.mxu0 0.0
      %2462 = vmatmul.mubr.f32.gmra.mrb[0].mxu0 %v2370
      %v2463 = vpop.f32.mrb[0].mxu0
      %v2464 = vadd.f32 0.0, %v2463
      %v2465 = vpop.f32.mrb[0].mxu0
      %2466 = vmatprep.mubr.f32.mxu0 0.0
      %2467 = vmatmul.mubr.f32.gmra.mrb[0].mxu0 %v2373
      %v2468 = vpop.f32.mrb[0].mxu0
      %v2469 = vadd.f32 0.0, %v2468
      %v2470 = vpop.f32.mrb[0].mxu0
      %2471 = vmatprep.mubr.f32.mxu0 0.0
      %2472 = vmatmul.mubr.f32.gmra.mrb[0].mxu0 %v2376
      %v2473 = vpop.f32.mrb[0].mxu0
      %v2474 = vadd.f32 0.0, %v2473
      %v2475 = vpop.f32.mrb[0].mxu0
      %2476 = vmatprep.mubr.f32.mxu0 0.0
      %2477 = vmatmul.mubr.f32.gmra.mrb[0].mxu0 %v2379
      %v2478 = vpop.f32.mrb[0].mxu0
      %v2479 = vadd.f32 0.0, %v2478
      %v2480 = vpop.f32.mrb[0].mxu0
      %2481 = vmatprep.mubr.f32.mxu0 0.0
      %2482 = vmatmul.mubr.f32.gmra.mrb[0].mxu0 %v2382
      %v2483 = vpop.f32.mrb[0].mxu0
      %v2484 = vadd.f32 0.0, %v2483
      %v2485 = vpop.f32.mrb[0].mxu0
      %2486 = vmatprep.mubr.f32.mxu0 0.0
      %2487 = vmatmul.mubr.f32.gmra.mrb[0].mxu0 %v2385
      %v2488 = vpop.f32.mrb[0].mxu0
      %v2489 = vadd.f32 0.0, %v2488
      %v2490 = vpop.f32.mrb[0].mxu0
      %2491 = vdwg.mxu0
      %v2492 = vadd.f32 %v2346, %v2454
      %v2493 = vadd.f32 %v2347, %v2459
      %v2494 = vadd.f32 %v2348, %v2464
      %v2495 = vadd.f32 %v2349, %v2469
      %v2496 = vadd.f32 %v2350, %v2474
      %v2497 = vadd.f32 %v2351, %v2479
      %v2498 = vadd.f32 %v2352, %v2484
      %v2499 = vadd.f32 %v2353, %v2489
      %s2500 = scalar_lea.vmem %s4, 448
      %v2501 = vld [vmem:[%s2500] sm:$0xff]
      %v2502 = vld [vmem:[%s2500 + $0x8] sm:$0xff]
      %v2503 = vld [vmem:[%s2500 + $0x10] sm:$0xff]
      %v2504 = vld [vmem:[%s2500 + $0x18] sm:$0xff]
      %v2505 = vld [vmem:[%s2500 + $0x20] sm:$0xff]
      %v2506 = vld [vmem:[%s2500 + $0x28] sm:$0xff]
      %v2507 = vld [vmem:[%s2500 + $0x30] sm:$0xff]
      %v2508 = vld [vmem:[%s2500 + $0x38] sm:$0xff]
      %v2510 = vsel %vm652, %v1417, 0
      %v2513 = vsel %vm652, %v1422, 0
      %v2516 = vsel %vm652, %v1427, 0
      %v2519 = vsel %vm652, %v1432, 0
      %v2522 = vsel %vm652, %v1437, 0
      %v2525 = vsel %vm652, %v1442, 0
      %v2528 = vsel %vm652, %v1447, 0
      %v2531 = vsel %vm652, %v1452, 0
      %2533 = vmatprep.subr.mxu0 0.0
      %2534 = vmatpush1.msra.mxu0 %v2501
      %2535 = vmatprep.subr.mxu0 0.0
      %2536 = vmatpush1.msra.mxu0 %v2502
      %2537 = vmatprep.subr.mxu0 0.0
      %2538 = vmatpush1.msra.mxu0 %v2503
      %2539 = vmatprep.subr.mxu0 0.0
      %2540 = vmatpush1.msra.mxu0 %v2504
      %2541 = vmatprep.subr.mxu0 0.0
      %2542 = vmatpush1.msra.mxu0 %v2505
      %2543 = vmatprep.subr.mxu0 0.0
      %2544 = vmatpush1.msra.mxu0 %v2506
      %2545 = vmatprep.subr.mxu0 0.0
      %2546 = vmatpush1.msra.mxu0 %v2507
      %2547 = vmatprep.subr.mxu0 0.0
      %2548 = vmatpush1.msra.mxu0 %v2508
      %2549 = vmatprep.subr.mxu0 0.0
      %2550 = vmatpush1.msra.mxu0 0.0
      %2551 = vmatprep.subr.mxu0 0.0
      %2552 = vmatpush1.msra.mxu0 0.0
      %2553 = vmatprep.subr.mxu0 0.0
      %2554 = vmatpush1.msra.mxu0 0.0
      %2555 = vmatprep.subr.mxu0 0.0
      %2556 = vmatpush1.msra.mxu0 0.0
      %2557 = vmatprep.subr.mxu0 0.0
      %2558 = vmatpush1.msra.mxu0 0.0
      %2559 = vmatprep.subr.mxu0 0.0
      %2560 = vmatpush1.msra.mxu0 0.0
      %2561 = vmatprep.subr.mxu0 0.0
      %2562 = vmatpush1.msra.mxu0 0.0
      %2563 = vmatprep.subr.mxu0 0.0
      %2564 = vmatpush1.msra.mxu0 0.0
      %2565 = vmatprep.subr.mxu0 0.0
      %2566 = vmatpush1.msra.mxu0 0.0
      %2567 = vmatprep.subr.mxu0 0.0
      %2568 = vmatpush1.msra.mxu0 0.0
      %2569 = vmatprep.subr.mxu0 0.0
      %2570 = vmatpush1.msra.mxu0 0.0
      %2571 = vmatprep.subr.mxu0 0.0
      %2572 = vmatpush1.msra.mxu0 0.0
      %2573 = vmatprep.subr.mxu0 0.0
      %2574 = vmatpush1.msra.mxu0 0.0
      %2575 = vmatprep.subr.mxu0 0.0
      %2576 = vmatpush1.msra.mxu0 0.0
      %2577 = vmatprep.subr.mxu0 0.0
      %2578 = vmatpush1.msra.mxu0 0.0
      %2579 = vmatprep.subr.mxu0 0.0
      %2580 = vmatpush1.msra.mxu0 0.0
      %2581 = vmatprep.subr.mxu0 0.0
      %2582 = vmatpush1.msra.mxu0 0.0
      %2583 = vmatprep.subr.mxu0 0.0
      %2584 = vmatpush1.msra.mxu0 0.0
      %2585 = vmatprep.subr.mxu0 0.0
      %2586 = vmatpush1.msra.mxu0 0.0
      %2587 = vmatprep.subr.mxu0 0.0
      %2588 = vmatpush1.msra.mxu0 0.0
      %2589 = vmatprep.subr.mxu0 0.0
      %2590 = vmatpush1.msra.mxu0 0.0
      %2591 = vmatprep.subr.mxu0 0.0
      %2592 = vmatpush1.msra.mxu0 0.0
      %2593 = vmatprep.subr.mxu0 0.0
      %2594 = vmatpush1.msra.mxu0 0.0
      %2595 = vmatprep.subr.mxu0 0.0
      %2596 = vmatpush1.msra.mxu0 0.0
      %2597 = vmatprep.mubr.f32.mxu0 0.0
      %2598 = vmatmul.mubr.f32.gmra.mrb[0].mxu0 %v2510
      %v2599 = vpop.f32.mrb[0].mxu0
      %v2600 = vadd.f32 0.0, %v2599
      %v2601 = vpop.f32.mrb[0].mxu0
      %2602 = vmatprep.mubr.f32.mxu0 0.0
      %2603 = vmatmul.mubr.f32.gmra.mrb[0].mxu0 %v2513
      %v2604 = vpop.f32.mrb[0].mxu0
      %v2605 = vadd.f32 0.0, %v2604
      %v2606 = vpop.f32.mrb[0].mxu0
      %2607 = vmatprep.mubr.f32.mxu0 0.0
      %2608 = vmatmul.mubr.f32.gmra.mrb[0].mxu0 %v2516
      %v2609 = vpop.f32.mrb[0].mxu0
      %v2610 = vadd.f32 0.0, %v2609
      %v2611 = vpop.f32.mrb[0].mxu0
      %2612 = vmatprep.mubr.f32.mxu0 0.0
      %2613 = vmatmul.mubr.f32.gmra.mrb[0].mxu0 %v2519
      %v2614 = vpop.f32.mrb[0].mxu0
      %v2615 = vadd.f32 0.0, %v2614
      %v2616 = vpop.f32.mrb[0].mxu0
      %2617 = vmatprep.mubr.f32.mxu0 0.0
      %2618 = vmatmul.mubr.f32.gmra.mrb[0].mxu0 %v2522
      %v2619 = vpop.f32.mrb[0].mxu0
      %v2620 = vadd.f32 0.0, %v2619
      %v2621 = vpop.f32.mrb[0].mxu0
      %2622 = vmatprep.mubr.f32.mxu0 0.0
      %2623 = vmatmul.mubr.f32.gmra.mrb[0].mxu0 %v2525
      %v2624 = vpop.f32.mrb[0].mxu0
      %v2625 = vadd.f32 0.0, %v2624
      %v2626 = vpop.f32.mrb[0].mxu0
      %2627 = vmatprep.mubr.f32.mxu0 0.0
      %2628 = vmatmul.mubr.f32.gmra.mrb[0].mxu0 %v2528
      %v2629 = vpop.f32.mrb[0].mxu0
      %v2630 = vadd.f32 0.0, %v2629
      %v2631 = vpop.f32.mrb[0].mxu0
      %2632 = vmatprep.mubr.f32.mxu0 0.0
      %2633 = vmatmul.mubr.f32.gmra.mrb[0].mxu0 %v2531
      %v2634 = vpop.f32.mrb[0].mxu0
      %v2635 = vadd.f32 0.0, %v2634
      %v2636 = vpop.f32.mrb[0].mxu0
      %2637 = vdwg.mxu0
      %v2638 = vadd.f32 %v2492, %v2600
      %v2639 = vadd.f32 %v2493, %v2605
      %v2640 = vadd.f32 %v2494, %v2610
      %v2641 = vadd.f32 %v2495, %v2615
      %v2642 = vadd.f32 %v2496, %v2620
      %v2643 = vadd.f32 %v2497, %v2625
      %v2644 = vadd.f32 %v2498, %v2630
      %v2645 = vadd.f32 %v2499, %v2635
      %s2646 = scalar_lea.vmem %s4, 512
      %v2647 = vld [vmem:[%s2646] sm:$0xff]
      %v2648 = vld [vmem:[%s2646 + $0x8] sm:$0xff]
      %v2649 = vld [vmem:[%s2646 + $0x10] sm:$0xff]
      %v2650 = vld [vmem:[%s2646 + $0x18] sm:$0xff]
      %v2651 = vld [vmem:[%s2646 + $0x20] sm:$0xff]
      %v2652 = vld [vmem:[%s2646 + $0x28] sm:$0xff]
      %v2653 = vld [vmem:[%s2646 + $0x30] sm:$0xff]
      %v2654 = vld [vmem:[%s2646 + $0x38] sm:$0xff]
      %v2656 = vsel %vm652, %v1457, 0
      %v2659 = vsel %vm652, %v1462, 0
      %v2662 = vsel %vm652, %v1467, 0
      %v2665 = vsel %vm652, %v1472, 0
      %v2668 = vsel %vm652, %v1477, 0
      %v2671 = vsel %vm652, %v1482, 0
      %v2674 = vsel %vm652, %v1487, 0
      %v2677 = vsel %vm652, %v1492, 0
      %2679 = vmatprep.subr.mxu0 0.0
      %2680 = vmatpush1.msra.mxu0 %v2647
      %2681 = vmatprep.subr.mxu0 0.0
      %2682 = vmatpush1.msra.mxu0 %v2648
      %2683 = vmatprep.subr.mxu0 0.0
      %2684 = vmatpush1.msra.mxu0 %v2649
      %2685 = vmatprep.subr.mxu0 0.0
      %2686 = vmatpush1.msra.mxu0 %v2650
      %2687 = vmatprep.subr.mxu0 0.0
      %2688 = vmatpush1.msra.mxu0 %v2651
      %2689 = vmatprep.subr.mxu0 0.0
      %2690 = vmatpush1.msra.mxu0 %v2652
      %2691 = vmatprep.subr.mxu0 0.0
      %2692 = vmatpush1.msra.mxu0 %v2653
      %2693 = vmatprep.subr.mxu0 0.0
      %2694 = vmatpush1.msra.mxu0 %v2654
      %2695 = vmatprep.subr.mxu0 0.0
      %2696 = vmatpush1.msra.mxu0 0.0
      %2697 = vmatprep.subr.mxu0 0.0
      %2698 = vmatpush1.msra.mxu0 0.0
      %2699 = vmatprep.subr.mxu0 0.0
      %2700 = vmatpush1.msra.mxu0 0.0
      %2701 = vmatprep.subr.mxu0 0.0
      %2702 = vmatpush1.msra.mxu0 0.0
      %2703 = vmatprep.subr.mxu0 0.0
      %2704 = vmatpush1.msra.mxu0 0.0
      %2705 = vmatprep.subr.mxu0 0.0
      %2706 = vmatpush1.msra.mxu0 0.0
      %2707 = vmatprep.subr.mxu0 0.0
      %2708 = vmatpush1.msra.mxu0 0.0
      %2709 = vmatprep.subr.mxu0 0.0
      %2710 = vmatpush1.msra.mxu0 0.0
      %2711 = vmatprep.subr.mxu0 0.0
      %2712 = vmatpush1.msra.mxu0 0.0
      %2713 = vmatprep.subr.mxu0 0.0
      %2714 = vmatpush1.msra.mxu0 0.0
      %2715 = vmatprep.subr.mxu0 0.0
      %2716 = vmatpush1.msra.mxu0 0.0
      %2717 = vmatprep.subr.mxu0 0.0
      %2718 = vmatpush1.msra.mxu0 0.0
      %2719 = vmatprep.subr.mxu0 0.0
      %2720 = vmatpush1.msra.mxu0 0.0
      %2721 = vmatprep.subr.mxu0 0.0
      %2722 = vmatpush1.msra.mxu0 0.0
      %2723 = vmatprep.subr.mxu0 0.0
      %2724 = vmatpush1.msra.mxu0 0.0
      %2725 = vmatprep.subr.mxu0 0.0
      %2726 = vmatpush1.msra.mxu0 0.0
      %2727 = vmatprep.subr.mxu0 0.0
      %2728 = vmatpush1.msra.mxu0 0.0
      %2729 = vmatprep.subr.mxu0 0.0
      %2730 = vmatpush1.msra.mxu0 0.0
      %2731 = vmatprep.subr.mxu0 0.0
      %2732 = vmatpush1.msra.mxu0 0.0
      %2733 = vmatprep.subr.mxu0 0.0
      %2734 = vmatpush1.msra.mxu0 0.0
      %2735 = vmatprep.subr.mxu0 0.0
      %2736 = vmatpush1.msra.mxu0 0.0
      %2737 = vmatprep.subr.mxu0 0.0
      %2738 = vmatpush1.msra.mxu0 0.0
      %2739 = vmatprep.subr.mxu0 0.0
      %2740 = vmatpush1.msra.mxu0 0.0
      %2741 = vmatprep.subr.mxu0 0.0
      %2742 = vmatpush1.msra.mxu0 0.0
      %2743 = vmatprep.mubr.f32.mxu0 0.0
      %2744 = vmatmul.mubr.f32.gmra.mrb[0].mxu0 %v2656
      %v2745 = vpop.f32.mrb[0].mxu0
      %v2746 = vadd.f32 0.0, %v2745
      %v2747 = vpop.f32.mrb[0].mxu0
      %2748 = vmatprep.mubr.f32.mxu0 0.0
      %2749 = vmatmul.mubr.f32.gmra.mrb[0].mxu0 %v2659
      %v2750 = vpop.f32.mrb[0].mxu0
      %v2751 = vadd.f32 0.0, %v2750
      %v2752 = vpop.f32.mrb[0].mxu0
      %2753 = vmatprep.mubr.f32.mxu0 0.0
      %2754 = vmatmul.mubr.f32.gmra.mrb[0].mxu0 %v2662
      %v2755 = vpop.f32.mrb[0].mxu0
      %v2756 = vadd.f32 0.0, %v2755
      %v2757 = vpop.f32.mrb[0].mxu0
      %2758 = vmatprep.mubr.f32.mxu0 0.0
      %2759 = vmatmul.mubr.f32.gmra.mrb[0].mxu0 %v2665
      %v2760 = vpop.f32.mrb[0].mxu0
      %v2761 = vadd.f32 0.0, %v2760
      %v2762 = vpop.f32.mrb[0].mxu0
      %2763 = vmatprep.mubr.f32.mxu0 0.0
      %2764 = vmatmul.mubr.f32.gmra.mrb[0].mxu0 %v2668
      %v2765 = vpop.f32.mrb[0].mxu0
      %v2766 = vadd.f32 0.0, %v2765
      %v2767 = vpop.f32.mrb[0].mxu0
      %2768 = vmatprep.mubr.f32.mxu0 0.0
      %2769 = vmatmul.mubr.f32.gmra.mrb[0].mxu0 %v2671
      %v2770 = vpop.f32.mrb[0].mxu0
      %v2771 = vadd.f32 0.0, %v2770
      %v2772 = vpop.f32.mrb[0].mxu0
      %2773 = vmatprep.mubr.f32.mxu0 0.0
      %2774 = vmatmul.mubr.f32.gmra.mrb[0].mxu0 %v2674
      %v2775 = vpop.f32.mrb[0].mxu0
      %v2776 = vadd.f32 0.0, %v2775
      %v2777 = vpop.f32.mrb[0].mxu0
      %2778 = vmatprep.mubr.f32.mxu0 0.0
      %2779 = vmatmul.mubr.f32.gmra.mrb[0].mxu0 %v2677
      %v2780 = vpop.f32.mrb[0].mxu0
      %v2781 = vadd.f32 0.0, %v2780
      %v2782 = vpop.f32.mrb[0].mxu0
      %2783 = vdwg.mxu0
      %v2784 = vadd.f32 %v2638, %v2746
      %v2785 = vadd.f32 %v2639, %v2751
      %v2786 = vadd.f32 %v2640, %v2756
      %v2787 = vadd.f32 %v2641, %v2761
      %v2788 = vadd.f32 %v2642, %v2766
      %v2789 = vadd.f32 %v2643, %v2771
      %v2790 = vadd.f32 %v2644, %v2776
      %v2791 = vadd.f32 %v2645, %v2781
      %v2792 = vld [vmem:[%s5] sm:$0x1]
      %v2794 = vlaneseq
      %v2795 = vshrl.u32 %v2794, 7
      %v2796 = vsub.s32 0, %v2795
      %v2797 = vrot.slane %v2792, %v2796
      %v2799 = vadd.f32 %v2784, %v2797
      %v2800 = vadd.f32 %v2785, %v2797
      %v2801 = vadd.f32 %v2786, %v2797
      %v2802 = vadd.f32 %v2787, %v2797
      %v2803 = vadd.f32 %v2788, %v2797
      %v2804 = vadd.f32 %v2789, %v2797
      %v2805 = vadd.f32 %v2790, %v2797
      %v2806 = vadd.f32 %v2791, %v2797
      %v2807 = vmax.f32 %v2799, 0.0
      %v2808 = vmax.f32 %v2800, 0.0
      %v2809 = vmax.f32 %v2801, 0.0
      %v2810 = vmax.f32 %v2802, 0.0
      %v2811 = vmax.f32 %v2803, 0.0
      %v2812 = vmax.f32 %v2804, 0.0
      %v2813 = vmax.f32 %v2805, 0.0
      %v2814 = vmax.f32 %v2806, 0.0
      %v2815 = vld [vmem:[%s12] sm:$0xff]
      %v2816 = vld [vmem:[%s12 + $0x8] sm:$0xff]
      %v2817 = vld [vmem:[%s13] sm:$0x1]
      %v2819 = vlaneseq
      %v2820 = vshrl.u32 %v2819, 7
      %v2821 = vsub.s32 0, %v2820
      %v2822 = vrot.slane %v2817, %v2821
      %vm2824 = vcmask 130048
      %v2826 = vsel %vm2824, %v2807, 0
      %v2829 = vsel %vm2824, %v2808, 0
      %v2832 = vsel %vm2824, %v2809, 0
      %v2835 = vsel %vm2824, %v2810, 0
      %v2838 = vsel %vm2824, %v2811, 0
      %v2841 = vsel %vm2824, %v2812, 0
      %v2844 = vsel %vm2824, %v2813, 0
      %v2847 = vsel %vm2824, %v2814, 0
      %2849 = vmatprep.subr.mxu0 0.0
      %2850 = vmatpush1.msra.mxu0 %v2815
      %2851 = vmatprep.subr.mxu0 0.0
      %2852 = vmatpush1.msra.mxu0 %v2816
      %2853 = vmatprep.subr.mxu0 0.0
      %2854 = vmatpush1.msra.mxu0 0.0
      %2855 = vmatprep.subr.mxu0 0.0
      %2856 = vmatpush1.msra.mxu0 0.0
      %2857 = vmatprep.subr.mxu0 0.0
      %2858 = vmatpush1.msra.mxu0 0.0
      %2859 = vmatprep.subr.mxu0 0.0
      %2860 = vmatpush1.msra.mxu0 0.0
      %2861 = vmatprep.subr.mxu0 0.0
      %2862 = vmatpush1.msra.mxu0 0.0
      %2863 = vmatprep.subr.mxu0 0.0
      %2864 = vmatpush1.msra.mxu0 0.0
      %2865 = vmatprep.subr.mxu0 0.0
      %2866 = vmatpush1.msra.mxu0 0.0
      %2867 = vmatprep.subr.mxu0 0.0
      %2868 = vmatpush1.msra.mxu0 0.0
      %2869 = vmatprep.subr.mxu0 0.0
      %2870 = vmatpush1.msra.mxu0 0.0
      %2871 = vmatprep.subr.mxu0 0.0
      %2872 = vmatpush1.msra.mxu0 0.0
      %2873 = vmatprep.subr.mxu0 0.0
      %2874 = vmatpush1.msra.mxu0 0.0
      %2875 = vmatprep.subr.mxu0 0.0
      %2876 = vmatpush1.msra.mxu0 0.0
      %2877 = vmatprep.subr.mxu0 0.0
      %2878 = vmatpush1.msra.mxu0 0.0
      %2879 = vmatprep.subr.mxu0 0.0
      %2880 = vmatpush1.msra.mxu0 0.0
      %2881 = vmatprep.subr.mxu0 0.0
      %2882 = vmatpush1.msra.mxu0 0.0
      %2883 = vmatprep.subr.mxu0 0.0
      %2884 = vmatpush1.msra.mxu0 0.0
      %2885 = vmatprep.subr.mxu0 0.0
      %2886 = vmatpush1.msra.mxu0 0.0
      %2887 = vmatprep.subr.mxu0 0.0
      %2888 = vmatpush1.msra.mxu0 0.0
      %2889 = vmatprep.subr.mxu0 0.0
      %2890 = vmatpush1.msra.mxu0 0.0
      %2891 = vmatprep.subr.mxu0 0.0
      %2892 = vmatpush1.msra.mxu0 0.0
      %2893 = vmatprep.subr.mxu0 0.0
      %2894 = vmatpush1.msra.mxu0 0.0
      %2895 = vmatprep.subr.mxu0 0.0
      %2896 = vmatpush1.msra.mxu0 0.0
      %2897 = vmatprep.subr.mxu0 0.0
      %2898 = vmatpush1.msra.mxu0 0.0
      %2899 = vmatprep.subr.mxu0 0.0
      %2900 = vmatpush1.msra.mxu0 0.0
      %2901 = vmatprep.subr.mxu0 0.0
      %2902 = vmatpush1.msra.mxu0 0.0
      %2903 = vmatprep.subr.mxu0 0.0
      %2904 = vmatpush1.msra.mxu0 0.0
      %2905 = vmatprep.subr.mxu0 0.0
      %2906 = vmatpush1.msra.mxu0 0.0
      %2907 = vmatprep.subr.mxu0 0.0
      %2908 = vmatpush1.msra.mxu0 0.0
      %2909 = vmatprep.subr.mxu0 0.0
      %2910 = vmatpush1.msra.mxu0 0.0
      %2911 = vmatprep.subr.mxu0 0.0
      %2912 = vmatpush1.msra.mxu0 0.0
      %2913 = vmatprep.mubr.f32.mxu0 0.0
      %2914 = vmatmul.mubr.f32.gmra.mrb[0].mxu0 %v2826
      %v2915 = vpop.f32.mrb[0].mxu0
      %v2916 = vadd.f32 %v2822, %v2915
      %v2917 = vpop.f32.mrb[0].mxu0
      %2918 = vmatprep.mubr.f32.mxu0 0.0
      %2919 = vmatmul.mubr.f32.gmra.mrb[0].mxu0 %v2829
      %v2920 = vpop.f32.mrb[0].mxu0
      %v2921 = vadd.f32 %v2822, %v2920
      %v2922 = vpop.f32.mrb[0].mxu0
      %2923 = vmatprep.mubr.f32.mxu0 0.0
      %2924 = vmatmul.mubr.f32.gmra.mrb[0].mxu0 %v2832
      %v2925 = vpop.f32.mrb[0].mxu0
      %v2926 = vadd.f32 %v2822, %v2925
      %v2927 = vpop.f32.mrb[0].mxu0
      %2928 = vmatprep.mubr.f32.mxu0 0.0
      %2929 = vmatmul.mubr.f32.gmra.mrb[0].mxu0 %v2835
      %v2930 = vpop.f32.mrb[0].mxu0
      %v2931 = vadd.f32 %v2822, %v2930
      %v2932 = vpop.f32.mrb[0].mxu0
      %2933 = vmatprep.mubr.f32.mxu0 0.0
      %2934 = vmatmul.mubr.f32.gmra.mrb[0].mxu0 %v2838
      %v2935 = vpop.f32.mrb[0].mxu0
      %v2936 = vadd.f32 %v2822, %v2935
      %v2937 = vpop.f32.mrb[0].mxu0
      %2938 = vmatprep.mubr.f32.mxu0 0.0
      %2939 = vmatmul.mubr.f32.gmra.mrb[0].mxu0 %v2841
      %v2940 = vpop.f32.mrb[0].mxu0
      %v2941 = vadd.f32 %v2822, %v2940
      %v2942 = vpop.f32.mrb[0].mxu0
      %2943 = vmatprep.mubr.f32.mxu0 0.0
      %2944 = vmatmul.mubr.f32.gmra.mrb[0].mxu0 %v2844
      %v2945 = vpop.f32.mrb[0].mxu0
      %v2946 = vadd.f32 %v2822, %v2945
      %v2947 = vpop.f32.mrb[0].mxu0
      %2948 = vmatprep.mubr.f32.mxu0 0.0
      %2949 = vmatmul.mubr.f32.gmra.mrb[0].mxu0 %v2847
      %v2950 = vpop.f32.mrb[0].mxu0
      %v2951 = vadd.f32 %v2822, %v2950
      %v2952 = vpop.f32.mrb[0].mxu0
      %2953 = vdwg.mxu0
      %2962 = vrot.lane.b32.xlu0 %v2916, 112
      %v2963 = vpop.permute.xlu0 %2962
      %2964 = vrot.lane.b32.xlu0 %v2921, 112
      %v2965 = vpop.permute.xlu0 %2964
      %2966 = vrot.lane.b32.xlu0 %v2926, 112
      %v2967 = vpop.permute.xlu0 %2966
      %2968 = vrot.lane.b32.xlu0 %v2931, 112
      %v2969 = vpop.permute.xlu0 %2968
      %2970 = vrot.lane.b32.xlu0 %v2936, 112
      %v2971 = vpop.permute.xlu0 %2970
      %2972 = vrot.lane.b32.xlu0 %v2941, 112
      %v2973 = vpop.permute.xlu0 %2972
      %2974 = vrot.lane.b32.xlu0 %v2946, 112
      %v2975 = vpop.permute.xlu0 %2974
      %2976 = vrot.lane.b32.xlu0 %v2951, 112
      %v2977 = vpop.permute.xlu0 %2976
      %2978 = vrot.lane.b32.xlu0 %v2916, 110
      %v2979 = vpop.permute.xlu0 %2978
      %2980 = vrot.lane.b32.xlu0 %v2921, 110
      %v2981 = vpop.permute.xlu0 %2980
      %2982 = vrot.lane.b32.xlu0 %v2926, 110
      %v2983 = vpop.permute.xlu0 %2982
      %2984 = vrot.lane.b32.xlu0 %v2931, 110
      %v2985 = vpop.permute.xlu0 %2984
      %2986 = vrot.lane.b32.xlu0 %v2936, 110
      %v2987 = vpop.permute.xlu0 %2986
      %2988 = vrot.lane.b32.xlu0 %v2941, 110
      %v2989 = vpop.permute.xlu0 %2988
      %2990 = vrot.lane.b32.xlu0 %v2946, 110
      %v2991 = vpop.permute.xlu0 %2990
      %2992 = vrot.lane.b32.xlu0 %v2951, 110
      %v2993 = vpop.permute.xlu0 %2992
      %vm2994 = vcmask 15360
      %v2995 = vsel %vm2994, %v2963, 0
      %v2997 = vsel %vm2994, %v2965, 0
      %v2999 = vsel %vm2994, %v2967, 0
      %v3001 = vsel %vm2994, %v2969, 0
      %v3003 = vsel %vm2994, %v2971, 0
      %v3005 = vsel %vm2994, %v2973, 0
      %v3007 = vsel %vm2994, %v2975, 0
      %v3009 = vsel %vm2994, %v2977, 0
      %v3011 = vsel %vm2994, %v2979, 0
      %v3013 = vsel %vm2994, %v2981, 0
      %v3015 = vsel %vm2994, %v2983, 0
      %v3017 = vsel %vm2994, %v2985, 0
      %v3019 = vsel %vm2994, %v2987, 0
      %v3021 = vsel %vm2994, %v2989, 0
      %v3023 = vsel %vm2994, %v2991, 0
      %v3025 = vsel %vm2994, %v2993, 0
      %3027 = vmatprep.subr.mxu0 0.0
      %3028 = vmatpush1.xpose.msra.mxu0 %v3011
      %3029 = vmatprep.subr.mxu0 0.0
      %3030 = vmatpush1.xpose.msra.mxu0 %v3013
      %3031 = vmatprep.subr.mxu0 0.0
      %3032 = vmatpush1.xpose.msra.mxu0 %v3015
      %3033 = vmatprep.subr.mxu0 0.0
      %3034 = vmatpush1.xpose.msra.mxu0 %v3017
      %3035 = vmatprep.subr.mxu0 0.0
      %3036 = vmatpush1.xpose.msra.mxu0 %v3019
      %3037 = vmatprep.subr.mxu0 0.0
      %3038 = vmatpush1.xpose.msra.mxu0 %v3021
      %3039 = vmatprep.subr.mxu0 0.0
      %3040 = vmatpush1.xpose.msra.mxu0 %v3023
      %3041 = vmatprep.subr.mxu0 0.0
      %3042 = vmatpush1.xpose.msra.mxu0 %v3025
      %3043 = vmatprep.subr.mxu0 0.0
      %3044 = vmatpush1.xpose.msra.mxu0 0.0
      %3045 = vmatprep.subr.mxu0 0.0
      %3046 = vmatpush1.xpose.msra.mxu0 0.0
      %3047 = vmatprep.subr.mxu0 0.0
      %3048 = vmatpush1.xpose.msra.mxu0 0.0
      %3049 = vmatprep.subr.mxu0 0.0
      %3050 = vmatpush1.xpose.msra.mxu0 0.0
      %3051 = vmatprep.subr.mxu0 0.0
      %3052 = vmatpush1.xpose.msra.mxu0 0.0
      %3053 = vmatprep.subr.mxu0 0.0
      %3054 = vmatpush1.xpose.msra.mxu0 0.0
      %3055 = vmatprep.subr.mxu0 0.0
      %3056 = vmatpush1.xpose.msra.mxu0 0.0
      %3057 = vmatprep.subr.mxu0 0.0
      %3058 = vmatpush1.xpose.msra.mxu0 0.0
      %3059 = vmatprep.subr.mxu0 0.0
      %3060 = vmatpush1.xpose.msra.mxu0 0.0
      %3061 = vmatprep.subr.mxu0 0.0
      %3062 = vmatpush1.xpose.msra.mxu0 0.0
      %3063 = vmatprep.subr.mxu0 0.0
      %3064 = vmatpush1.xpose.msra.mxu0 0.0
      %3065 = vmatprep.subr.mxu0 0.0
      %3066 = vmatpush1.xpose.msra.mxu0 0.0
      %3067 = vmatprep.subr.mxu0 0.0
      %3068 = vmatpush1.xpose.msra.mxu0 0.0
      %3069 = vmatprep.subr.mxu0 0.0
      %3070 = vmatpush1.xpose.msra.mxu0 0.0
      %3071 = vmatprep.subr.mxu0 0.0
      %3072 = vmatpush1.xpose.msra.mxu0 0.0
      %3073 = vmatprep.subr.mxu0 0.0
      %3074 = vmatpush1.xpose.msra.mxu0 0.0
      %3075 = vmatprep.subr.mxu0 0.0
      %3076 = vmatpush1.xpose.msra.mxu0 0.0
      %3077 = vmatprep.subr.mxu0 0.0
      %3078 = vmatpush1.xpose.msra.mxu0 0.0
      %3079 = vmatprep.subr.mxu0 0.0
      %3080 = vmatpush1.xpose.msra.mxu0 0.0
      %3081 = vmatprep.subr.mxu0 0.0
      %3082 = vmatpush1.xpose.msra.mxu0 0.0
      %3083 = vmatprep.subr.mxu0 0.0
      %3084 = vmatpush1.xpose.msra.mxu0 0.0
      %3085 = vmatprep.subr.mxu0 0.0
      %3086 = vmatpush1.xpose.msra.mxu0 0.0
      %3087 = vmatprep.subr.mxu0 0.0
      %3088 = vmatpush1.xpose.msra.mxu0 0.0
      %3089 = vmatprep.subr.mxu0 0.0
      %3090 = vmatpush1.xpose.msra.mxu0 0.0
      %3091 = vmatprep.mubr.f32.mxu0 0.0
      %3092 = vmatmul.mubr.f32.gmra.mrb[0].mxu0 %v2995
      %v3093 = vpop.f32.mrb[0].mxu0
      %v3094 = vadd.f32 0.0, %v3093
      %v3095 = vpop.f32.mrb[0].mxu0
      %3096 = vmatprep.mubr.f32.mxu0 0.0
      %3097 = vmatmul.mubr.f32.gmra.mrb[0].mxu0 %v2997
      %v3098 = vpop.f32.mrb[0].mxu0
      %v3099 = vadd.f32 0.0, %v3098
      %v3100 = vpop.f32.mrb[0].mxu0
      %3101 = vmatprep.mubr.f32.mxu0 0.0
      %3102 = vmatmul.mubr.f32.gmra.mrb[0].mxu0 %v2999
      %v3103 = vpop.f32.mrb[0].mxu0
      %v3104 = vadd.f32 0.0, %v3103
      %v3105 = vpop.f32.mrb[0].mxu0
      %3106 = vmatprep.mubr.f32.mxu0 0.0
      %3107 = vmatmul.mubr.f32.gmra.mrb[0].mxu0 %v3001
      %v3108 = vpop.f32.mrb[0].mxu0
      %v3109 = vadd.f32 0.0, %v3108
      %v3110 = vpop.f32.mrb[0].mxu0
      %3111 = vmatprep.mubr.f32.mxu0 0.0
      %3112 = vmatmul.mubr.f32.gmra.mrb[0].mxu0 %v3003
      %v3113 = vpop.f32.mrb[0].mxu0
      %v3114 = vadd.f32 0.0, %v3113
      %v3115 = vpop.f32.mrb[0].mxu0
      %3116 = vmatprep.mubr.f32.mxu0 0.0
      %3117 = vmatmul.mubr.f32.gmra.mrb[0].mxu0 %v3005
      %v3118 = vpop.f32.mrb[0].mxu0
      %v3119 = vadd.f32 0.0, %v3118
      %v3120 = vpop.f32.mrb[0].mxu0
      %3121 = vmatprep.mubr.f32.mxu0 0.0
      %3122 = vmatmul.mubr.f32.gmra.mrb[0].mxu0 %v3007
      %v3123 = vpop.f32.mrb[0].mxu0
      %v3124 = vadd.f32 0.0, %v3123
      %v3125 = vpop.f32.mrb[0].mxu0
      %3126 = vmatprep.mubr.f32.mxu0 0.0
      %3127 = vmatmul.mubr.f32.gmra.mrb[0].mxu0 %v3009
      %v3128 = vpop.f32.mrb[0].mxu0
      %v3129 = vadd.f32 0.0, %v3128
      %v3130 = vpop.f32.mrb[0].mxu0
      %3131 = vdwg.mxu0
      %v3132 = vsel %vm652, %v3094, -inf
      %3133 = vmax.xlane.f32.xlu0 %v3132
      %v3134 = vpop.xlane.xlu0 %3133
      %v3135 = vsel %vm652, %v3099, -inf
      %3136 = vmax.xlane.f32.xlu0 %v3135
      %v3137 = vpop.xlane.xlu0 %3136
      %v3138 = vsel %vm652, %v3104, -inf
      %3139 = vmax.xlane.f32.xlu0 %v3138
      %v3140 = vpop.xlane.xlu0 %3139
      %v3141 = vsel %vm652, %v3109, -inf
      %3142 = vmax.xlane.f32.xlu0 %v3141
      %v3143 = vpop.xlane.xlu0 %3142
      %v3144 = vsel %vm652, %v3114, -inf
      %3145 = vmax.xlane.f32.xlu0 %v3144
      %v3146 = vpop.xlane.xlu0 %3145
      %v3147 = vsel %vm652, %v3119, -inf
      %3148 = vmax.xlane.f32.xlu0 %v3147
      %v3149 = vpop.xlane.xlu0 %3148
      %v3150 = vsel %vm652, %v3124, -inf
      %3151 = vmax.xlane.f32.xlu0 %v3150
      %v3152 = vpop.xlane.xlu0 %3151
      %v3153 = vsel %vm652, %v3129, -inf
      %3154 = vmax.xlane.f32.xlu0 %v3153
      %v3155 = vpop.xlane.xlu0 %3154
      %v3156 = vsub.f32 %v3094, %v3134
      %v3157 = vsub.f32 %v3099, %v3137
      %v3158 = vsub.f32 %v3104, %v3140
      %v3159 = vsub.f32 %v3109, %v3143
      %v3160 = vsub.f32 %v3114, %v3146
      %v3161 = vsub.f32 %v3119, %v3149
      %v3162 = vsub.f32 %v3124, %v3152
      %v3163 = vsub.f32 %v3129, %v3155
      %v3164 = vmul.f32 %v3156, 1.442695
      %v3165 = vpow.pop %v3164
      %v3166 = vmul.f32 %v3157, 1.442695
      %v3167 = vpow.pop %v3166
      %v3168 = vmul.f32 %v3158, 1.442695
      %v3169 = vpow.pop %v3168
      %v3170 = vmul.f32 %v3159, 1.442695
      %v3171 = vpow.pop %v3170
      %v3172 = vmul.f32 %v3160, 1.442695
      %v3173 = vpow.pop %v3172
      %v3174 = vmul.f32 %v3161, 1.442695
      %v3175 = vpow.pop %v3174
      %v3176 = vmul.f32 %v3162, 1.442695
      %v3177 = vpow.pop %v3176
      %v3178 = vmul.f32 %v3163, 1.442695
      %v3179 = vpow.pop %v3178
      %v3180 = vsel %vm652, %v3165, 0.0
      %3181 = vadd.xlane.f32.xlu0 %v3180
      %v3182 = vpop.xlane.xlu0 %3181
      %v3183 = vsel %vm652, %v3167, 0.0
      %3184 = vadd.xlane.f32.xlu0 %v3183
      %v3185 = vpop.xlane.xlu0 %3184
      %v3186 = vsel %vm652, %v3169, 0.0
      %3187 = vadd.xlane.f32.xlu0 %v3186
      %v3188 = vpop.xlane.xlu0 %3187
      %v3189 = vsel %vm652, %v3171, 0.0
      %3190 = vadd.xlane.f32.xlu0 %v3189
      %v3191 = vpop.xlane.xlu0 %3190
      %v3192 = vsel %vm652, %v3173, 0.0
      %3193 = vadd.xlane.f32.xlu0 %v3192
      %v3194 = vpop.xlane.xlu0 %3193
      %v3195 = vsel %vm652, %v3175, 0.0
      %3196 = vadd.xlane.f32.xlu0 %v3195
      %v3197 = vpop.xlane.xlu0 %3196
      %v3198 = vsel %vm652, %v3177, 0.0
      %3199 = vadd.xlane.f32.xlu0 %v3198
      %v3200 = vpop.xlane.xlu0 %3199
      %v3201 = vsel %vm652, %v3179, 0.0
      %3202 = vadd.xlane.f32.xlu0 %v3201
      %v3203 = vpop.xlane.xlu0 %3202
      %v3204 = vrcp.pop %v3182
      %v3205 = vmul.f32 %v3165, %v3204
      %v3206 = vrcp.pop %v3185
      %v3207 = vmul.f32 %v3167, %v3206
      %v3208 = vrcp.pop %v3188
      %v3209 = vmul.f32 %v3169, %v3208
      %v3210 = vrcp.pop %v3191
      %v3211 = vmul.f32 %v3171, %v3210
      %v3212 = vrcp.pop %v3194
      %v3213 = vmul.f32 %v3173, %v3212
      %v3214 = vrcp.pop %v3197
      %v3215 = vmul.f32 %v3175, %v3214
      %v3216 = vrcp.pop %v3200
      %v3217 = vmul.f32 %v3177, %v3216
      %v3218 = vrcp.pop %v3203
      %v3219 = vmul.f32 %v3179, %v3218
      %s3220 = sld [smem:[#allocation2]]
      %v3222 = vsel %vm652, %v3205, 0
      %v3225 = vsel %vm652, %v3207, 0
      %v3228 = vsel %vm652, %v3209, 0
      %v3231 = vsel %vm652, %v3211, 0
      %v3234 = vsel %vm652, %v3213, 0
      %v3237 = vsel %vm652, %v3215, 0
      %v3240 = vsel %vm652, %v3217, 0
      %v3243 = vsel %vm652, %v3219, 0
      %3245 = vmatprep.subr.mxu0 0.0
      %3246 = vmatpush1.msra.mxu0 %v2916
      %3247 = vmatprep.subr.mxu0 0.0
      %3248 = vmatpush1.msra.mxu0 %v2921
      %3249 = vmatprep.subr.mxu0 0.0
      %3250 = vmatpush1.msra.mxu0 %v2926
      %3251 = vmatprep.subr.mxu0 0.0
      %3252 = vmatpush1.msra.mxu0 %v2931
      %3253 = vmatprep.subr.mxu0 0.0
      %3254 = vmatpush1.msra.mxu0 %v2936
      %3255 = vmatprep.subr.mxu0 0.0
      %3256 = vmatpush1.msra.mxu0 %v2941
      %3257 = vmatprep.subr.mxu0 0.0
      %3258 = vmatpush1.msra.mxu0 %v2946
      %3259 = vmatprep.subr.mxu0 0.0
      %3260 = vmatpush1.msra.mxu0 %v2951
      %3261 = vmatprep.subr.mxu0 0.0
      %3262 = vmatpush1.msra.mxu0 0.0
      %3263 = vmatprep.subr.mxu0 0.0
      %3264 = vmatpush1.msra.mxu0 0.0
      %3265 = vmatprep.subr.mxu0 0.0
      %3266 = vmatpush1.msra.mxu0 0.0
      %3267 = vmatprep.subr.mxu0 0.0
      %3268 = vmatpush1.msra.mxu0 0.0
      %3269 = vmatprep.subr.mxu0 0.0
      %3270 = vmatpush1.msra.mxu0 0.0
      %3271 = vmatprep.subr.mxu0 0.0
      %3272 = vmatpush1.msra.mxu0 0.0
      %3273 = vmatprep.subr.mxu0 0.0
      %3274 = vmatpush1.msra.mxu0 0.0
      %3275 = vmatprep.subr.mxu0 0.0
      %3276 = vmatpush1.msra.mxu0 0.0
      %3277 = vmatprep.subr.mxu0 0.0
      %3278 = vmatpush1.msra.mxu0 0.0
      %3279 = vmatprep.subr.mxu0 0.0
      %3280 = vmatpush1.msra.mxu0 0.0
      %3281 = vmatprep.subr.mxu0 0.0
      %3282 = vmatpush1.msra.mxu0 0.0
      %3283 = vmatprep.subr.mxu0 0.0
      %3284 = vmatpush1.msra.mxu0 0.0
      %3285 = vmatprep.subr.mxu0 0.0
      %3286 = vmatpush1.msra.mxu0 0.0
      %3287 = vmatprep.subr.mxu0 0.0
      %3288 = vmatpush1.msra.mxu0 0.0
      %3289 = vmatprep.subr.mxu0 0.0
      %3290 = vmatpush1.msra.mxu0 0.0
      %3291 = vmatprep.subr.mxu0 0.0
      %3292 = vmatpush1.msra.mxu0 0.0
      %3293 = vmatprep.subr.mxu0 0.0
      %3294 = vmatpush1.msra.mxu0 0.0
      %3295 = vmatprep.subr.mxu0 0.0
      %3296 = vmatpush1.msra.mxu0 0.0
      %3297 = vmatprep.subr.mxu0 0.0
      %3298 = vmatpush1.msra.mxu0 0.0
      %3299 = vmatprep.subr.mxu0 0.0
      %3300 = vmatpush1.msra.mxu0 0.0
      %3301 = vmatprep.subr.mxu0 0.0
      %3302 = vmatpush1.msra.mxu0 0.0
      %3303 = vmatprep.subr.mxu0 0.0
      %3304 = vmatpush1.msra.mxu0 0.0
      %3305 = vmatprep.subr.mxu0 0.0
      %3306 = vmatpush1.msra.mxu0 0.0
      %3307 = vmatprep.subr.mxu0 0.0
      %3308 = vmatpush1.msra.mxu0 0.0
      %3309 = vmatprep.mubr.f32.mxu0 0.0
      %3310 = vmatmul.mubr.f32.gmra.mrb[0].mxu0 %v3222
      %v3311 = vpop.f32.mrb[0].mxu0
      %v3312 = vadd.f32 0.0, %v3311
      %v3313 = vpop.f32.mrb[0].mxu0
      %3314 = vmatprep.mubr.f32.mxu0 0.0
      %3315 = vmatmul.mubr.f32.gmra.mrb[0].mxu0 %v3225
      %v3316 = vpop.f32.mrb[0].mxu0
      %v3317 = vadd.f32 0.0, %v3316
      %v3318 = vpop.f32.mrb[0].mxu0
      %3319 = vmatprep.mubr.f32.mxu0 0.0
      %3320 = vmatmul.mubr.f32.gmra.mrb[0].mxu0 %v3228
      %v3321 = vpop.f32.mrb[0].mxu0
      %v3322 = vadd.f32 0.0, %v3321
      %v3323 = vpop.f32.mrb[0].mxu0
      %3324 = vmatprep.mubr.f32.mxu0 0.0
      %3325 = vmatmul.mubr.f32.gmra.mrb[0].mxu0 %v3231
      %v3326 = vpop.f32.mrb[0].mxu0
      %v3327 = vadd.f32 0.0, %v3326
      %v3328 = vpop.f32.mrb[0].mxu0
      %3329 = vmatprep.mubr.f32.mxu0 0.0
      %3330 = vmatmul.mubr.f32.gmra.mrb[0].mxu0 %v3234
      %v3331 = vpop.f32.mrb[0].mxu0
      %v3332 = vadd.f32 0.0, %v3331
      %v3333 = vpop.f32.mrb[0].mxu0
      %3334 = vmatprep.mubr.f32.mxu0 0.0
      %3335 = vmatmul.mubr.f32.gmra.mrb[0].mxu0 %v3237
      %v3336 = vpop.f32.mrb[0].mxu0
      %v3337 = vadd.f32 0.0, %v3336
      %v3338 = vpop.f32.mrb[0].mxu0
      %3339 = vmatprep.mubr.f32.mxu0 0.0
      %3340 = vmatmul.mubr.f32.gmra.mrb[0].mxu0 %v3240
      %v3341 = vpop.f32.mrb[0].mxu0
      %v3342 = vadd.f32 0.0, %v3341
      %v3343 = vpop.f32.mrb[0].mxu0
      %3344 = vmatprep.mubr.f32.mxu0 0.0
      %3345 = vmatmul.mubr.f32.gmra.mrb[0].mxu0 %v3243
      %v3346 = vpop.f32.mrb[0].mxu0
      %v3347 = vadd.f32 0.0, %v3346
      %v3348 = vpop.f32.mrb[0].mxu0
      %3349 = vdwg.mxu0
      %v3350 = vstv %s3220
      %v3351 = vmul.f32 %v3350, %v3312
      %v3352 = vmul.f32 %v3350, %v3317
      %v3353 = vmul.f32 %v3350, %v3322
      %v3354 = vmul.f32 %v3350, %v3327
      %v3355 = vmul.f32 %v3350, %v3332
      %v3356 = vmul.f32 %v3350, %v3337
      %v3357 = vmul.f32 %v3350, %v3342
      %v3358 = vmul.f32 %v3350, %v3347
      %v3359 = vadd.f32 %v3351, %v2807
      %v3360 = vadd.f32 %v3352, %v2808
      %v3361 = vadd.f32 %v3353, %v2809
      %v3362 = vadd.f32 %v3354, %v2810
      %v3363 = vadd.f32 %v3355, %v2811
      %v3364 = vadd.f32 %v3356, %v2812
      %v3365 = vadd.f32 %v3357, %v2813
      %v3366 = vadd.f32 %v3358, %v2814
      %3367 = vmatprep.subr.mxu0 0.0
      %3368 = vmatpush1.msra.mxu0 %v3359
      %3369 = vmatprep.subr.mxu0 0.0
      %3370 = vmatpush1.msra.mxu0 %v3360
      %3371 = vmatprep.subr.mxu0 0.0
      %3372 = vmatpush1.msra.mxu0 %v3361
      %3373 = vmatprep.subr.mxu0 0.0
      %3374 = vmatpush1.msra.mxu0 %v3362
      %3375 = vmatprep.subr.mxu0 0.0
      %3376 = vmatpush1.msra.mxu0 %v3363
      %3377 = vmatprep.subr.mxu0 0.0
      %3378 = vmatpush1.msra.mxu0 %v3364
      %3379 = vmatprep.subr.mxu0 0.0
      %3380 = vmatpush1.msra.mxu0 %v3365
      %3381 = vmatprep.subr.mxu0 0.0
      %3382 = vmatpush1.msra.mxu0 %v3366
      %3383 = vmatprep.subr.mxu0 0.0
      %3384 = vmatpush1.msra.mxu0 0.0
      %3385 = vmatprep.subr.mxu0 0.0
      %3386 = vmatpush1.msra.mxu0 0.0
      %3387 = vmatprep.subr.mxu0 0.0
      %3388 = vmatpush1.msra.mxu0 0.0
      %3389 = vmatprep.subr.mxu0 0.0
      %3390 = vmatpush1.msra.mxu0 0.0
      %3391 = vmatprep.subr.mxu0 0.0
      %3392 = vmatpush1.msra.mxu0 0.0
      %3393 = vmatprep.subr.mxu0 0.0
      %3394 = vmatpush1.msra.mxu0 0.0
      %3395 = vmatprep.subr.mxu0 0.0
      %3396 = vmatpush1.msra.mxu0 0.0
      %3397 = vmatprep.subr.mxu0 0.0
      %3398 = vmatpush1.msra.mxu0 0.0
      %3399 = vmatprep.subr.mxu0 0.0
      %3400 = vmatpush1.msra.mxu0 0.0
      %3401 = vmatprep.subr.mxu0 0.0
      %3402 = vmatpush1.msra.mxu0 0.0
      %3403 = vmatprep.subr.mxu0 0.0
      %3404 = vmatpush1.msra.mxu0 0.0
      %3405 = vmatprep.subr.mxu0 0.0
      %3406 = vmatpush1.msra.mxu0 0.0
      %3407 = vmatprep.subr.mxu0 0.0
      %3408 = vmatpush1.msra.mxu0 0.0
      %3409 = vmatprep.subr.mxu0 0.0
      %3410 = vmatpush1.msra.mxu0 0.0
      %3411 = vmatprep.subr.mxu0 0.0
      %3412 = vmatpush1.msra.mxu0 0.0
      %3413 = vmatprep.subr.mxu0 0.0
      %3414 = vmatpush1.msra.mxu0 0.0
      %3415 = vmatprep.subr.mxu0 0.0
      %3416 = vmatpush1.msra.mxu0 0.0
      %3417 = vmatprep.subr.mxu0 0.0
      %3418 = vmatpush1.msra.mxu0 0.0
      %3419 = vmatprep.subr.mxu0 0.0
      %3420 = vmatpush1.msra.mxu0 0.0
      %3421 = vmatprep.subr.mxu0 0.0
      %3422 = vmatpush1.msra.mxu0 0.0
      %3423 = vmatprep.subr.mxu0 0.0
      %3424 = vmatpush1.msra.mxu0 0.0
      %3425 = vmatprep.subr.mxu0 0.0
      %3426 = vmatpush1.msra.mxu0 0.0
      %3427 = vmatprep.subr.mxu0 0.0
      %3428 = vmatpush1.msra.mxu0 0.0
      %3429 = vmatprep.subr.mxu0 0.0
      %3430 = vmatpush1.msra.mxu0 0.0
      %3431 = vmatprep.mubr.f32.mxu0 0.0
      %3432 = vmatmul.mubr.f32.gmra.mrb[0].mxu0 %v855
      %v3433 = vpop.f32.mrb[0].mxu0
      %v3434 = vadd.f32 0.0, %v3433
      %v3435 = vpop.f32.mrb[0].mxu0
      %3436 = vmatprep.mubr.f32.mxu0 0.0
      %3437 = vmatmul.mubr.f32.gmra.mrb[0].mxu0 %v858
      %v3438 = vpop.f32.mrb[0].mxu0
      %v3439 = vadd.f32 0.0, %v3438
      %v3440 = vpop.f32.mrb[0].mxu0
      %3441 = vmatprep.mubr.f32.mxu0 0.0
      %3442 = vmatmul.mubr.f32.gmra.mrb[0].mxu0 %v861
      %v3443 = vpop.f32.mrb[0].mxu0
      %v3444 = vadd.f32 0.0, %v3443
      %v3445 = vpop.f32.mrb[0].mxu0
      %3446 = vmatprep.mubr.f32.mxu0 0.0
      %3447 = vmatmul.mubr.f32.gmra.mrb[0].mxu0 %v864
      %v3448 = vpop.f32.mrb[0].mxu0
      %v3449 = vadd.f32 0.0, %v3448
      %v3450 = vpop.f32.mrb[0].mxu0
      %3451 = vmatprep.mubr.f32.mxu0 0.0
      %3452 = vmatmul.mubr.f32.gmra.mrb[0].mxu0 %v867
      %v3453 = vpop.f32.mrb[0].mxu0
      %v3454 = vadd.f32 0.0, %v3453
      %v3455 = vpop.f32.mrb[0].mxu0
      %3456 = vmatprep.mubr.f32.mxu0 0.0
      %3457 = vmatmul.mubr.f32.gmra.mrb[0].mxu0 %v870
      %v3458 = vpop.f32.mrb[0].mxu0
      %v3459 = vadd.f32 0.0, %v3458
      %v3460 = vpop.f32.mrb[0].mxu0
      %3461 = vmatprep.mubr.f32.mxu0 0.0
      %3462 = vmatmul.mubr.f32.gmra.mrb[0].mxu0 %v873
      %v3463 = vpop.f32.mrb[0].mxu0
      %v3464 = vadd.f32 0.0, %v3463
      %v3465 = vpop.f32.mrb[0].mxu0
      %3466 = vmatprep.mubr.f32.mxu0 0.0
      %3467 = vmatmul.mubr.f32.gmra.mrb[0].mxu0 %v876
      %v3468 = vpop.f32.mrb[0].mxu0
      %v3469 = vadd.f32 0.0, %v3468
      %v3470 = vpop.f32.mrb[0].mxu0
      %3471 = vmatprep.mubr.f32.mxu0 0.0
      %3472 = vmatmul.mubr.f32.gmra.mrb[0].mxu0 %v879
      %v3473 = vpop.f32.mrb[0].mxu0
      %v3474 = vadd.f32 0.0, %v3473
      %v3475 = vpop.f32.mrb[0].mxu0
      %3476 = vmatprep.mubr.f32.mxu0 0.0
      %3477 = vmatmul.mubr.f32.gmra.mrb[0].mxu0 %v882
      %v3478 = vpop.f32.mrb[0].mxu0
      %v3479 = vadd.f32 0.0, %v3478
      %v3480 = vpop.f32.mrb[0].mxu0
      %3481 = vmatprep.mubr.f32.mxu0 0.0
      %3482 = vmatmul.mubr.f32.gmra.mrb[0].mxu0 %v885
      %v3483 = vpop.f32.mrb[0].mxu0
      %v3484 = vadd.f32 0.0, %v3483
      %v3485 = vpop.f32.mrb[0].mxu0
      %3486 = vmatprep.mubr.f32.mxu0 0.0
      %3487 = vmatmul.mubr.f32.gmra.mrb[0].mxu0 %v888
      %v3488 = vpop.f32.mrb[0].mxu0
      %v3489 = vadd.f32 0.0, %v3488
      %v3490 = vpop.f32.mrb[0].mxu0
      %3491 = vmatprep.mubr.f32.mxu0 0.0
      %3492 = vmatmul.mubr.f32.gmra.mrb[0].mxu0 %v891
      %v3493 = vpop.f32.mrb[0].mxu0
      %v3494 = vadd.f32 0.0, %v3493
      %v3495 = vpop.f32.mrb[0].mxu0
      %3496 = vmatprep.mubr.f32.mxu0 0.0
      %3497 = vmatmul.mubr.f32.gmra.mrb[0].mxu0 %v894
      %v3498 = vpop.f32.mrb[0].mxu0
      %v3499 = vadd.f32 0.0, %v3498
      %v3500 = vpop.f32.mrb[0].mxu0
      %3501 = vmatprep.mubr.f32.mxu0 0.0
      %3502 = vmatmul.mubr.f32.gmra.mrb[0].mxu0 %v897
      %v3503 = vpop.f32.mrb[0].mxu0
      %v3504 = vadd.f32 0.0, %v3503
      %v3505 = vpop.f32.mrb[0].mxu0
      %3506 = vmatprep.mubr.f32.mxu0 0.0
      %3507 = vmatmul.mubr.f32.gmra.mrb[0].mxu0 %v900
      %v3508 = vpop.f32.mrb[0].mxu0
      %v3509 = vadd.f32 0.0, %v3508
      %v3510 = vpop.f32.mrb[0].mxu0
      %3511 = vmatprep.mubr.f32.mxu0 0.0
      %3512 = vmatmul.mubr.f32.gmra.mrb[0].mxu0 %v903
      %v3513 = vpop.f32.mrb[0].mxu0
      %v3514 = vadd.f32 0.0, %v3513
      %v3515 = vpop.f32.mrb[0].mxu0
      %3516 = vmatprep.mubr.f32.mxu0 0.0
      %3517 = vmatmul.mubr.f32.gmra.mrb[0].mxu0 %v906
      %v3518 = vpop.f32.mrb[0].mxu0
      %v3519 = vadd.f32 0.0, %v3518
      %v3520 = vpop.f32.mrb[0].mxu0
      %3521 = vmatprep.mubr.f32.mxu0 0.0
      %3522 = vmatmul.mubr.f32.gmra.mrb[0].mxu0 %v909
      %v3523 = vpop.f32.mrb[0].mxu0
      %v3524 = vadd.f32 0.0, %v3523
      %v3525 = vpop.f32.mrb[0].mxu0
      %3526 = vmatprep.mubr.f32.mxu0 0.0
      %3527 = vmatmul.mubr.f32.gmra.mrb[0].mxu0 %v912
      %v3528 = vpop.f32.mrb[0].mxu0
      %v3529 = vadd.f32 0.0, %v3528
      %v3530 = vpop.f32.mrb[0].mxu0
      %3531 = vmatprep.mubr.f32.mxu0 0.0
      %3532 = vmatmul.mubr.f32.gmra.mrb[0].mxu0 %v915
      %v3533 = vpop.f32.mrb[0].mxu0
      %v3534 = vadd.f32 0.0, %v3533
      %v3535 = vpop.f32.mrb[0].mxu0
      %3536 = vmatprep.mubr.f32.mxu0 0.0
      %3537 = vmatmul.mubr.f32.gmra.mrb[0].mxu0 %v918
      %v3538 = vpop.f32.mrb[0].mxu0
      %v3539 = vadd.f32 0.0, %v3538
      %v3540 = vpop.f32.mrb[0].mxu0
      %3541 = vmatprep.mubr.f32.mxu0 0.0
      %3542 = vmatmul.mubr.f32.gmra.mrb[0].mxu0 %v921
      %v3543 = vpop.f32.mrb[0].mxu0
      %v3544 = vadd.f32 0.0, %v3543
      %v3545 = vpop.f32.mrb[0].mxu0
      %3546 = vmatprep.mubr.f32.mxu0 0.0
      %3547 = vmatmul.mubr.f32.gmra.mrb[0].mxu0 %v924
      %v3548 = vpop.f32.mrb[0].mxu0
      %v3549 = vadd.f32 0.0, %v3548
      %v3550 = vpop.f32.mrb[0].mxu0
      %3551 = vmatprep.mubr.f32.mxu0 0.0
      %3552 = vmatmul.mubr.f32.gmra.mrb[0].mxu0 %v927
      %v3553 = vpop.f32.mrb[0].mxu0
      %v3554 = vadd.f32 0.0, %v3553
      %v3555 = vpop.f32.mrb[0].mxu0
      %3556 = vmatprep.mubr.f32.mxu0 0.0
      %3557 = vmatmul.mubr.f32.gmra.mrb[0].mxu0 %v930
      %v3558 = vpop.f32.mrb[0].mxu0
      %v3559 = vadd.f32 0.0, %v3558
      %v3560 = vpop.f32.mrb[0].mxu0
      %3561 = vmatprep.mubr.f32.mxu0 0.0
      %3562 = vmatmul.mubr.f32.gmra.mrb[0].mxu0 %v933
      %v3563 = vpop.f32.mrb[0].mxu0
      %v3564 = vadd.f32 0.0, %v3563
      %v3565 = vpop.f32.mrb[0].mxu0
      %3566 = vmatprep.mubr.f32.mxu0 0.0
      %3567 = vmatmul.mubr.f32.gmra.mrb[0].mxu0 %v936
      %v3568 = vpop.f32.mrb[0].mxu0
      %v3569 = vadd.f32 0.0, %v3568
      %v3570 = vpop.f32.mrb[0].mxu0
      %3571 = vmatprep.mubr.f32.mxu0 0.0
      %3572 = vmatmul.mubr.f32.gmra.mrb[0].mxu0 %v939
      %v3573 = vpop.f32.mrb[0].mxu0
      %v3574 = vadd.f32 0.0, %v3573
      %v3575 = vpop.f32.mrb[0].mxu0
      %3576 = vmatprep.mubr.f32.mxu0 0.0
      %3577 = vmatmul.mubr.f32.gmra.mrb[0].mxu0 %v942
      %v3578 = vpop.f32.mrb[0].mxu0
      %v3579 = vadd.f32 0.0, %v3578
      %v3580 = vpop.f32.mrb[0].mxu0
      %3581 = vmatprep.mubr.f32.mxu0 0.0
      %3582 = vmatmul.mubr.f32.gmra.mrb[0].mxu0 %v945
      %v3583 = vpop.f32.mrb[0].mxu0
      %v3584 = vadd.f32 0.0, %v3583
      %v3585 = vpop.f32.mrb[0].mxu0
      %3586 = vmatprep.mubr.f32.mxu0 0.0
      %3587 = vmatmul.mubr.f32.gmra.mrb[0].mxu0 %v948
      %v3588 = vpop.f32.mrb[0].mxu0
      %v3589 = vadd.f32 0.0, %v3588
      %v3590 = vpop.f32.mrb[0].mxu0
      %3591 = vmatprep.mubr.f32.mxu0 0.0
      %3592 = vmatmul.mubr.f32.gmra.mrb[0].mxu0 %v951
      %v3593 = vpop.f32.mrb[0].mxu0
      %v3594 = vadd.f32 0.0, %v3593
      %v3595 = vpop.f32.mrb[0].mxu0
      %3596 = vmatprep.mubr.f32.mxu0 0.0
      %3597 = vmatmul.mubr.f32.gmra.mrb[0].mxu0 %v954
      %v3598 = vpop.f32.mrb[0].mxu0
      %v3599 = vadd.f32 0.0, %v3598
      %v3600 = vpop.f32.mrb[0].mxu0
      %3601 = vmatprep.mubr.f32.mxu0 0.0
      %3602 = vmatmul.mubr.f32.gmra.mrb[0].mxu0 %v957
      %v3603 = vpop.f32.mrb[0].mxu0
      %v3604 = vadd.f32 0.0, %v3603
      %v3605 = vpop.f32.mrb[0].mxu0
      %3606 = vmatprep.mubr.f32.mxu0 0.0
      %3607 = vmatmul.mubr.f32.gmra.mrb[0].mxu0 %v960
      %v3608 = vpop.f32.mrb[0].mxu0
      %v3609 = vadd.f32 0.0, %v3608
      %v3610 = vpop.f32.mrb[0].mxu0
      %3611 = vmatprep.mubr.f32.mxu0 0.0
      %3612 = vmatmul.mubr.f32.gmra.mrb[0].mxu0 %v963
      %v3613 = vpop.f32.mrb[0].mxu0
      %v3614 = vadd.f32 0.0, %v3613
      %v3615 = vpop.f32.mrb[0].mxu0
      %3616 = vmatprep.mubr.f32.mxu0 0.0
      %3617 = vmatmul.mubr.f32.gmra.mrb[0].mxu0 %v966
      %v3618 = vpop.f32.mrb[0].mxu0
      %v3619 = vadd.f32 0.0, %v3618
      %v3620 = vpop.f32.mrb[0].mxu0
      %3621 = vmatprep.mubr.f32.mxu0 0.0
      %3622 = vmatmul.mubr.f32.gmra.mrb[0].mxu0 %v969
      %v3623 = vpop.f32.mrb[0].mxu0
      %v3624 = vadd.f32 0.0, %v3623
      %v3625 = vpop.f32.mrb[0].mxu0
      %3626 = vmatprep.mubr.f32.mxu0 0.0
      %3627 = vmatmul.mubr.f32.gmra.mrb[0].mxu0 %v972
      %v3628 = vpop.f32.mrb[0].mxu0
      %v3629 = vadd.f32 0.0, %v3628
      %v3630 = vpop.f32.mrb[0].mxu0
      %3631 = vmatprep.mubr.f32.mxu0 0.0
      %3632 = vmatmul.mubr.f32.gmra.mrb[0].mxu0 %v975
      %v3633 = vpop.f32.mrb[0].mxu0
      %v3634 = vadd.f32 0.0, %v3633
      %v3635 = vpop.f32.mrb[0].mxu0
      %3636 = vmatprep.mubr.f32.mxu0 0.0
      %3637 = vmatmul.mubr.f32.gmra.mrb[0].mxu0 %v978
      %v3638 = vpop.f32.mrb[0].mxu0
      %v3639 = vadd.f32 0.0, %v3638
      %v3640 = vpop.f32.mrb[0].mxu0
      %3641 = vmatprep.mubr.f32.mxu0 0.0
      %3642 = vmatmul.mubr.f32.gmra.mrb[0].mxu0 %v981
      %v3643 = vpop.f32.mrb[0].mxu0
      %v3644 = vadd.f32 0.0, %v3643
      %v3645 = vpop.f32.mrb[0].mxu0
      %3646 = vmatprep.mubr.f32.mxu0 0.0
      %3647 = vmatmul.mubr.f32.gmra.mrb[0].mxu0 %v984
      %v3648 = vpop.f32.mrb[0].mxu0
      %v3649 = vadd.f32 0.0, %v3648
      %v3650 = vpop.f32.mrb[0].mxu0
      %3651 = vmatprep.mubr.f32.mxu0 0.0
      %3652 = vmatmul.mubr.f32.gmra.mrb[0].mxu0 %v987
      %v3653 = vpop.f32.mrb[0].mxu0
      %v3654 = vadd.f32 0.0, %v3653
      %v3655 = vpop.f32.mrb[0].mxu0
      %3656 = vmatprep.mubr.f32.mxu0 0.0
      %3657 = vmatmul.mubr.f32.gmra.mrb[0].mxu0 %v990
      %v3658 = vpop.f32.mrb[0].mxu0
      %v3659 = vadd.f32 0.0, %v3658
      %v3660 = vpop.f32.mrb[0].mxu0
      %3661 = vmatprep.mubr.f32.mxu0 0.0
      %3662 = vmatmul.mubr.f32.gmra.mrb[0].mxu0 %v993
      %v3663 = vpop.f32.mrb[0].mxu0
      %v3664 = vadd.f32 0.0, %v3663
      %v3665 = vpop.f32.mrb[0].mxu0
      %3666 = vmatprep.mubr.f32.mxu0 0.0
      %3667 = vmatmul.mubr.f32.gmra.mrb[0].mxu0 %v996
      %v3668 = vpop.f32.mrb[0].mxu0
      %v3669 = vadd.f32 0.0, %v3668
      %v3670 = vpop.f32.mrb[0].mxu0
      %3671 = vmatprep.mubr.f32.mxu0 0.0
      %3672 = vmatmul.mubr.f32.gmra.mrb[0].mxu0 %v999
      %v3673 = vpop.f32.mrb[0].mxu0
      %v3674 = vadd.f32 0.0, %v3673
      %v3675 = vpop.f32.mrb[0].mxu0
      %3676 = vmatprep.mubr.f32.mxu0 0.0
      %3677 = vmatmul.mubr.f32.gmra.mrb[0].mxu0 %v1002
      %v3678 = vpop.f32.mrb[0].mxu0
      %v3679 = vadd.f32 0.0, %v3678
      %v3680 = vpop.f32.mrb[0].mxu0
      %3681 = vmatprep.mubr.f32.mxu0 0.0
      %3682 = vmatmul.mubr.f32.gmra.mrb[0].mxu0 %v1005
      %v3683 = vpop.f32.mrb[0].mxu0
      %v3684 = vadd.f32 0.0, %v3683
      %v3685 = vpop.f32.mrb[0].mxu0
      %3686 = vmatprep.mubr.f32.mxu0 0.0
      %3687 = vmatmul.mubr.f32.gmra.mrb[0].mxu0 %v1008
      %v3688 = vpop.f32.mrb[0].mxu0
      %v3689 = vadd.f32 0.0, %v3688
      %v3690 = vpop.f32.mrb[0].mxu0
      %3691 = vmatprep.mubr.f32.mxu0 0.0
      %3692 = vmatmul.mubr.f32.gmra.mrb[0].mxu0 %v1011
      %v3693 = vpop.f32.mrb[0].mxu0
      %v3694 = vadd.f32 0.0, %v3693
      %v3695 = vpop.f32.mrb[0].mxu0
      %3696 = vmatprep.mubr.f32.mxu0 0.0
      %3697 = vmatmul.mubr.f32.gmra.mrb[0].mxu0 %v1014
      %v3698 = vpop.f32.mrb[0].mxu0
      %v3699 = vadd.f32 0.0, %v3698
      %v3700 = vpop.f32.mrb[0].mxu0
      %3701 = vmatprep.mubr.f32.mxu0 0.0
      %3702 = vmatmul.mubr.f32.gmra.mrb[0].mxu0 %v1017
      %v3703 = vpop.f32.mrb[0].mxu0
      %v3704 = vadd.f32 0.0, %v3703
      %v3705 = vpop.f32.mrb[0].mxu0
      %3706 = vmatprep.mubr.f32.mxu0 0.0
      %3707 = vmatmul.mubr.f32.gmra.mrb[0].mxu0 %v1020
      %v3708 = vpop.f32.mrb[0].mxu0
      %v3709 = vadd.f32 0.0, %v3708
      %v3710 = vpop.f32.mrb[0].mxu0
      %3711 = vmatprep.mubr.f32.mxu0 0.0
      %3712 = vmatmul.mubr.f32.gmra.mrb[0].mxu0 %v1023
      %v3713 = vpop.f32.mrb[0].mxu0
      %v3714 = vadd.f32 0.0, %v3713
      %v3715 = vpop.f32.mrb[0].mxu0
      %3716 = vmatprep.mubr.f32.mxu0 0.0
      %3717 = vmatmul.mubr.f32.gmra.mrb[0].mxu0 %v1026
      %v3718 = vpop.f32.mrb[0].mxu0
      %v3719 = vadd.f32 0.0, %v3718
      %v3720 = vpop.f32.mrb[0].mxu0
      %3721 = vmatprep.mubr.f32.mxu0 0.0
      %3722 = vmatmul.mubr.f32.gmra.mrb[0].mxu0 %v1029
      %v3723 = vpop.f32.mrb[0].mxu0
      %v3724 = vadd.f32 0.0, %v3723
      %v3725 = vpop.f32.mrb[0].mxu0
      %3726 = vmatprep.mubr.f32.mxu0 0.0
      %3727 = vmatmul.mubr.f32.gmra.mrb[0].mxu0 %v1032
      %v3728 = vpop.f32.mrb[0].mxu0
      %v3729 = vadd.f32 0.0, %v3728
      %v3730 = vpop.f32.mrb[0].mxu0
      %3731 = vmatprep.mubr.f32.mxu0 0.0
      %3732 = vmatmul.mubr.f32.gmra.mrb[0].mxu0 %v1035
      %v3733 = vpop.f32.mrb[0].mxu0
      %v3734 = vadd.f32 0.0, %v3733
      %v3735 = vpop.f32.mrb[0].mxu0
      %3736 = vmatprep.mubr.f32.mxu0 0.0
      %3737 = vmatmul.mubr.f32.gmra.mrb[0].mxu0 %v1038
      %v3738 = vpop.f32.mrb[0].mxu0
      %v3739 = vadd.f32 0.0, %v3738
      %v3740 = vpop.f32.mrb[0].mxu0
      %3741 = vmatprep.mubr.f32.mxu0 0.0
      %3742 = vmatmul.mubr.f32.gmra.mrb[0].mxu0 %v1041
      %v3743 = vpop.f32.mrb[0].mxu0
      %v3744 = vadd.f32 0.0, %v3743
      %v3745 = vpop.f32.mrb[0].mxu0
      %3746 = vmatprep.mubr.f32.mxu0 0.0
      %3747 = vmatmul.mubr.f32.gmra.mrb[0].mxu0 %v1044
      %v3748 = vpop.f32.mrb[0].mxu0
      %v3749 = vadd.f32 0.0, %v3748
      %v3750 = vpop.f32.mrb[0].mxu0
      %3751 = vmatprep.mubr.f32.mxu0 0.0
      %3752 = vmatmul.mubr.f32.gmra.mrb[0].mxu0 %v1047
      %v3753 = vpop.f32.mrb[0].mxu0
      %v3754 = vadd.f32 0.0, %v3753
      %v3755 = vpop.f32.mrb[0].mxu0
      %3756 = vmatprep.mubr.f32.mxu0 0.0
      %3757 = vmatmul.mubr.f32.gmra.mrb[0].mxu0 %v1050
      %v3758 = vpop.f32.mrb[0].mxu0
      %v3759 = vadd.f32 0.0, %v3758
      %v3760 = vpop.f32.mrb[0].mxu0
      %3761 = vmatprep.mubr.f32.mxu0 0.0
      %3762 = vmatmul.mubr.f32.gmra.mrb[0].mxu0 %v1053
      %v3763 = vpop.f32.mrb[0].mxu0
      %v3764 = vadd.f32 0.0, %v3763
      %v3765 = vpop.f32.mrb[0].mxu0
      %3766 = vmatprep.mubr.f32.mxu0 0.0
      %3767 = vmatmul.mubr.f32.gmra.mrb[0].mxu0 %v1056
      %v3768 = vpop.f32.mrb[0].mxu0
      %v3769 = vadd.f32 0.0, %v3768
      %v3770 = vpop.f32.mrb[0].mxu0
      %3771 = vmatprep.mubr.f32.mxu0 0.0
      %3772 = vmatmul.mubr.f32.gmra.mrb[0].mxu0 %v1059
      %v3773 = vpop.f32.mrb[0].mxu0
      %v3774 = vadd.f32 0.0, %v3773
      %v3775 = vpop.f32.mrb[0].mxu0
      %3776 = vmatprep.mubr.f32.mxu0 0.0
      %3777 = vmatmul.mubr.f32.gmra.mrb[0].mxu0 %v1062
      %v3778 = vpop.f32.mrb[0].mxu0
      %v3779 = vadd.f32 0.0, %v3778
      %v3780 = vpop.f32.mrb[0].mxu0
      %3781 = vmatprep.mubr.f32.mxu0 0.0
      %3782 = vmatmul.mubr.f32.gmra.mrb[0].mxu0 %v1065
      %v3783 = vpop.f32.mrb[0].mxu0
      %v3784 = vadd.f32 0.0, %v3783
      %v3785 = vpop.f32.mrb[0].mxu0
      %3786 = vmatprep.mubr.f32.mxu0 0.0
      %3787 = vmatmul.mubr.f32.gmra.mrb[0].mxu0 %v1068
      %v3788 = vpop.f32.mrb[0].mxu0
      %v3789 = vadd.f32 0.0, %v3788
      %v3790 = vpop.f32.mrb[0].mxu0
      %3791 = vdwg.mxu0
      %v3792 = vld [vmem:[%s8] sm:$0xff]
      %v3793 = vld [vmem:[%s8 + $0x8] sm:$0xff]
      %s3794 = scalar_lea.vmem %s8, 16
      %v3795 = vld [vmem:[%s3794] sm:$0xff]
      %v3796 = vld [vmem:[%s3794 + $0x8] sm:$0xff]
      %v3798 = vsel %vm2824, %v3474, 0
      %v3801 = vsel %vm2824, %v3479, 0
      %v3804 = vsel %vm2824, %v3484, 0
      %v3807 = vsel %vm2824, %v3489, 0
      %v3810 = vsel %vm2824, %v3494, 0
      %v3813 = vsel %vm2824, %v3499, 0
      %v3816 = vsel %vm2824, %v3504, 0
      %v3819 = vsel %vm2824, %v3509, 0
      %3821 = vmatprep.subr.mxu0 0.0
      %3822 = vmatpush1.msra.mxu0 %v3795
      %3823 = vmatprep.subr.mxu0 0.0
      %3824 = vmatpush1.msra.mxu0 %v3796
      %3825 = vmatprep.subr.mxu0 0.0
      %3826 = vmatpush1.msra.mxu0 0.0
      %3827 = vmatprep.subr.mxu0 0.0
      %3828 = vmatpush1.msra.mxu0 0.0
      %3829 = vmatprep.subr.mxu0 0.0
      %3830 = vmatpush1.msra.mxu0 0.0
      %3831 = vmatprep.subr.mxu0 0.0
      %3832 = vmatpush1.msra.mxu0 0.0
      %3833 = vmatprep.subr.mxu0 0.0
      %3834 = vmatpush1.msra.mxu0 0.0
      %3835 = vmatprep.subr.mxu0 0.0
      %3836 = vmatpush1.msra.mxu0 0.0
      %3837 = vmatprep.subr.mxu0 0.0
      %3838 = vmatpush1.msra.mxu0 0.0
      %3839 = vmatprep.subr.mxu0 0.0
      %3840 = vmatpush1.msra.mxu0 0.0
      %3841 = vmatprep.subr.mxu0 0.0
      %3842 = vmatpush1.msra.mxu0 0.0
      %3843 = vmatprep.subr.mxu0 0.0
      %3844 = vmatpush1.msra.mxu0 0.0
      %3845 = vmatprep.subr.mxu0 0.0
      %3846 = vmatpush1.msra.mxu0 0.0
      %3847 = vmatprep.subr.mxu0 0.0
      %3848 = vmatpush1.msra.mxu0 0.0
      %3849 = vmatprep.subr.mxu0 0.0
      %3850 = vmatpush1.msra.mxu0 0.0
      %3851 = vmatprep.subr.mxu0 0.0
      %3852 = vmatpush1.msra.mxu0 0.0
      %3853 = vmatprep.subr.mxu0 0.0
      %3854 = vmatpush1.msra.mxu0 0.0
      %3855 = vmatprep.subr.mxu0 0.0
      %3856 = vmatpush1.msra.mxu0 0.0
      %3857 = vmatprep.subr.mxu0 0.0
      %3858 = vmatpush1.msra.mxu0 0.0
      %3859 = vmatprep.subr.mxu0 0.0
      %3860 = vmatpush1.msra.mxu0 0.0
      %3861 = vmatprep.subr.mxu0 0.0
      %3862 = vmatpush1.msra.mxu0 0.0
      %3863 = vmatprep.subr.mxu0 0.0
      %3864 = vmatpush1.msra.mxu0 0.0
      %3865 = vmatprep.subr.mxu0 0.0
      %3866 = vmatpush1.msra.mxu0 0.0
      %3867 = vmatprep.subr.mxu0 0.0
      %3868 = vmatpush1.msra.mxu0 0.0
      %3869 = vmatprep.subr.mxu0 0.0
      %3870 = vmatpush1.msra.mxu0 0.0
      %3871 = vmatprep.subr.mxu0 0.0
      %3872 = vmatpush1.msra.mxu0 0.0
      %3873 = vmatprep.subr.mxu0 0.0
      %3874 = vmatpush1.msra.mxu0 0.0
      %3875 = vmatprep.subr.mxu0 0.0
      %3876 = vmatpush1.msra.mxu0 0.0
      %3877 = vmatprep.subr.mxu0 0.0
      %3878 = vmatpush1.msra.mxu0 0.0
      %3879 = vmatprep.subr.mxu0 0.0
      %3880 = vmatpush1.msra.mxu0 0.0
      %3881 = vmatprep.subr.mxu0 0.0
      %3882 = vmatpush1.msra.mxu0 0.0
      %3883 = vmatprep.subr.mxu0 0.0
      %3884 = vmatpush1.msra.mxu0 0.0
      %3885 = vmatprep.mubr.f32.mxu0 0.0
      %3886 = vmatmul.mubr.f32.gmra.mrb[0].mxu0 %v3798
      %v3887 = vpop.f32.mrb[0].mxu0
      %v3888 = vadd.f32 0.0, %v3887
      %v3889 = vpop.f32.mrb[0].mxu0
      %3890 = vmatprep.mubr.f32.mxu0 0.0
      %3891 = vmatmul.mubr.f32.gmra.mrb[0].mxu0 %v3801
      %v3892 = vpop.f32.mrb[0].mxu0
      %v3893 = vadd.f32 0.0, %v3892
      %v3894 = vpop.f32.mrb[0].mxu0
      %3895 = vmatprep.mubr.f32.mxu0 0.0
      %3896 = vmatmul.mubr.f32.gmra.mrb[0].mxu0 %v3804
      %v3897 = vpop.f32.mrb[0].mxu0
      %v3898 = vadd.f32 0.0, %v3897
      %v3899 = vpop.f32.mrb[0].mxu0
      %3900 = vmatprep.mubr.f32.mxu0 0.0
      %3901 = vmatmul.mubr.f32.gmra.mrb[0].mxu0 %v3807
      %v3902 = vpop.f32.mrb[0].mxu0
      %v3903 = vadd.f32 0.0, %v3902
      %v3904 = vpop.f32.mrb[0].mxu0
      %3905 = vmatprep.mubr.f32.mxu0 0.0
      %3906 = vmatmul.mubr.f32.gmra.mrb[0].mxu0 %v3810
      %v3907 = vpop.f32.mrb[0].mxu0
      %v3908 = vadd.f32 0.0, %v3907
      %v3909 = vpop.f32.mrb[0].mxu0
      %3910 = vmatprep.mubr.f32.mxu0 0.0
      %3911 = vmatmul.mubr.f32.gmra.mrb[0].mxu0 %v3813
      %v3912 = vpop.f32.mrb[0].mxu0
      %v3913 = vadd.f32 0.0, %v3912
      %v3914 = vpop.f32.mrb[0].mxu0
      %3915 = vmatprep.mubr.f32.mxu0 0.0
      %3916 = vmatmul.mubr.f32.gmra.mrb[0].mxu0 %v3816
      %v3917 = vpop.f32.mrb[0].mxu0
      %v3918 = vadd.f32 0.0, %v3917
      %v3919 = vpop.f32.mrb[0].mxu0
      %3920 = vmatprep.mubr.f32.mxu0 0.0
      %3921 = vmatmul.mubr.f32.gmra.mrb[0].mxu0 %v3819
      %v3922 = vpop.f32.mrb[0].mxu0
      %v3923 = vadd.f32 0.0, %v3922
      %v3924 = vpop.f32.mrb[0].mxu0
      %3925 = vdwg.mxu0
      %v3927 = vsel %vm2824, %v3434, 0
      %v3930 = vsel %vm2824, %v3439, 0
      %v3933 = vsel %vm2824, %v3444, 0
      %v3936 = vsel %vm2824, %v3449, 0
      %v3939 = vsel %vm2824, %v3454, 0
      %v3942 = vsel %vm2824, %v3459, 0
      %v3945 = vsel %vm2824, %v3464, 0
      %v3948 = vsel %vm2824, %v3469, 0
      %3950 = vmatprep.subr.mxu0 0.0
      %3951 = vmatpush1.msra.mxu0 %v3792
      %3952 = vmatprep.subr.mxu0 0.0
      %3953 = vmatpush1.msra.mxu0 %v3793
      %3954 = vmatprep.subr.mxu0 0.0
      %3955 = vmatpush1.msra.mxu0 0.0
      %3956 = vmatprep.subr.mxu0 0.0
      %3957 = vmatpush1.msra.mxu0 0.0
      %3958 = vmatprep.subr.mxu0 0.0
      %3959 = vmatpush1.msra.mxu0 0.0
      %3960 = vmatprep.subr.mxu0 0.0
      %3961 = vmatpush1.msra.mxu0 0.0
      %3962 = vmatprep.subr.mxu0 0.0
      %3963 = vmatpush1.msra.mxu0 0.0
      %3964 = vmatprep.subr.mxu0 0.0
      %3965 = vmatpush1.msra.mxu0 0.0
      %3966 = vmatprep.subr.mxu0 0.0
      %3967 = vmatpush1.msra.mxu0 0.0
      %3968 = vmatprep.subr.mxu0 0.0
      %3969 = vmatpush1.msra.mxu0 0.0
      %3970 = vmatprep.subr.mxu0 0.0
      %3971 = vmatpush1.msra.mxu0 0.0
      %3972 = vmatprep.subr.mxu0 0.0
      %3973 = vmatpush1.msra.mxu0 0.0
      %3974 = vmatprep.subr.mxu0 0.0
      %3975 = vmatpush1.msra.mxu0 0.0
      %3976 = vmatprep.subr.mxu0 0.0
      %3977 = vmatpush1.msra.mxu0 0.0
      %3978 = vmatprep.subr.mxu0 0.0
      %3979 = vmatpush1.msra.mxu0 0.0
      %3980 = vmatprep.subr.mxu0 0.0
      %3981 = vmatpush1.msra.mxu0 0.0
      %3982 = vmatprep.subr.mxu0 0.0
      %3983 = vmatpush1.msra.mxu0 0.0
      %3984 = vmatprep.subr.mxu0 0.0
      %3985 = vmatpush1.msra.mxu0 0.0
      %3986 = vmatprep.subr.mxu0 0.0
      %3987 = vmatpush1.msra.mxu0 0.0
      %3988 = vmatprep.subr.mxu0 0.0
      %3989 = vmatpush1.msra.mxu0 0.0
      %3990 = vmatprep.subr.mxu0 0.0
      %3991 = vmatpush1.msra.mxu0 0.0
      %3992 = vmatprep.subr.mxu0 0.0
      %3993 = vmatpush1.msra.mxu0 0.0
      %3994 = vmatprep.subr.mxu0 0.0
      %3995 = vmatpush1.msra.mxu0 0.0
      %3996 = vmatprep.subr.mxu0 0.0
      %3997 = vmatpush1.msra.mxu0 0.0
      %3998 = vmatprep.subr.mxu0 0.0
      %3999 = vmatpush1.msra.mxu0 0.0
      %4000 = vmatprep.subr.mxu0 0.0
      %4001 = vmatpush1.msra.mxu0 0.0
      %4002 = vmatprep.subr.mxu0 0.0
      %4003 = vmatpush1.msra.mxu0 0.0
      %4004 = vmatprep.subr.mxu0 0.0
      %4005 = vmatpush1.msra.mxu0 0.0
      %4006 = vmatprep.subr.mxu0 0.0
      %4007 = vmatpush1.msra.mxu0 0.0
      %4008 = vmatprep.subr.mxu0 0.0
      %4009 = vmatpush1.msra.mxu0 0.0
      %4010 = vmatprep.subr.mxu0 0.0
      %4011 = vmatpush1.msra.mxu0 0.0
      %4012 = vmatprep.subr.mxu0 0.0
      %4013 = vmatpush1.msra.mxu0 0.0
      %4014 = vmatprep.mubr.f32.mxu0 0.0
      %4015 = vmatmul.mubr.f32.gmra.mrb[0].mxu0 %v3927
      %v4016 = vpop.f32.mrb[0].mxu0
      %v4017 = vadd.f32 %v3888, %v4016
      %v4018 = vpop.f32.mrb[0].mxu0
      %4019 = vmatprep.mubr.f32.mxu0 0.0
      %4020 = vmatmul.mubr.f32.gmra.mrb[0].mxu0 %v3930
      %v4021 = vpop.f32.mrb[0].mxu0
      %v4022 = vadd.f32 %v3893, %v4021
      %v4023 = vpop.f32.mrb[0].mxu0
      %4024 = vmatprep.mubr.f32.mxu0 0.0
      %4025 = vmatmul.mubr.f32.gmra.mrb[0].mxu0 %v3933
      %v4026 = vpop.f32.mrb[0].mxu0
      %v4027 = vadd.f32 %v3898, %v4026
      %v4028 = vpop.f32.mrb[0].mxu0
      %4029 = vmatprep.mubr.f32.mxu0 0.0
      %4030 = vmatmul.mubr.f32.gmra.mrb[0].mxu0 %v3936
      %v4031 = vpop.f32.mrb[0].mxu0
      %v4032 = vadd.f32 %v3903, %v4031
      %v4033 = vpop.f32.mrb[0].mxu0
      %4034 = vmatprep.mubr.f32.mxu0 0.0
      %4035 = vmatmul.mubr.f32.gmra.mrb[0].mxu0 %v3939
      %v4036 = vpop.f32.mrb[0].mxu0
      %v4037 = vadd.f32 %v3908, %v4036
      %v4038 = vpop.f32.mrb[0].mxu0
      %4039 = vmatprep.mubr.f32.mxu0 0.0
      %4040 = vmatmul.mubr.f32.gmra.mrb[0].mxu0 %v3942
      %v4041 = vpop.f32.mrb[0].mxu0
      %v4042 = vadd.f32 %v3913, %v4041
      %v4043 = vpop.f32.mrb[0].mxu0
      %4044 = vmatprep.mubr.f32.mxu0 0.0
      %4045 = vmatmul.mubr.f32.gmra.mrb[0].mxu0 %v3945
      %v4046 = vpop.f32.mrb[0].mxu0
      %v4047 = vadd.f32 %v3918, %v4046
      %v4048 = vpop.f32.mrb[0].mxu0
      %4049 = vmatprep.mubr.f32.mxu0 0.0
      %4050 = vmatmul.mubr.f32.gmra.mrb[0].mxu0 %v3948
      %v4051 = vpop.f32.mrb[0].mxu0
      %v4052 = vadd.f32 %v3923, %v4051
      %v4053 = vpop.f32.mrb[0].mxu0
      %4054 = vdwg.mxu0
      %s4055 = scalar_lea.vmem %s8, 32
      %v4056 = vld [vmem:[%s4055] sm:$0xff]
      %v4057 = vld [vmem:[%s4055 + $0x8] sm:$0xff]
      %v4059 = vsel %vm2824, %v3514, 0
      %v4062 = vsel %vm2824, %v3519, 0
      %v4065 = vsel %vm2824, %v3524, 0
      %v4068 = vsel %vm2824, %v3529, 0
      %v4071 = vsel %vm2824, %v3534, 0
      %v4074 = vsel %vm2824, %v3539, 0
      %v4077 = vsel %vm2824, %v3544, 0
      %v4080 = vsel %vm2824, %v3549, 0
      %4082 = vmatprep.subr.mxu0 0.0
      %4083 = vmatpush1.msra.mxu0 %v4056
      %4084 = vmatprep.subr.mxu0 0.0
      %4085 = vmatpush1.msra.mxu0 %v4057
      %4086 = vmatprep.subr.mxu0 0.0
      %4087 = vmatpush1.msra.mxu0 0.0
      %4088 = vmatprep.subr.mxu0 0.0
      %4089 = vmatpush1.msra.mxu0 0.0
      %4090 = vmatprep.subr.mxu0 0.0
      %4091 = vmatpush1.msra.mxu0 0.0
      %4092 = vmatprep.subr.mxu0 0.0
      %4093 = vmatpush1.msra.mxu0 0.0
      %4094 = vmatprep.subr.mxu0 0.0
      %4095 = vmatpush1.msra.mxu0 0.0
      %4096 = vmatprep.subr.mxu0 0.0
      %4097 = vmatpush1.msra.mxu0 0.0
      %4098 = vmatprep.subr.mxu0 0.0
      %4099 = vmatpush1.msra.mxu0 0.0
      %4100 = vmatprep.subr.mxu0 0.0
      %4101 = vmatpush1.msra.mxu0 0.0
      %4102 = vmatprep.subr.mxu0 0.0
      %4103 = vmatpush1.msra.mxu0 0.0
      %4104 = vmatprep.subr.mxu0 0.0
      %4105 = vmatpush1.msra.mxu0 0.0
      %4106 = vmatprep.subr.mxu0 0.0
      %4107 = vmatpush1.msra.mxu0 0.0
      %4108 = vmatprep.subr.mxu0 0.0
      %4109 = vmatpush1.msra.mxu0 0.0
      %4110 = vmatprep.subr.mxu0 0.0
      %4111 = vmatpush1.msra.mxu0 0.0
      %4112 = vmatprep.subr.mxu0 0.0
      %4113 = vmatpush1.msra.mxu0 0.0
      %4114 = vmatprep.subr.mxu0 0.0
      %4115 = vmatpush1.msra.mxu0 0.0
      %4116 = vmatprep.subr.mxu0 0.0
      %4117 = vmatpush1.msra.mxu0 0.0
      %4118 = vmatprep.subr.mxu0 0.0
      %4119 = vmatpush1.msra.mxu0 0.0
      %4120 = vmatprep.subr.mxu0 0.0
      %4121 = vmatpush1.msra.mxu0 0.0
      %4122 = vmatprep.subr.mxu0 0.0
      %4123 = vmatpush1.msra.mxu0 0.0
      %4124 = vmatprep.subr.mxu0 0.0
      %4125 = vmatpush1.msra.mxu0 0.0
      %4126 = vmatprep.subr.mxu0 0.0
      %4127 = vmatpush1.msra.mxu0 0.0
      %4128 = vmatprep.subr.mxu0 0.0
      %4129 = vmatpush1.msra.mxu0 0.0
      %4130 = vmatprep.subr.mxu0 0.0
      %4131 = vmatpush1.msra.mxu0 0.0
      %4132 = vmatprep.subr.mxu0 0.0
      %4133 = vmatpush1.msra.mxu0 0.0
      %4134 = vmatprep.subr.mxu0 0.0
      %4135 = vmatpush1.msra.mxu0 0.0
      %4136 = vmatprep.subr.mxu0 0.0
      %4137 = vmatpush1.msra.mxu0 0.0
      %4138 = vmatprep.subr.mxu0 0.0
      %4139 = vmatpush1.msra.mxu0 0.0
      %4140 = vmatprep.subr.mxu0 0.0
      %4141 = vmatpush1.msra.mxu0 0.0
      %4142 = vmatprep.subr.mxu0 0.0
      %4143 = vmatpush1.msra.mxu0 0.0
      %4144 = vmatprep.subr.mxu0 0.0
      %4145 = vmatpush1.msra.mxu0 0.0
      %4146 = vmatprep.mubr.f32.mxu0 0.0
      %4147 = vmatmul.mubr.f32.gmra.mrb[0].mxu0 %v4059
      %v4148 = vpop.f32.mrb[0].mxu0
      %v4149 = vadd.f32 0.0, %v4148
      %v4150 = vpop.f32.mrb[0].mxu0
      %4151 = vmatprep.mubr.f32.mxu0 0.0
      %4152 = vmatmul.mubr.f32.gmra.mrb[0].mxu0 %v4062
      %v4153 = vpop.f32.mrb[0].mxu0
      %v4154 = vadd.f32 0.0, %v4153
      %v4155 = vpop.f32.mrb[0].mxu0
      %4156 = vmatprep.mubr.f32.mxu0 0.0
      %4157 = vmatmul.mubr.f32.gmra.mrb[0].mxu0 %v4065
      %v4158 = vpop.f32.mrb[0].mxu0
      %v4159 = vadd.f32 0.0, %v4158
      %v4160 = vpop.f32.mrb[0].mxu0
      %4161 = vmatprep.mubr.f32.mxu0 0.0
      %4162 = vmatmul.mubr.f32.gmra.mrb[0].mxu0 %v4068
      %v4163 = vpop.f32.mrb[0].mxu0
      %v4164 = vadd.f32 0.0, %v4163
      %v4165 = vpop.f32.mrb[0].mxu0
      %4166 = vmatprep.mubr.f32.mxu0 0.0
      %4167 = vmatmul.mubr.f32.gmra.mrb[0].mxu0 %v4071
      %v4168 = vpop.f32.mrb[0].mxu0
      %v4169 = vadd.f32 0.0, %v4168
      %v4170 = vpop.f32.mrb[0].mxu0
      %4171 = vmatprep.mubr.f32.mxu0 0.0
      %4172 = vmatmul.mubr.f32.gmra.mrb[0].mxu0 %v4074
      %v4173 = vpop.f32.mrb[0].mxu0
      %v4174 = vadd.f32 0.0, %v4173
      %v4175 = vpop.f32.mrb[0].mxu0
      %4176 = vmatprep.mubr.f32.mxu0 0.0
      %4177 = vmatmul.mubr.f32.gmra.mrb[0].mxu0 %v4077
      %v4178 = vpop.f32.mrb[0].mxu0
      %v4179 = vadd.f32 0.0, %v4178
      %v4180 = vpop.f32.mrb[0].mxu0
      %4181 = vmatprep.mubr.f32.mxu0 0.0
      %4182 = vmatmul.mubr.f32.gmra.mrb[0].mxu0 %v4080
      %v4183 = vpop.f32.mrb[0].mxu0
      %v4184 = vadd.f32 0.0, %v4183
      %v4185 = vpop.f32.mrb[0].mxu0
      %4186 = vdwg.mxu0
      %v4187 = vadd.f32 %v4017, %v4149
      %v4188 = vadd.f32 %v4022, %v4154
      %v4189 = vadd.f32 %v4027, %v4159
      %v4190 = vadd.f32 %v4032, %v4164
      %v4191 = vadd.f32 %v4037, %v4169
      %v4192 = vadd.f32 %v4042, %v4174
      %v4193 = vadd.f32 %v4047, %v4179
      %v4194 = vadd.f32 %v4052, %v4184
      %s4195 = scalar_lea.vmem %s8, 48
      %v4196 = vld [vmem:[%s4195] sm:$0xff]
      %v4197 = vld [vmem:[%s4195 + $0x8] sm:$0xff]
      %v4199 = vsel %vm2824, %v3554, 0
      %v4202 = vsel %vm2824, %v3559, 0
      %v4205 = vsel %vm2824, %v3564, 0
      %v4208 = vsel %vm2824, %v3569, 0
      %v4211 = vsel %vm2824, %v3574, 0
      %v4214 = vsel %vm2824, %v3579, 0
      %v4217 = vsel %vm2824, %v3584, 0
      %v4220 = vsel %vm2824, %v3589, 0
      %4222 = vmatprep.subr.mxu0 0.0
      %4223 = vmatpush1.msra.mxu0 %v4196
      %4224 = vmatprep.subr.mxu0 0.0
      %4225 = vmatpush1.msra.mxu0 %v4197
      %4226 = vmatprep.subr.mxu0 0.0
      %4227 = vmatpush1.msra.mxu0 0.0
      %4228 = vmatprep.subr.mxu0 0.0
      %4229 = vmatpush1.msra.mxu0 0.0
      %4230 = vmatprep.subr.mxu0 0.0
      %4231 = vmatpush1.msra.mxu0 0.0
      %4232 = vmatprep.subr.mxu0 0.0
      %4233 = vmatpush1.msra.mxu0 0.0
      %4234 = vmatprep.subr.mxu0 0.0
      %4235 = vmatpush1.msra.mxu0 0.0
      %4236 = vmatprep.subr.mxu0 0.0
      %4237 = vmatpush1.msra.mxu0 0.0
      %4238 = vmatprep.subr.mxu0 0.0
      %4239 = vmatpush1.msra.mxu0 0.0
      %4240 = vmatprep.subr.mxu0 0.0
      %4241 = vmatpush1.msra.mxu0 0.0
      %4242 = vmatprep.subr.mxu0 0.0
      %4243 = vmatpush1.msra.mxu0 0.0
      %4244 = vmatprep.subr.mxu0 0.0
      %4245 = vmatpush1.msra.mxu0 0.0
      %4246 = vmatprep.subr.mxu0 0.0
      %4247 = vmatpush1.msra.mxu0 0.0
      %4248 = vmatprep.subr.mxu0 0.0
      %4249 = vmatpush1.msra.mxu0 0.0
      %4250 = vmatprep.subr.mxu0 0.0
      %4251 = vmatpush1.msra.mxu0 0.0
      %4252 = vmatprep.subr.mxu0 0.0
      %4253 = vmatpush1.msra.mxu0 0.0
      %4254 = vmatprep.subr.mxu0 0.0
      %4255 = vmatpush1.msra.mxu0 0.0
      %4256 = vmatprep.subr.mxu0 0.0
      %4257 = vmatpush1.msra.mxu0 0.0
      %4258 = vmatprep.subr.mxu0 0.0
      %4259 = vmatpush1.msra.mxu0 0.0
      %4260 = vmatprep.subr.mxu0 0.0
      %4261 = vmatpush1.msra.mxu0 0.0
      %4262 = vmatprep.subr.mxu0 0.0
      %4263 = vmatpush1.msra.mxu0 0.0
      %4264 = vmatprep.subr.mxu0 0.0
      %4265 = vmatpush1.msra.mxu0 0.0
      %4266 = vmatprep.subr.mxu0 0.0
      %4267 = vmatpush1.msra.mxu0 0.0
      %4268 = vmatprep.subr.mxu0 0.0
      %4269 = vmatpush1.msra.mxu0 0.0
      %4270 = vmatprep.subr.mxu0 0.0
      %4271 = vmatpush1.msra.mxu0 0.0
      %4272 = vmatprep.subr.mxu0 0.0
      %4273 = vmatpush1.msra.mxu0 0.0
      %4274 = vmatprep.subr.mxu0 0.0
      %4275 = vmatpush1.msra.mxu0 0.0
      %4276 = vmatprep.subr.mxu0 0.0
      %4277 = vmatpush1.msra.mxu0 0.0
      %4278 = vmatprep.subr.mxu0 0.0
      %4279 = vmatpush1.msra.mxu0 0.0
      %4280 = vmatprep.subr.mxu0 0.0
      %4281 = vmatpush1.msra.mxu0 0.0
      %4282 = vmatprep.subr.mxu0 0.0
      %4283 = vmatpush1.msra.mxu0 0.0
      %4284 = vmatprep.subr.mxu0 0.0
      %4285 = vmatpush1.msra.mxu0 0.0
      %4286 = vmatprep.mubr.f32.mxu0 0.0
      %4287 = vmatmul.mubr.f32.gmra.mrb[0].mxu0 %v4199
      %v4288 = vpop.f32.mrb[0].mxu0
      %v4289 = vadd.f32 0.0, %v4288
      %v4290 = vpop.f32.mrb[0].mxu0
      %4291 = vmatprep.mubr.f32.mxu0 0.0
      %4292 = vmatmul.mubr.f32.gmra.mrb[0].mxu0 %v4202
      %v4293 = vpop.f32.mrb[0].mxu0
      %v4294 = vadd.f32 0.0, %v4293
      %v4295 = vpop.f32.mrb[0].mxu0
      %4296 = vmatprep.mubr.f32.mxu0 0.0
      %4297 = vmatmul.mubr.f32.gmra.mrb[0].mxu0 %v4205
      %v4298 = vpop.f32.mrb[0].mxu0
      %v4299 = vadd.f32 0.0, %v4298
      %v4300 = vpop.f32.mrb[0].mxu0
      %4301 = vmatprep.mubr.f32.mxu0 0.0
      %4302 = vmatmul.mubr.f32.gmra.mrb[0].mxu0 %v4208
      %v4303 = vpop.f32.mrb[0].mxu0
      %v4304 = vadd.f32 0.0, %v4303
      %v4305 = vpop.f32.mrb[0].mxu0
      %4306 = vmatprep.mubr.f32.mxu0 0.0
      %4307 = vmatmul.mubr.f32.gmra.mrb[0].mxu0 %v4211
      %v4308 = vpop.f32.mrb[0].mxu0
      %v4309 = vadd.f32 0.0, %v4308
      %v4310 = vpop.f32.mrb[0].mxu0
      %4311 = vmatprep.mubr.f32.mxu0 0.0
      %4312 = vmatmul.mubr.f32.gmra.mrb[0].mxu0 %v4214
      %v4313 = vpop.f32.mrb[0].mxu0
      %v4314 = vadd.f32 0.0, %v4313
      %v4315 = vpop.f32.mrb[0].mxu0
      %4316 = vmatprep.mubr.f32.mxu0 0.0
      %4317 = vmatmul.mubr.f32.gmra.mrb[0].mxu0 %v4217
      %v4318 = vpop.f32.mrb[0].mxu0
      %v4319 = vadd.f32 0.0, %v4318
      %v4320 = vpop.f32.mrb[0].mxu0
      %4321 = vmatprep.mubr.f32.mxu0 0.0
      %4322 = vmatmul.mubr.f32.gmra.mrb[0].mxu0 %v4220
      %v4323 = vpop.f32.mrb[0].mxu0
      %v4324 = vadd.f32 0.0, %v4323
      %v4325 = vpop.f32.mrb[0].mxu0
      %4326 = vdwg.mxu0
      %v4327 = vadd.f32 %v4187, %v4289
      %v4328 = vadd.f32 %v4188, %v4294
      %v4329 = vadd.f32 %v4189, %v4299
      %v4330 = vadd.f32 %v4190, %v4304
      %v4331 = vadd.f32 %v4191, %v4309
      %v4332 = vadd.f32 %v4192, %v4314
      %v4333 = vadd.f32 %v4193, %v4319
      %v4334 = vadd.f32 %v4194, %v4324
      %s4335 = scalar_lea.vmem %s8, 64
      %v4336 = vld [vmem:[%s4335] sm:$0xff]
      %v4337 = vld [vmem:[%s4335 + $0x8] sm:$0xff]
      %v4339 = vsel %vm2824, %v3594, 0
      %v4342 = vsel %vm2824, %v3599, 0
      %v4345 = vsel %vm2824, %v3604, 0
      %v4348 = vsel %vm2824, %v3609, 0
      %v4351 = vsel %vm2824, %v3614, 0
      %v4354 = vsel %vm2824, %v3619, 0
      %v4357 = vsel %vm2824, %v3624, 0
      %v4360 = vsel %vm2824, %v3629, 0
      %4362 = vmatprep.subr.mxu0 0.0
      %4363 = vmatpush1.msra.mxu0 %v4336
      %4364 = vmatprep.subr.mxu0 0.0
      %4365 = vmatpush1.msra.mxu0 %v4337
      %4366 = vmatprep.subr.mxu0 0.0
      %4367 = vmatpush1.msra.mxu0 0.0
      %4368 = vmatprep.subr.mxu0 0.0
      %4369 = vmatpush1.msra.mxu0 0.0
      %4370 = vmatprep.subr.mxu0 0.0
      %4371 = vmatpush1.msra.mxu0 0.0
      %4372 = vmatprep.subr.mxu0 0.0
      %4373 = vmatpush1.msra.mxu0 0.0
      %4374 = vmatprep.subr.mxu0 0.0
      %4375 = vmatpush1.msra.mxu0 0.0
      %4376 = vmatprep.subr.mxu0 0.0
      %4377 = vmatpush1.msra.mxu0 0.0
      %4378 = vmatprep.subr.mxu0 0.0
      %4379 = vmatpush1.msra.mxu0 0.0
      %4380 = vmatprep.subr.mxu0 0.0
      %4381 = vmatpush1.msra.mxu0 0.0
      %4382 = vmatprep.subr.mxu0 0.0
      %4383 = vmatpush1.msra.mxu0 0.0
      %4384 = vmatprep.subr.mxu0 0.0
      %4385 = vmatpush1.msra.mxu0 0.0
      %4386 = vmatprep.subr.mxu0 0.0
      %4387 = vmatpush1.msra.mxu0 0.0
      %4388 = vmatprep.subr.mxu0 0.0
      %4389 = vmatpush1.msra.mxu0 0.0
      %4390 = vmatprep.subr.mxu0 0.0
      %4391 = vmatpush1.msra.mxu0 0.0
      %4392 = vmatprep.subr.mxu0 0.0
      %4393 = vmatpush1.msra.mxu0 0.0
      %4394 = vmatprep.subr.mxu0 0.0
      %4395 = vmatpush1.msra.mxu0 0.0
      %4396 = vmatprep.subr.mxu0 0.0
      %4397 = vmatpush1.msra.mxu0 0.0
      %4398 = vmatprep.subr.mxu0 0.0
      %4399 = vmatpush1.msra.mxu0 0.0
      %4400 = vmatprep.subr.mxu0 0.0
      %4401 = vmatpush1.msra.mxu0 0.0
      %4402 = vmatprep.subr.mxu0 0.0
      %4403 = vmatpush1.msra.mxu0 0.0
      %4404 = vmatprep.subr.mxu0 0.0
      %4405 = vmatpush1.msra.mxu0 0.0
      %4406 = vmatprep.subr.mxu0 0.0
      %4407 = vmatpush1.msra.mxu0 0.0
      %4408 = vmatprep.subr.mxu0 0.0
      %4409 = vmatpush1.msra.mxu0 0.0
      %4410 = vmatprep.subr.mxu0 0.0
      %4411 = vmatpush1.msra.mxu0 0.0
      %4412 = vmatprep.subr.mxu0 0.0
      %4413 = vmatpush1.msra.mxu0 0.0
      %4414 = vmatprep.subr.mxu0 0.0
      %4415 = vmatpush1.msra.mxu0 0.0
      %4416 = vmatprep.subr.mxu0 0.0
      %4417 = vmatpush1.msra.mxu0 0.0
      %4418 = vmatprep.subr.mxu0 0.0
      %4419 = vmatpush1.msra.mxu0 0.0
      %4420 = vmatprep.subr.mxu0 0.0
      %4421 = vmatpush1.msra.mxu0 0.0
      %4422 = vmatprep.subr.mxu0 0.0
      %4423 = vmatpush1.msra.mxu0 0.0
      %4424 = vmatprep.subr.mxu0 0.0
      %4425 = vmatpush1.msra.mxu0 0.0
      %4426 = vmatprep.mubr.f32.mxu0 0.0
      %4427 = vmatmul.mubr.f32.gmra.mrb[0].mxu0 %v4339
      %v4428 = vpop.f32.mrb[0].mxu0
      %v4429 = vadd.f32 0.0, %v4428
      %v4430 = vpop.f32.mrb[0].mxu0
      %4431 = vmatprep.mubr.f32.mxu0 0.0
      %4432 = vmatmul.mubr.f32.gmra.mrb[0].mxu0 %v4342
      %v4433 = vpop.f32.mrb[0].mxu0
      %v4434 = vadd.f32 0.0, %v4433
      %v4435 = vpop.f32.mrb[0].mxu0
      %4436 = vmatprep.mubr.f32.mxu0 0.0
      %4437 = vmatmul.mubr.f32.gmra.mrb[0].mxu0 %v4345
      %v4438 = vpop.f32.mrb[0].mxu0
      %v4439 = vadd.f32 0.0, %v4438
      %v4440 = vpop.f32.mrb[0].mxu0
      %4441 = vmatprep.mubr.f32.mxu0 0.0
      %4442 = vmatmul.mubr.f32.gmra.mrb[0].mxu0 %v4348
      %v4443 = vpop.f32.mrb[0].mxu0
      %v4444 = vadd.f32 0.0, %v4443
      %v4445 = vpop.f32.mrb[0].mxu0
      %4446 = vmatprep.mubr.f32.mxu0 0.0
      %4447 = vmatmul.mubr.f32.gmra.mrb[0].mxu0 %v4351
      %v4448 = vpop.f32.mrb[0].mxu0
      %v4449 = vadd.f32 0.0, %v4448
      %v4450 = vpop.f32.mrb[0].mxu0
      %4451 = vmatprep.mubr.f32.mxu0 0.0
      %4452 = vmatmul.mubr.f32.gmra.mrb[0].mxu0 %v4354
      %v4453 = vpop.f32.mrb[0].mxu0
      %v4454 = vadd.f32 0.0, %v4453
      %v4455 = vpop.f32.mrb[0].mxu0
      %4456 = vmatprep.mubr.f32.mxu0 0.0
      %4457 = vmatmul.mubr.f32.gmra.mrb[0].mxu0 %v4357
      %v4458 = vpop.f32.mrb[0].mxu0
      %v4459 = vadd.f32 0.0, %v4458
      %v4460 = vpop.f32.mrb[0].mxu0
      %4461 = vmatprep.mubr.f32.mxu0 0.0
      %4462 = vmatmul.mubr.f32.gmra.mrb[0].mxu0 %v4360
      %v4463 = vpop.f32.mrb[0].mxu0
      %v4464 = vadd.f32 0.0, %v4463
      %v4465 = vpop.f32.mrb[0].mxu0
      %4466 = vdwg.mxu0
      %v4467 = vadd.f32 %v4327, %v4429
      %v4468 = vadd.f32 %v4328, %v4434
      %v4469 = vadd.f32 %v4329, %v4439
      %v4470 = vadd.f32 %v4330, %v4444
      %v4471 = vadd.f32 %v4331, %v4449
      %v4472 = vadd.f32 %v4332, %v4454
      %v4473 = vadd.f32 %v4333, %v4459
      %v4474 = vadd.f32 %v4334, %v4464
      %s4475 = scalar_lea.vmem %s8, 80
      %v4476 = vld [vmem:[%s4475] sm:$0xff]
      %v4477 = vld [vmem:[%s4475 + $0x8] sm:$0xff]
      %v4479 = vsel %vm2824, %v3634, 0
      %v4482 = vsel %vm2824, %v3639, 0
      %v4485 = vsel %vm2824, %v3644, 0
      %v4488 = vsel %vm2824, %v3649, 0
      %v4491 = vsel %vm2824, %v3654, 0
      %v4494 = vsel %vm2824, %v3659, 0
      %v4497 = vsel %vm2824, %v3664, 0
      %v4500 = vsel %vm2824, %v3669, 0
      %4502 = vmatprep.subr.mxu0 0.0
      %4503 = vmatpush1.msra.mxu0 %v4476
      %4504 = vmatprep.subr.mxu0 0.0
      %4505 = vmatpush1.msra.mxu0 %v4477
      %4506 = vmatprep.subr.mxu0 0.0
      %4507 = vmatpush1.msra.mxu0 0.0
      %4508 = vmatprep.subr.mxu0 0.0
      %4509 = vmatpush1.msra.mxu0 0.0
      %4510 = vmatprep.subr.mxu0 0.0
      %4511 = vmatpush1.msra.mxu0 0.0
      %4512 = vmatprep.subr.mxu0 0.0
      %4513 = vmatpush1.msra.mxu0 0.0
      %4514 = vmatprep.subr.mxu0 0.0
      %4515 = vmatpush1.msra.mxu0 0.0
      %4516 = vmatprep.subr.mxu0 0.0
      %4517 = vmatpush1.msra.mxu0 0.0
      %4518 = vmatprep.subr.mxu0 0.0
      %4519 = vmatpush1.msra.mxu0 0.0
      %4520 = vmatprep.subr.mxu0 0.0
      %4521 = vmatpush1.msra.mxu0 0.0
      %4522 = vmatprep.subr.mxu0 0.0
      %4523 = vmatpush1.msra.mxu0 0.0
      %4524 = vmatprep.subr.mxu0 0.0
      %4525 = vmatpush1.msra.mxu0 0.0
      %4526 = vmatprep.subr.mxu0 0.0
      %4527 = vmatpush1.msra.mxu0 0.0
      %4528 = vmatprep.subr.mxu0 0.0
      %4529 = vmatpush1.msra.mxu0 0.0
      %4530 = vmatprep.subr.mxu0 0.0
      %4531 = vmatpush1.msra.mxu0 0.0
      %4532 = vmatprep.subr.mxu0 0.0
      %4533 = vmatpush1.msra.mxu0 0.0
      %4534 = vmatprep.subr.mxu0 0.0
      %4535 = vmatpush1.msra.mxu0 0.0
      %4536 = vmatprep.subr.mxu0 0.0
      %4537 = vmatpush1.msra.mxu0 0.0
      %4538 = vmatprep.subr.mxu0 0.0
      %4539 = vmatpush1.msra.mxu0 0.0
      %4540 = vmatprep.subr.mxu0 0.0
      %4541 = vmatpush1.msra.mxu0 0.0
      %4542 = vmatprep.subr.mxu0 0.0
      %4543 = vmatpush1.msra.mxu0 0.0
      %4544 = vmatprep.subr.mxu0 0.0
      %4545 = vmatpush1.msra.mxu0 0.0
      %4546 = vmatprep.subr.mxu0 0.0
      %4547 = vmatpush1.msra.mxu0 0.0
      %4548 = vmatprep.subr.mxu0 0.0
      %4549 = vmatpush1.msra.mxu0 0.0
      %4550 = vmatprep.subr.mxu0 0.0
      %4551 = vmatpush1.msra.mxu0 0.0
      %4552 = vmatprep.subr.mxu0 0.0
      %4553 = vmatpush1.msra.mxu0 0.0
      %4554 = vmatprep.subr.mxu0 0.0
      %4555 = vmatpush1.msra.mxu0 0.0
      %4556 = vmatprep.subr.mxu0 0.0
      %4557 = vmatpush1.msra.mxu0 0.0
      %4558 = vmatprep.subr.mxu0 0.0
      %4559 = vmatpush1.msra.mxu0 0.0
      %4560 = vmatprep.subr.mxu0 0.0
      %4561 = vmatpush1.msra.mxu0 0.0
      %4562 = vmatprep.subr.mxu0 0.0
      %4563 = vmatpush1.msra.mxu0 0.0
      %4564 = vmatprep.subr.mxu0 0.0
      %4565 = vmatpush1.msra.mxu0 0.0
      %4566 = vmatprep.mubr.f32.mxu0 0.0
      %4567 = vmatmul.mubr.f32.gmra.mrb[0].mxu0 %v4479
      %v4568 = vpop.f32.mrb[0].mxu0
      %v4569 = vadd.f32 0.0, %v4568
      %v4570 = vpop.f32.mrb[0].mxu0
      %4571 = vmatprep.mubr.f32.mxu0 0.0
      %4572 = vmatmul.mubr.f32.gmra.mrb[0].mxu0 %v4482
      %v4573 = vpop.f32.mrb[0].mxu0
      %v4574 = vadd.f32 0.0, %v4573
      %v4575 = vpop.f32.mrb[0].mxu0
      %4576 = vmatprep.mubr.f32.mxu0 0.0
      %4577 = vmatmul.mubr.f32.gmra.mrb[0].mxu0 %v4485
      %v4578 = vpop.f32.mrb[0].mxu0
      %v4579 = vadd.f32 0.0, %v4578
      %v4580 = vpop.f32.mrb[0].mxu0
      %4581 = vmatprep.mubr.f32.mxu0 0.0
      %4582 = vmatmul.mubr.f32.gmra.mrb[0].mxu0 %v4488
      %v4583 = vpop.f32.mrb[0].mxu0
      %v4584 = vadd.f32 0.0, %v4583
      %v4585 = vpop.f32.mrb[0].mxu0
      %4586 = vmatprep.mubr.f32.mxu0 0.0
      %4587 = vmatmul.mubr.f32.gmra.mrb[0].mxu0 %v4491
      %v4588 = vpop.f32.mrb[0].mxu0
      %v4589 = vadd.f32 0.0, %v4588
      %v4590 = vpop.f32.mrb[0].mxu0
      %4591 = vmatprep.mubr.f32.mxu0 0.0
      %4592 = vmatmul.mubr.f32.gmra.mrb[0].mxu0 %v4494
      %v4593 = vpop.f32.mrb[0].mxu0
      %v4594 = vadd.f32 0.0, %v4593
      %v4595 = vpop.f32.mrb[0].mxu0
      %4596 = vmatprep.mubr.f32.mxu0 0.0
      %4597 = vmatmul.mubr.f32.gmra.mrb[0].mxu0 %v4497
      %v4598 = vpop.f32.mrb[0].mxu0
      %v4599 = vadd.f32 0.0, %v4598
      %v4600 = vpop.f32.mrb[0].mxu0
      %4601 = vmatprep.mubr.f32.mxu0 0.0
      %4602 = vmatmul.mubr.f32.gmra.mrb[0].mxu0 %v4500
      %v4603 = vpop.f32.mrb[0].mxu0
      %v4604 = vadd.f32 0.0, %v4603
      %v4605 = vpop.f32.mrb[0].mxu0
      %4606 = vdwg.mxu0
      %v4607 = vadd.f32 %v4467, %v4569
      %v4608 = vadd.f32 %v4468, %v4574
      %v4609 = vadd.f32 %v4469, %v4579
      %v4610 = vadd.f32 %v4470, %v4584
      %v4611 = vadd.f32 %v4471, %v4589
      %v4612 = vadd.f32 %v4472, %v4594
      %v4613 = vadd.f32 %v4473, %v4599
      %v4614 = vadd.f32 %v4474, %v4604
      %s4615 = scalar_lea.vmem %s8, 96
      %v4616 = vld [vmem:[%s4615] sm:$0xff]
      %v4617 = vld [vmem:[%s4615 + $0x8] sm:$0xff]
      %v4619 = vsel %vm2824, %v3674, 0
      %v4622 = vsel %vm2824, %v3679, 0
      %v4625 = vsel %vm2824, %v3684, 0
      %v4628 = vsel %vm2824, %v3689, 0
      %v4631 = vsel %vm2824, %v3694, 0
      %v4634 = vsel %vm2824, %v3699, 0
      %v4637 = vsel %vm2824, %v3704, 0
      %v4640 = vsel %vm2824, %v3709, 0
      %4642 = vmatprep.subr.mxu0 0.0
      %4643 = vmatpush1.msra.mxu0 %v4616
      %4644 = vmatprep.subr.mxu0 0.0
      %4645 = vmatpush1.msra.mxu0 %v4617
      %4646 = vmatprep.subr.mxu0 0.0
      %4647 = vmatpush1.msra.mxu0 0.0
      %4648 = vmatprep.subr.mxu0 0.0
      %4649 = vmatpush1.msra.mxu0 0.0
      %4650 = vmatprep.subr.mxu0 0.0
      %4651 = vmatpush1.msra.mxu0 0.0
      %4652 = vmatprep.subr.mxu0 0.0
      %4653 = vmatpush1.msra.mxu0 0.0
      %4654 = vmatprep.subr.mxu0 0.0
      %4655 = vmatpush1.msra.mxu0 0.0
      %4656 = vmatprep.subr.mxu0 0.0
      %4657 = vmatpush1.msra.mxu0 0.0
      %4658 = vmatprep.subr.mxu0 0.0
      %4659 = vmatpush1.msra.mxu0 0.0
      %4660 = vmatprep.subr.mxu0 0.0
      %4661 = vmatpush1.msra.mxu0 0.0
      %4662 = vmatprep.subr.mxu0 0.0
      %4663 = vmatpush1.msra.mxu0 0.0
      %4664 = vmatprep.subr.mxu0 0.0
      %4665 = vmatpush1.msra.mxu0 0.0
      %4666 = vmatprep.subr.mxu0 0.0
      %4667 = vmatpush1.msra.mxu0 0.0
      %4668 = vmatprep.subr.mxu0 0.0
      %4669 = vmatpush1.msra.mxu0 0.0
      %4670 = vmatprep.subr.mxu0 0.0
      %4671 = vmatpush1.msra.mxu0 0.0
      %4672 = vmatprep.subr.mxu0 0.0
      %4673 = vmatpush1.msra.mxu0 0.0
      %4674 = vmatprep.subr.mxu0 0.0
      %4675 = vmatpush1.msra.mxu0 0.0
      %4676 = vmatprep.subr.mxu0 0.0
      %4677 = vmatpush1.msra.mxu0 0.0
      %4678 = vmatprep.subr.mxu0 0.0
      %4679 = vmatpush1.msra.mxu0 0.0
      %4680 = vmatprep.subr.mxu0 0.0
      %4681 = vmatpush1.msra.mxu0 0.0
      %4682 = vmatprep.subr.mxu0 0.0
      %4683 = vmatpush1.msra.mxu0 0.0
      %4684 = vmatprep.subr.mxu0 0.0
      %4685 = vmatpush1.msra.mxu0 0.0
      %4686 = vmatprep.subr.mxu0 0.0
      %4687 = vmatpush1.msra.mxu0 0.0
      %4688 = vmatprep.subr.mxu0 0.0
      %4689 = vmatpush1.msra.mxu0 0.0
      %4690 = vmatprep.subr.mxu0 0.0
      %4691 = vmatpush1.msra.mxu0 0.0
      %4692 = vmatprep.subr.mxu0 0.0
      %4693 = vmatpush1.msra.mxu0 0.0
      %4694 = vmatprep.subr.mxu0 0.0
      %4695 = vmatpush1.msra.mxu0 0.0
      %4696 = vmatprep.subr.mxu0 0.0
      %4697 = vmatpush1.msra.mxu0 0.0
      %4698 = vmatprep.subr.mxu0 0.0
      %4699 = vmatpush1.msra.mxu0 0.0
      %4700 = vmatprep.subr.mxu0 0.0
      %4701 = vmatpush1.msra.mxu0 0.0
      %4702 = vmatprep.subr.mxu0 0.0
      %4703 = vmatpush1.msra.mxu0 0.0
      %4704 = vmatprep.subr.mxu0 0.0
      %4705 = vmatpush1.msra.mxu0 0.0
      %4706 = vmatprep.mubr.f32.mxu0 0.0
      %4707 = vmatmul.mubr.f32.gmra.mrb[0].mxu0 %v4619
      %v4708 = vpop.f32.mrb[0].mxu0
      %v4709 = vadd.f32 0.0, %v4708
      %v4710 = vpop.f32.mrb[0].mxu0
      %4711 = vmatprep.mubr.f32.mxu0 0.0
      %4712 = vmatmul.mubr.f32.gmra.mrb[0].mxu0 %v4622
      %v4713 = vpop.f32.mrb[0].mxu0
      %v4714 = vadd.f32 0.0, %v4713
      %v4715 = vpop.f32.mrb[0].mxu0
      %4716 = vmatprep.mubr.f32.mxu0 0.0
      %4717 = vmatmul.mubr.f32.gmra.mrb[0].mxu0 %v4625
      %v4718 = vpop.f32.mrb[0].mxu0
      %v4719 = vadd.f32 0.0, %v4718
      %v4720 = vpop.f32.mrb[0].mxu0
      %4721 = vmatprep.mubr.f32.mxu0 0.0
      %4722 = vmatmul.mubr.f32.gmra.mrb[0].mxu0 %v4628
      %v4723 = vpop.f32.mrb[0].mxu0
      %v4724 = vadd.f32 0.0, %v4723
      %v4725 = vpop.f32.mrb[0].mxu0
      %4726 = vmatprep.mubr.f32.mxu0 0.0
      %4727 = vmatmul.mubr.f32.gmra.mrb[0].mxu0 %v4631
      %v4728 = vpop.f32.mrb[0].mxu0
      %v4729 = vadd.f32 0.0, %v4728
      %v4730 = vpop.f32.mrb[0].mxu0
      %4731 = vmatprep.mubr.f32.mxu0 0.0
      %4732 = vmatmul.mubr.f32.gmra.mrb[0].mxu0 %v4634
      %v4733 = vpop.f32.mrb[0].mxu0
      %v4734 = vadd.f32 0.0, %v4733
      %v4735 = vpop.f32.mrb[0].mxu0
      %4736 = vmatprep.mubr.f32.mxu0 0.0
      %4737 = vmatmul.mubr.f32.gmra.mrb[0].mxu0 %v4637
      %v4738 = vpop.f32.mrb[0].mxu0
      %v4739 = vadd.f32 0.0, %v4738
      %v4740 = vpop.f32.mrb[0].mxu0
      %4741 = vmatprep.mubr.f32.mxu0 0.0
      %4742 = vmatmul.mubr.f32.gmra.mrb[0].mxu0 %v4640
      %v4743 = vpop.f32.mrb[0].mxu0
      %v4744 = vadd.f32 0.0, %v4743
      %v4745 = vpop.f32.mrb[0].mxu0
      %4746 = vdwg.mxu0
      %v4747 = vadd.f32 %v4607, %v4709
      %v4748 = vadd.f32 %v4608, %v4714
      %v4749 = vadd.f32 %v4609, %v4719
      %v4750 = vadd.f32 %v4610, %v4724
      %v4751 = vadd.f32 %v4611, %v4729
      %v4752 = vadd.f32 %v4612, %v4734
      %v4753 = vadd.f32 %v4613, %v4739
      %v4754 = vadd.f32 %v4614, %v4744
      %s4755 = scalar_lea.vmem %s8, 112
      %v4756 = vld [vmem:[%s4755] sm:$0xff]
      %v4757 = vld [vmem:[%s4755 + $0x8] sm:$0xff]
      %v4759 = vsel %vm2824, %v3714, 0
      %v4762 = vsel %vm2824, %v3719, 0
      %v4765 = vsel %vm2824, %v3724, 0
      %v4768 = vsel %vm2824, %v3729, 0
      %v4771 = vsel %vm2824, %v3734, 0
      %v4774 = vsel %vm2824, %v3739, 0
      %v4777 = vsel %vm2824, %v3744, 0
      %v4780 = vsel %vm2824, %v3749, 0
      %4782 = vmatprep.subr.mxu0 0.0
      %4783 = vmatpush1.msra.mxu0 %v4756
      %4784 = vmatprep.subr.mxu0 0.0
      %4785 = vmatpush1.msra.mxu0 %v4757
      %4786 = vmatprep.subr.mxu0 0.0
      %4787 = vmatpush1.msra.mxu0 0.0
      %4788 = vmatprep.subr.mxu0 0.0
      %4789 = vmatpush1.msra.mxu0 0.0
      %4790 = vmatprep.subr.mxu0 0.0
      %4791 = vmatpush1.msra.mxu0 0.0
      %4792 = vmatprep.subr.mxu0 0.0
      %4793 = vmatpush1.msra.mxu0 0.0
      %4794 = vmatprep.subr.mxu0 0.0
      %4795 = vmatpush1.msra.mxu0 0.0
      %4796 = vmatprep.subr.mxu0 0.0
      %4797 = vmatpush1.msra.mxu0 0.0
      %4798 = vmatprep.subr.mxu0 0.0
      %4799 = vmatpush1.msra.mxu0 0.0
      %4800 = vmatprep.subr.mxu0 0.0
      %4801 = vmatpush1.msra.mxu0 0.0
      %4802 = vmatprep.subr.mxu0 0.0
      %4803 = vmatpush1.msra.mxu0 0.0
      %4804 = vmatprep.subr.mxu0 0.0
      %4805 = vmatpush1.msra.mxu0 0.0
      %4806 = vmatprep.subr.mxu0 0.0
      %4807 = vmatpush1.msra.mxu0 0.0
      %4808 = vmatprep.subr.mxu0 0.0
      %4809 = vmatpush1.msra.mxu0 0.0
      %4810 = vmatprep.subr.mxu0 0.0
      %4811 = vmatpush1.msra.mxu0 0.0
      %4812 = vmatprep.subr.mxu0 0.0
      %4813 = vmatpush1.msra.mxu0 0.0
      %4814 = vmatprep.subr.mxu0 0.0
      %4815 = vmatpush1.msra.mxu0 0.0
      %4816 = vmatprep.subr.mxu0 0.0
      %4817 = vmatpush1.msra.mxu0 0.0
      %4818 = vmatprep.subr.mxu0 0.0
      %4819 = vmatpush1.msra.mxu0 0.0
      %4820 = vmatprep.subr.mxu0 0.0
      %4821 = vmatpush1.msra.mxu0 0.0
      %4822 = vmatprep.subr.mxu0 0.0
      %4823 = vmatpush1.msra.mxu0 0.0
      %4824 = vmatprep.subr.mxu0 0.0
      %4825 = vmatpush1.msra.mxu0 0.0
      %4826 = vmatprep.subr.mxu0 0.0
      %4827 = vmatpush1.msra.mxu0 0.0
      %4828 = vmatprep.subr.mxu0 0.0
      %4829 = vmatpush1.msra.mxu0 0.0
      %4830 = vmatprep.subr.mxu0 0.0
      %4831 = vmatpush1.msra.mxu0 0.0
      %4832 = vmatprep.subr.mxu0 0.0
      %4833 = vmatpush1.msra.mxu0 0.0
      %4834 = vmatprep.subr.mxu0 0.0
      %4835 = vmatpush1.msra.mxu0 0.0
      %4836 = vmatprep.subr.mxu0 0.0
      %4837 = vmatpush1.msra.mxu0 0.0
      %4838 = vmatprep.subr.mxu0 0.0
      %4839 = vmatpush1.msra.mxu0 0.0
      %4840 = vmatprep.subr.mxu0 0.0
      %4841 = vmatpush1.msra.mxu0 0.0
      %4842 = vmatprep.subr.mxu0 0.0
      %4843 = vmatpush1.msra.mxu0 0.0
      %4844 = vmatprep.subr.mxu0 0.0
      %4845 = vmatpush1.msra.mxu0 0.0
      %4846 = vmatprep.mubr.f32.mxu0 0.0
      %4847 = vmatmul.mubr.f32.gmra.mrb[0].mxu0 %v4759
      %v4848 = vpop.f32.mrb[0].mxu0
      %v4849 = vadd.f32 0.0, %v4848
      %v4850 = vpop.f32.mrb[0].mxu0
      %4851 = vmatprep.mubr.f32.mxu0 0.0
      %4852 = vmatmul.mubr.f32.gmra.mrb[0].mxu0 %v4762
      %v4853 = vpop.f32.mrb[0].mxu0
      %v4854 = vadd.f32 0.0, %v4853
      %v4855 = vpop.f32.mrb[0].mxu0
      %4856 = vmatprep.mubr.f32.mxu0 0.0
      %4857 = vmatmul.mubr.f32.gmra.mrb[0].mxu0 %v4765
      %v4858 = vpop.f32.mrb[0].mxu0
      %v4859 = vadd.f32 0.0, %v4858
      %v4860 = vpop.f32.mrb[0].mxu0
      %4861 = vmatprep.mubr.f32.mxu0 0.0
      %4862 = vmatmul.mubr.f32.gmra.mrb[0].mxu0 %v4768
      %v4863 = vpop.f32.mrb[0].mxu0
      %v4864 = vadd.f32 0.0, %v4863
      %v4865 = vpop.f32.mrb[0].mxu0
      %4866 = vmatprep.mubr.f32.mxu0 0.0
      %4867 = vmatmul.mubr.f32.gmra.mrb[0].mxu0 %v4771
      %v4868 = vpop.f32.mrb[0].mxu0
      %v4869 = vadd.f32 0.0, %v4868
      %v4870 = vpop.f32.mrb[0].mxu0
      %4871 = vmatprep.mubr.f32.mxu0 0.0
      %4872 = vmatmul.mubr.f32.gmra.mrb[0].mxu0 %v4774
      %v4873 = vpop.f32.mrb[0].mxu0
      %v4874 = vadd.f32 0.0, %v4873
      %v4875 = vpop.f32.mrb[0].mxu0
      %4876 = vmatprep.mubr.f32.mxu0 0.0
      %4877 = vmatmul.mubr.f32.gmra.mrb[0].mxu0 %v4777
      %v4878 = vpop.f32.mrb[0].mxu0
      %v4879 = vadd.f32 0.0, %v4878
      %v4880 = vpop.f32.mrb[0].mxu0
      %4881 = vmatprep.mubr.f32.mxu0 0.0
      %4882 = vmatmul.mubr.f32.gmra.mrb[0].mxu0 %v4780
      %v4883 = vpop.f32.mrb[0].mxu0
      %v4884 = vadd.f32 0.0, %v4883
      %v4885 = vpop.f32.mrb[0].mxu0
      %4886 = vdwg.mxu0
      %v4887 = vadd.f32 %v4747, %v4849
      %v4888 = vadd.f32 %v4748, %v4854
      %v4889 = vadd.f32 %v4749, %v4859
      %v4890 = vadd.f32 %v4750, %v4864
      %v4891 = vadd.f32 %v4751, %v4869
      %v4892 = vadd.f32 %v4752, %v4874
      %v4893 = vadd.f32 %v4753, %v4879
      %v4894 = vadd.f32 %v4754, %v4884
      %s4895 = scalar_lea.vmem %s8, 128
      %v4896 = vld [vmem:[%s4895] sm:$0xff]
      %v4897 = vld [vmem:[%s4895 + $0x8] sm:$0xff]
      %v4899 = vsel %vm2824, %v3754, 0
      %v4902 = vsel %vm2824, %v3759, 0
      %v4905 = vsel %vm2824, %v3764, 0
      %v4908 = vsel %vm2824, %v3769, 0
      %v4911 = vsel %vm2824, %v3774, 0
      %v4914 = vsel %vm2824, %v3779, 0
      %v4917 = vsel %vm2824, %v3784, 0
      %v4920 = vsel %vm2824, %v3789, 0
      %4922 = vmatprep.subr.mxu0 0.0
      %4923 = vmatpush1.msra.mxu0 %v4896
      %4924 = vmatprep.subr.mxu0 0.0
      %4925 = vmatpush1.msra.mxu0 %v4897
      %4926 = vmatprep.subr.mxu0 0.0
      %4927 = vmatpush1.msra.mxu0 0.0
      %4928 = vmatprep.subr.mxu0 0.0
      %4929 = vmatpush1.msra.mxu0 0.0
      %4930 = vmatprep.subr.mxu0 0.0
      %4931 = vmatpush1.msra.mxu0 0.0
      %4932 = vmatprep.subr.mxu0 0.0
      %4933 = vmatpush1.msra.mxu0 0.0
      %4934 = vmatprep.subr.mxu0 0.0
      %4935 = vmatpush1.msra.mxu0 0.0
      %4936 = vmatprep.subr.mxu0 0.0
      %4937 = vmatpush1.msra.mxu0 0.0
      %4938 = vmatprep.subr.mxu0 0.0
      %4939 = vmatpush1.msra.mxu0 0.0
      %4940 = vmatprep.subr.mxu0 0.0
      %4941 = vmatpush1.msra.mxu0 0.0
      %4942 = vmatprep.subr.mxu0 0.0
      %4943 = vmatpush1.msra.mxu0 0.0
      %4944 = vmatprep.subr.mxu0 0.0
      %4945 = vmatpush1.msra.mxu0 0.0
      %4946 = vmatprep.subr.mxu0 0.0
      %4947 = vmatpush1.msra.mxu0 0.0
      %4948 = vmatprep.subr.mxu0 0.0
      %4949 = vmatpush1.msra.mxu0 0.0
      %4950 = vmatprep.subr.mxu0 0.0
      %4951 = vmatpush1.msra.mxu0 0.0
      %4952 = vmatprep.subr.mxu0 0.0
      %4953 = vmatpush1.msra.mxu0 0.0
      %4954 = vmatprep.subr.mxu0 0.0
      %4955 = vmatpush1.msra.mxu0 0.0
      %4956 = vmatprep.subr.mxu0 0.0
      %4957 = vmatpush1.msra.mxu0 0.0
      %4958 = vmatprep.subr.mxu0 0.0
      %4959 = vmatpush1.msra.mxu0 0.0
      %4960 = vmatprep.subr.mxu0 0.0
      %4961 = vmatpush1.msra.mxu0 0.0
      %4962 = vmatprep.subr.mxu0 0.0
      %4963 = vmatpush1.msra.mxu0 0.0
      %4964 = vmatprep.subr.mxu0 0.0
      %4965 = vmatpush1.msra.mxu0 0.0
      %4966 = vmatprep.subr.mxu0 0.0
      %4967 = vmatpush1.msra.mxu0 0.0
      %4968 = vmatprep.subr.mxu0 0.0
      %4969 = vmatpush1.msra.mxu0 0.0
      %4970 = vmatprep.subr.mxu0 0.0
      %4971 = vmatpush1.msra.mxu0 0.0
      %4972 = vmatprep.subr.mxu0 0.0
      %4973 = vmatpush1.msra.mxu0 0.0
      %4974 = vmatprep.subr.mxu0 0.0
      %4975 = vmatpush1.msra.mxu0 0.0
      %4976 = vmatprep.subr.mxu0 0.0
      %4977 = vmatpush1.msra.mxu0 0.0
      %4978 = vmatprep.subr.mxu0 0.0
      %4979 = vmatpush1.msra.mxu0 0.0
      %4980 = vmatprep.subr.mxu0 0.0
      %4981 = vmatpush1.msra.mxu0 0.0
      %4982 = vmatprep.subr.mxu0 0.0
      %4983 = vmatpush1.msra.mxu0 0.0
      %4984 = vmatprep.subr.mxu0 0.0
      %4985 = vmatpush1.msra.mxu0 0.0
      %4986 = vmatprep.mubr.f32.mxu0 0.0
      %4987 = vmatmul.mubr.f32.gmra.mrb[0].mxu0 %v4899
      %v4988 = vpop.f32.mrb[0].mxu0
      %v4989 = vadd.f32 0.0, %v4988
      %v4990 = vpop.f32.mrb[0].mxu0
      %4991 = vmatprep.mubr.f32.mxu0 0.0
      %4992 = vmatmul.mubr.f32.gmra.mrb[0].mxu0 %v4902
      %v4993 = vpop.f32.mrb[0].mxu0
      %v4994 = vadd.f32 0.0, %v4993
      %v4995 = vpop.f32.mrb[0].mxu0
      %4996 = vmatprep.mubr.f32.mxu0 0.0
      %4997 = vmatmul.mubr.f32.gmra.mrb[0].mxu0 %v4905
      %v4998 = vpop.f32.mrb[0].mxu0
      %v4999 = vadd.f32 0.0, %v4998
      %v5000 = vpop.f32.mrb[0].mxu0
      %5001 = vmatprep.mubr.f32.mxu0 0.0
      %5002 = vmatmul.mubr.f32.gmra.mrb[0].mxu0 %v4908
      %v5003 = vpop.f32.mrb[0].mxu0
      %v5004 = vadd.f32 0.0, %v5003
      %v5005 = vpop.f32.mrb[0].mxu0
      %5006 = vmatprep.mubr.f32.mxu0 0.0
      %5007 = vmatmul.mubr.f32.gmra.mrb[0].mxu0 %v4911
      %v5008 = vpop.f32.mrb[0].mxu0
      %v5009 = vadd.f32 0.0, %v5008
      %v5010 = vpop.f32.mrb[0].mxu0
      %5011 = vmatprep.mubr.f32.mxu0 0.0
      %5012 = vmatmul.mubr.f32.gmra.mrb[0].mxu0 %v4914
      %v5013 = vpop.f32.mrb[0].mxu0
      %v5014 = vadd.f32 0.0, %v5013
      %v5015 = vpop.f32.mrb[0].mxu0
      %5016 = vmatprep.mubr.f32.mxu0 0.0
      %5017 = vmatmul.mubr.f32.gmra.mrb[0].mxu0 %v4917
      %v5018 = vpop.f32.mrb[0].mxu0
      %v5019 = vadd.f32 0.0, %v5018
      %v5020 = vpop.f32.mrb[0].mxu0
      %5021 = vmatprep.mubr.f32.mxu0 0.0
      %5022 = vmatmul.mubr.f32.gmra.mrb[0].mxu0 %v4920
      %v5023 = vpop.f32.mrb[0].mxu0
      %v5024 = vadd.f32 0.0, %v5023
      %v5025 = vpop.f32.mrb[0].mxu0
      %5026 = vdwg.mxu0
      %v5027 = vadd.f32 %v4887, %v4989
      %v5028 = vadd.f32 %v4888, %v4994
      %v5029 = vadd.f32 %v4889, %v4999
      %v5030 = vadd.f32 %v4890, %v5004
      %v5031 = vadd.f32 %v4891, %v5009
      %v5032 = vadd.f32 %v4892, %v5014
      %v5033 = vadd.f32 %v4893, %v5019
      %v5034 = vadd.f32 %v4894, %v5024
      %v5035 = vld [vmem:[%s9] sm:$0x1]
      %v5037 = vlaneseq
      %v5038 = vshrl.u32 %v5037, 7
      %v5039 = vsub.s32 0, %v5038
      %v5040 = vrot.slane %v5035, %v5039
      %v5042 = vadd.f32 %v5027, %v5040
      %v5043 = vadd.f32 %v5028, %v5040
      %v5044 = vadd.f32 %v5029, %v5040
      %v5045 = vadd.f32 %v5030, %v5040
      %v5046 = vadd.f32 %v5031, %v5040
      %v5047 = vadd.f32 %v5032, %v5040
      %v5048 = vadd.f32 %v5033, %v5040
      %v5049 = vadd.f32 %v5034, %v5040
      %v5050 = vmax.f32 %v5042, 0.0
      %v5051 = vmax.f32 %v5043, 0.0
      %v5052 = vmax.f32 %v5044, 0.0
      %v5053 = vmax.f32 %v5045, 0.0
      %v5054 = vmax.f32 %v5046, 0.0
      %v5055 = vmax.f32 %v5047, 0.0
      %v5056 = vmax.f32 %v5048, 0.0
      %v5057 = vmax.f32 %v5049, 0.0
      %v5058 = vld [vmem:[%s6] sm:$0xff]
      %v5059 = vld [vmem:[%s6 + $0x8] sm:$0xff]
      %v5060 = vld [vmem:[%s6 + $0x10] sm:$0xff]
      %v5061 = vld [vmem:[%s6 + $0x18] sm:$0xff]
      %v5062 = vld [vmem:[%s6 + $0x20] sm:$0xff]
      %v5063 = vld [vmem:[%s6 + $0x28] sm:$0xff]
      %v5064 = vld [vmem:[%s6 + $0x30] sm:$0xff]
      %v5065 = vld [vmem:[%s6 + $0x38] sm:$0xff]
      %s5066 = scalar_lea.vmem %s6, 64
      %v5067 = vld [vmem:[%s5066] sm:$0xff]
      %v5068 = vld [vmem:[%s5066 + $0x8] sm:$0xff]
      %v5069 = vld [vmem:[%s5066 + $0x10] sm:$0xff]
      %v5070 = vld [vmem:[%s5066 + $0x18] sm:$0xff]
      %v5071 = vld [vmem:[%s5066 + $0x20] sm:$0xff]
      %v5072 = vld [vmem:[%s5066 + $0x28] sm:$0xff]
      %v5073 = vld [vmem:[%s5066 + $0x30] sm:$0xff]
      %v5074 = vld [vmem:[%s5066 + $0x38] sm:$0xff]
      %5075 = vmatprep.subr.mxu0 0.0
      %5076 = vmatpush1.msra.mxu0 %v5067
      %5077 = vmatprep.subr.mxu0 0.0
      %5078 = vmatpush1.msra.mxu0 %v5068
      %5079 = vmatprep.subr.mxu0 0.0
      %5080 = vmatpush1.msra.mxu0 %v5069
      %5081 = vmatprep.subr.mxu0 0.0
      %5082 = vmatpush1.msra.mxu0 %v5070
      %5083 = vmatprep.subr.mxu0 0.0
      %5084 = vmatpush1.msra.mxu0 %v5071
      %5085 = vmatprep.subr.mxu0 0.0
      %5086 = vmatpush1.msra.mxu0 %v5072
      %5087 = vmatprep.subr.mxu0 0.0
      %5088 = vmatpush1.msra.mxu0 %v5073
      %5089 = vmatprep.subr.mxu0 0.0
      %5090 = vmatpush1.msra.mxu0 %v5074
      %5091 = vmatprep.subr.mxu0 0.0
      %5092 = vmatpush1.msra.mxu0 0.0
      %5093 = vmatprep.subr.mxu0 0.0
      %5094 = vmatpush1.msra.mxu0 0.0
      %5095 = vmatprep.subr.mxu0 0.0
      %5096 = vmatpush1.msra.mxu0 0.0
      %5097 = vmatprep.subr.mxu0 0.0
      %5098 = vmatpush1.msra.mxu0 0.0
      %5099 = vmatprep.subr.mxu0 0.0
      %5100 = vmatpush1.msra.mxu0 0.0
      %5101 = vmatprep.subr.mxu0 0.0
      %5102 = vmatpush1.msra.mxu0 0.0
      %5103 = vmatprep.subr.mxu0 0.0
      %5104 = vmatpush1.msra.mxu0 0.0
      %5105 = vmatprep.subr.mxu0 0.0
      %5106 = vmatpush1.msra.mxu0 0.0
      %5107 = vmatprep.subr.mxu0 0.0
      %5108 = vmatpush1.msra.mxu0 0.0
      %5109 = vmatprep.subr.mxu0 0.0
      %5110 = vmatpush1.msra.mxu0 0.0
      %5111 = vmatprep.subr.mxu0 0.0
      %5112 = vmatpush1.msra.mxu0 0.0
      %5113 = vmatprep.subr.mxu0 0.0
      %5114 = vmatpush1.msra.mxu0 0.0
      %5115 = vmatprep.subr.mxu0 0.0
      %5116 = vmatpush1.msra.mxu0 0.0
      %5117 = vmatprep.subr.mxu0 0.0
      %5118 = vmatpush1.msra.mxu0 0.0
      %5119 = vmatprep.subr.mxu0 0.0
      %5120 = vmatpush1.msra.mxu0 0.0
      %5121 = vmatprep.subr.mxu0 0.0
      %5122 = vmatpush1.msra.mxu0 0.0
      %5123 = vmatprep.subr.mxu0 0.0
      %5124 = vmatpush1.msra.mxu0 0.0
      %5125 = vmatprep.subr.mxu0 0.0
      %5126 = vmatpush1.msra.mxu0 0.0
      %5127 = vmatprep.subr.mxu0 0.0
      %5128 = vmatpush1.msra.mxu0 0.0
      %5129 = vmatprep.subr.mxu0 0.0
      %5130 = vmatpush1.msra.mxu0 0.0
      %5131 = vmatprep.subr.mxu0 0.0
      %5132 = vmatpush1.msra.mxu0 0.0
      %5133 = vmatprep.subr.mxu0 0.0
      %5134 = vmatpush1.msra.mxu0 0.0
      %5135 = vmatprep.subr.mxu0 0.0
      %5136 = vmatpush1.msra.mxu0 0.0
      %5137 = vmatprep.subr.mxu0 0.0
      %5138 = vmatpush1.msra.mxu0 0.0
      %5139 = vmatprep.mubr.f32.mxu0 0.0
      %5140 = vmatmul.mubr.f32.gmra.mrb[0].mxu0 %v1513
      %v5141 = vpop.f32.mrb[0].mxu0
      %v5142 = vadd.f32 0.0, %v5141
      %v5143 = vpop.f32.mrb[0].mxu0
      %5144 = vmatprep.mubr.f32.mxu0 0.0
      %5145 = vmatmul.mubr.f32.gmra.mrb[0].mxu0 %v1516
      %v5146 = vpop.f32.mrb[0].mxu0
      %v5147 = vadd.f32 0.0, %v5146
      %v5148 = vpop.f32.mrb[0].mxu0
      %5149 = vmatprep.mubr.f32.mxu0 0.0
      %5150 = vmatmul.mubr.f32.gmra.mrb[0].mxu0 %v1519
      %v5151 = vpop.f32.mrb[0].mxu0
      %v5152 = vadd.f32 0.0, %v5151
      %v5153 = vpop.f32.mrb[0].mxu0
      %5154 = vmatprep.mubr.f32.mxu0 0.0
      %5155 = vmatmul.mubr.f32.gmra.mrb[0].mxu0 %v1522
      %v5156 = vpop.f32.mrb[0].mxu0
      %v5157 = vadd.f32 0.0, %v5156
      %v5158 = vpop.f32.mrb[0].mxu0
      %5159 = vmatprep.mubr.f32.mxu0 0.0
      %5160 = vmatmul.mubr.f32.gmra.mrb[0].mxu0 %v1525
      %v5161 = vpop.f32.mrb[0].mxu0
      %v5162 = vadd.f32 0.0, %v5161
      %v5163 = vpop.f32.mrb[0].mxu0
      %5164 = vmatprep.mubr.f32.mxu0 0.0
      %5165 = vmatmul.mubr.f32.gmra.mrb[0].mxu0 %v1528
      %v5166 = vpop.f32.mrb[0].mxu0
      %v5167 = vadd.f32 0.0, %v5166
      %v5168 = vpop.f32.mrb[0].mxu0
      %5169 = vmatprep.mubr.f32.mxu0 0.0
      %5170 = vmatmul.mubr.f32.gmra.mrb[0].mxu0 %v1531
      %v5171 = vpop.f32.mrb[0].mxu0
      %v5172 = vadd.f32 0.0, %v5171
      %v5173 = vpop.f32.mrb[0].mxu0
      %5174 = vmatprep.mubr.f32.mxu0 0.0
      %5175 = vmatmul.mubr.f32.gmra.mrb[0].mxu0 %v1534
      %v5176 = vpop.f32.mrb[0].mxu0
      %v5177 = vadd.f32 0.0, %v5176
      %v5178 = vpop.f32.mrb[0].mxu0
      %5179 = vdwg.mxu0
      %5180 = vmatprep.subr.mxu0 0.0
      %5181 = vmatpush1.msra.mxu0 %v5058
      %5182 = vmatprep.subr.mxu0 0.0
      %5183 = vmatpush1.msra.mxu0 %v5059
      %5184 = vmatprep.subr.mxu0 0.0
      %5185 = vmatpush1.msra.mxu0 %v5060
      %5186 = vmatprep.subr.mxu0 0.0
      %5187 = vmatpush1.msra.mxu0 %v5061
      %5188 = vmatprep.subr.mxu0 0.0
      %5189 = vmatpush1.msra.mxu0 %v5062
      %5190 = vmatprep.subr.mxu0 0.0
      %5191 = vmatpush1.msra.mxu0 %v5063
      %5192 = vmatprep.subr.mxu0 0.0
      %5193 = vmatpush1.msra.mxu0 %v5064
      %5194 = vmatprep.subr.mxu0 0.0
      %5195 = vmatpush1.msra.mxu0 %v5065
      %5196 = vmatprep.subr.mxu0 0.0
      %5197 = vmatpush1.msra.mxu0 0.0
      %5198 = vmatprep.subr.mxu0 0.0
      %5199 = vmatpush1.msra.mxu0 0.0
      %5200 = vmatprep.subr.mxu0 0.0
      %5201 = vmatpush1.msra.mxu0 0.0
      %5202 = vmatprep.subr.mxu0 0.0
      %5203 = vmatpush1.msra.mxu0 0.0
      %5204 = vmatprep.subr.mxu0 0.0
      %5205 = vmatpush1.msra.mxu0 0.0
      %5206 = vmatprep.subr.mxu0 0.0
      %5207 = vmatpush1.msra.mxu0 0.0
      %5208 = vmatprep.subr.mxu0 0.0
      %5209 = vmatpush1.msra.mxu0 0.0
      %5210 = vmatprep.subr.mxu0 0.0
      %5211 = vmatpush1.msra.mxu0 0.0
      %5212 = vmatprep.subr.mxu0 0.0
      %5213 = vmatpush1.msra.mxu0 0.0
      %5214 = vmatprep.subr.mxu0 0.0
      %5215 = vmatpush1.msra.mxu0 0.0
      %5216 = vmatprep.subr.mxu0 0.0
      %5217 = vmatpush1.msra.mxu0 0.0
      %5218 = vmatprep.subr.mxu0 0.0
      %5219 = vmatpush1.msra.mxu0 0.0
      %5220 = vmatprep.subr.mxu0 0.0
      %5221 = vmatpush1.msra.mxu0 0.0
      %5222 = vmatprep.subr.mxu0 0.0
      %5223 = vmatpush1.msra.mxu0 0.0
      %5224 = vmatprep.subr.mxu0 0.0
      %5225 = vmatpush1.msra.mxu0 0.0
      %5226 = vmatprep.subr.mxu0 0.0
      %5227 = vmatpush1.msra.mxu0 0.0
      %5228 = vmatprep.subr.mxu0 0.0
      %5229 = vmatpush1.msra.mxu0 0.0
      %5230 = vmatprep.subr.mxu0 0.0
      %5231 = vmatpush1.msra.mxu0 0.0
      %5232 = vmatprep.subr.mxu0 0.0
      %5233 = vmatpush1.msra.mxu0 0.0
      %5234 = vmatprep.subr.mxu0 0.0
      %5235 = vmatpush1.msra.mxu0 0.0
      %5236 = vmatprep.subr.mxu0 0.0
      %5237 = vmatpush1.msra.mxu0 0.0
      %5238 = vmatprep.subr.mxu0 0.0
      %5239 = vmatpush1.msra.mxu0 0.0
      %5240 = vmatprep.subr.mxu0 0.0
      %5241 = vmatpush1.msra.mxu0 0.0
      %5242 = vmatprep.subr.mxu0 0.0
      %5243 = vmatpush1.msra.mxu0 0.0
      %5244 = vmatprep.mubr.f32.mxu0 0.0
      %5245 = vmatmul.mubr.f32.gmra.mrb[0].mxu0 %v1642
      %v5246 = vpop.f32.mrb[0].mxu0
      %v5247 = vadd.f32 %v5142, %v5246
      %v5248 = vpop.f32.mrb[0].mxu0
      %5249 = vmatprep.mubr.f32.mxu0 0.0
      %5250 = vmatmul.mubr.f32.gmra.mrb[0].mxu0 %v1645
      %v5251 = vpop.f32.mrb[0].mxu0
      %v5252 = vadd.f32 %v5147, %v5251
      %v5253 = vpop.f32.mrb[0].mxu0
      %5254 = vmatprep.mubr.f32.mxu0 0.0
      %5255 = vmatmul.mubr.f32.gmra.mrb[0].mxu0 %v1648
      %v5256 = vpop.f32.mrb[0].mxu0
      %v5257 = vadd.f32 %v5152, %v5256
      %v5258 = vpop.f32.mrb[0].mxu0
      %5259 = vmatprep.mubr.f32.mxu0 0.0
      %5260 = vmatmul.mubr.f32.gmra.mrb[0].mxu0 %v1651
      %v5261 = vpop.f32.mrb[0].mxu0
      %v5262 = vadd.f32 %v5157, %v5261
      %v5263 = vpop.f32.mrb[0].mxu0
      %5264 = vmatprep.mubr.f32.mxu0 0.0
      %5265 = vmatmul.mubr.f32.gmra.mrb[0].mxu0 %v1654
      %v5266 = vpop.f32.mrb[0].mxu0
      %v5267 = vadd.f32 %v5162, %v5266
      %v5268 = vpop.f32.mrb[0].mxu0
      %5269 = vmatprep.mubr.f32.mxu0 0.0
      %5270 = vmatmul.mubr.f32.gmra.mrb[0].mxu0 %v1657
      %v5271 = vpop.f32.mrb[0].mxu0
      %v5272 = vadd.f32 %v5167, %v5271
      %v5273 = vpop.f32.mrb[0].mxu0
      %5274 = vmatprep.mubr.f32.mxu0 0.0
      %5275 = vmatmul.mubr.f32.gmra.mrb[0].mxu0 %v1660
      %v5276 = vpop.f32.mrb[0].mxu0
      %v5277 = vadd.f32 %v5172, %v5276
      %v5278 = vpop.f32.mrb[0].mxu0
      %5279 = vmatprep.mubr.f32.mxu0 0.0
      %5280 = vmatmul.mubr.f32.gmra.mrb[0].mxu0 %v1663
      %v5281 = vpop.f32.mrb[0].mxu0
      %v5282 = vadd.f32 %v5177, %v5281
      %v5283 = vpop.f32.mrb[0].mxu0
      %5284 = vdwg.mxu0
      %s5285 = scalar_lea.vmem %s6, 128
      %v5286 = vld [vmem:[%s5285] sm:$0xff]
      %v5287 = vld [vmem:[%s5285 + $0x8] sm:$0xff]
      %v5288 = vld [vmem:[%s5285 + $0x10] sm:$0xff]
      %v5289 = vld [vmem:[%s5285 + $0x18] sm:$0xff]
      %v5290 = vld [vmem:[%s5285 + $0x20] sm:$0xff]
      %v5291 = vld [vmem:[%s5285 + $0x28] sm:$0xff]
      %v5292 = vld [vmem:[%s5285 + $0x30] sm:$0xff]
      %v5293 = vld [vmem:[%s5285 + $0x38] sm:$0xff]
      %5294 = vmatprep.subr.mxu0 0.0
      %5295 = vmatpush1.msra.mxu0 %v5286
      %5296 = vmatprep.subr.mxu0 0.0
      %5297 = vmatpush1.msra.mxu0 %v5287
      %5298 = vmatprep.subr.mxu0 0.0
      %5299 = vmatpush1.msra.mxu0 %v5288
      %5300 = vmatprep.subr.mxu0 0.0
      %5301 = vmatpush1.msra.mxu0 %v5289
      %5302 = vmatprep.subr.mxu0 0.0
      %5303 = vmatpush1.msra.mxu0 %v5290
      %5304 = vmatprep.subr.mxu0 0.0
      %5305 = vmatpush1.msra.mxu0 %v5291
      %5306 = vmatprep.subr.mxu0 0.0
      %5307 = vmatpush1.msra.mxu0 %v5292
      %5308 = vmatprep.subr.mxu0 0.0
      %5309 = vmatpush1.msra.mxu0 %v5293
      %5310 = vmatprep.subr.mxu0 0.0
      %5311 = vmatpush1.msra.mxu0 0.0
      %5312 = vmatprep.subr.mxu0 0.0
      %5313 = vmatpush1.msra.mxu0 0.0
      %5314 = vmatprep.subr.mxu0 0.0
      %5315 = vmatpush1.msra.mxu0 0.0
      %5316 = vmatprep.subr.mxu0 0.0
      %5317 = vmatpush1.msra.mxu0 0.0
      %5318 = vmatprep.subr.mxu0 0.0
      %5319 = vmatpush1.msra.mxu0 0.0
      %5320 = vmatprep.subr.mxu0 0.0
      %5321 = vmatpush1.msra.mxu0 0.0
      %5322 = vmatprep.subr.mxu0 0.0
      %5323 = vmatpush1.msra.mxu0 0.0
      %5324 = vmatprep.subr.mxu0 0.0
      %5325 = vmatpush1.msra.mxu0 0.0
      %5326 = vmatprep.subr.mxu0 0.0
      %5327 = vmatpush1.msra.mxu0 0.0
      %5328 = vmatprep.subr.mxu0 0.0
      %5329 = vmatpush1.msra.mxu0 0.0
      %5330 = vmatprep.subr.mxu0 0.0
      %5331 = vmatpush1.msra.mxu0 0.0
      %5332 = vmatprep.subr.mxu0 0.0
      %5333 = vmatpush1.msra.mxu0 0.0
      %5334 = vmatprep.subr.mxu0 0.0
      %5335 = vmatpush1.msra.mxu0 0.0
      %5336 = vmatprep.subr.mxu0 0.0
      %5337 = vmatpush1.msra.mxu0 0.0
      %5338 = vmatprep.subr.mxu0 0.0
      %5339 = vmatpush1.msra.mxu0 0.0
      %5340 = vmatprep.subr.mxu0 0.0
      %5341 = vmatpush1.msra.mxu0 0.0
      %5342 = vmatprep.subr.mxu0 0.0
      %5343 = vmatpush1.msra.mxu0 0.0
      %5344 = vmatprep.subr.mxu0 0.0
      %5345 = vmatpush1.msra.mxu0 0.0
      %5346 = vmatprep.subr.mxu0 0.0
      %5347 = vmatpush1.msra.mxu0 0.0
      %5348 = vmatprep.subr.mxu0 0.0
      %5349 = vmatpush1.msra.mxu0 0.0
      %5350 = vmatprep.subr.mxu0 0.0
      %5351 = vmatpush1.msra.mxu0 0.0
      %5352 = vmatprep.subr.mxu0 0.0
      %5353 = vmatpush1.msra.mxu0 0.0
      %5354 = vmatprep.subr.mxu0 0.0
      %5355 = vmatpush1.msra.mxu0 0.0
      %5356 = vmatprep.subr.mxu0 0.0
      %5357 = vmatpush1.msra.mxu0 0.0
      %5358 = vmatprep.mubr.f32.mxu0 0.0
      %5359 = vmatmul.mubr.f32.gmra.mrb[0].mxu0 %v1780
      %v5360 = vpop.f32.mrb[0].mxu0
      %v5361 = vadd.f32 0.0, %v5360
      %v5362 = vpop.f32.mrb[0].mxu0
      %5363 = vmatprep.mubr.f32.mxu0 0.0
      %5364 = vmatmul.mubr.f32.gmra.mrb[0].mxu0 %v1783
      %v5365 = vpop.f32.mrb[0].mxu0
      %v5366 = vadd.f32 0.0, %v5365
      %v5367 = vpop.f32.mrb[0].mxu0
      %5368 = vmatprep.mubr.f32.mxu0 0.0
      %5369 = vmatmul.mubr.f32.gmra.mrb[0].mxu0 %v1786
      %v5370 = vpop.f32.mrb[0].mxu0
      %v5371 = vadd.f32 0.0, %v5370
      %v5372 = vpop.f32.mrb[0].mxu0
      %5373 = vmatprep.mubr.f32.mxu0 0.0
      %5374 = vmatmul.mubr.f32.gmra.mrb[0].mxu0 %v1789
      %v5375 = vpop.f32.mrb[0].mxu0
      %v5376 = vadd.f32 0.0, %v5375
      %v5377 = vpop.f32.mrb[0].mxu0
      %5378 = vmatprep.mubr.f32.mxu0 0.0
      %5379 = vmatmul.mubr.f32.gmra.mrb[0].mxu0 %v1792
      %v5380 = vpop.f32.mrb[0].mxu0
      %v5381 = vadd.f32 0.0, %v5380
      %v5382 = vpop.f32.mrb[0].mxu0
      %5383 = vmatprep.mubr.f32.mxu0 0.0
      %5384 = vmatmul.mubr.f32.gmra.mrb[0].mxu0 %v1795
      %v5385 = vpop.f32.mrb[0].mxu0
      %v5386 = vadd.f32 0.0, %v5385
      %v5387 = vpop.f32.mrb[0].mxu0
      %5388 = vmatprep.mubr.f32.mxu0 0.0
      %5389 = vmatmul.mubr.f32.gmra.mrb[0].mxu0 %v1798
      %v5390 = vpop.f32.mrb[0].mxu0
      %v5391 = vadd.f32 0.0, %v5390
      %v5392 = vpop.f32.mrb[0].mxu0
      %5393 = vmatprep.mubr.f32.mxu0 0.0
      %5394 = vmatmul.mubr.f32.gmra.mrb[0].mxu0 %v1801
      %v5395 = vpop.f32.mrb[0].mxu0
      %v5396 = vadd.f32 0.0, %v5395
      %v5397 = vpop.f32.mrb[0].mxu0
      %5398 = vdwg.mxu0
      %v5399 = vadd.f32 %v5247, %v5361
      %v5400 = vadd.f32 %v5252, %v5366
      %v5401 = vadd.f32 %v5257, %v5371
      %v5402 = vadd.f32 %v5262, %v5376
      %v5403 = vadd.f32 %v5267, %v5381
      %v5404 = vadd.f32 %v5272, %v5386
      %v5405 = vadd.f32 %v5277, %v5391
      %v5406 = vadd.f32 %v5282, %v5396
      %s5407 = scalar_lea.vmem %s6, 192
      %v5408 = vld [vmem:[%s5407] sm:$0xff]
      %v5409 = vld [vmem:[%s5407 + $0x8] sm:$0xff]
      %v5410 = vld [vmem:[%s5407 + $0x10] sm:$0xff]
      %v5411 = vld [vmem:[%s5407 + $0x18] sm:$0xff]
      %v5412 = vld [vmem:[%s5407 + $0x20] sm:$0xff]
      %v5413 = vld [vmem:[%s5407 + $0x28] sm:$0xff]
      %v5414 = vld [vmem:[%s5407 + $0x30] sm:$0xff]
      %v5415 = vld [vmem:[%s5407 + $0x38] sm:$0xff]
      %5416 = vmatprep.subr.mxu0 0.0
      %5417 = vmatpush1.msra.mxu0 %v5408
      %5418 = vmatprep.subr.mxu0 0.0
      %5419 = vmatpush1.msra.mxu0 %v5409
      %5420 = vmatprep.subr.mxu0 0.0
      %5421 = vmatpush1.msra.mxu0 %v5410
      %5422 = vmatprep.subr.mxu0 0.0
      %5423 = vmatpush1.msra.mxu0 %v5411
      %5424 = vmatprep.subr.mxu0 0.0
      %5425 = vmatpush1.msra.mxu0 %v5412
      %5426 = vmatprep.subr.mxu0 0.0
      %5427 = vmatpush1.msra.mxu0 %v5413
      %5428 = vmatprep.subr.mxu0 0.0
      %5429 = vmatpush1.msra.mxu0 %v5414
      %5430 = vmatprep.subr.mxu0 0.0
      %5431 = vmatpush1.msra.mxu0 %v5415
      %5432 = vmatprep.subr.mxu0 0.0
      %5433 = vmatpush1.msra.mxu0 0.0
      %5434 = vmatprep.subr.mxu0 0.0
      %5435 = vmatpush1.msra.mxu0 0.0
      %5436 = vmatprep.subr.mxu0 0.0
      %5437 = vmatpush1.msra.mxu0 0.0
      %5438 = vmatprep.subr.mxu0 0.0
      %5439 = vmatpush1.msra.mxu0 0.0
      %5440 = vmatprep.subr.mxu0 0.0
      %5441 = vmatpush1.msra.mxu0 0.0
      %5442 = vmatprep.subr.mxu0 0.0
      %5443 = vmatpush1.msra.mxu0 0.0
      %5444 = vmatprep.subr.mxu0 0.0
      %5445 = vmatpush1.msra.mxu0 0.0
      %5446 = vmatprep.subr.mxu0 0.0
      %5447 = vmatpush1.msra.mxu0 0.0
      %5448 = vmatprep.subr.mxu0 0.0
      %5449 = vmatpush1.msra.mxu0 0.0
      %5450 = vmatprep.subr.mxu0 0.0
      %5451 = vmatpush1.msra.mxu0 0.0
      %5452 = vmatprep.subr.mxu0 0.0
      %5453 = vmatpush1.msra.mxu0 0.0
      %5454 = vmatprep.subr.mxu0 0.0
      %5455 = vmatpush1.msra.mxu0 0.0
      %5456 = vmatprep.subr.mxu0 0.0
      %5457 = vmatpush1.msra.mxu0 0.0
      %5458 = vmatprep.subr.mxu0 0.0
      %5459 = vmatpush1.msra.mxu0 0.0
      %5460 = vmatprep.subr.mxu0 0.0
      %5461 = vmatpush1.msra.mxu0 0.0
      %5462 = vmatprep.subr.mxu0 0.0
      %5463 = vmatpush1.msra.mxu0 0.0
      %5464 = vmatprep.subr.mxu0 0.0
      %5465 = vmatpush1.msra.mxu0 0.0
      %5466 = vmatprep.subr.mxu0 0.0
      %5467 = vmatpush1.msra.mxu0 0.0
      %5468 = vmatprep.subr.mxu0 0.0
      %5469 = vmatpush1.msra.mxu0 0.0
      %5470 = vmatprep.subr.mxu0 0.0
      %5471 = vmatpush1.msra.mxu0 0.0
      %5472 = vmatprep.subr.mxu0 0.0
      %5473 = vmatpush1.msra.mxu0 0.0
      %5474 = vmatprep.subr.mxu0 0.0
      %5475 = vmatpush1.msra.mxu0 0.0
      %5476 = vmatprep.subr.mxu0 0.0
      %5477 = vmatpush1.msra.mxu0 0.0
      %5478 = vmatprep.subr.mxu0 0.0
      %5479 = vmatpush1.msra.mxu0 0.0
      %5480 = vmatprep.mubr.f32.mxu0 0.0
      %5481 = vmatmul.mubr.f32.gmra.mrb[0].mxu0 %v1926
      %v5482 = vpop.f32.mrb[0].mxu0
      %v5483 = vadd.f32 0.0, %v5482
      %v5484 = vpop.f32.mrb[0].mxu0
      %5485 = vmatprep.mubr.f32.mxu0 0.0
      %5486 = vmatmul.mubr.f32.gmra.mrb[0].mxu0 %v1929
      %v5487 = vpop.f32.mrb[0].mxu0
      %v5488 = vadd.f32 0.0, %v5487
      %v5489 = vpop.f32.mrb[0].mxu0
      %5490 = vmatprep.mubr.f32.mxu0 0.0
      %5491 = vmatmul.mubr.f32.gmra.mrb[0].mxu0 %v1932
      %v5492 = vpop.f32.mrb[0].mxu0
      %v5493 = vadd.f32 0.0, %v5492
      %v5494 = vpop.f32.mrb[0].mxu0
      %5495 = vmatprep.mubr.f32.mxu0 0.0
      %5496 = vmatmul.mubr.f32.gmra.mrb[0].mxu0 %v1935
      %v5497 = vpop.f32.mrb[0].mxu0
      %v5498 = vadd.f32 0.0, %v5497
      %v5499 = vpop.f32.mrb[0].mxu0
      %5500 = vmatprep.mubr.f32.mxu0 0.0
      %5501 = vmatmul.mubr.f32.gmra.mrb[0].mxu0 %v1938
      %v5502 = vpop.f32.mrb[0].mxu0
      %v5503 = vadd.f32 0.0, %v5502
      %v5504 = vpop.f32.mrb[0].mxu0
      %5505 = vmatprep.mubr.f32.mxu0 0.0
      %5506 = vmatmul.mubr.f32.gmra.mrb[0].mxu0 %v1941
      %v5507 = vpop.f32.mrb[0].mxu0
      %v5508 = vadd.f32 0.0, %v5507
      %v5509 = vpop.f32.mrb[0].mxu0
      %5510 = vmatprep.mubr.f32.mxu0 0.0
      %5511 = vmatmul.mubr.f32.gmra.mrb[0].mxu0 %v1944
      %v5512 = vpop.f32.mrb[0].mxu0
      %v5513 = vadd.f32 0.0, %v5512
      %v5514 = vpop.f32.mrb[0].mxu0
      %5515 = vmatprep.mubr.f32.mxu0 0.0
      %5516 = vmatmul.mubr.f32.gmra.mrb[0].mxu0 %v1947
      %v5517 = vpop.f32.mrb[0].mxu0
      %v5518 = vadd.f32 0.0, %v5517
      %v5519 = vpop.f32.mrb[0].mxu0
      %5520 = vdwg.mxu0
      %v5521 = vadd.f32 %v5399, %v5483
      %v5522 = vadd.f32 %v5400, %v5488
      %v5523 = vadd.f32 %v5401, %v5493
      %v5524 = vadd.f32 %v5402, %v5498
      %v5525 = vadd.f32 %v5403, %v5503
      %v5526 = vadd.f32 %v5404, %v5508
      %v5527 = vadd.f32 %v5405, %v5513
      %v5528 = vadd.f32 %v5406, %v5518
      %s5529 = scalar_lea.vmem %s6, 256
      %v5530 = vld [vmem:[%s5529] sm:$0xff]
      %v5531 = vld [vmem:[%s5529 + $0x8] sm:$0xff]
      %v5532 = vld [vmem:[%s5529 + $0x10] sm:$0xff]
      %v5533 = vld [vmem:[%s5529 + $0x18] sm:$0xff]
      %v5534 = vld [vmem:[%s5529 + $0x20] sm:$0xff]
      %v5535 = vld [vmem:[%s5529 + $0x28] sm:$0xff]
      %v5536 = vld [vmem:[%s5529 + $0x30] sm:$0xff]
      %v5537 = vld [vmem:[%s5529 + $0x38] sm:$0xff]
      %5538 = vmatprep.subr.mxu0 0.0
      %5539 = vmatpush1.msra.mxu0 %v5530
      %5540 = vmatprep.subr.mxu0 0.0
      %5541 = vmatpush1.msra.mxu0 %v5531
      %5542 = vmatprep.subr.mxu0 0.0
      %5543 = vmatpush1.msra.mxu0 %v5532
      %5544 = vmatprep.subr.mxu0 0.0
      %5545 = vmatpush1.msra.mxu0 %v5533
      %5546 = vmatprep.subr.mxu0 0.0
      %5547 = vmatpush1.msra.mxu0 %v5534
      %5548 = vmatprep.subr.mxu0 0.0
      %5549 = vmatpush1.msra.mxu0 %v5535
      %5550 = vmatprep.subr.mxu0 0.0
      %5551 = vmatpush1.msra.mxu0 %v5536
      %5552 = vmatprep.subr.mxu0 0.0
      %5553 = vmatpush1.msra.mxu0 %v5537
      %5554 = vmatprep.subr.mxu0 0.0
      %5555 = vmatpush1.msra.mxu0 0.0
      %5556 = vmatprep.subr.mxu0 0.0
      %5557 = vmatpush1.msra.mxu0 0.0
      %5558 = vmatprep.subr.mxu0 0.0
      %5559 = vmatpush1.msra.mxu0 0.0
      %5560 = vmatprep.subr.mxu0 0.0
      %5561 = vmatpush1.msra.mxu0 0.0
      %5562 = vmatprep.subr.mxu0 0.0
      %5563 = vmatpush1.msra.mxu0 0.0
      %5564 = vmatprep.subr.mxu0 0.0
      %5565 = vmatpush1.msra.mxu0 0.0
      %5566 = vmatprep.subr.mxu0 0.0
      %5567 = vmatpush1.msra.mxu0 0.0
      %5568 = vmatprep.subr.mxu0 0.0
      %5569 = vmatpush1.msra.mxu0 0.0
      %5570 = vmatprep.subr.mxu0 0.0
      %5571 = vmatpush1.msra.mxu0 0.0
      %5572 = vmatprep.subr.mxu0 0.0
      %5573 = vmatpush1.msra.mxu0 0.0
      %5574 = vmatprep.subr.mxu0 0.0
      %5575 = vmatpush1.msra.mxu0 0.0
      %5576 = vmatprep.subr.mxu0 0.0
      %5577 = vmatpush1.msra.mxu0 0.0
      %5578 = vmatprep.subr.mxu0 0.0
      %5579 = vmatpush1.msra.mxu0 0.0
      %5580 = vmatprep.subr.mxu0 0.0
      %5581 = vmatpush1.msra.mxu0 0.0
      %5582 = vmatprep.subr.mxu0 0.0
      %5583 = vmatpush1.msra.mxu0 0.0
      %5584 = vmatprep.subr.mxu0 0.0
      %5585 = vmatpush1.msra.mxu0 0.0
      %5586 = vmatprep.subr.mxu0 0.0
      %5587 = vmatpush1.msra.mxu0 0.0
      %5588 = vmatprep.subr.mxu0 0.0
      %5589 = vmatpush1.msra.mxu0 0.0
      %5590 = vmatprep.subr.mxu0 0.0
      %5591 = vmatpush1.msra.mxu0 0.0
      %5592 = vmatprep.subr.mxu0 0.0
      %5593 = vmatpush1.msra.mxu0 0.0
      %5594 = vmatprep.subr.mxu0 0.0
      %5595 = vmatpush1.msra.mxu0 0.0
      %5596 = vmatprep.subr.mxu0 0.0
      %5597 = vmatpush1.msra.mxu0 0.0
      %5598 = vmatprep.subr.mxu0 0.0
      %5599 = vmatpush1.msra.mxu0 0.0
      %5600 = vmatprep.subr.mxu0 0.0
      %5601 = vmatpush1.msra.mxu0 0.0
      %5602 = vmatprep.mubr.f32.mxu0 0.0
      %5603 = vmatmul.mubr.f32.gmra.mrb[0].mxu0 %v2072
      %v5604 = vpop.f32.mrb[0].mxu0
      %v5605 = vadd.f32 0.0, %v5604
      %v5606 = vpop.f32.mrb[0].mxu0
      %5607 = vmatprep.mubr.f32.mxu0 0.0
      %5608 = vmatmul.mubr.f32.gmra.mrb[0].mxu0 %v2075
      %v5609 = vpop.f32.mrb[0].mxu0
      %v5610 = vadd.f32 0.0, %v5609
      %v5611 = vpop.f32.mrb[0].mxu0
      %5612 = vmatprep.mubr.f32.mxu0 0.0
      %5613 = vmatmul.mubr.f32.gmra.mrb[0].mxu0 %v2078
      %v5614 = vpop.f32.mrb[0].mxu0
      %v5615 = vadd.f32 0.0, %v5614
      %v5616 = vpop.f32.mrb[0].mxu0
      %5617 = vmatprep.mubr.f32.mxu0 0.0
      %5618 = vmatmul.mubr.f32.gmra.mrb[0].mxu0 %v2081
      %v5619 = vpop.f32.mrb[0].mxu0
      %v5620 = vadd.f32 0.0, %v5619
      %v5621 = vpop.f32.mrb[0].mxu0
      %5622 = vmatprep.mubr.f32.mxu0 0.0
      %5623 = vmatmul.mubr.f32.gmra.mrb[0].mxu0 %v2084
      %v5624 = vpop.f32.mrb[0].mxu0
      %v5625 = vadd.f32 0.0, %v5624
      %v5626 = vpop.f32.mrb[0].mxu0
      %5627 = vmatprep.mubr.f32.mxu0 0.0
      %5628 = vmatmul.mubr.f32.gmra.mrb[0].mxu0 %v2087
      %v5629 = vpop.f32.mrb[0].mxu0
      %v5630 = vadd.f32 0.0, %v5629
      %v5631 = vpop.f32.mrb[0].mxu0
      %5632 = vmatprep.mubr.f32.mxu0 0.0
      %5633 = vmatmul.mubr.f32.gmra.mrb[0].mxu0 %v2090
      %v5634 = vpop.f32.mrb[0].mxu0
      %v5635 = vadd.f32 0.0, %v5634
      %v5636 = vpop.f32.mrb[0].mxu0
      %5637 = vmatprep.mubr.f32.mxu0 0.0
      %5638 = vmatmul.mubr.f32.gmra.mrb[0].mxu0 %v2093
      %v5639 = vpop.f32.mrb[0].mxu0
      %v5640 = vadd.f32 0.0, %v5639
      %v5641 = vpop.f32.mrb[0].mxu0
      %5642 = vdwg.mxu0
      %v5643 = vadd.f32 %v5521, %v5605
      %v5644 = vadd.f32 %v5522, %v5610
      %v5645 = vadd.f32 %v5523, %v5615
      %v5646 = vadd.f32 %v5524, %v5620
      %v5647 = vadd.f32 %v5525, %v5625
      %v5648 = vadd.f32 %v5526, %v5630
      %v5649 = vadd.f32 %v5527, %v5635
      %v5650 = vadd.f32 %v5528, %v5640
      %s5651 = scalar_lea.vmem %s6, 320
      %v5652 = vld [vmem:[%s5651] sm:$0xff]
      %v5653 = vld [vmem:[%s5651 + $0x8] sm:$0xff]
      %v5654 = vld [vmem:[%s5651 + $0x10] sm:$0xff]
      %v5655 = vld [vmem:[%s5651 + $0x18] sm:$0xff]
      %v5656 = vld [vmem:[%s5651 + $0x20] sm:$0xff]
      %v5657 = vld [vmem:[%s5651 + $0x28] sm:$0xff]
      %v5658 = vld [vmem:[%s5651 + $0x30] sm:$0xff]
      %v5659 = vld [vmem:[%s5651 + $0x38] sm:$0xff]
      %5660 = vmatprep.subr.mxu0 0.0
      %5661 = vmatpush1.msra.mxu0 %v5652
      %5662 = vmatprep.subr.mxu0 0.0
      %5663 = vmatpush1.msra.mxu0 %v5653
      %5664 = vmatprep.subr.mxu0 0.0
      %5665 = vmatpush1.msra.mxu0 %v5654
      %5666 = vmatprep.subr.mxu0 0.0
      %5667 = vmatpush1.msra.mxu0 %v5655
      %5668 = vmatprep.subr.mxu0 0.0
      %5669 = vmatpush1.msra.mxu0 %v5656
      %5670 = vmatprep.subr.mxu0 0.0
      %5671 = vmatpush1.msra.mxu0 %v5657
      %5672 = vmatprep.subr.mxu0 0.0
      %5673 = vmatpush1.msra.mxu0 %v5658
      %5674 = vmatprep.subr.mxu0 0.0
      %5675 = vmatpush1.msra.mxu0 %v5659
      %5676 = vmatprep.subr.mxu0 0.0
      %5677 = vmatpush1.msra.mxu0 0.0
      %5678 = vmatprep.subr.mxu0 0.0
      %5679 = vmatpush1.msra.mxu0 0.0
      %5680 = vmatprep.subr.mxu0 0.0
      %5681 = vmatpush1.msra.mxu0 0.0
      %5682 = vmatprep.subr.mxu0 0.0
      %5683 = vmatpush1.msra.mxu0 0.0
      %5684 = vmatprep.subr.mxu0 0.0
      %5685 = vmatpush1.msra.mxu0 0.0
      %5686 = vmatprep.subr.mxu0 0.0
      %5687 = vmatpush1.msra.mxu0 0.0
      %5688 = vmatprep.subr.mxu0 0.0
      %5689 = vmatpush1.msra.mxu0 0.0
      %5690 = vmatprep.subr.mxu0 0.0
      %5691 = vmatpush1.msra.mxu0 0.0
      %5692 = vmatprep.subr.mxu0 0.0
      %5693 = vmatpush1.msra.mxu0 0.0
      %5694 = vmatprep.subr.mxu0 0.0
      %5695 = vmatpush1.msra.mxu0 0.0
      %5696 = vmatprep.subr.mxu0 0.0
      %5697 = vmatpush1.msra.mxu0 0.0
      %5698 = vmatprep.subr.mxu0 0.0
      %5699 = vmatpush1.msra.mxu0 0.0
      %5700 = vmatprep.subr.mxu0 0.0
      %5701 = vmatpush1.msra.mxu0 0.0
      %5702 = vmatprep.subr.mxu0 0.0
      %5703 = vmatpush1.msra.mxu0 0.0
      %5704 = vmatprep.subr.mxu0 0.0
      %5705 = vmatpush1.msra.mxu0 0.0
      %5706 = vmatprep.subr.mxu0 0.0
      %5707 = vmatpush1.msra.mxu0 0.0
      %5708 = vmatprep.subr.mxu0 0.0
      %5709 = vmatpush1.msra.mxu0 0.0
      %5710 = vmatprep.subr.mxu0 0.0
      %5711 = vmatpush1.msra.mxu0 0.0
      %5712 = vmatprep.subr.mxu0 0.0
      %5713 = vmatpush1.msra.mxu0 0.0
      %5714 = vmatprep.subr.mxu0 0.0
      %5715 = vmatpush1.msra.mxu0 0.0
      %5716 = vmatprep.subr.mxu0 0.0
      %5717 = vmatpush1.msra.mxu0 0.0
      %5718 = vmatprep.subr.mxu0 0.0
      %5719 = vmatpush1.msra.mxu0 0.0
      %5720 = vmatprep.subr.mxu0 0.0
      %5721 = vmatpush1.msra.mxu0 0.0
      %5722 = vmatprep.subr.mxu0 0.0
      %5723 = vmatpush1.msra.mxu0 0.0
      %5724 = vmatprep.mubr.f32.mxu0 0.0
      %5725 = vmatmul.mubr.f32.gmra.mrb[0].mxu0 %v2218
      %v5726 = vpop.f32.mrb[0].mxu0
      %v5727 = vadd.f32 0.0, %v5726
      %v5728 = vpop.f32.mrb[0].mxu0
      %5729 = vmatprep.mubr.f32.mxu0 0.0
      %5730 = vmatmul.mubr.f32.gmra.mrb[0].mxu0 %v2221
      %v5731 = vpop.f32.mrb[0].mxu0
      %v5732 = vadd.f32 0.0, %v5731
      %v5733 = vpop.f32.mrb[0].mxu0
      %5734 = vmatprep.mubr.f32.mxu0 0.0
      %5735 = vmatmul.mubr.f32.gmra.mrb[0].mxu0 %v2224
      %v5736 = vpop.f32.mrb[0].mxu0
      %v5737 = vadd.f32 0.0, %v5736
      %v5738 = vpop.f32.mrb[0].mxu0
      %5739 = vmatprep.mubr.f32.mxu0 0.0
      %5740 = vmatmul.mubr.f32.gmra.mrb[0].mxu0 %v2227
      %v5741 = vpop.f32.mrb[0].mxu0
      %v5742 = vadd.f32 0.0, %v5741
      %v5743 = vpop.f32.mrb[0].mxu0
      %5744 = vmatprep.mubr.f32.mxu0 0.0
      %5745 = vmatmul.mubr.f32.gmra.mrb[0].mxu0 %v2230
      %v5746 = vpop.f32.mrb[0].mxu0
      %v5747 = vadd.f32 0.0, %v5746
      %v5748 = vpop.f32.mrb[0].mxu0
      %5749 = vmatprep.mubr.f32.mxu0 0.0
      %5750 = vmatmul.mubr.f32.gmra.mrb[0].mxu0 %v2233
      %v5751 = vpop.f32.mrb[0].mxu0
      %v5752 = vadd.f32 0.0, %v5751
      %v5753 = vpop.f32.mrb[0].mxu0
      %5754 = vmatprep.mubr.f32.mxu0 0.0
      %5755 = vmatmul.mubr.f32.gmra.mrb[0].mxu0 %v2236
      %v5756 = vpop.f32.mrb[0].mxu0
      %v5757 = vadd.f32 0.0, %v5756
      %v5758 = vpop.f32.mrb[0].mxu0
      %5759 = vmatprep.mubr.f32.mxu0 0.0
      %5760 = vmatmul.mubr.f32.gmra.mrb[0].mxu0 %v2239
      %v5761 = vpop.f32.mrb[0].mxu0
      %v5762 = vadd.f32 0.0, %v5761
      %v5763 = vpop.f32.mrb[0].mxu0
      %5764 = vdwg.mxu0
      %v5765 = vadd.f32 %v5643, %v5727
      %v5766 = vadd.f32 %v5644, %v5732
      %v5767 = vadd.f32 %v5645, %v5737
      %v5768 = vadd.f32 %v5646, %v5742
      %v5769 = vadd.f32 %v5647, %v5747
      %v5770 = vadd.f32 %v5648, %v5752
      %v5771 = vadd.f32 %v5649, %v5757
      %v5772 = vadd.f32 %v5650, %v5762
      %s5773 = scalar_lea.vmem %s6, 384
      %v5774 = vld [vmem:[%s5773] sm:$0xff]
      %v5775 = vld [vmem:[%s5773 + $0x8] sm:$0xff]
      %v5776 = vld [vmem:[%s5773 + $0x10] sm:$0xff]
      %v5777 = vld [vmem:[%s5773 + $0x18] sm:$0xff]
      %v5778 = vld [vmem:[%s5773 + $0x20] sm:$0xff]
      %v5779 = vld [vmem:[%s5773 + $0x28] sm:$0xff]
      %v5780 = vld [vmem:[%s5773 + $0x30] sm:$0xff]
      %v5781 = vld [vmem:[%s5773 + $0x38] sm:$0xff]
      %5782 = vmatprep.subr.mxu0 0.0
      %5783 = vmatpush1.msra.mxu0 %v5774
      %5784 = vmatprep.subr.mxu0 0.0
      %5785 = vmatpush1.msra.mxu0 %v5775
      %5786 = vmatprep.subr.mxu0 0.0
      %5787 = vmatpush1.msra.mxu0 %v5776
      %5788 = vmatprep.subr.mxu0 0.0
      %5789 = vmatpush1.msra.mxu0 %v5777
      %5790 = vmatprep.subr.mxu0 0.0
      %5791 = vmatpush1.msra.mxu0 %v5778
      %5792 = vmatprep.subr.mxu0 0.0
      %5793 = vmatpush1.msra.mxu0 %v5779
      %5794 = vmatprep.subr.mxu0 0.0
      %5795 = vmatpush1.msra.mxu0 %v5780
      %5796 = vmatprep.subr.mxu0 0.0
      %5797 = vmatpush1.msra.mxu0 %v5781
      %5798 = vmatprep.subr.mxu0 0.0
      %5799 = vmatpush1.msra.mxu0 0.0
      %5800 = vmatprep.subr.mxu0 0.0
      %5801 = vmatpush1.msra.mxu0 0.0
      %5802 = vmatprep.subr.mxu0 0.0
      %5803 = vmatpush1.msra.mxu0 0.0
      %5804 = vmatprep.subr.mxu0 0.0
      %5805 = vmatpush1.msra.mxu0 0.0
      %5806 = vmatprep.subr.mxu0 0.0
      %5807 = vmatpush1.msra.mxu0 0.0
      %5808 = vmatprep.subr.mxu0 0.0
      %5809 = vmatpush1.msra.mxu0 0.0
      %5810 = vmatprep.subr.mxu0 0.0
      %5811 = vmatpush1.msra.mxu0 0.0
      %5812 = vmatprep.subr.mxu0 0.0
      %5813 = vmatpush1.msra.mxu0 0.0
      %5814 = vmatprep.subr.mxu0 0.0
      %5815 = vmatpush1.msra.mxu0 0.0
      %5816 = vmatprep.subr.mxu0 0.0
      %5817 = vmatpush1.msra.mxu0 0.0
      %5818 = vmatprep.subr.mxu0 0.0
      %5819 = vmatpush1.msra.mxu0 0.0
      %5820 = vmatprep.subr.mxu0 0.0
      %5821 = vmatpush1.msra.mxu0 0.0
      %5822 = vmatprep.subr.mxu0 0.0
      %5823 = vmatpush1.msra.mxu0 0.0
      %5824 = vmatprep.subr.mxu0 0.0
      %5825 = vmatpush1.msra.mxu0 0.0
      %5826 = vmatprep.subr.mxu0 0.0
      %5827 = vmatpush1.msra.mxu0 0.0
      %5828 = vmatprep.subr.mxu0 0.0
      %5829 = vmatpush1.msra.mxu0 0.0
      %5830 = vmatprep.subr.mxu0 0.0
      %5831 = vmatpush1.msra.mxu0 0.0
      %5832 = vmatprep.subr.mxu0 0.0
      %5833 = vmatpush1.msra.mxu0 0.0
      %5834 = vmatprep.subr.mxu0 0.0
      %5835 = vmatpush1.msra.mxu0 0.0
      %5836 = vmatprep.subr.mxu0 0.0
      %5837 = vmatpush1.msra.mxu0 0.0
      %5838 = vmatprep.subr.mxu0 0.0
      %5839 = vmatpush1.msra.mxu0 0.0
      %5840 = vmatprep.subr.mxu0 0.0
      %5841 = vmatpush1.msra.mxu0 0.0
      %5842 = vmatprep.subr.mxu0 0.0
      %5843 = vmatpush1.msra.mxu0 0.0
      %5844 = vmatprep.subr.mxu0 0.0
      %5845 = vmatpush1.msra.mxu0 0.0
      %5846 = vmatprep.mubr.f32.mxu0 0.0
      %5847 = vmatmul.mubr.f32.gmra.mrb[0].mxu0 %v2364
      %v5848 = vpop.f32.mrb[0].mxu0
      %v5849 = vadd.f32 0.0, %v5848
      %v5850 = vpop.f32.mrb[0].mxu0
      %5851 = vmatprep.mubr.f32.mxu0 0.0
      %5852 = vmatmul.mubr.f32.gmra.mrb[0].mxu0 %v2367
      %v5853 = vpop.f32.mrb[0].mxu0
      %v5854 = vadd.f32 0.0, %v5853
      %v5855 = vpop.f32.mrb[0].mxu0
      %5856 = vmatprep.mubr.f32.mxu0 0.0
      %5857 = vmatmul.mubr.f32.gmra.mrb[0].mxu0 %v2370
      %v5858 = vpop.f32.mrb[0].mxu0
      %v5859 = vadd.f32 0.0, %v5858
      %v5860 = vpop.f32.mrb[0].mxu0
      %5861 = vmatprep.mubr.f32.mxu0 0.0
      %5862 = vmatmul.mubr.f32.gmra.mrb[0].mxu0 %v2373
      %v5863 = vpop.f32.mrb[0].mxu0
      %v5864 = vadd.f32 0.0, %v5863
      %v5865 = vpop.f32.mrb[0].mxu0
      %5866 = vmatprep.mubr.f32.mxu0 0.0
      %5867 = vmatmul.mubr.f32.gmra.mrb[0].mxu0 %v2376
      %v5868 = vpop.f32.mrb[0].mxu0
      %v5869 = vadd.f32 0.0, %v5868
      %v5870 = vpop.f32.mrb[0].mxu0
      %5871 = vmatprep.mubr.f32.mxu0 0.0
      %5872 = vmatmul.mubr.f32.gmra.mrb[0].mxu0 %v2379
      %v5873 = vpop.f32.mrb[0].mxu0
      %v5874 = vadd.f32 0.0, %v5873
      %v5875 = vpop.f32.mrb[0].mxu0
      %5876 = vmatprep.mubr.f32.mxu0 0.0
      %5877 = vmatmul.mubr.f32.gmra.mrb[0].mxu0 %v2382
      %v5878 = vpop.f32.mrb[0].mxu0
      %v5879 = vadd.f32 0.0, %v5878
      %v5880 = vpop.f32.mrb[0].mxu0
      %5881 = vmatprep.mubr.f32.mxu0 0.0
      %5882 = vmatmul.mubr.f32.gmra.mrb[0].mxu0 %v2385
      %v5883 = vpop.f32.mrb[0].mxu0
      %v5884 = vadd.f32 0.0, %v5883
      %v5885 = vpop.f32.mrb[0].mxu0
      %5886 = vdwg.mxu0
      %v5887 = vadd.f32 %v5765, %v5849
      %v5888 = vadd.f32 %v5766, %v5854
      %v5889 = vadd.f32 %v5767, %v5859
      %v5890 = vadd.f32 %v5768, %v5864
      %v5891 = vadd.f32 %v5769, %v5869
      %v5892 = vadd.f32 %v5770, %v5874
      %v5893 = vadd.f32 %v5771, %v5879
      %v5894 = vadd.f32 %v5772, %v5884
      %s5895 = scalar_lea.vmem %s6, 448
      %v5896 = vld [vmem:[%s5895] sm:$0xff]
      %v5897 = vld [vmem:[%s5895 + $0x8] sm:$0xff]
      %v5898 = vld [vmem:[%s5895 + $0x10] sm:$0xff]
      %v5899 = vld [vmem:[%s5895 + $0x18] sm:$0xff]
      %v5900 = vld [vmem:[%s5895 + $0x20] sm:$0xff]
      %v5901 = vld [vmem:[%s5895 + $0x28] sm:$0xff]
      %v5902 = vld [vmem:[%s5895 + $0x30] sm:$0xff]
      %v5903 = vld [vmem:[%s5895 + $0x38] sm:$0xff]
      %5904 = vmatprep.subr.mxu0 0.0
      %5905 = vmatpush1.msra.mxu0 %v5896
      %5906 = vmatprep.subr.mxu0 0.0
      %5907 = vmatpush1.msra.mxu0 %v5897
      %5908 = vmatprep.subr.mxu0 0.0
      %5909 = vmatpush1.msra.mxu0 %v5898
      %5910 = vmatprep.subr.mxu0 0.0
      %5911 = vmatpush1.msra.mxu0 %v5899
      %5912 = vmatprep.subr.mxu0 0.0
      %5913 = vmatpush1.msra.mxu0 %v5900
      %5914 = vmatprep.subr.mxu0 0.0
      %5915 = vmatpush1.msra.mxu0 %v5901
      %5916 = vmatprep.subr.mxu0 0.0
      %5917 = vmatpush1.msra.mxu0 %v5902
      %5918 = vmatprep.subr.mxu0 0.0
      %5919 = vmatpush1.msra.mxu0 %v5903
      %5920 = vmatprep.subr.mxu0 0.0
      %5921 = vmatpush1.msra.mxu0 0.0
      %5922 = vmatprep.subr.mxu0 0.0
      %5923 = vmatpush1.msra.mxu0 0.0
      %5924 = vmatprep.subr.mxu0 0.0
      %5925 = vmatpush1.msra.mxu0 0.0
      %5926 = vmatprep.subr.mxu0 0.0
      %5927 = vmatpush1.msra.mxu0 0.0
      %5928 = vmatprep.subr.mxu0 0.0
      %5929 = vmatpush1.msra.mxu0 0.0
      %5930 = vmatprep.subr.mxu0 0.0
      %5931 = vmatpush1.msra.mxu0 0.0
      %5932 = vmatprep.subr.mxu0 0.0
      %5933 = vmatpush1.msra.mxu0 0.0
      %5934 = vmatprep.subr.mxu0 0.0
      %5935 = vmatpush1.msra.mxu0 0.0
      %5936 = vmatprep.subr.mxu0 0.0
      %5937 = vmatpush1.msra.mxu0 0.0
      %5938 = vmatprep.subr.mxu0 0.0
      %5939 = vmatpush1.msra.mxu0 0.0
      %5940 = vmatprep.subr.mxu0 0.0
      %5941 = vmatpush1.msra.mxu0 0.0
      %5942 = vmatprep.subr.mxu0 0.0
      %5943 = vmatpush1.msra.mxu0 0.0
      %5944 = vmatprep.subr.mxu0 0.0
      %5945 = vmatpush1.msra.mxu0 0.0
      %5946 = vmatprep.subr.mxu0 0.0
      %5947 = vmatpush1.msra.mxu0 0.0
      %5948 = vmatprep.subr.mxu0 0.0
      %5949 = vmatpush1.msra.mxu0 0.0
      %5950 = vmatprep.subr.mxu0 0.0
      %5951 = vmatpush1.msra.mxu0 0.0
      %5952 = vmatprep.subr.mxu0 0.0
      %5953 = vmatpush1.msra.mxu0 0.0
      %5954 = vmatprep.subr.mxu0 0.0
      %5955 = vmatpush1.msra.mxu0 0.0
      %5956 = vmatprep.subr.mxu0 0.0
      %5957 = vmatpush1.msra.mxu0 0.0
      %5958 = vmatprep.subr.mxu0 0.0
      %5959 = vmatpush1.msra.mxu0 0.0
      %5960 = vmatprep.subr.mxu0 0.0
      %5961 = vmatpush1.msra.mxu0 0.0
      %5962 = vmatprep.subr.mxu0 0.0
      %5963 = vmatpush1.msra.mxu0 0.0
      %5964 = vmatprep.subr.mxu0 0.0
      %5965 = vmatpush1.msra.mxu0 0.0
      %5966 = vmatprep.subr.mxu0 0.0
      %5967 = vmatpush1.msra.mxu0 0.0
      %5968 = vmatprep.mubr.f32.mxu0 0.0
      %5969 = vmatmul.mubr.f32.gmra.mrb[0].mxu0 %v2510
      %v5970 = vpop.f32.mrb[0].mxu0
      %v5971 = vadd.f32 0.0, %v5970
      %v5972 = vpop.f32.mrb[0].mxu0
      %5973 = vmatprep.mubr.f32.mxu0 0.0
      %5974 = vmatmul.mubr.f32.gmra.mrb[0].mxu0 %v2513
      %v5975 = vpop.f32.mrb[0].mxu0
      %v5976 = vadd.f32 0.0, %v5975
      %v5977 = vpop.f32.mrb[0].mxu0
      %5978 = vmatprep.mubr.f32.mxu0 0.0
      %5979 = vmatmul.mubr.f32.gmra.mrb[0].mxu0 %v2516
      %v5980 = vpop.f32.mrb[0].mxu0
      %v5981 = vadd.f32 0.0, %v5980
      %v5982 = vpop.f32.mrb[0].mxu0
      %5983 = vmatprep.mubr.f32.mxu0 0.0
      %5984 = vmatmul.mubr.f32.gmra.mrb[0].mxu0 %v2519
      %v5985 = vpop.f32.mrb[0].mxu0
      %v5986 = vadd.f32 0.0, %v5985
      %v5987 = vpop.f32.mrb[0].mxu0
      %5988 = vmatprep.mubr.f32.mxu0 0.0
      %5989 = vmatmul.mubr.f32.gmra.mrb[0].mxu0 %v2522
      %v5990 = vpop.f32.mrb[0].mxu0
      %v5991 = vadd.f32 0.0, %v5990
      %v5992 = vpop.f32.mrb[0].mxu0
      %5993 = vmatprep.mubr.f32.mxu0 0.0
      %5994 = vmatmul.mubr.f32.gmra.mrb[0].mxu0 %v2525
      %v5995 = vpop.f32.mrb[0].mxu0
      %v5996 = vadd.f32 0.0, %v5995
      %v5997 = vpop.f32.mrb[0].mxu0
      %5998 = vmatprep.mubr.f32.mxu0 0.0
      %5999 = vmatmul.mubr.f32.gmra.mrb[0].mxu0 %v2528
      %v6000 = vpop.f32.mrb[0].mxu0
      %v6001 = vadd.f32 0.0, %v6000
      %v6002 = vpop.f32.mrb[0].mxu0
      %6003 = vmatprep.mubr.f32.mxu0 0.0
      %6004 = vmatmul.mubr.f32.gmra.mrb[0].mxu0 %v2531
      %v6005 = vpop.f32.mrb[0].mxu0
      %v6006 = vadd.f32 0.0, %v6005
      %v6007 = vpop.f32.mrb[0].mxu0
      %6008 = vdwg.mxu0
      %v6009 = vadd.f32 %v5887, %v5971
      %v6010 = vadd.f32 %v5888, %v5976
      %v6011 = vadd.f32 %v5889, %v5981
      %v6012 = vadd.f32 %v5890, %v5986
      %v6013 = vadd.f32 %v5891, %v5991
      %v6014 = vadd.f32 %v5892, %v5996
      %v6015 = vadd.f32 %v5893, %v6001
      %v6016 = vadd.f32 %v5894, %v6006
      %s6017 = scalar_lea.vmem %s6, 512
      %v6018 = vld [vmem:[%s6017] sm:$0xff]
      %v6019 = vld [vmem:[%s6017 + $0x8] sm:$0xff]
      %v6020 = vld [vmem:[%s6017 + $0x10] sm:$0xff]
      %v6021 = vld [vmem:[%s6017 + $0x18] sm:$0xff]
      %v6022 = vld [vmem:[%s6017 + $0x20] sm:$0xff]
      %v6023 = vld [vmem:[%s6017 + $0x28] sm:$0xff]
      %v6024 = vld [vmem:[%s6017 + $0x30] sm:$0xff]
      %v6025 = vld [vmem:[%s6017 + $0x38] sm:$0xff]
      %6026 = vmatprep.subr.mxu0 0.0
      %6027 = vmatpush1.msra.mxu0 %v6018
      %6028 = vmatprep.subr.mxu0 0.0
      %6029 = vmatpush1.msra.mxu0 %v6019
      %6030 = vmatprep.subr.mxu0 0.0
      %6031 = vmatpush1.msra.mxu0 %v6020
      %6032 = vmatprep.subr.mxu0 0.0
      %6033 = vmatpush1.msra.mxu0 %v6021
      %6034 = vmatprep.subr.mxu0 0.0
      %6035 = vmatpush1.msra.mxu0 %v6022
      %6036 = vmatprep.subr.mxu0 0.0
      %6037 = vmatpush1.msra.mxu0 %v6023
      %6038 = vmatprep.subr.mxu0 0.0
      %6039 = vmatpush1.msra.mxu0 %v6024
      %6040 = vmatprep.subr.mxu0 0.0
      %6041 = vmatpush1.msra.mxu0 %v6025
      %6042 = vmatprep.subr.mxu0 0.0
      %6043 = vmatpush1.msra.mxu0 0.0
      %6044 = vmatprep.subr.mxu0 0.0
      %6045 = vmatpush1.msra.mxu0 0.0
      %6046 = vmatprep.subr.mxu0 0.0
      %6047 = vmatpush1.msra.mxu0 0.0
      %6048 = vmatprep.subr.mxu0 0.0
      %6049 = vmatpush1.msra.mxu0 0.0
      %6050 = vmatprep.subr.mxu0 0.0
      %6051 = vmatpush1.msra.mxu0 0.0
      %6052 = vmatprep.subr.mxu0 0.0
      %6053 = vmatpush1.msra.mxu0 0.0
      %6054 = vmatprep.subr.mxu0 0.0
      %6055 = vmatpush1.msra.mxu0 0.0
      %6056 = vmatprep.subr.mxu0 0.0
      %6057 = vmatpush1.msra.mxu0 0.0
      %6058 = vmatprep.subr.mxu0 0.0
      %6059 = vmatpush1.msra.mxu0 0.0
      %6060 = vmatprep.subr.mxu0 0.0
      %6061 = vmatpush1.msra.mxu0 0.0
      %6062 = vmatprep.subr.mxu0 0.0
      %6063 = vmatpush1.msra.mxu0 0.0
      %6064 = vmatprep.subr.mxu0 0.0
      %6065 = vmatpush1.msra.mxu0 0.0
      %6066 = vmatprep.subr.mxu0 0.0
      %6067 = vmatpush1.msra.mxu0 0.0
      %6068 = vmatprep.subr.mxu0 0.0
      %6069 = vmatpush1.msra.mxu0 0.0
      %6070 = vmatprep.subr.mxu0 0.0
      %6071 = vmatpush1.msra.mxu0 0.0
      %6072 = vmatprep.subr.mxu0 0.0
      %6073 = vmatpush1.msra.mxu0 0.0
      %6074 = vmatprep.subr.mxu0 0.0
      %6075 = vmatpush1.msra.mxu0 0.0
      %6076 = vmatprep.subr.mxu0 0.0
      %6077 = vmatpush1.msra.mxu0 0.0
      %6078 = vmatprep.subr.mxu0 0.0
      %6079 = vmatpush1.msra.mxu0 0.0
      %6080 = vmatprep.subr.mxu0 0.0
      %6081 = vmatpush1.msra.mxu0 0.0
      %6082 = vmatprep.subr.mxu0 0.0
      %6083 = vmatpush1.msra.mxu0 0.0
      %6084 = vmatprep.subr.mxu0 0.0
      %6085 = vmatpush1.msra.mxu0 0.0
      %6086 = vmatprep.subr.mxu0 0.0
      %6087 = vmatpush1.msra.mxu0 0.0
      %6088 = vmatprep.subr.mxu0 0.0
      %6089 = vmatpush1.msra.mxu0 0.0
      %6090 = vmatprep.mubr.f32.mxu0 0.0
      %6091 = vmatmul.mubr.f32.gmra.mrb[0].mxu0 %v2656
      %v6092 = vpop.f32.mrb[0].mxu0
      %v6093 = vadd.f32 0.0, %v6092
      %v6094 = vpop.f32.mrb[0].mxu0
      %6095 = vmatprep.mubr.f32.mxu0 0.0
      %6096 = vmatmul.mubr.f32.gmra.mrb[0].mxu0 %v2659
      %v6097 = vpop.f32.mrb[0].mxu0
      %v6098 = vadd.f32 0.0, %v6097
      %v6099 = vpop.f32.mrb[0].mxu0
      %6100 = vmatprep.mubr.f32.mxu0 0.0
      %6101 = vmatmul.mubr.f32.gmra.mrb[0].mxu0 %v2662
      %v6102 = vpop.f32.mrb[0].mxu0
      %v6103 = vadd.f32 0.0, %v6102
      %v6104 = vpop.f32.mrb[0].mxu0
      %6105 = vmatprep.mubr.f32.mxu0 0.0
      %6106 = vmatmul.mubr.f32.gmra.mrb[0].mxu0 %v2665
      %v6107 = vpop.f32.mrb[0].mxu0
      %v6108 = vadd.f32 0.0, %v6107
      %v6109 = vpop.f32.mrb[0].mxu0
      %6110 = vmatprep.mubr.f32.mxu0 0.0
      %6111 = vmatmul.mubr.f32.gmra.mrb[0].mxu0 %v2668
      %v6112 = vpop.f32.mrb[0].mxu0
      %v6113 = vadd.f32 0.0, %v6112
      %v6114 = vpop.f32.mrb[0].mxu0
      %6115 = vmatprep.mubr.f32.mxu0 0.0
      %6116 = vmatmul.mubr.f32.gmra.mrb[0].mxu0 %v2671
      %v6117 = vpop.f32.mrb[0].mxu0
      %v6118 = vadd.f32 0.0, %v6117
      %v6119 = vpop.f32.mrb[0].mxu0
      %6120 = vmatprep.mubr.f32.mxu0 0.0
      %6121 = vmatmul.mubr.f32.gmra.mrb[0].mxu0 %v2674
      %v6122 = vpop.f32.mrb[0].mxu0
      %v6123 = vadd.f32 0.0, %v6122
      %v6124 = vpop.f32.mrb[0].mxu0
      %6125 = vmatprep.mubr.f32.mxu0 0.0
      %6126 = vmatmul.mubr.f32.gmra.mrb[0].mxu0 %v2677
      %v6127 = vpop.f32.mrb[0].mxu0
      %v6128 = vadd.f32 0.0, %v6127
      %v6129 = vpop.f32.mrb[0].mxu0
      %6130 = vdwg.mxu0
      %v6131 = vadd.f32 %v6009, %v6093
      %v6132 = vadd.f32 %v6010, %v6098
      %v6133 = vadd.f32 %v6011, %v6103
      %v6134 = vadd.f32 %v6012, %v6108
      %v6135 = vadd.f32 %v6013, %v6113
      %v6136 = vadd.f32 %v6014, %v6118
      %v6137 = vadd.f32 %v6015, %v6123
      %v6138 = vadd.f32 %v6016, %v6128
      %v6139 = vld [vmem:[%s7] sm:$0x1]
      %v6141 = vlaneseq
      %v6142 = vshrl.u32 %v6141, 7
      %v6143 = vsub.s32 0, %v6142
      %v6144 = vrot.slane %v6139, %v6143
      %v6146 = vadd.f32 %v6131, %v6144
      %v6147 = vadd.f32 %v6132, %v6144
      %v6148 = vadd.f32 %v6133, %v6144
      %v6149 = vadd.f32 %v6134, %v6144
      %v6150 = vadd.f32 %v6135, %v6144
      %v6151 = vadd.f32 %v6136, %v6144
      %v6152 = vadd.f32 %v6137, %v6144
      %v6153 = vadd.f32 %v6138, %v6144
      %v6154 = vmax.f32 %v6146, 0.0
      %v6155 = vmax.f32 %v6147, 0.0
      %v6156 = vmax.f32 %v6148, 0.0
      %v6157 = vmax.f32 %v6149, 0.0
      %v6158 = vmax.f32 %v6150, 0.0
      %v6159 = vmax.f32 %v6151, 0.0
      %v6160 = vmax.f32 %v6152, 0.0
      %v6161 = vmax.f32 %v6153, 0.0
      %6162 = vxpose.xlu0.b32.start [1/16] %v6154, 128
      %6163 = vxpose.xlu0.b32.cont [2/16] %v6155, 128
      %6164 = vxpose.xlu0.b32.cont [3/16] %v6156, 128
      %6165 = vxpose.xlu0.b32.cont [4/16] %v6157, 128
      %6166 = vxpose.xlu0.b32.cont [5/16] %v6158, 128
      %6167 = vxpose.xlu0.b32.cont [6/16] %v6159, 128
      %6168 = vxpose.xlu0.b32.cont [7/16] %v6160, 128
      %6169 = vxpose.xlu0.b32.cont [8/16] %v6161, 128
      %6170 = vxpose.xlu0.b32.cont [9/16] 0.0, 128
      %6171 = vxpose.xlu0.b32.cont [10/16] 0.0, 128
      %6172 = vxpose.xlu0.b32.cont [11/16] 0.0, 128
      %6173 = vxpose.xlu0.b32.cont [12/16] 0.0, 128
      %6174 = vxpose.xlu0.b32.cont [13/16] 0.0, 128
      %6175 = vxpose.xlu0.b32.cont [14/16] 0.0, 128
      %6176 = vxpose.xlu0.b32.cont [15/16] 0.0, 128
      %6177 = vxpose.xlu0.b32.end [16/16] 0.0, 128
      %v6178 = vpop.trf.xlu0
      %v6179 = vpop.trf.xlu0
      %v6180 = vpop.trf.xlu0
      %v6181 = vpop.trf.xlu0
      %v6182 = vpop.trf.xlu0
      %v6183 = vpop.trf.xlu0
      %v6184 = vpop.trf.xlu0
      %v6185 = vpop.trf.xlu0
      %v6186 = vpop.trf.xlu0
      %v6187 = vpop.trf.xlu0
      %v6188 = vpop.trf.xlu0
      %v6189 = vpop.trf.xlu0
      %v6190 = vpop.trf.xlu0
      %v6191 = vpop.trf.xlu0
      %v6192 = vpop.trf.xlu0
      %v6193 = vpop.trf.xlu0
      %v6195 = vsel %vm652, %v6178, 0
      %v6198 = vsel %vm652, %v6179, 0
      %6200 = vmatprep.subr.mxu0 0.0
      %6201 = vmatpush1.msra.mxu0 %v6154
      %6202 = vmatprep.subr.mxu0 0.0
      %6203 = vmatpush1.msra.mxu0 %v6155
      %6204 = vmatprep.subr.mxu0 0.0
      %6205 = vmatpush1.msra.mxu0 %v6156
      %6206 = vmatprep.subr.mxu0 0.0
      %6207 = vmatpush1.msra.mxu0 %v6157
      %6208 = vmatprep.subr.mxu0 0.0
      %6209 = vmatpush1.msra.mxu0 %v6158
      %6210 = vmatprep.subr.mxu0 0.0
      %6211 = vmatpush1.msra.mxu0 %v6159
      %6212 = vmatprep.subr.mxu0 0.0
      %6213 = vmatpush1.msra.mxu0 %v6160
      %6214 = vmatprep.subr.mxu0 0.0
      %6215 = vmatpush1.msra.mxu0 %v6161
      %6216 = vmatprep.subr.mxu0 0.0
      %6217 = vmatpush1.msra.mxu0 0.0
      %6218 = vmatprep.subr.mxu0 0.0
      %6219 = vmatpush1.msra.mxu0 0.0
      %6220 = vmatprep.subr.mxu0 0.0
      %6221 = vmatpush1.msra.mxu0 0.0
      %6222 = vmatprep.subr.mxu0 0.0
      %6223 = vmatpush1.msra.mxu0 0.0
      %6224 = vmatprep.subr.mxu0 0.0
      %6225 = vmatpush1.msra.mxu0 0.0
      %6226 = vmatprep.subr.mxu0 0.0
      %6227 = vmatpush1.msra.mxu0 0.0
      %6228 = vmatprep.subr.mxu0 0.0
      %6229 = vmatpush1.msra.mxu0 0.0
      %6230 = vmatprep.subr.mxu0 0.0
      %6231 = vmatpush1.msra.mxu0 0.0
      %6232 = vmatprep.subr.mxu0 0.0
      %6233 = vmatpush1.msra.mxu0 0.0
      %6234 = vmatprep.subr.mxu0 0.0
      %6235 = vmatpush1.msra.mxu0 0.0
      %6236 = vmatprep.subr.mxu0 0.0
      %6237 = vmatpush1.msra.mxu0 0.0
      %6238 = vmatprep.subr.mxu0 0.0
      %6239 = vmatpush1.msra.mxu0 0.0
      %6240 = vmatprep.subr.mxu0 0.0
      %6241 = vmatpush1.msra.mxu0 0.0
      %6242 = vmatprep.subr.mxu0 0.0
      %6243 = vmatpush1.msra.mxu0 0.0
      %6244 = vmatprep.subr.mxu0 0.0
      %6245 = vmatpush1.msra.mxu0 0.0
      %6246 = vmatprep.subr.mxu0 0.0
      %6247 = vmatpush1.msra.mxu0 0.0
      %6248 = vmatprep.subr.mxu0 0.0
      %6249 = vmatpush1.msra.mxu0 0.0
      %6250 = vmatprep.subr.mxu0 0.0
      %6251 = vmatpush1.msra.mxu0 0.0
      %6252 = vmatprep.subr.mxu0 0.0
      %6253 = vmatpush1.msra.mxu0 0.0
      %6254 = vmatprep.subr.mxu0 0.0
      %6255 = vmatpush1.msra.mxu0 0.0
      %6256 = vmatprep.subr.mxu0 0.0
      %6257 = vmatpush1.msra.mxu0 0.0
      %6258 = vmatprep.subr.mxu0 0.0
      %6259 = vmatpush1.msra.mxu0 0.0
      %6260 = vmatprep.subr.mxu0 0.0
      %6261 = vmatpush1.msra.mxu0 0.0
      %6262 = vmatprep.subr.mxu0 0.0
      %6263 = vmatpush1.msra.mxu0 0.0
      %6264 = vmatprep.mubr.f32.mxu0 0.0
      %6265 = vmatmul.mubr.f32.gmra.mrb[0].mxu0 %v6195
      %v6266 = vpop.f32.mrb[0].mxu0
      %v6267 = vadd.f32 0.0, %v6266
      %v6268 = vpop.f32.mrb[0].mxu0
      %6269 = vmatprep.mubr.f32.mxu0 0.0
      %6270 = vmatmul.mubr.f32.gmra.mrb[0].mxu0 %v6198
      %v6271 = vpop.f32.mrb[0].mxu0
      %v6272 = vadd.f32 0.0, %v6271
      %v6273 = vpop.f32.mrb[0].mxu0
      %6274 = vdwg.mxu0
      %v6275 = vsel %vm2824, %v6267, -inf
      %6276 = vmax.xlane.f32.xlu0 %v6275
      %v6277 = vpop.xlane.xlu0 %6276
      %v6278 = vsel %vm2824, %v6272, -inf
      %6279 = vmax.xlane.f32.xlu0 %v6278
      %v6280 = vpop.xlane.xlu0 %6279
      %v6281 = vsub.f32 %v6277, %v6267
      %v6282 = vsub.f32 %v6280, %v6272
      %v6283 = vsel %vm2824, %v6281, -inf
      %6284 = vmax.xlane.f32.xlu0 %v6283
      %v6285 = vpop.xlane.xlu0 %6284
      %v6286 = vsel %vm2824, %v6282, -inf
      %6287 = vmax.xlane.f32.xlu0 %v6286
      %v6288 = vpop.xlane.xlu0 %6287
      %v6289 = vsub.f32 %v6281, %v6285
      %v6290 = vsub.f32 %v6282, %v6288
      %v6291 = vmul.f32 %v6289, 1.442695
      %v6292 = vpow.pop %v6291
      %v6293 = vmul.f32 %v6290, 1.442695
      %v6294 = vpow.pop %v6293
      %v6295 = vsel %vm2824, %v6292, 0.0
      %6296 = vadd.xlane.f32.xlu0 %v6295
      %v6297 = vpop.xlane.xlu0 %6296
      %v6298 = vsel %vm2824, %v6294, 0.0
      %6299 = vadd.xlane.f32.xlu0 %v6298
      %v6300 = vpop.xlane.xlu0 %6299
      %v6301 = vrcp.pop %v6297
      %v6302 = vmul.f32 %v6292, %v6301
      %v6303 = vrcp.pop %v6300
      %v6304 = vmul.f32 %v6294, %v6303
      %v6306 = vsel %vm2824, %v6154, 0
      %v6309 = vsel %vm2824, %v6155, 0
      %v6312 = vsel %vm2824, %v6156, 0
      %v6315 = vsel %vm2824, %v6157, 0
      %v6318 = vsel %vm2824, %v6158, 0
      %v6321 = vsel %vm2824, %v6159, 0
      %v6324 = vsel %vm2824, %v6160, 0
      %v6327 = vsel %vm2824, %v6161, 0
      %v6330 = vsel %vm2824, %v6302, 0
      %v6333 = vsel %vm2824, %v6304, 0
      %6335 = vmatprep.subr.mxu0 0.0
      %6336 = vmatpush1.xpose.msra.mxu0 %v6330
      %6337 = vmatprep.subr.mxu0 0.0
      %6338 = vmatpush1.xpose.msra.mxu0 %v6333
      %6339 = vmatprep.subr.mxu0 0.0
      %6340 = vmatpush1.xpose.msra.mxu0 0.0
      %6341 = vmatprep.subr.mxu0 0.0
      %6342 = vmatpush1.xpose.msra.mxu0 0.0
      %6343 = vmatprep.subr.mxu0 0.0
      %6344 = vmatpush1.xpose.msra.mxu0 0.0
      %6345 = vmatprep.subr.mxu0 0.0
      %6346 = vmatpush1.xpose.msra.mxu0 0.0
      %6347 = vmatprep.subr.mxu0 0.0
      %6348 = vmatpush1.xpose.msra.mxu0 0.0
      %6349 = vmatprep.subr.mxu0 0.0
      %6350 = vmatpush1.xpose.msra.mxu0 0.0
      %6351 = vmatprep.subr.mxu0 0.0
      %6352 = vmatpush1.xpose.msra.mxu0 0.0
      %6353 = vmatprep.subr.mxu0 0.0
      %6354 = vmatpush1.xpose.msra.mxu0 0.0
      %6355 = vmatprep.subr.mxu0 0.0
      %6356 = vmatpush1.xpose.msra.mxu0 0.0
      %6357 = vmatprep.subr.mxu0 0.0
      %6358 = vmatpush1.xpose.msra.mxu0 0.0
      %6359 = vmatprep.subr.mxu0 0.0
      %6360 = vmatpush1.xpose.msra.mxu0 0.0
      %6361 = vmatprep.subr.mxu0 0.0
      %6362 = vmatpush1.xpose.msra.mxu0 0.0
      %6363 = vmatprep.subr.mxu0 0.0
      %6364 = vmatpush1.xpose.msra.mxu0 0.0
      %6365 = vmatprep.subr.mxu0 0.0
      %6366 = vmatpush1.xpose.msra.mxu0 0.0
      %6367 = vmatprep.subr.mxu0 0.0
      %6368 = vmatpush1.xpose.msra.mxu0 0.0
      %6369 = vmatprep.subr.mxu0 0.0
      %6370 = vmatpush1.xpose.msra.mxu0 0.0
      %6371 = vmatprep.subr.mxu0 0.0
      %6372 = vmatpush1.xpose.msra.mxu0 0.0
      %6373 = vmatprep.subr.mxu0 0.0
      %6374 = vmatpush1.xpose.msra.mxu0 0.0
      %6375 = vmatprep.subr.mxu0 0.0
      %6376 = vmatpush1.xpose.msra.mxu0 0.0
      %6377 = vmatprep.subr.mxu0 0.0
      %6378 = vmatpush1.xpose.msra.mxu0 0.0
      %6379 = vmatprep.subr.mxu0 0.0
      %6380 = vmatpush1.xpose.msra.mxu0 0.0
      %6381 = vmatprep.subr.mxu0 0.0
      %6382 = vmatpush1.xpose.msra.mxu0 0.0
      %6383 = vmatprep.subr.mxu0 0.0
      %6384 = vmatpush1.xpose.msra.mxu0 0.0
      %6385 = vmatprep.subr.mxu0 0.0
      %6386 = vmatpush1.xpose.msra.mxu0 0.0
      %6387 = vmatprep.subr.mxu0 0.0
      %6388 = vmatpush1.xpose.msra.mxu0 0.0
      %6389 = vmatprep.subr.mxu0 0.0
      %6390 = vmatpush1.xpose.msra.mxu0 0.0
      %6391 = vmatprep.subr.mxu0 0.0
      %6392 = vmatpush1.xpose.msra.mxu0 0.0
      %6393 = vmatprep.subr.mxu0 0.0
      %6394 = vmatpush1.xpose.msra.mxu0 0.0
      %6395 = vmatprep.subr.mxu0 0.0
      %6396 = vmatpush1.xpose.msra.mxu0 0.0
      %6397 = vmatprep.subr.mxu0 0.0
      %6398 = vmatpush1.xpose.msra.mxu0 0.0
      %6399 = vmatprep.mubr.f32.mxu0 0.0
      %6400 = vmatmul.mubr.f32.gmra.mrb[0].mxu0 %v6306
      %v6401 = vpop.f32.mrb[0].mxu0
      %v6402 = vadd.f32 0.0, %v6401
      %v6403 = vpop.f32.mrb[0].mxu0
      %6404 = vmatprep.mubr.f32.mxu0 0.0
      %6405 = vmatmul.mubr.f32.gmra.mrb[0].mxu0 %v6309
      %v6406 = vpop.f32.mrb[0].mxu0
      %v6407 = vadd.f32 0.0, %v6406
      %v6408 = vpop.f32.mrb[0].mxu0
      %6409 = vmatprep.mubr.f32.mxu0 0.0
      %6410 = vmatmul.mubr.f32.gmra.mrb[0].mxu0 %v6312
      %v6411 = vpop.f32.mrb[0].mxu0
      %v6412 = vadd.f32 0.0, %v6411
      %v6413 = vpop.f32.mrb[0].mxu0
      %6414 = vmatprep.mubr.f32.mxu0 0.0
      %6415 = vmatmul.mubr.f32.gmra.mrb[0].mxu0 %v6315
      %v6416 = vpop.f32.mrb[0].mxu0
      %v6417 = vadd.f32 0.0, %v6416
      %v6418 = vpop.f32.mrb[0].mxu0
      %6419 = vmatprep.mubr.f32.mxu0 0.0
      %6420 = vmatmul.mubr.f32.gmra.mrb[0].mxu0 %v6318
      %v6421 = vpop.f32.mrb[0].mxu0
      %v6422 = vadd.f32 0.0, %v6421
      %v6423 = vpop.f32.mrb[0].mxu0
      %6424 = vmatprep.mubr.f32.mxu0 0.0
      %6425 = vmatmul.mubr.f32.gmra.mrb[0].mxu0 %v6321
      %v6426 = vpop.f32.mrb[0].mxu0
      %v6427 = vadd.f32 0.0, %v6426
      %v6428 = vpop.f32.mrb[0].mxu0
      %6429 = vmatprep.mubr.f32.mxu0 0.0
      %6430 = vmatmul.mubr.f32.gmra.mrb[0].mxu0 %v6324
      %v6431 = vpop.f32.mrb[0].mxu0
      %v6432 = vadd.f32 0.0, %v6431
      %v6433 = vpop.f32.mrb[0].mxu0
      %6434 = vmatprep.mubr.f32.mxu0 0.0
      %6435 = vmatmul.mubr.f32.gmra.mrb[0].mxu0 %v6327
      %v6436 = vpop.f32.mrb[0].mxu0
      %v6437 = vadd.f32 0.0, %v6436
      %v6438 = vpop.f32.mrb[0].mxu0
      %6439 = vdwg.mxu0
      %s6440 = sld [smem:[#allocation3]]
      %v6441 = vstv %s6440
      %v6442 = vmul.f32 %v6441, %v6402
      %v6443 = vmul.f32 %v6441, %v6407
      %v6444 = vmul.f32 %v6441, %v6412
      %v6445 = vmul.f32 %v6441, %v6417
      %v6446 = vmul.f32 %v6441, %v6422
      %v6447 = vmul.f32 %v6441, %v6427
      %v6448 = vmul.f32 %v6441, %v6432
      %v6449 = vmul.f32 %v6441, %v6437
      %v6450 = vadd.f32 %v6442, %v6154
      %v6451 = vadd.f32 %v6443, %v6155
      %v6452 = vadd.f32 %v6444, %v6156
      %v6453 = vadd.f32 %v6445, %v6157
      %v6454 = vadd.f32 %v6446, %v6158
      %v6455 = vadd.f32 %v6447, %v6159
      %v6456 = vadd.f32 %v6448, %v6160
      %v6457 = vadd.f32 %v6449, %v6161
      %6458 = vmatprep.subr.mxu0 0.0
      %6459 = vmatpush1.msra.mxu0 %v6450
      %6460 = vmatprep.subr.mxu0 0.0
      %6461 = vmatpush1.msra.mxu0 %v6451
      %6462 = vmatprep.subr.mxu0 0.0
      %6463 = vmatpush1.msra.mxu0 %v6452
      %6464 = vmatprep.subr.mxu0 0.0
      %6465 = vmatpush1.msra.mxu0 %v6453
      %6466 = vmatprep.subr.mxu0 0.0
      %6467 = vmatpush1.msra.mxu0 %v6454
      %6468 = vmatprep.subr.mxu0 0.0
      %6469 = vmatpush1.msra.mxu0 %v6455
      %6470 = vmatprep.subr.mxu0 0.0
      %6471 = vmatpush1.msra.mxu0 %v6456
      %6472 = vmatprep.subr.mxu0 0.0
      %6473 = vmatpush1.msra.mxu0 %v6457
      %6474 = vmatprep.subr.mxu0 0.0
      %6475 = vmatpush1.msra.mxu0 0.0
      %6476 = vmatprep.subr.mxu0 0.0
      %6477 = vmatpush1.msra.mxu0 0.0
      %6478 = vmatprep.subr.mxu0 0.0
      %6479 = vmatpush1.msra.mxu0 0.0
      %6480 = vmatprep.subr.mxu0 0.0
      %6481 = vmatpush1.msra.mxu0 0.0
      %6482 = vmatprep.subr.mxu0 0.0
      %6483 = vmatpush1.msra.mxu0 0.0
      %6484 = vmatprep.subr.mxu0 0.0
      %6485 = vmatpush1.msra.mxu0 0.0
      %6486 = vmatprep.subr.mxu0 0.0
      %6487 = vmatpush1.msra.mxu0 0.0
      %6488 = vmatprep.subr.mxu0 0.0
      %6489 = vmatpush1.msra.mxu0 0.0
      %6490 = vmatprep.subr.mxu0 0.0
      %6491 = vmatpush1.msra.mxu0 0.0
      %6492 = vmatprep.subr.mxu0 0.0
      %6493 = vmatpush1.msra.mxu0 0.0
      %6494 = vmatprep.subr.mxu0 0.0
      %6495 = vmatpush1.msra.mxu0 0.0
      %6496 = vmatprep.subr.mxu0 0.0
      %6497 = vmatpush1.msra.mxu0 0.0
      %6498 = vmatprep.subr.mxu0 0.0
      %6499 = vmatpush1.msra.mxu0 0.0
      %6500 = vmatprep.subr.mxu0 0.0
      %6501 = vmatpush1.msra.mxu0 0.0
      %6502 = vmatprep.subr.mxu0 0.0
      %6503 = vmatpush1.msra.mxu0 0.0
      %6504 = vmatprep.subr.mxu0 0.0
      %6505 = vmatpush1.msra.mxu0 0.0
      %6506 = vmatprep.subr.mxu0 0.0
      %6507 = vmatpush1.msra.mxu0 0.0
      %6508 = vmatprep.subr.mxu0 0.0
      %6509 = vmatpush1.msra.mxu0 0.0
      %6510 = vmatprep.subr.mxu0 0.0
      %6511 = vmatpush1.msra.mxu0 0.0
      %6512 = vmatprep.subr.mxu0 0.0
      %6513 = vmatpush1.msra.mxu0 0.0
      %6514 = vmatprep.subr.mxu0 0.0
      %6515 = vmatpush1.msra.mxu0 0.0
      %6516 = vmatprep.subr.mxu0 0.0
      %6517 = vmatpush1.msra.mxu0 0.0
      %6518 = vmatprep.subr.mxu0 0.0
      %6519 = vmatpush1.msra.mxu0 0.0
      %6520 = vmatprep.subr.mxu0 0.0
      %6521 = vmatpush1.msra.mxu0 0.0
      %6522 = vmatprep.mubr.f32.mxu0 0.0
      %6523 = vmatmul.mubr.f32.gmra.mrb[0].mxu0 %v855
      %v6524 = vpop.f32.mrb[0].mxu0
      %v6525 = vadd.f32 0.0, %v6524
      %v6526 = vpop.f32.mrb[0].mxu0
      %6527 = vmatprep.mubr.f32.mxu0 0.0
      %6528 = vmatmul.mubr.f32.gmra.mrb[0].mxu0 %v858
      %v6529 = vpop.f32.mrb[0].mxu0
      %v6530 = vadd.f32 0.0, %v6529
      %v6531 = vpop.f32.mrb[0].mxu0
      %6532 = vmatprep.mubr.f32.mxu0 0.0
      %6533 = vmatmul.mubr.f32.gmra.mrb[0].mxu0 %v861
      %v6534 = vpop.f32.mrb[0].mxu0
      %v6535 = vadd.f32 0.0, %v6534
      %v6536 = vpop.f32.mrb[0].mxu0
      %6537 = vmatprep.mubr.f32.mxu0 0.0
      %6538 = vmatmul.mubr.f32.gmra.mrb[0].mxu0 %v864
      %v6539 = vpop.f32.mrb[0].mxu0
      %v6540 = vadd.f32 0.0, %v6539
      %v6541 = vpop.f32.mrb[0].mxu0
      %6542 = vmatprep.mubr.f32.mxu0 0.0
      %6543 = vmatmul.mubr.f32.gmra.mrb[0].mxu0 %v867
      %v6544 = vpop.f32.mrb[0].mxu0
      %v6545 = vadd.f32 0.0, %v6544
      %v6546 = vpop.f32.mrb[0].mxu0
      %6547 = vmatprep.mubr.f32.mxu0 0.0
      %6548 = vmatmul.mubr.f32.gmra.mrb[0].mxu0 %v870
      %v6549 = vpop.f32.mrb[0].mxu0
      %v6550 = vadd.f32 0.0, %v6549
      %v6551 = vpop.f32.mrb[0].mxu0
      %6552 = vmatprep.mubr.f32.mxu0 0.0
      %6553 = vmatmul.mubr.f32.gmra.mrb[0].mxu0 %v873
      %v6554 = vpop.f32.mrb[0].mxu0
      %v6555 = vadd.f32 0.0, %v6554
      %v6556 = vpop.f32.mrb[0].mxu0
      %6557 = vmatprep.mubr.f32.mxu0 0.0
      %6558 = vmatmul.mubr.f32.gmra.mrb[0].mxu0 %v876
      %v6559 = vpop.f32.mrb[0].mxu0
      %v6560 = vadd.f32 0.0, %v6559
      %v6561 = vpop.f32.mrb[0].mxu0
      %6562 = vmatprep.mubr.f32.mxu0 0.0
      %6563 = vmatmul.mubr.f32.gmra.mrb[0].mxu0 %v879
      %v6564 = vpop.f32.mrb[0].mxu0
      %v6565 = vadd.f32 0.0, %v6564
      %v6566 = vpop.f32.mrb[0].mxu0
      %6567 = vmatprep.mubr.f32.mxu0 0.0
      %6568 = vmatmul.mubr.f32.gmra.mrb[0].mxu0 %v882
      %v6569 = vpop.f32.mrb[0].mxu0
      %v6570 = vadd.f32 0.0, %v6569
      %v6571 = vpop.f32.mrb[0].mxu0
      %6572 = vmatprep.mubr.f32.mxu0 0.0
      %6573 = vmatmul.mubr.f32.gmra.mrb[0].mxu0 %v885
      %v6574 = vpop.f32.mrb[0].mxu0
      %v6575 = vadd.f32 0.0, %v6574
      %v6576 = vpop.f32.mrb[0].mxu0
      %6577 = vmatprep.mubr.f32.mxu0 0.0
      %6578 = vmatmul.mubr.f32.gmra.mrb[0].mxu0 %v888
      %v6579 = vpop.f32.mrb[0].mxu0
      %v6580 = vadd.f32 0.0, %v6579
      %v6581 = vpop.f32.mrb[0].mxu0
      %6582 = vmatprep.mubr.f32.mxu0 0.0
      %6583 = vmatmul.mubr.f32.gmra.mrb[0].mxu0 %v891
      %v6584 = vpop.f32.mrb[0].mxu0
      %v6585 = vadd.f32 0.0, %v6584
      %v6586 = vpop.f32.mrb[0].mxu0
      %6587 = vmatprep.mubr.f32.mxu0 0.0
      %6588 = vmatmul.mubr.f32.gmra.mrb[0].mxu0 %v894
      %v6589 = vpop.f32.mrb[0].mxu0
      %v6590 = vadd.f32 0.0, %v6589
      %v6591 = vpop.f32.mrb[0].mxu0
      %6592 = vmatprep.mubr.f32.mxu0 0.0
      %6593 = vmatmul.mubr.f32.gmra.mrb[0].mxu0 %v897
      %v6594 = vpop.f32.mrb[0].mxu0
      %v6595 = vadd.f32 0.0, %v6594
      %v6596 = vpop.f32.mrb[0].mxu0
      %6597 = vmatprep.mubr.f32.mxu0 0.0
      %6598 = vmatmul.mubr.f32.gmra.mrb[0].mxu0 %v900
      %v6599 = vpop.f32.mrb[0].mxu0
      %v6600 = vadd.f32 0.0, %v6599
      %v6601 = vpop.f32.mrb[0].mxu0
      %6602 = vmatprep.mubr.f32.mxu0 0.0
      %6603 = vmatmul.mubr.f32.gmra.mrb[0].mxu0 %v903
      %v6604 = vpop.f32.mrb[0].mxu0
      %v6605 = vadd.f32 0.0, %v6604
      %v6606 = vpop.f32.mrb[0].mxu0
      %6607 = vmatprep.mubr.f32.mxu0 0.0
      %6608 = vmatmul.mubr.f32.gmra.mrb[0].mxu0 %v906
      %v6609 = vpop.f32.mrb[0].mxu0
      %v6610 = vadd.f32 0.0, %v6609
      %v6611 = vpop.f32.mrb[0].mxu0
      %6612 = vmatprep.mubr.f32.mxu0 0.0
      %6613 = vmatmul.mubr.f32.gmra.mrb[0].mxu0 %v909
      %v6614 = vpop.f32.mrb[0].mxu0
      %v6615 = vadd.f32 0.0, %v6614
      %v6616 = vpop.f32.mrb[0].mxu0
      %6617 = vmatprep.mubr.f32.mxu0 0.0
      %6618 = vmatmul.mubr.f32.gmra.mrb[0].mxu0 %v912
      %v6619 = vpop.f32.mrb[0].mxu0
      %v6620 = vadd.f32 0.0, %v6619
      %v6621 = vpop.f32.mrb[0].mxu0
      %6622 = vmatprep.mubr.f32.mxu0 0.0
      %6623 = vmatmul.mubr.f32.gmra.mrb[0].mxu0 %v915
      %v6624 = vpop.f32.mrb[0].mxu0
      %v6625 = vadd.f32 0.0, %v6624
      %v6626 = vpop.f32.mrb[0].mxu0
      %6627 = vmatprep.mubr.f32.mxu0 0.0
      %6628 = vmatmul.mubr.f32.gmra.mrb[0].mxu0 %v918
      %v6629 = vpop.f32.mrb[0].mxu0
      %v6630 = vadd.f32 0.0, %v6629
      %v6631 = vpop.f32.mrb[0].mxu0
      %6632 = vmatprep.mubr.f32.mxu0 0.0
      %6633 = vmatmul.mubr.f32.gmra.mrb[0].mxu0 %v921
      %v6634 = vpop.f32.mrb[0].mxu0
      %v6635 = vadd.f32 0.0, %v6634
      %v6636 = vpop.f32.mrb[0].mxu0
      %6637 = vmatprep.mubr.f32.mxu0 0.0
      %6638 = vmatmul.mubr.f32.gmra.mrb[0].mxu0 %v924
      %v6639 = vpop.f32.mrb[0].mxu0
      %v6640 = vadd.f32 0.0, %v6639
      %v6641 = vpop.f32.mrb[0].mxu0
      %6642 = vmatprep.mubr.f32.mxu0 0.0
      %6643 = vmatmul.mubr.f32.gmra.mrb[0].mxu0 %v927
      %v6644 = vpop.f32.mrb[0].mxu0
      %v6645 = vadd.f32 0.0, %v6644
      %v6646 = vpop.f32.mrb[0].mxu0
      %6647 = vmatprep.mubr.f32.mxu0 0.0
      %6648 = vmatmul.mubr.f32.gmra.mrb[0].mxu0 %v930
      %v6649 = vpop.f32.mrb[0].mxu0
      %v6650 = vadd.f32 0.0, %v6649
      %v6651 = vpop.f32.mrb[0].mxu0
      %6652 = vmatprep.mubr.f32.mxu0 0.0
      %6653 = vmatmul.mubr.f32.gmra.mrb[0].mxu0 %v933
      %v6654 = vpop.f32.mrb[0].mxu0
      %v6655 = vadd.f32 0.0, %v6654
      %v6656 = vpop.f32.mrb[0].mxu0
      %6657 = vmatprep.mubr.f32.mxu0 0.0
      %6658 = vmatmul.mubr.f32.gmra.mrb[0].mxu0 %v936
      %v6659 = vpop.f32.mrb[0].mxu0
      %v6660 = vadd.f32 0.0, %v6659
      %v6661 = vpop.f32.mrb[0].mxu0
      %6662 = vmatprep.mubr.f32.mxu0 0.0
      %6663 = vmatmul.mubr.f32.gmra.mrb[0].mxu0 %v939
      %v6664 = vpop.f32.mrb[0].mxu0
      %v6665 = vadd.f32 0.0, %v6664
      %v6666 = vpop.f32.mrb[0].mxu0
      %6667 = vmatprep.mubr.f32.mxu0 0.0
      %6668 = vmatmul.mubr.f32.gmra.mrb[0].mxu0 %v942
      %v6669 = vpop.f32.mrb[0].mxu0
      %v6670 = vadd.f32 0.0, %v6669
      %v6671 = vpop.f32.mrb[0].mxu0
      %6672 = vmatprep.mubr.f32.mxu0 0.0
      %6673 = vmatmul.mubr.f32.gmra.mrb[0].mxu0 %v945
      %v6674 = vpop.f32.mrb[0].mxu0
      %v6675 = vadd.f32 0.0, %v6674
      %v6676 = vpop.f32.mrb[0].mxu0
      %6677 = vmatprep.mubr.f32.mxu0 0.0
      %6678 = vmatmul.mubr.f32.gmra.mrb[0].mxu0 %v948
      %v6679 = vpop.f32.mrb[0].mxu0
      %v6680 = vadd.f32 0.0, %v6679
      %v6681 = vpop.f32.mrb[0].mxu0
      %6682 = vmatprep.mubr.f32.mxu0 0.0
      %6683 = vmatmul.mubr.f32.gmra.mrb[0].mxu0 %v951
      %v6684 = vpop.f32.mrb[0].mxu0
      %v6685 = vadd.f32 0.0, %v6684
      %v6686 = vpop.f32.mrb[0].mxu0
      %6687 = vmatprep.mubr.f32.mxu0 0.0
      %6688 = vmatmul.mubr.f32.gmra.mrb[0].mxu0 %v954
      %v6689 = vpop.f32.mrb[0].mxu0
      %v6690 = vadd.f32 0.0, %v6689
      %v6691 = vpop.f32.mrb[0].mxu0
      %6692 = vmatprep.mubr.f32.mxu0 0.0
      %6693 = vmatmul.mubr.f32.gmra.mrb[0].mxu0 %v957
      %v6694 = vpop.f32.mrb[0].mxu0
      %v6695 = vadd.f32 0.0, %v6694
      %v6696 = vpop.f32.mrb[0].mxu0
      %6697 = vmatprep.mubr.f32.mxu0 0.0
      %6698 = vmatmul.mubr.f32.gmra.mrb[0].mxu0 %v960
      %v6699 = vpop.f32.mrb[0].mxu0
      %v6700 = vadd.f32 0.0, %v6699
      %v6701 = vpop.f32.mrb[0].mxu0
      %6702 = vmatprep.mubr.f32.mxu0 0.0
      %6703 = vmatmul.mubr.f32.gmra.mrb[0].mxu0 %v963
      %v6704 = vpop.f32.mrb[0].mxu0
      %v6705 = vadd.f32 0.0, %v6704
      %v6706 = vpop.f32.mrb[0].mxu0
      %6707 = vmatprep.mubr.f32.mxu0 0.0
      %6708 = vmatmul.mubr.f32.gmra.mrb[0].mxu0 %v966
      %v6709 = vpop.f32.mrb[0].mxu0
      %v6710 = vadd.f32 0.0, %v6709
      %v6711 = vpop.f32.mrb[0].mxu0
      %6712 = vmatprep.mubr.f32.mxu0 0.0
      %6713 = vmatmul.mubr.f32.gmra.mrb[0].mxu0 %v969
      %v6714 = vpop.f32.mrb[0].mxu0
      %v6715 = vadd.f32 0.0, %v6714
      %v6716 = vpop.f32.mrb[0].mxu0
      %6717 = vmatprep.mubr.f32.mxu0 0.0
      %6718 = vmatmul.mubr.f32.gmra.mrb[0].mxu0 %v972
      %v6719 = vpop.f32.mrb[0].mxu0
      %v6720 = vadd.f32 0.0, %v6719
      %v6721 = vpop.f32.mrb[0].mxu0
      %6722 = vmatprep.mubr.f32.mxu0 0.0
      %6723 = vmatmul.mubr.f32.gmra.mrb[0].mxu0 %v975
      %v6724 = vpop.f32.mrb[0].mxu0
      %v6725 = vadd.f32 0.0, %v6724
      %v6726 = vpop.f32.mrb[0].mxu0
      %6727 = vmatprep.mubr.f32.mxu0 0.0
      %6728 = vmatmul.mubr.f32.gmra.mrb[0].mxu0 %v978
      %v6729 = vpop.f32.mrb[0].mxu0
      %v6730 = vadd.f32 0.0, %v6729
      %v6731 = vpop.f32.mrb[0].mxu0
      %6732 = vmatprep.mubr.f32.mxu0 0.0
      %6733 = vmatmul.mubr.f32.gmra.mrb[0].mxu0 %v981
      %v6734 = vpop.f32.mrb[0].mxu0
      %v6735 = vadd.f32 0.0, %v6734
      %v6736 = vpop.f32.mrb[0].mxu0
      %6737 = vmatprep.mubr.f32.mxu0 0.0
      %6738 = vmatmul.mubr.f32.gmra.mrb[0].mxu0 %v984
      %v6739 = vpop.f32.mrb[0].mxu0
      %v6740 = vadd.f32 0.0, %v6739
      %v6741 = vpop.f32.mrb[0].mxu0
      %6742 = vmatprep.mubr.f32.mxu0 0.0
      %6743 = vmatmul.mubr.f32.gmra.mrb[0].mxu0 %v987
      %v6744 = vpop.f32.mrb[0].mxu0
      %v6745 = vadd.f32 0.0, %v6744
      %v6746 = vpop.f32.mrb[0].mxu0
      %6747 = vmatprep.mubr.f32.mxu0 0.0
      %6748 = vmatmul.mubr.f32.gmra.mrb[0].mxu0 %v990
      %v6749 = vpop.f32.mrb[0].mxu0
      %v6750 = vadd.f32 0.0, %v6749
      %v6751 = vpop.f32.mrb[0].mxu0
      %6752 = vmatprep.mubr.f32.mxu0 0.0
      %6753 = vmatmul.mubr.f32.gmra.mrb[0].mxu0 %v993
      %v6754 = vpop.f32.mrb[0].mxu0
      %v6755 = vadd.f32 0.0, %v6754
      %v6756 = vpop.f32.mrb[0].mxu0
      %6757 = vmatprep.mubr.f32.mxu0 0.0
      %6758 = vmatmul.mubr.f32.gmra.mrb[0].mxu0 %v996
      %v6759 = vpop.f32.mrb[0].mxu0
      %v6760 = vadd.f32 0.0, %v6759
      %v6761 = vpop.f32.mrb[0].mxu0
      %6762 = vmatprep.mubr.f32.mxu0 0.0
      %6763 = vmatmul.mubr.f32.gmra.mrb[0].mxu0 %v999
      %v6764 = vpop.f32.mrb[0].mxu0
      %v6765 = vadd.f32 0.0, %v6764
      %v6766 = vpop.f32.mrb[0].mxu0
      %6767 = vmatprep.mubr.f32.mxu0 0.0
      %6768 = vmatmul.mubr.f32.gmra.mrb[0].mxu0 %v1002
      %v6769 = vpop.f32.mrb[0].mxu0
      %v6770 = vadd.f32 0.0, %v6769
      %v6771 = vpop.f32.mrb[0].mxu0
      %6772 = vmatprep.mubr.f32.mxu0 0.0
      %6773 = vmatmul.mubr.f32.gmra.mrb[0].mxu0 %v1005
      %v6774 = vpop.f32.mrb[0].mxu0
      %v6775 = vadd.f32 0.0, %v6774
      %v6776 = vpop.f32.mrb[0].mxu0
      %6777 = vmatprep.mubr.f32.mxu0 0.0
      %6778 = vmatmul.mubr.f32.gmra.mrb[0].mxu0 %v1008
      %v6779 = vpop.f32.mrb[0].mxu0
      %v6780 = vadd.f32 0.0, %v6779
      %v6781 = vpop.f32.mrb[0].mxu0
      %6782 = vmatprep.mubr.f32.mxu0 0.0
      %6783 = vmatmul.mubr.f32.gmra.mrb[0].mxu0 %v1011
      %v6784 = vpop.f32.mrb[0].mxu0
      %v6785 = vadd.f32 0.0, %v6784
      %v6786 = vpop.f32.mrb[0].mxu0
      %6787 = vmatprep.mubr.f32.mxu0 0.0
      %6788 = vmatmul.mubr.f32.gmra.mrb[0].mxu0 %v1014
      %v6789 = vpop.f32.mrb[0].mxu0
      %v6790 = vadd.f32 0.0, %v6789
      %v6791 = vpop.f32.mrb[0].mxu0
      %6792 = vmatprep.mubr.f32.mxu0 0.0
      %6793 = vmatmul.mubr.f32.gmra.mrb[0].mxu0 %v1017
      %v6794 = vpop.f32.mrb[0].mxu0
      %v6795 = vadd.f32 0.0, %v6794
      %v6796 = vpop.f32.mrb[0].mxu0
      %6797 = vmatprep.mubr.f32.mxu0 0.0
      %6798 = vmatmul.mubr.f32.gmra.mrb[0].mxu0 %v1020
      %v6799 = vpop.f32.mrb[0].mxu0
      %v6800 = vadd.f32 0.0, %v6799
      %v6801 = vpop.f32.mrb[0].mxu0
      %6802 = vmatprep.mubr.f32.mxu0 0.0
      %6803 = vmatmul.mubr.f32.gmra.mrb[0].mxu0 %v1023
      %v6804 = vpop.f32.mrb[0].mxu0
      %v6805 = vadd.f32 0.0, %v6804
      %v6806 = vpop.f32.mrb[0].mxu0
      %6807 = vmatprep.mubr.f32.mxu0 0.0
      %6808 = vmatmul.mubr.f32.gmra.mrb[0].mxu0 %v1026
      %v6809 = vpop.f32.mrb[0].mxu0
      %v6810 = vadd.f32 0.0, %v6809
      %v6811 = vpop.f32.mrb[0].mxu0
      %6812 = vmatprep.mubr.f32.mxu0 0.0
      %6813 = vmatmul.mubr.f32.gmra.mrb[0].mxu0 %v1029
      %v6814 = vpop.f32.mrb[0].mxu0
      %v6815 = vadd.f32 0.0, %v6814
      %v6816 = vpop.f32.mrb[0].mxu0
      %6817 = vmatprep.mubr.f32.mxu0 0.0
      %6818 = vmatmul.mubr.f32.gmra.mrb[0].mxu0 %v1032
      %v6819 = vpop.f32.mrb[0].mxu0
      %v6820 = vadd.f32 0.0, %v6819
      %v6821 = vpop.f32.mrb[0].mxu0
      %6822 = vmatprep.mubr.f32.mxu0 0.0
      %6823 = vmatmul.mubr.f32.gmra.mrb[0].mxu0 %v1035
      %v6824 = vpop.f32.mrb[0].mxu0
      %v6825 = vadd.f32 0.0, %v6824
      %v6826 = vpop.f32.mrb[0].mxu0
      %6827 = vmatprep.mubr.f32.mxu0 0.0
      %6828 = vmatmul.mubr.f32.gmra.mrb[0].mxu0 %v1038
      %v6829 = vpop.f32.mrb[0].mxu0
      %v6830 = vadd.f32 0.0, %v6829
      %v6831 = vpop.f32.mrb[0].mxu0
      %6832 = vmatprep.mubr.f32.mxu0 0.0
      %6833 = vmatmul.mubr.f32.gmra.mrb[0].mxu0 %v1041
      %v6834 = vpop.f32.mrb[0].mxu0
      %v6835 = vadd.f32 0.0, %v6834
      %v6836 = vpop.f32.mrb[0].mxu0
      %6837 = vmatprep.mubr.f32.mxu0 0.0
      %6838 = vmatmul.mubr.f32.gmra.mrb[0].mxu0 %v1044
      %v6839 = vpop.f32.mrb[0].mxu0
      %v6840 = vadd.f32 0.0, %v6839
      %v6841 = vpop.f32.mrb[0].mxu0
      %6842 = vmatprep.mubr.f32.mxu0 0.0
      %6843 = vmatmul.mubr.f32.gmra.mrb[0].mxu0 %v1047
      %v6844 = vpop.f32.mrb[0].mxu0
      %v6845 = vadd.f32 0.0, %v6844
      %v6846 = vpop.f32.mrb[0].mxu0
      %6847 = vmatprep.mubr.f32.mxu0 0.0
      %6848 = vmatmul.mubr.f32.gmra.mrb[0].mxu0 %v1050
      %v6849 = vpop.f32.mrb[0].mxu0
      %v6850 = vadd.f32 0.0, %v6849
      %v6851 = vpop.f32.mrb[0].mxu0
      %6852 = vmatprep.mubr.f32.mxu0 0.0
      %6853 = vmatmul.mubr.f32.gmra.mrb[0].mxu0 %v1053
      %v6854 = vpop.f32.mrb[0].mxu0
      %v6855 = vadd.f32 0.0, %v6854
      %v6856 = vpop.f32.mrb[0].mxu0
      %6857 = vmatprep.mubr.f32.mxu0 0.0
      %6858 = vmatmul.mubr.f32.gmra.mrb[0].mxu0 %v1056
      %v6859 = vpop.f32.mrb[0].mxu0
      %v6860 = vadd.f32 0.0, %v6859
      %v6861 = vpop.f32.mrb[0].mxu0
      %6862 = vmatprep.mubr.f32.mxu0 0.0
      %6863 = vmatmul.mubr.f32.gmra.mrb[0].mxu0 %v1059
      %v6864 = vpop.f32.mrb[0].mxu0
      %v6865 = vadd.f32 0.0, %v6864
      %v6866 = vpop.f32.mrb[0].mxu0
      %6867 = vmatprep.mubr.f32.mxu0 0.0
      %6868 = vmatmul.mubr.f32.gmra.mrb[0].mxu0 %v1062
      %v6869 = vpop.f32.mrb[0].mxu0
      %v6870 = vadd.f32 0.0, %v6869
      %v6871 = vpop.f32.mrb[0].mxu0
      %6872 = vmatprep.mubr.f32.mxu0 0.0
      %6873 = vmatmul.mubr.f32.gmra.mrb[0].mxu0 %v1065
      %v6874 = vpop.f32.mrb[0].mxu0
      %v6875 = vadd.f32 0.0, %v6874
      %v6876 = vpop.f32.mrb[0].mxu0
      %6877 = vmatprep.mubr.f32.mxu0 0.0
      %6878 = vmatmul.mubr.f32.gmra.mrb[0].mxu0 %v1068
      %v6879 = vpop.f32.mrb[0].mxu0
      %v6880 = vadd.f32 0.0, %v6879
      %v6881 = vpop.f32.mrb[0].mxu0
      %6882 = vdwg.mxu0
      %v6883 = vld [vmem:[%s10] sm:$0xff]
      %v6884 = vld [vmem:[%s10 + $0x8] sm:$0xff]
      %s6885 = scalar_lea.vmem %s10, 16
      %v6886 = vld [vmem:[%s6885] sm:$0xff]
      %v6887 = vld [vmem:[%s6885 + $0x8] sm:$0xff]
      %v6889 = vsel %vm2824, %v6565, 0
      %v6892 = vsel %vm2824, %v6570, 0
      %v6895 = vsel %vm2824, %v6575, 0
      %v6898 = vsel %vm2824, %v6580, 0
      %v6901 = vsel %vm2824, %v6585, 0
      %v6904 = vsel %vm2824, %v6590, 0
      %v6907 = vsel %vm2824, %v6595, 0
      %v6910 = vsel %vm2824, %v6600, 0
      %6912 = vmatprep.subr.mxu0 0.0
      %6913 = vmatpush1.msra.mxu0 %v6886
      %6914 = vmatprep.subr.mxu0 0.0
      %6915 = vmatpush1.msra.mxu0 %v6887
      %6916 = vmatprep.subr.mxu0 0.0
      %6917 = vmatpush1.msra.mxu0 0.0
      %6918 = vmatprep.subr.mxu0 0.0
      %6919 = vmatpush1.msra.mxu0 0.0
      %6920 = vmatprep.subr.mxu0 0.0
      %6921 = vmatpush1.msra.mxu0 0.0
      %6922 = vmatprep.subr.mxu0 0.0
      %6923 = vmatpush1.msra.mxu0 0.0
      %6924 = vmatprep.subr.mxu0 0.0
      %6925 = vmatpush1.msra.mxu0 0.0
      %6926 = vmatprep.subr.mxu0 0.0
      %6927 = vmatpush1.msra.mxu0 0.0
      %6928 = vmatprep.subr.mxu0 0.0
      %6929 = vmatpush1.msra.mxu0 0.0
      %6930 = vmatprep.subr.mxu0 0.0
      %6931 = vmatpush1.msra.mxu0 0.0
      %6932 = vmatprep.subr.mxu0 0.0
      %6933 = vmatpush1.msra.mxu0 0.0
      %6934 = vmatprep.subr.mxu0 0.0
      %6935 = vmatpush1.msra.mxu0 0.0
      %6936 = vmatprep.subr.mxu0 0.0
      %6937 = vmatpush1.msra.mxu0 0.0
      %6938 = vmatprep.subr.mxu0 0.0
      %6939 = vmatpush1.msra.mxu0 0.0
      %6940 = vmatprep.subr.mxu0 0.0
      %6941 = vmatpush1.msra.mxu0 0.0
      %6942 = vmatprep.subr.mxu0 0.0
      %6943 = vmatpush1.msra.mxu0 0.0
      %6944 = vmatprep.subr.mxu0 0.0
      %6945 = vmatpush1.msra.mxu0 0.0
      %6946 = vmatprep.subr.mxu0 0.0
      %6947 = vmatpush1.msra.mxu0 0.0
      %6948 = vmatprep.subr.mxu0 0.0
      %6949 = vmatpush1.msra.mxu0 0.0
      %6950 = vmatprep.subr.mxu0 0.0
      %6951 = vmatpush1.msra.mxu0 0.0
      %6952 = vmatprep.subr.mxu0 0.0
      %6953 = vmatpush1.msra.mxu0 0.0
      %6954 = vmatprep.subr.mxu0 0.0
      %6955 = vmatpush1.msra.mxu0 0.0
      %6956 = vmatprep.subr.mxu0 0.0
      %6957 = vmatpush1.msra.mxu0 0.0
      %6958 = vmatprep.subr.mxu0 0.0
      %6959 = vmatpush1.msra.mxu0 0.0
      %6960 = vmatprep.subr.mxu0 0.0
      %6961 = vmatpush1.msra.mxu0 0.0
      %6962 = vmatprep.subr.mxu0 0.0
      %6963 = vmatpush1.msra.mxu0 0.0
      %6964 = vmatprep.subr.mxu0 0.0
      %6965 = vmatpush1.msra.mxu0 0.0
      %6966 = vmatprep.subr.mxu0 0.0
      %6967 = vmatpush1.msra.mxu0 0.0
      %6968 = vmatprep.subr.mxu0 0.0
      %6969 = vmatpush1.msra.mxu0 0.0
      %6970 = vmatprep.subr.mxu0 0.0
      %6971 = vmatpush1.msra.mxu0 0.0
      %6972 = vmatprep.subr.mxu0 0.0
      %6973 = vmatpush1.msra.mxu0 0.0
      %6974 = vmatprep.subr.mxu0 0.0
      %6975 = vmatpush1.msra.mxu0 0.0
      %6976 = vmatprep.mubr.f32.mxu0 0.0
      %6977 = vmatmul.mubr.f32.gmra.mrb[0].mxu0 %v6889
      %v6978 = vpop.f32.mrb[0].mxu0
      %v6979 = vadd.f32 0.0, %v6978
      %v6980 = vpop.f32.mrb[0].mxu0
      %6981 = vmatprep.mubr.f32.mxu0 0.0
      %6982 = vmatmul.mubr.f32.gmra.mrb[0].mxu0 %v6892
      %v6983 = vpop.f32.mrb[0].mxu0
      %v6984 = vadd.f32 0.0, %v6983
      %v6985 = vpop.f32.mrb[0].mxu0
      %6986 = vmatprep.mubr.f32.mxu0 0.0
      %6987 = vmatmul.mubr.f32.gmra.mrb[0].mxu0 %v6895
      %v6988 = vpop.f32.mrb[0].mxu0
      %v6989 = vadd.f32 0.0, %v6988
      %v6990 = vpop.f32.mrb[0].mxu0
      %6991 = vmatprep.mubr.f32.mxu0 0.0
      %6992 = vmatmul.mubr.f32.gmra.mrb[0].mxu0 %v6898
      %v6993 = vpop.f32.mrb[0].mxu0
      %v6994 = vadd.f32 0.0, %v6993
      %v6995 = vpop.f32.mrb[0].mxu0
      %6996 = vmatprep.mubr.f32.mxu0 0.0
      %6997 = vmatmul.mubr.f32.gmra.mrb[0].mxu0 %v6901
      %v6998 = vpop.f32.mrb[0].mxu0
      %v6999 = vadd.f32 0.0, %v6998
      %v7000 = vpop.f32.mrb[0].mxu0
      %7001 = vmatprep.mubr.f32.mxu0 0.0
      %7002 = vmatmul.mubr.f32.gmra.mrb[0].mxu0 %v6904
      %v7003 = vpop.f32.mrb[0].mxu0
      %v7004 = vadd.f32 0.0, %v7003
      %v7005 = vpop.f32.mrb[0].mxu0
      %7006 = vmatprep.mubr.f32.mxu0 0.0
      %7007 = vmatmul.mubr.f32.gmra.mrb[0].mxu0 %v6907
      %v7008 = vpop.f32.mrb[0].mxu0
      %v7009 = vadd.f32 0.0, %v7008
      %v7010 = vpop.f32.mrb[0].mxu0
      %7011 = vmatprep.mubr.f32.mxu0 0.0
      %7012 = vmatmul.mubr.f32.gmra.mrb[0].mxu0 %v6910
      %v7013 = vpop.f32.mrb[0].mxu0
      %v7014 = vadd.f32 0.0, %v7013
      %v7015 = vpop.f32.mrb[0].mxu0
      %7016 = vdwg.mxu0
      %v7018 = vsel %vm2824, %v6525, 0
      %v7021 = vsel %vm2824, %v6530, 0
      %v7024 = vsel %vm2824, %v6535, 0
      %v7027 = vsel %vm2824, %v6540, 0
      %v7030 = vsel %vm2824, %v6545, 0
      %v7033 = vsel %vm2824, %v6550, 0
      %v7036 = vsel %vm2824, %v6555, 0
      %v7039 = vsel %vm2824, %v6560, 0
      %7041 = vmatprep.subr.mxu0 0.0
      %7042 = vmatpush1.msra.mxu0 %v6883
      %7043 = vmatprep.subr.mxu0 0.0
      %7044 = vmatpush1.msra.mxu0 %v6884
      %7045 = vmatprep.subr.mxu0 0.0
      %7046 = vmatpush1.msra.mxu0 0.0
      %7047 = vmatprep.subr.mxu0 0.0
      %7048 = vmatpush1.msra.mxu0 0.0
      %7049 = vmatprep.subr.mxu0 0.0
      %7050 = vmatpush1.msra.mxu0 0.0
      %7051 = vmatprep.subr.mxu0 0.0
      %7052 = vmatpush1.msra.mxu0 0.0
      %7053 = vmatprep.subr.mxu0 0.0
      %7054 = vmatpush1.msra.mxu0 0.0
      %7055 = vmatprep.subr.mxu0 0.0
      %7056 = vmatpush1.msra.mxu0 0.0
      %7057 = vmatprep.subr.mxu0 0.0
      %7058 = vmatpush1.msra.mxu0 0.0
      %7059 = vmatprep.subr.mxu0 0.0
      %7060 = vmatpush1.msra.mxu0 0.0
      %7061 = vmatprep.subr.mxu0 0.0
      %7062 = vmatpush1.msra.mxu0 0.0
      %7063 = vmatprep.subr.mxu0 0.0
      %7064 = vmatpush1.msra.mxu0 0.0
      %7065 = vmatprep.subr.mxu0 0.0
      %7066 = vmatpush1.msra.mxu0 0.0
      %7067 = vmatprep.subr.mxu0 0.0
      %7068 = vmatpush1.msra.mxu0 0.0
      %7069 = vmatprep.subr.mxu0 0.0
      %7070 = vmatpush1.msra.mxu0 0.0
      %7071 = vmatprep.subr.mxu0 0.0
      %7072 = vmatpush1.msra.mxu0 0.0
      %7073 = vmatprep.subr.mxu0 0.0
      %7074 = vmatpush1.msra.mxu0 0.0
      %7075 = vmatprep.subr.mxu0 0.0
      %7076 = vmatpush1.msra.mxu0 0.0
      %7077 = vmatprep.subr.mxu0 0.0
      %7078 = vmatpush1.msra.mxu0 0.0
      %7079 = vmatprep.subr.mxu0 0.0
      %7080 = vmatpush1.msra.mxu0 0.0
      %7081 = vmatprep.subr.mxu0 0.0
      %7082 = vmatpush1.msra.mxu0 0.0
      %7083 = vmatprep.subr.mxu0 0.0
      %7084 = vmatpush1.msra.mxu0 0.0
      %7085 = vmatprep.subr.mxu0 0.0
      %7086 = vmatpush1.msra.mxu0 0.0
      %7087 = vmatprep.subr.mxu0 0.0
      %7088 = vmatpush1.msra.mxu0 0.0
      %7089 = vmatprep.subr.mxu0 0.0
      %7090 = vmatpush1.msra.mxu0 0.0
      %7091 = vmatprep.subr.mxu0 0.0
      %7092 = vmatpush1.msra.mxu0 0.0
      %7093 = vmatprep.subr.mxu0 0.0
      %7094 = vmatpush1.msra.mxu0 0.0
      %7095 = vmatprep.subr.mxu0 0.0
      %7096 = vmatpush1.msra.mxu0 0.0
      %7097 = vmatprep.subr.mxu0 0.0
      %7098 = vmatpush1.msra.mxu0 0.0
      %7099 = vmatprep.subr.mxu0 0.0
      %7100 = vmatpush1.msra.mxu0 0.0
      %7101 = vmatprep.subr.mxu0 0.0
      %7102 = vmatpush1.msra.mxu0 0.0
      %7103 = vmatprep.subr.mxu0 0.0
      %7104 = vmatpush1.msra.mxu0 0.0
      %7105 = vmatprep.mubr.f32.mxu0 0.0
      %7106 = vmatmul.mubr.f32.gmra.mrb[0].mxu0 %v7018
      %v7107 = vpop.f32.mrb[0].mxu0
      %v7108 = vadd.f32 %v6979, %v7107
      %v7109 = vpop.f32.mrb[0].mxu0
      %7110 = vmatprep.mubr.f32.mxu0 0.0
      %7111 = vmatmul.mubr.f32.gmra.mrb[0].mxu0 %v7021
      %v7112 = vpop.f32.mrb[0].mxu0
      %v7113 = vadd.f32 %v6984, %v7112
      %v7114 = vpop.f32.mrb[0].mxu0
      %7115 = vmatprep.mubr.f32.mxu0 0.0
      %7116 = vmatmul.mubr.f32.gmra.mrb[0].mxu0 %v7024
      %v7117 = vpop.f32.mrb[0].mxu0
      %v7118 = vadd.f32 %v6989, %v7117
      %v7119 = vpop.f32.mrb[0].mxu0
      %7120 = vmatprep.mubr.f32.mxu0 0.0
      %7121 = vmatmul.mubr.f32.gmra.mrb[0].mxu0 %v7027
      %v7122 = vpop.f32.mrb[0].mxu0
      %v7123 = vadd.f32 %v6994, %v7122
      %v7124 = vpop.f32.mrb[0].mxu0
      %7125 = vmatprep.mubr.f32.mxu0 0.0
      %7126 = vmatmul.mubr.f32.gmra.mrb[0].mxu0 %v7030
      %v7127 = vpop.f32.mrb[0].mxu0
      %v7128 = vadd.f32 %v6999, %v7127
      %v7129 = vpop.f32.mrb[0].mxu0
      %7130 = vmatprep.mubr.f32.mxu0 0.0
      %7131 = vmatmul.mubr.f32.gmra.mrb[0].mxu0 %v7033
      %v7132 = vpop.f32.mrb[0].mxu0
      %v7133 = vadd.f32 %v7004, %v7132
      %v7134 = vpop.f32.mrb[0].mxu0
      %7135 = vmatprep.mubr.f32.mxu0 0.0
      %7136 = vmatmul.mubr.f32.gmra.mrb[0].mxu0 %v7036
      %v7137 = vpop.f32.mrb[0].mxu0
      %v7138 = vadd.f32 %v7009, %v7137
      %v7139 = vpop.f32.mrb[0].mxu0
      %7140 = vmatprep.mubr.f32.mxu0 0.0
      %7141 = vmatmul.mubr.f32.gmra.mrb[0].mxu0 %v7039
      %v7142 = vpop.f32.mrb[0].mxu0
      %v7143 = vadd.f32 %v7014, %v7142
      %v7144 = vpop.f32.mrb[0].mxu0
      %7145 = vdwg.mxu0
      %s7146 = scalar_lea.vmem %s10, 32
      %v7147 = vld [vmem:[%s7146] sm:$0xff]
      %v7148 = vld [vmem:[%s7146 + $0x8] sm:$0xff]
      %v7150 = vsel %vm2824, %v6605, 0
      %v7153 = vsel %vm2824, %v6610, 0
      %v7156 = vsel %vm2824, %v6615, 0
      %v7159 = vsel %vm2824, %v6620, 0
      %v7162 = vsel %vm2824, %v6625, 0
      %v7165 = vsel %vm2824, %v6630, 0
      %v7168 = vsel %vm2824, %v6635, 0
      %v7171 = vsel %vm2824, %v6640, 0
      %7173 = vmatprep.subr.mxu0 0.0
      %7174 = vmatpush1.msra.mxu0 %v7147
      %7175 = vmatprep.subr.mxu0 0.0
      %7176 = vmatpush1.msra.mxu0 %v7148
      %7177 = vmatprep.subr.mxu0 0.0
      %7178 = vmatpush1.msra.mxu0 0.0
      %7179 = vmatprep.subr.mxu0 0.0
      %7180 = vmatpush1.msra.mxu0 0.0
      %7181 = vmatprep.subr.mxu0 0.0
      %7182 = vmatpush1.msra.mxu0 0.0
      %7183 = vmatprep.subr.mxu0 0.0
      %7184 = vmatpush1.msra.mxu0 0.0
      %7185 = vmatprep.subr.mxu0 0.0
      %7186 = vmatpush1.msra.mxu0 0.0
      %7187 = vmatprep.subr.mxu0 0.0
      %7188 = vmatpush1.msra.mxu0 0.0
      %7189 = vmatprep.subr.mxu0 0.0
      %7190 = vmatpush1.msra.mxu0 0.0
      %7191 = vmatprep.subr.mxu0 0.0
      %7192 = vmatpush1.msra.mxu0 0.0
      %7193 = vmatprep.subr.mxu0 0.0
      %7194 = vmatpush1.msra.mxu0 0.0
      %7195 = vmatprep.subr.mxu0 0.0
      %7196 = vmatpush1.msra.mxu0 0.0
      %7197 = vmatprep.subr.mxu0 0.0
      %7198 = vmatpush1.msra.mxu0 0.0
      %7199 = vmatprep.subr.mxu0 0.0
      %7200 = vmatpush1.msra.mxu0 0.0
      %7201 = vmatprep.subr.mxu0 0.0
      %7202 = vmatpush1.msra.mxu0 0.0
      %7203 = vmatprep.subr.mxu0 0.0
      %7204 = vmatpush1.msra.mxu0 0.0
      %7205 = vmatprep.subr.mxu0 0.0
      %7206 = vmatpush1.msra.mxu0 0.0
      %7207 = vmatprep.subr.mxu0 0.0
      %7208 = vmatpush1.msra.mxu0 0.0
      %7209 = vmatprep.subr.mxu0 0.0
      %7210 = vmatpush1.msra.mxu0 0.0
      %7211 = vmatprep.subr.mxu0 0.0
      %7212 = vmatpush1.msra.mxu0 0.0
      %7213 = vmatprep.subr.mxu0 0.0
      %7214 = vmatpush1.msra.mxu0 0.0
      %7215 = vmatprep.subr.mxu0 0.0
      %7216 = vmatpush1.msra.mxu0 0.0
      %7217 = vmatprep.subr.mxu0 0.0
      %7218 = vmatpush1.msra.mxu0 0.0
      %7219 = vmatprep.subr.mxu0 0.0
      %7220 = vmatpush1.msra.mxu0 0.0
      %7221 = vmatprep.subr.mxu0 0.0
      %7222 = vmatpush1.msra.mxu0 0.0
      %7223 = vmatprep.subr.mxu0 0.0
      %7224 = vmatpush1.msra.mxu0 0.0
      %7225 = vmatprep.subr.mxu0 0.0
      %7226 = vmatpush1.msra.mxu0 0.0
      %7227 = vmatprep.subr.mxu0 0.0
      %7228 = vmatpush1.msra.mxu0 0.0
      %7229 = vmatprep.subr.mxu0 0.0
      %7230 = vmatpush1.msra.mxu0 0.0
      %7231 = vmatprep.subr.mxu0 0.0
      %7232 = vmatpush1.msra.mxu0 0.0
      %7233 = vmatprep.subr.mxu0 0.0
      %7234 = vmatpush1.msra.mxu0 0.0
      %7235 = vmatprep.subr.mxu0 0.0
      %7236 = vmatpush1.msra.mxu0 0.0
      %7237 = vmatprep.mubr.f32.mxu0 0.0
      %7238 = vmatmul.mubr.f32.gmra.mrb[0].mxu0 %v7150
      %v7239 = vpop.f32.mrb[0].mxu0
      %v7240 = vadd.f32 0.0, %v7239
      %v7241 = vpop.f32.mrb[0].mxu0
      %7242 = vmatprep.mubr.f32.mxu0 0.0
      %7243 = vmatmul.mubr.f32.gmra.mrb[0].mxu0 %v7153
      %v7244 = vpop.f32.mrb[0].mxu0
      %v7245 = vadd.f32 0.0, %v7244
      %v7246 = vpop.f32.mrb[0].mxu0
      %7247 = vmatprep.mubr.f32.mxu0 0.0
      %7248 = vmatmul.mubr.f32.gmra.mrb[0].mxu0 %v7156
      %v7249 = vpop.f32.mrb[0].mxu0
      %v7250 = vadd.f32 0.0, %v7249
      %v7251 = vpop.f32.mrb[0].mxu0
      %7252 = vmatprep.mubr.f32.mxu0 0.0
      %7253 = vmatmul.mubr.f32.gmra.mrb[0].mxu0 %v7159
      %v7254 = vpop.f32.mrb[0].mxu0
      %v7255 = vadd.f32 0.0, %v7254
      %v7256 = vpop.f32.mrb[0].mxu0
      %7257 = vmatprep.mubr.f32.mxu0 0.0
      %7258 = vmatmul.mubr.f32.gmra.mrb[0].mxu0 %v7162
      %v7259 = vpop.f32.mrb[0].mxu0
      %v7260 = vadd.f32 0.0, %v7259
      %v7261 = vpop.f32.mrb[0].mxu0
      %7262 = vmatprep.mubr.f32.mxu0 0.0
      %7263 = vmatmul.mubr.f32.gmra.mrb[0].mxu0 %v7165
      %v7264 = vpop.f32.mrb[0].mxu0
      %v7265 = vadd.f32 0.0, %v7264
      %v7266 = vpop.f32.mrb[0].mxu0
      %7267 = vmatprep.mubr.f32.mxu0 0.0
      %7268 = vmatmul.mubr.f32.gmra.mrb[0].mxu0 %v7168
      %v7269 = vpop.f32.mrb[0].mxu0
      %v7270 = vadd.f32 0.0, %v7269
      %v7271 = vpop.f32.mrb[0].mxu0
      %7272 = vmatprep.mubr.f32.mxu0 0.0
      %7273 = vmatmul.mubr.f32.gmra.mrb[0].mxu0 %v7171
      %v7274 = vpop.f32.mrb[0].mxu0
      %v7275 = vadd.f32 0.0, %v7274
      %v7276 = vpop.f32.mrb[0].mxu0
      %7277 = vdwg.mxu0
      %v7278 = vadd.f32 %v7108, %v7240
      %v7279 = vadd.f32 %v7113, %v7245
      %v7280 = vadd.f32 %v7118, %v7250
      %v7281 = vadd.f32 %v7123, %v7255
      %v7282 = vadd.f32 %v7128, %v7260
      %v7283 = vadd.f32 %v7133, %v7265
      %v7284 = vadd.f32 %v7138, %v7270
      %v7285 = vadd.f32 %v7143, %v7275
      %s7286 = scalar_lea.vmem %s10, 48
      %v7287 = vld [vmem:[%s7286] sm:$0xff]
      %v7288 = vld [vmem:[%s7286 + $0x8] sm:$0xff]
      %v7290 = vsel %vm2824, %v6645, 0
      %v7293 = vsel %vm2824, %v6650, 0
      %v7296 = vsel %vm2824, %v6655, 0
      %v7299 = vsel %vm2824, %v6660, 0
      %v7302 = vsel %vm2824, %v6665, 0
      %v7305 = vsel %vm2824, %v6670, 0
      %v7308 = vsel %vm2824, %v6675, 0
      %v7311 = vsel %vm2824, %v6680, 0
      %7313 = vmatprep.subr.mxu0 0.0
      %7314 = vmatpush1.msra.mxu0 %v7287
      %7315 = vmatprep.subr.mxu0 0.0
      %7316 = vmatpush1.msra.mxu0 %v7288
      %7317 = vmatprep.subr.mxu0 0.0
      %7318 = vmatpush1.msra.mxu0 0.0
      %7319 = vmatprep.subr.mxu0 0.0
      %7320 = vmatpush1.msra.mxu0 0.0
      %7321 = vmatprep.subr.mxu0 0.0
      %7322 = vmatpush1.msra.mxu0 0.0
      %7323 = vmatprep.subr.mxu0 0.0
      %7324 = vmatpush1.msra.mxu0 0.0
      %7325 = vmatprep.subr.mxu0 0.0
      %7326 = vmatpush1.msra.mxu0 0.0
      %7327 = vmatprep.subr.mxu0 0.0
      %7328 = vmatpush1.msra.mxu0 0.0
      %7329 = vmatprep.subr.mxu0 0.0
      %7330 = vmatpush1.msra.mxu0 0.0
      %7331 = vmatprep.subr.mxu0 0.0
      %7332 = vmatpush1.msra.mxu0 0.0
      %7333 = vmatprep.subr.mxu0 0.0
      %7334 = vmatpush1.msra.mxu0 0.0
      %7335 = vmatprep.subr.mxu0 0.0
      %7336 = vmatpush1.msra.mxu0 0.0
      %7337 = vmatprep.subr.mxu0 0.0
      %7338 = vmatpush1.msra.mxu0 0.0
      %7339 = vmatprep.subr.mxu0 0.0
      %7340 = vmatpush1.msra.mxu0 0.0
      %7341 = vmatprep.subr.mxu0 0.0
      %7342 = vmatpush1.msra.mxu0 0.0
      %7343 = vmatprep.subr.mxu0 0.0
      %7344 = vmatpush1.msra.mxu0 0.0
      %7345 = vmatprep.subr.mxu0 0.0
      %7346 = vmatpush1.msra.mxu0 0.0
      %7347 = vmatprep.subr.mxu0 0.0
      %7348 = vmatpush1.msra.mxu0 0.0
      %7349 = vmatprep.subr.mxu0 0.0
      %7350 = vmatpush1.msra.mxu0 0.0
      %7351 = vmatprep.subr.mxu0 0.0
      %7352 = vmatpush1.msra.mxu0 0.0
      %7353 = vmatprep.subr.mxu0 0.0
      %7354 = vmatpush1.msra.mxu0 0.0
      %7355 = vmatprep.subr.mxu0 0.0
      %7356 = vmatpush1.msra.mxu0 0.0
      %7357 = vmatprep.subr.mxu0 0.0
      %7358 = vmatpush1.msra.mxu0 0.0
      %7359 = vmatprep.subr.mxu0 0.0
      %7360 = vmatpush1.msra.mxu0 0.0
      %7361 = vmatprep.subr.mxu0 0.0
      %7362 = vmatpush1.msra.mxu0 0.0
      %7363 = vmatprep.subr.mxu0 0.0
      %7364 = vmatpush1.msra.mxu0 0.0
      %7365 = vmatprep.subr.mxu0 0.0
      %7366 = vmatpush1.msra.mxu0 0.0
      %7367 = vmatprep.subr.mxu0 0.0
      %7368 = vmatpush1.msra.mxu0 0.0
      %7369 = vmatprep.subr.mxu0 0.0
      %7370 = vmatpush1.msra.mxu0 0.0
      %7371 = vmatprep.subr.mxu0 0.0
      %7372 = vmatpush1.msra.mxu0 0.0
      %7373 = vmatprep.subr.mxu0 0.0
      %7374 = vmatpush1.msra.mxu0 0.0
      %7375 = vmatprep.subr.mxu0 0.0
      %7376 = vmatpush1.msra.mxu0 0.0
      %7377 = vmatprep.mubr.f32.mxu0 0.0
      %7378 = vmatmul.mubr.f32.gmra.mrb[0].mxu0 %v7290
      %v7379 = vpop.f32.mrb[0].mxu0
      %v7380 = vadd.f32 0.0, %v7379
      %v7381 = vpop.f32.mrb[0].mxu0
      %7382 = vmatprep.mubr.f32.mxu0 0.0
      %7383 = vmatmul.mubr.f32.gmra.mrb[0].mxu0 %v7293
      %v7384 = vpop.f32.mrb[0].mxu0
      %v7385 = vadd.f32 0.0, %v7384
      %v7386 = vpop.f32.mrb[0].mxu0
      %7387 = vmatprep.mubr.f32.mxu0 0.0
      %7388 = vmatmul.mubr.f32.gmra.mrb[0].mxu0 %v7296
      %v7389 = vpop.f32.mrb[0].mxu0
      %v7390 = vadd.f32 0.0, %v7389
      %v7391 = vpop.f32.mrb[0].mxu0
      %7392 = vmatprep.mubr.f32.mxu0 0.0
      %7393 = vmatmul.mubr.f32.gmra.mrb[0].mxu0 %v7299
      %v7394 = vpop.f32.mrb[0].mxu0
      %v7395 = vadd.f32 0.0, %v7394
      %v7396 = vpop.f32.mrb[0].mxu0
      %7397 = vmatprep.mubr.f32.mxu0 0.0
      %7398 = vmatmul.mubr.f32.gmra.mrb[0].mxu0 %v7302
      %v7399 = vpop.f32.mrb[0].mxu0
      %v7400 = vadd.f32 0.0, %v7399
      %v7401 = vpop.f32.mrb[0].mxu0
      %7402 = vmatprep.mubr.f32.mxu0 0.0
      %7403 = vmatmul.mubr.f32.gmra.mrb[0].mxu0 %v7305
      %v7404 = vpop.f32.mrb[0].mxu0
      %v7405 = vadd.f32 0.0, %v7404
      %v7406 = vpop.f32.mrb[0].mxu0
      %7407 = vmatprep.mubr.f32.mxu0 0.0
      %7408 = vmatmul.mubr.f32.gmra.mrb[0].mxu0 %v7308
      %v7409 = vpop.f32.mrb[0].mxu0
      %v7410 = vadd.f32 0.0, %v7409
      %v7411 = vpop.f32.mrb[0].mxu0
      %7412 = vmatprep.mubr.f32.mxu0 0.0
      %7413 = vmatmul.mubr.f32.gmra.mrb[0].mxu0 %v7311
      %v7414 = vpop.f32.mrb[0].mxu0
      %v7415 = vadd.f32 0.0, %v7414
      %v7416 = vpop.f32.mrb[0].mxu0
      %7417 = vdwg.mxu0
      %v7418 = vadd.f32 %v7278, %v7380
      %v7419 = vadd.f32 %v7279, %v7385
      %v7420 = vadd.f32 %v7280, %v7390
      %v7421 = vadd.f32 %v7281, %v7395
      %v7422 = vadd.f32 %v7282, %v7400
      %v7423 = vadd.f32 %v7283, %v7405
      %v7424 = vadd.f32 %v7284, %v7410
      %v7425 = vadd.f32 %v7285, %v7415
      %s7426 = scalar_lea.vmem %s10, 64
      %v7427 = vld [vmem:[%s7426] sm:$0xff]
      %v7428 = vld [vmem:[%s7426 + $0x8] sm:$0xff]
      %v7430 = vsel %vm2824, %v6685, 0
      %v7433 = vsel %vm2824, %v6690, 0
      %v7436 = vsel %vm2824, %v6695, 0
      %v7439 = vsel %vm2824, %v6700, 0
      %v7442 = vsel %vm2824, %v6705, 0
      %v7445 = vsel %vm2824, %v6710, 0
      %v7448 = vsel %vm2824, %v6715, 0
      %v7451 = vsel %vm2824, %v6720, 0
      %7453 = vmatprep.subr.mxu0 0.0
      %7454 = vmatpush1.msra.mxu0 %v7427
      %7455 = vmatprep.subr.mxu0 0.0
      %7456 = vmatpush1.msra.mxu0 %v7428
      %7457 = vmatprep.subr.mxu0 0.0
      %7458 = vmatpush1.msra.mxu0 0.0
      %7459 = vmatprep.subr.mxu0 0.0
      %7460 = vmatpush1.msra.mxu0 0.0
      %7461 = vmatprep.subr.mxu0 0.0
      %7462 = vmatpush1.msra.mxu0 0.0
      %7463 = vmatprep.subr.mxu0 0.0
      %7464 = vmatpush1.msra.mxu0 0.0
      %7465 = vmatprep.subr.mxu0 0.0
      %7466 = vmatpush1.msra.mxu0 0.0
      %7467 = vmatprep.subr.mxu0 0.0
      %7468 = vmatpush1.msra.mxu0 0.0
      %7469 = vmatprep.subr.mxu0 0.0
      %7470 = vmatpush1.msra.mxu0 0.0
      %7471 = vmatprep.subr.mxu0 0.0
      %7472 = vmatpush1.msra.mxu0 0.0
      %7473 = vmatprep.subr.mxu0 0.0
      %7474 = vmatpush1.msra.mxu0 0.0
      %7475 = vmatprep.subr.mxu0 0.0
      %7476 = vmatpush1.msra.mxu0 0.0
      %7477 = vmatprep.subr.mxu0 0.0
      %7478 = vmatpush1.msra.mxu0 0.0
      %7479 = vmatprep.subr.mxu0 0.0
      %7480 = vmatpush1.msra.mxu0 0.0
      %7481 = vmatprep.subr.mxu0 0.0
      %7482 = vmatpush1.msra.mxu0 0.0
      %7483 = vmatprep.subr.mxu0 0.0
      %7484 = vmatpush1.msra.mxu0 0.0
      %7485 = vmatprep.subr.mxu0 0.0
      %7486 = vmatpush1.msra.mxu0 0.0
      %7487 = vmatprep.subr.mxu0 0.0
      %7488 = vmatpush1.msra.mxu0 0.0
      %7489 = vmatprep.subr.mxu0 0.0
      %7490 = vmatpush1.msra.mxu0 0.0
      %7491 = vmatprep.subr.mxu0 0.0
      %7492 = vmatpush1.msra.mxu0 0.0
      %7493 = vmatprep.subr.mxu0 0.0
      %7494 = vmatpush1.msra.mxu0 0.0
      %7495 = vmatprep.subr.mxu0 0.0
      %7496 = vmatpush1.msra.mxu0 0.0
      %7497 = vmatprep.subr.mxu0 0.0
      %7498 = vmatpush1.msra.mxu0 0.0
      %7499 = vmatprep.subr.mxu0 0.0
      %7500 = vmatpush1.msra.mxu0 0.0
      %7501 = vmatprep.subr.mxu0 0.0
      %7502 = vmatpush1.msra.mxu0 0.0
      %7503 = vmatprep.subr.mxu0 0.0
      %7504 = vmatpush1.msra.mxu0 0.0
      %7505 = vmatprep.subr.mxu0 0.0
      %7506 = vmatpush1.msra.mxu0 0.0
      %7507 = vmatprep.subr.mxu0 0.0
      %7508 = vmatpush1.msra.mxu0 0.0
      %7509 = vmatprep.subr.mxu0 0.0
      %7510 = vmatpush1.msra.mxu0 0.0
      %7511 = vmatprep.subr.mxu0 0.0
      %7512 = vmatpush1.msra.mxu0 0.0
      %7513 = vmatprep.subr.mxu0 0.0
      %7514 = vmatpush1.msra.mxu0 0.0
      %7515 = vmatprep.subr.mxu0 0.0
      %7516 = vmatpush1.msra.mxu0 0.0
      %7517 = vmatprep.mubr.f32.mxu0 0.0
      %7518 = vmatmul.mubr.f32.gmra.mrb[0].mxu0 %v7430
      %v7519 = vpop.f32.mrb[0].mxu0
      %v7520 = vadd.f32 0.0, %v7519
      %v7521 = vpop.f32.mrb[0].mxu0
      %7522 = vmatprep.mubr.f32.mxu0 0.0
      %7523 = vmatmul.mubr.f32.gmra.mrb[0].mxu0 %v7433
      %v7524 = vpop.f32.mrb[0].mxu0
      %v7525 = vadd.f32 0.0, %v7524
      %v7526 = vpop.f32.mrb[0].mxu0
      %7527 = vmatprep.mubr.f32.mxu0 0.0
      %7528 = vmatmul.mubr.f32.gmra.mrb[0].mxu0 %v7436
      %v7529 = vpop.f32.mrb[0].mxu0
      %v7530 = vadd.f32 0.0, %v7529
      %v7531 = vpop.f32.mrb[0].mxu0
      %7532 = vmatprep.mubr.f32.mxu0 0.0
      %7533 = vmatmul.mubr.f32.gmra.mrb[0].mxu0 %v7439
      %v7534 = vpop.f32.mrb[0].mxu0
      %v7535 = vadd.f32 0.0, %v7534
      %v7536 = vpop.f32.mrb[0].mxu0
      %7537 = vmatprep.mubr.f32.mxu0 0.0
      %7538 = vmatmul.mubr.f32.gmra.mrb[0].mxu0 %v7442
      %v7539 = vpop.f32.mrb[0].mxu0
      %v7540 = vadd.f32 0.0, %v7539
      %v7541 = vpop.f32.mrb[0].mxu0
      %7542 = vmatprep.mubr.f32.mxu0 0.0
      %7543 = vmatmul.mubr.f32.gmra.mrb[0].mxu0 %v7445
      %v7544 = vpop.f32.mrb[0].mxu0
      %v7545 = vadd.f32 0.0, %v7544
      %v7546 = vpop.f32.mrb[0].mxu0
      %7547 = vmatprep.mubr.f32.mxu0 0.0
      %7548 = vmatmul.mubr.f32.gmra.mrb[0].mxu0 %v7448
      %v7549 = vpop.f32.mrb[0].mxu0
      %v7550 = vadd.f32 0.0, %v7549
      %v7551 = vpop.f32.mrb[0].mxu0
      %7552 = vmatprep.mubr.f32.mxu0 0.0
      %7553 = vmatmul.mubr.f32.gmra.mrb[0].mxu0 %v7451
      %v7554 = vpop.f32.mrb[0].mxu0
      %v7555 = vadd.f32 0.0, %v7554
      %v7556 = vpop.f32.mrb[0].mxu0
      %7557 = vdwg.mxu0
      %v7558 = vadd.f32 %v7418, %v7520
      %v7559 = vadd.f32 %v7419, %v7525
      %v7560 = vadd.f32 %v7420, %v7530
      %v7561 = vadd.f32 %v7421, %v7535
      %v7562 = vadd.f32 %v7422, %v7540
      %v7563 = vadd.f32 %v7423, %v7545
      %v7564 = vadd.f32 %v7424, %v7550
      %v7565 = vadd.f32 %v7425, %v7555
      %s7566 = scalar_lea.vmem %s10, 80
      %v7567 = vld [vmem:[%s7566] sm:$0xff]
      %v7568 = vld [vmem:[%s7566 + $0x8] sm:$0xff]
      %v7570 = vsel %vm2824, %v6725, 0
      %v7573 = vsel %vm2824, %v6730, 0
      %v7576 = vsel %vm2824, %v6735, 0
      %v7579 = vsel %vm2824, %v6740, 0
      %v7582 = vsel %vm2824, %v6745, 0
      %v7585 = vsel %vm2824, %v6750, 0
      %v7588 = vsel %vm2824, %v6755, 0
      %v7591 = vsel %vm2824, %v6760, 0
      %7593 = vmatprep.subr.mxu0 0.0
      %7594 = vmatpush1.msra.mxu0 %v7567
      %7595 = vmatprep.subr.mxu0 0.0
      %7596 = vmatpush1.msra.mxu0 %v7568
      %7597 = vmatprep.subr.mxu0 0.0
      %7598 = vmatpush1.msra.mxu0 0.0
      %7599 = vmatprep.subr.mxu0 0.0
      %7600 = vmatpush1.msra.mxu0 0.0
      %7601 = vmatprep.subr.mxu0 0.0
      %7602 = vmatpush1.msra.mxu0 0.0
      %7603 = vmatprep.subr.mxu0 0.0
      %7604 = vmatpush1.msra.mxu0 0.0
      %7605 = vmatprep.subr.mxu0 0.0
      %7606 = vmatpush1.msra.mxu0 0.0
      %7607 = vmatprep.subr.mxu0 0.0
      %7608 = vmatpush1.msra.mxu0 0.0
      %7609 = vmatprep.subr.mxu0 0.0
      %7610 = vmatpush1.msra.mxu0 0.0
      %7611 = vmatprep.subr.mxu0 0.0
      %7612 = vmatpush1.msra.mxu0 0.0
      %7613 = vmatprep.subr.mxu0 0.0
      %7614 = vmatpush1.msra.mxu0 0.0
      %7615 = vmatprep.subr.mxu0 0.0
      %7616 = vmatpush1.msra.mxu0 0.0
      %7617 = vmatprep.subr.mxu0 0.0
      %7618 = vmatpush1.msra.mxu0 0.0
      %7619 = vmatprep.subr.mxu0 0.0
      %7620 = vmatpush1.msra.mxu0 0.0
      %7621 = vmatprep.subr.mxu0 0.0
      %7622 = vmatpush1.msra.mxu0 0.0
      %7623 = vmatprep.subr.mxu0 0.0
      %7624 = vmatpush1.msra.mxu0 0.0
      %7625 = vmatprep.subr.mxu0 0.0
      %7626 = vmatpush1.msra.mxu0 0.0
      %7627 = vmatprep.subr.mxu0 0.0
      %7628 = vmatpush1.msra.mxu0 0.0
      %7629 = vmatprep.subr.mxu0 0.0
      %7630 = vmatpush1.msra.mxu0 0.0
      %7631 = vmatprep.subr.mxu0 0.0
      %7632 = vmatpush1.msra.mxu0 0.0
      %7633 = vmatprep.subr.mxu0 0.0
      %7634 = vmatpush1.msra.mxu0 0.0
      %7635 = vmatprep.subr.mxu0 0.0
      %7636 = vmatpush1.msra.mxu0 0.0
      %7637 = vmatprep.subr.mxu0 0.0
      %7638 = vmatpush1.msra.mxu0 0.0
      %7639 = vmatprep.subr.mxu0 0.0
      %7640 = vmatpush1.msra.mxu0 0.0
      %7641 = vmatprep.subr.mxu0 0.0
      %7642 = vmatpush1.msra.mxu0 0.0
      %7643 = vmatprep.subr.mxu0 0.0
      %7644 = vmatpush1.msra.mxu0 0.0
      %7645 = vmatprep.subr.mxu0 0.0
      %7646 = vmatpush1.msra.mxu0 0.0
      %7647 = vmatprep.subr.mxu0 0.0
      %7648 = vmatpush1.msra.mxu0 0.0
      %7649 = vmatprep.subr.mxu0 0.0
      %7650 = vmatpush1.msra.mxu0 0.0
      %7651 = vmatprep.subr.mxu0 0.0
      %7652 = vmatpush1.msra.mxu0 0.0
      %7653 = vmatprep.subr.mxu0 0.0
      %7654 = vmatpush1.msra.mxu0 0.0
      %7655 = vmatprep.subr.mxu0 0.0
      %7656 = vmatpush1.msra.mxu0 0.0
      %7657 = vmatprep.mubr.f32.mxu0 0.0
      %7658 = vmatmul.mubr.f32.gmra.mrb[0].mxu0 %v7570
      %v7659 = vpop.f32.mrb[0].mxu0
      %v7660 = vadd.f32 0.0, %v7659
      %v7661 = vpop.f32.mrb[0].mxu0
      %7662 = vmatprep.mubr.f32.mxu0 0.0
      %7663 = vmatmul.mubr.f32.gmra.mrb[0].mxu0 %v7573
      %v7664 = vpop.f32.mrb[0].mxu0
      %v7665 = vadd.f32 0.0, %v7664
      %v7666 = vpop.f32.mrb[0].mxu0
      %7667 = vmatprep.mubr.f32.mxu0 0.0
      %7668 = vmatmul.mubr.f32.gmra.mrb[0].mxu0 %v7576
      %v7669 = vpop.f32.mrb[0].mxu0
      %v7670 = vadd.f32 0.0, %v7669
      %v7671 = vpop.f32.mrb[0].mxu0
      %7672 = vmatprep.mubr.f32.mxu0 0.0
      %7673 = vmatmul.mubr.f32.gmra.mrb[0].mxu0 %v7579
      %v7674 = vpop.f32.mrb[0].mxu0
      %v7675 = vadd.f32 0.0, %v7674
      %v7676 = vpop.f32.mrb[0].mxu0
      %7677 = vmatprep.mubr.f32.mxu0 0.0
      %7678 = vmatmul.mubr.f32.gmra.mrb[0].mxu0 %v7582
      %v7679 = vpop.f32.mrb[0].mxu0
      %v7680 = vadd.f32 0.0, %v7679
      %v7681 = vpop.f32.mrb[0].mxu0
      %7682 = vmatprep.mubr.f32.mxu0 0.0
      %7683 = vmatmul.mubr.f32.gmra.mrb[0].mxu0 %v7585
      %v7684 = vpop.f32.mrb[0].mxu0
      %v7685 = vadd.f32 0.0, %v7684
      %v7686 = vpop.f32.mrb[0].mxu0
      %7687 = vmatprep.mubr.f32.mxu0 0.0
      %7688 = vmatmul.mubr.f32.gmra.mrb[0].mxu0 %v7588
      %v7689 = vpop.f32.mrb[0].mxu0
      %v7690 = vadd.f32 0.0, %v7689
      %v7691 = vpop.f32.mrb[0].mxu0
      %7692 = vmatprep.mubr.f32.mxu0 0.0
      %7693 = vmatmul.mubr.f32.gmra.mrb[0].mxu0 %v7591
      %v7694 = vpop.f32.mrb[0].mxu0
      %v7695 = vadd.f32 0.0, %v7694
      %v7696 = vpop.f32.mrb[0].mxu0
      %7697 = vdwg.mxu0
      %v7698 = vadd.f32 %v7558, %v7660
      %v7699 = vadd.f32 %v7559, %v7665
      %v7700 = vadd.f32 %v7560, %v7670
      %v7701 = vadd.f32 %v7561, %v7675
      %v7702 = vadd.f32 %v7562, %v7680
      %v7703 = vadd.f32 %v7563, %v7685
      %v7704 = vadd.f32 %v7564, %v7690
      %v7705 = vadd.f32 %v7565, %v7695
      %s7706 = scalar_lea.vmem %s10, 96
      %v7707 = vld [vmem:[%s7706] sm:$0xff]
      %v7708 = vld [vmem:[%s7706 + $0x8] sm:$0xff]
      %v7710 = vsel %vm2824, %v6765, 0
      %v7713 = vsel %vm2824, %v6770, 0
      %v7716 = vsel %vm2824, %v6775, 0
      %v7719 = vsel %vm2824, %v6780, 0
      %v7722 = vsel %vm2824, %v6785, 0
      %v7725 = vsel %vm2824, %v6790, 0
      %v7728 = vsel %vm2824, %v6795, 0
      %v7731 = vsel %vm2824, %v6800, 0
      %7733 = vmatprep.subr.mxu0 0.0
      %7734 = vmatpush1.msra.mxu0 %v7707
      %7735 = vmatprep.subr.mxu0 0.0
      %7736 = vmatpush1.msra.mxu0 %v7708
      %7737 = vmatprep.subr.mxu0 0.0
      %7738 = vmatpush1.msra.mxu0 0.0
      %7739 = vmatprep.subr.mxu0 0.0
      %7740 = vmatpush1.msra.mxu0 0.0
      %7741 = vmatprep.subr.mxu0 0.0
      %7742 = vmatpush1.msra.mxu0 0.0
      %7743 = vmatprep.subr.mxu0 0.0
      %7744 = vmatpush1.msra.mxu0 0.0
      %7745 = vmatprep.subr.mxu0 0.0
      %7746 = vmatpush1.msra.mxu0 0.0
      %7747 = vmatprep.subr.mxu0 0.0
      %7748 = vmatpush1.msra.mxu0 0.0
      %7749 = vmatprep.subr.mxu0 0.0
      %7750 = vmatpush1.msra.mxu0 0.0
      %7751 = vmatprep.subr.mxu0 0.0
      %7752 = vmatpush1.msra.mxu0 0.0
      %7753 = vmatprep.subr.mxu0 0.0
      %7754 = vmatpush1.msra.mxu0 0.0
      %7755 = vmatprep.subr.mxu0 0.0
      %7756 = vmatpush1.msra.mxu0 0.0
      %7757 = vmatprep.subr.mxu0 0.0
      %7758 = vmatpush1.msra.mxu0 0.0
      %7759 = vmatprep.subr.mxu0 0.0
      %7760 = vmatpush1.msra.mxu0 0.0
      %7761 = vmatprep.subr.mxu0 0.0
      %7762 = vmatpush1.msra.mxu0 0.0
      %7763 = vmatprep.subr.mxu0 0.0
      %7764 = vmatpush1.msra.mxu0 0.0
      %7765 = vmatprep.subr.mxu0 0.0
      %7766 = vmatpush1.msra.mxu0 0.0
      %7767 = vmatprep.subr.mxu0 0.0
      %7768 = vmatpush1.msra.mxu0 0.0
      %7769 = vmatprep.subr.mxu0 0.0
      %7770 = vmatpush1.msra.mxu0 0.0
      %7771 = vmatprep.subr.mxu0 0.0
      %7772 = vmatpush1.msra.mxu0 0.0
      %7773 = vmatprep.subr.mxu0 0.0
      %7774 = vmatpush1.msra.mxu0 0.0
      %7775 = vmatprep.subr.mxu0 0.0
      %7776 = vmatpush1.msra.mxu0 0.0
      %7777 = vmatprep.subr.mxu0 0.0
      %7778 = vmatpush1.msra.mxu0 0.0
      %7779 = vmatprep.subr.mxu0 0.0
      %7780 = vmatpush1.msra.mxu0 0.0
      %7781 = vmatprep.subr.mxu0 0.0
      %7782 = vmatpush1.msra.mxu0 0.0
      %7783 = vmatprep.subr.mxu0 0.0
      %7784 = vmatpush1.msra.mxu0 0.0
      %7785 = vmatprep.subr.mxu0 0.0
      %7786 = vmatpush1.msra.mxu0 0.0
      %7787 = vmatprep.subr.mxu0 0.0
      %7788 = vmatpush1.msra.mxu0 0.0
      %7789 = vmatprep.subr.mxu0 0.0
      %7790 = vmatpush1.msra.mxu0 0.0
      %7791 = vmatprep.subr.mxu0 0.0
      %7792 = vmatpush1.msra.mxu0 0.0
      %7793 = vmatprep.subr.mxu0 0.0
      %7794 = vmatpush1.msra.mxu0 0.0
      %7795 = vmatprep.subr.mxu0 0.0
      %7796 = vmatpush1.msra.mxu0 0.0
      %7797 = vmatprep.mubr.f32.mxu0 0.0
      %7798 = vmatmul.mubr.f32.gmra.mrb[0].mxu0 %v7710
      %v7799 = vpop.f32.mrb[0].mxu0
      %v7800 = vadd.f32 0.0, %v7799
      %v7801 = vpop.f32.mrb[0].mxu0
      %7802 = vmatprep.mubr.f32.mxu0 0.0
      %7803 = vmatmul.mubr.f32.gmra.mrb[0].mxu0 %v7713
      %v7804 = vpop.f32.mrb[0].mxu0
      %v7805 = vadd.f32 0.0, %v7804
      %v7806 = vpop.f32.mrb[0].mxu0
      %7807 = vmatprep.mubr.f32.mxu0 0.0
      %7808 = vmatmul.mubr.f32.gmra.mrb[0].mxu0 %v7716
      %v7809 = vpop.f32.mrb[0].mxu0
      %v7810 = vadd.f32 0.0, %v7809
      %v7811 = vpop.f32.mrb[0].mxu0
      %7812 = vmatprep.mubr.f32.mxu0 0.0
      %7813 = vmatmul.mubr.f32.gmra.mrb[0].mxu0 %v7719
      %v7814 = vpop.f32.mrb[0].mxu0
      %v7815 = vadd.f32 0.0, %v7814
      %v7816 = vpop.f32.mrb[0].mxu0
      %7817 = vmatprep.mubr.f32.mxu0 0.0
      %7818 = vmatmul.mubr.f32.gmra.mrb[0].mxu0 %v7722
      %v7819 = vpop.f32.mrb[0].mxu0
      %v7820 = vadd.f32 0.0, %v7819
      %v7821 = vpop.f32.mrb[0].mxu0
      %7822 = vmatprep.mubr.f32.mxu0 0.0
      %7823 = vmatmul.mubr.f32.gmra.mrb[0].mxu0 %v7725
      %v7824 = vpop.f32.mrb[0].mxu0
      %v7825 = vadd.f32 0.0, %v7824
      %v7826 = vpop.f32.mrb[0].mxu0
      %7827 = vmatprep.mubr.f32.mxu0 0.0
      %7828 = vmatmul.mubr.f32.gmra.mrb[0].mxu0 %v7728
      %v7829 = vpop.f32.mrb[0].mxu0
      %v7830 = vadd.f32 0.0, %v7829
      %v7831 = vpop.f32.mrb[0].mxu0
      %7832 = vmatprep.mubr.f32.mxu0 0.0
      %7833 = vmatmul.mubr.f32.gmra.mrb[0].mxu0 %v7731
      %v7834 = vpop.f32.mrb[0].mxu0
      %v7835 = vadd.f32 0.0, %v7834
      %v7836 = vpop.f32.mrb[0].mxu0
      %7837 = vdwg.mxu0
      %v7838 = vadd.f32 %v7698, %v7800
      %v7839 = vadd.f32 %v7699, %v7805
      %v7840 = vadd.f32 %v7700, %v7810
      %v7841 = vadd.f32 %v7701, %v7815
      %v7842 = vadd.f32 %v7702, %v7820
      %v7843 = vadd.f32 %v7703, %v7825
      %v7844 = vadd.f32 %v7704, %v7830
      %v7845 = vadd.f32 %v7705, %v7835
      %s7846 = scalar_lea.vmem %s10, 112
      %v7847 = vld [vmem:[%s7846] sm:$0xff]
      %v7848 = vld [vmem:[%s7846 + $0x8] sm:$0xff]
      %v7850 = vsel %vm2824, %v6805, 0
      %v7853 = vsel %vm2824, %v6810, 0
      %v7856 = vsel %vm2824, %v6815, 0
      %v7859 = vsel %vm2824, %v6820, 0
      %v7862 = vsel %vm2824, %v6825, 0
      %v7865 = vsel %vm2824, %v6830, 0
      %v7868 = vsel %vm2824, %v6835, 0
      %v7871 = vsel %vm2824, %v6840, 0
      %7873 = vmatprep.subr.mxu0 0.0
      %7874 = vmatpush1.msra.mxu0 %v7847
      %7875 = vmatprep.subr.mxu0 0.0
      %7876 = vmatpush1.msra.mxu0 %v7848
      %7877 = vmatprep.subr.mxu0 0.0
      %7878 = vmatpush1.msra.mxu0 0.0
      %7879 = vmatprep.subr.mxu0 0.0
      %7880 = vmatpush1.msra.mxu0 0.0
      %7881 = vmatprep.subr.mxu0 0.0
      %7882 = vmatpush1.msra.mxu0 0.0
      %7883 = vmatprep.subr.mxu0 0.0
      %7884 = vmatpush1.msra.mxu0 0.0
      %7885 = vmatprep.subr.mxu0 0.0
      %7886 = vmatpush1.msra.mxu0 0.0
      %7887 = vmatprep.subr.mxu0 0.0
      %7888 = vmatpush1.msra.mxu0 0.0
      %7889 = vmatprep.subr.mxu0 0.0
      %7890 = vmatpush1.msra.mxu0 0.0
      %7891 = vmatprep.subr.mxu0 0.0
      %7892 = vmatpush1.msra.mxu0 0.0
      %7893 = vmatprep.subr.mxu0 0.0
      %7894 = vmatpush1.msra.mxu0 0.0
      %7895 = vmatprep.subr.mxu0 0.0
      %7896 = vmatpush1.msra.mxu0 0.0
      %7897 = vmatprep.subr.mxu0 0.0
      %7898 = vmatpush1.msra.mxu0 0.0
      %7899 = vmatprep.subr.mxu0 0.0
      %7900 = vmatpush1.msra.mxu0 0.0
      %7901 = vmatprep.subr.mxu0 0.0
      %7902 = vmatpush1.msra.mxu0 0.0
      %7903 = vmatprep.subr.mxu0 0.0
      %7904 = vmatpush1.msra.mxu0 0.0
      %7905 = vmatprep.subr.mxu0 0.0
      %7906 = vmatpush1.msra.mxu0 0.0
      %7907 = vmatprep.subr.mxu0 0.0
      %7908 = vmatpush1.msra.mxu0 0.0
      %7909 = vmatprep.subr.mxu0 0.0
      %7910 = vmatpush1.msra.mxu0 0.0
      %7911 = vmatprep.subr.mxu0 0.0
      %7912 = vmatpush1.msra.mxu0 0.0
      %7913 = vmatprep.subr.mxu0 0.0
      %7914 = vmatpush1.msra.mxu0 0.0
      %7915 = vmatprep.subr.mxu0 0.0
      %7916 = vmatpush1.msra.mxu0 0.0
      %7917 = vmatprep.subr.mxu0 0.0
      %7918 = vmatpush1.msra.mxu0 0.0
      %7919 = vmatprep.subr.mxu0 0.0
      %7920 = vmatpush1.msra.mxu0 0.0
      %7921 = vmatprep.subr.mxu0 0.0
      %7922 = vmatpush1.msra.mxu0 0.0
      %7923 = vmatprep.subr.mxu0 0.0
      %7924 = vmatpush1.msra.mxu0 0.0
      %7925 = vmatprep.subr.mxu0 0.0
      %7926 = vmatpush1.msra.mxu0 0.0
      %7927 = vmatprep.subr.mxu0 0.0
      %7928 = vmatpush1.msra.mxu0 0.0
      %7929 = vmatprep.subr.mxu0 0.0
      %7930 = vmatpush1.msra.mxu0 0.0
      %7931 = vmatprep.subr.mxu0 0.0
      %7932 = vmatpush1.msra.mxu0 0.0
      %7933 = vmatprep.subr.mxu0 0.0
      %7934 = vmatpush1.msra.mxu0 0.0
      %7935 = vmatprep.subr.mxu0 0.0
      %7936 = vmatpush1.msra.mxu0 0.0
      %7937 = vmatprep.mubr.f32.mxu0 0.0
      %7938 = vmatmul.mubr.f32.gmra.mrb[0].mxu0 %v7850
      %v7939 = vpop.f32.mrb[0].mxu0
      %v7940 = vadd.f32 0.0, %v7939
      %v7941 = vpop.f32.mrb[0].mxu0
      %7942 = vmatprep.mubr.f32.mxu0 0.0
      %7943 = vmatmul.mubr.f32.gmra.mrb[0].mxu0 %v7853
      %v7944 = vpop.f32.mrb[0].mxu0
      %v7945 = vadd.f32 0.0, %v7944
      %v7946 = vpop.f32.mrb[0].mxu0
      %7947 = vmatprep.mubr.f32.mxu0 0.0
      %7948 = vmatmul.mubr.f32.gmra.mrb[0].mxu0 %v7856
      %v7949 = vpop.f32.mrb[0].mxu0
      %v7950 = vadd.f32 0.0, %v7949
      %v7951 = vpop.f32.mrb[0].mxu0
      %7952 = vmatprep.mubr.f32.mxu0 0.0
      %7953 = vmatmul.mubr.f32.gmra.mrb[0].mxu0 %v7859
      %v7954 = vpop.f32.mrb[0].mxu0
      %v7955 = vadd.f32 0.0, %v7954
      %v7956 = vpop.f32.mrb[0].mxu0
      %7957 = vmatprep.mubr.f32.mxu0 0.0
      %7958 = vmatmul.mubr.f32.gmra.mrb[0].mxu0 %v7862
      %v7959 = vpop.f32.mrb[0].mxu0
      %v7960 = vadd.f32 0.0, %v7959
      %v7961 = vpop.f32.mrb[0].mxu0
      %7962 = vmatprep.mubr.f32.mxu0 0.0
      %7963 = vmatmul.mubr.f32.gmra.mrb[0].mxu0 %v7865
      %v7964 = vpop.f32.mrb[0].mxu0
      %v7965 = vadd.f32 0.0, %v7964
      %v7966 = vpop.f32.mrb[0].mxu0
      %7967 = vmatprep.mubr.f32.mxu0 0.0
      %7968 = vmatmul.mubr.f32.gmra.mrb[0].mxu0 %v7868
      %v7969 = vpop.f32.mrb[0].mxu0
      %v7970 = vadd.f32 0.0, %v7969
      %v7971 = vpop.f32.mrb[0].mxu0
      %7972 = vmatprep.mubr.f32.mxu0 0.0
      %7973 = vmatmul.mubr.f32.gmra.mrb[0].mxu0 %v7871
      %v7974 = vpop.f32.mrb[0].mxu0
      %v7975 = vadd.f32 0.0, %v7974
      %v7976 = vpop.f32.mrb[0].mxu0
      %7977 = vdwg.mxu0
      %v7978 = vadd.f32 %v7838, %v7940
      %v7979 = vadd.f32 %v7839, %v7945
      %v7980 = vadd.f32 %v7840, %v7950
      %v7981 = vadd.f32 %v7841, %v7955
      %v7982 = vadd.f32 %v7842, %v7960
      %v7983 = vadd.f32 %v7843, %v7965
      %v7984 = vadd.f32 %v7844, %v7970
      %v7985 = vadd.f32 %v7845, %v7975
      %s7986 = scalar_lea.vmem %s10, 128
      %v7987 = vld [vmem:[%s7986] sm:$0xff]
      %v7988 = vld [vmem:[%s7986 + $0x8] sm:$0xff]
      %v7990 = vsel %vm2824, %v6845, 0
      %v7993 = vsel %vm2824, %v6850, 0
      %v7996 = vsel %vm2824, %v6855, 0
      %v7999 = vsel %vm2824, %v6860, 0
      %v8002 = vsel %vm2824, %v6865, 0
      %v8005 = vsel %vm2824, %v6870, 0
      %v8008 = vsel %vm2824, %v6875, 0
      %v8011 = vsel %vm2824, %v6880, 0
      %8013 = vmatprep.subr.mxu0 0.0
      %8014 = vmatpush1.msra.mxu0 %v7987
      %8015 = vmatprep.subr.mxu0 0.0
      %8016 = vmatpush1.msra.mxu0 %v7988
      %8017 = vmatprep.subr.mxu0 0.0
      %8018 = vmatpush1.msra.mxu0 0.0
      %8019 = vmatprep.subr.mxu0 0.0
      %8020 = vmatpush1.msra.mxu0 0.0
      %8021 = vmatprep.subr.mxu0 0.0
      %8022 = vmatpush1.msra.mxu0 0.0
      %8023 = vmatprep.subr.mxu0 0.0
      %8024 = vmatpush1.msra.mxu0 0.0
      %8025 = vmatprep.subr.mxu0 0.0
      %8026 = vmatpush1.msra.mxu0 0.0
      %8027 = vmatprep.subr.mxu0 0.0
      %8028 = vmatpush1.msra.mxu0 0.0
      %8029 = vmatprep.subr.mxu0 0.0
      %8030 = vmatpush1.msra.mxu0 0.0
      %8031 = vmatprep.subr.mxu0 0.0
      %8032 = vmatpush1.msra.mxu0 0.0
      %8033 = vmatprep.subr.mxu0 0.0
      %8034 = vmatpush1.msra.mxu0 0.0
      %8035 = vmatprep.subr.mxu0 0.0
      %8036 = vmatpush1.msra.mxu0 0.0
      %8037 = vmatprep.subr.mxu0 0.0
      %8038 = vmatpush1.msra.mxu0 0.0
      %8039 = vmatprep.subr.mxu0 0.0
      %8040 = vmatpush1.msra.mxu0 0.0
      %8041 = vmatprep.subr.mxu0 0.0
      %8042 = vmatpush1.msra.mxu0 0.0
      %8043 = vmatprep.subr.mxu0 0.0
      %8044 = vmatpush1.msra.mxu0 0.0
      %8045 = vmatprep.subr.mxu0 0.0
      %8046 = vmatpush1.msra.mxu0 0.0
      %8047 = vmatprep.subr.mxu0 0.0
      %8048 = vmatpush1.msra.mxu0 0.0
      %8049 = vmatprep.subr.mxu0 0.0
      %8050 = vmatpush1.msra.mxu0 0.0
      %8051 = vmatprep.subr.mxu0 0.0
      %8052 = vmatpush1.msra.mxu0 0.0
      %8053 = vmatprep.subr.mxu0 0.0
      %8054 = vmatpush1.msra.mxu0 0.0
      %8055 = vmatprep.subr.mxu0 0.0
      %8056 = vmatpush1.msra.mxu0 0.0
      %8057 = vmatprep.subr.mxu0 0.0
      %8058 = vmatpush1.msra.mxu0 0.0
      %8059 = vmatprep.subr.mxu0 0.0
      %8060 = vmatpush1.msra.mxu0 0.0
      %8061 = vmatprep.subr.mxu0 0.0
      %8062 = vmatpush1.msra.mxu0 0.0
      %8063 = vmatprep.subr.mxu0 0.0
      %8064 = vmatpush1.msra.mxu0 0.0
      %8065 = vmatprep.subr.mxu0 0.0
      %8066 = vmatpush1.msra.mxu0 0.0
      %8067 = vmatprep.subr.mxu0 0.0
      %8068 = vmatpush1.msra.mxu0 0.0
      %8069 = vmatprep.subr.mxu0 0.0
      %8070 = vmatpush1.msra.mxu0 0.0
      %8071 = vmatprep.subr.mxu0 0.0
      %8072 = vmatpush1.msra.mxu0 0.0
      %8073 = vmatprep.subr.mxu0 0.0
      %8074 = vmatpush1.msra.mxu0 0.0
      %8075 = vmatprep.subr.mxu0 0.0
      %8076 = vmatpush1.msra.mxu0 0.0
      %8077 = vmatprep.mubr.f32.mxu0 0.0
      %8078 = vmatmul.mubr.f32.gmra.mrb[0].mxu0 %v7990
      %v8079 = vpop.f32.mrb[0].mxu0
      %v8080 = vadd.f32 0.0, %v8079
      %v8081 = vpop.f32.mrb[0].mxu0
      %8082 = vmatprep.mubr.f32.mxu0 0.0
      %8083 = vmatmul.mubr.f32.gmra.mrb[0].mxu0 %v7993
      %v8084 = vpop.f32.mrb[0].mxu0
      %v8085 = vadd.f32 0.0, %v8084
      %v8086 = vpop.f32.mrb[0].mxu0
      %8087 = vmatprep.mubr.f32.mxu0 0.0
      %8088 = vmatmul.mubr.f32.gmra.mrb[0].mxu0 %v7996
      %v8089 = vpop.f32.mrb[0].mxu0
      %v8090 = vadd.f32 0.0, %v8089
      %v8091 = vpop.f32.mrb[0].mxu0
      %8092 = vmatprep.mubr.f32.mxu0 0.0
      %8093 = vmatmul.mubr.f32.gmra.mrb[0].mxu0 %v7999
      %v8094 = vpop.f32.mrb[0].mxu0
      %v8095 = vadd.f32 0.0, %v8094
      %v8096 = vpop.f32.mrb[0].mxu0
      %8097 = vmatprep.mubr.f32.mxu0 0.0
      %8098 = vmatmul.mubr.f32.gmra.mrb[0].mxu0 %v8002
      %v8099 = vpop.f32.mrb[0].mxu0
      %v8100 = vadd.f32 0.0, %v8099
      %v8101 = vpop.f32.mrb[0].mxu0
      %8102 = vmatprep.mubr.f32.mxu0 0.0
      %8103 = vmatmul.mubr.f32.gmra.mrb[0].mxu0 %v8005
      %v8104 = vpop.f32.mrb[0].mxu0
      %v8105 = vadd.f32 0.0, %v8104
      %v8106 = vpop.f32.mrb[0].mxu0
      %8107 = vmatprep.mubr.f32.mxu0 0.0
      %8108 = vmatmul.mubr.f32.gmra.mrb[0].mxu0 %v8008
      %v8109 = vpop.f32.mrb[0].mxu0
      %v8110 = vadd.f32 0.0, %v8109
      %v8111 = vpop.f32.mrb[0].mxu0
      %8112 = vmatprep.mubr.f32.mxu0 0.0
      %8113 = vmatmul.mubr.f32.gmra.mrb[0].mxu0 %v8011
      %v8114 = vpop.f32.mrb[0].mxu0
      %v8115 = vadd.f32 0.0, %v8114
      %v8116 = vpop.f32.mrb[0].mxu0
      %8117 = vdwg.mxu0
      %v8118 = vadd.f32 %v7978, %v8080
      %v8119 = vadd.f32 %v7979, %v8085
      %v8120 = vadd.f32 %v7980, %v8090
      %v8121 = vadd.f32 %v7981, %v8095
      %v8122 = vadd.f32 %v7982, %v8100
      %v8123 = vadd.f32 %v7983, %v8105
      %v8124 = vadd.f32 %v7984, %v8110
      %v8125 = vadd.f32 %v7985, %v8115
      %v8126 = vld [vmem:[%s11] sm:$0x1]
      %v8128 = vlaneseq
      %v8129 = vshrl.u32 %v8128, 7
      %v8130 = vsub.s32 0, %v8129
      %v8131 = vrot.slane %v8126, %v8130
      %v8133 = vadd.f32 %v8118, %v8131
      %v8134 = vadd.f32 %v8119, %v8131
      %v8135 = vadd.f32 %v8120, %v8131
      %v8136 = vadd.f32 %v8121, %v8131
      %v8137 = vadd.f32 %v8122, %v8131
      %v8138 = vadd.f32 %v8123, %v8131
      %v8139 = vadd.f32 %v8124, %v8131
      %v8140 = vadd.f32 %v8125, %v8131
      %v8141 = vmax.f32 %v8133, 0.0
      %v8142 = vmax.f32 %v8134, 0.0
      %v8143 = vmax.f32 %v8135, 0.0
      %v8144 = vmax.f32 %v8136, 0.0
      %v8145 = vmax.f32 %v8137, 0.0
      %v8146 = vmax.f32 %v8138, 0.0
      %v8147 = vmax.f32 %v8139, 0.0
      %v8148 = vmax.f32 %v8140, 0.0
      %v8149 = vadd.f32 %v5050, %v8141
      %v8150 = vadd.f32 %v5051, %v8142
      %v8151 = vadd.f32 %v5052, %v8143
      %v8152 = vadd.f32 %v5053, %v8144
      %v8153 = vadd.f32 %v5054, %v8145
      %v8154 = vadd.f32 %v5055, %v8146
      %v8155 = vadd.f32 %v5056, %v8147
      %v8156 = vadd.f32 %v5057, %v8148
      %v8157 = vld [vmem:[%s14] sm:$0xff]
      %v8158 = vld [vmem:[%s14 + $0x8] sm:$0xff]
      %v8159 = vld [vmem:[%s15] sm:$0x1]
      %v8161 = vlaneseq
      %v8162 = vshrl.u32 %v8161, 7
      %v8163 = vsub.s32 0, %v8162
      %v8164 = vrot.slane %v8159, %v8163
      %v8167 = vsel %vm2824, %v8149, 0
      %v8170 = vsel %vm2824, %v8150, 0
      %v8173 = vsel %vm2824, %v8151, 0
      %v8176 = vsel %vm2824, %v8152, 0
      %v8179 = vsel %vm2824, %v8153, 0
      %v8182 = vsel %vm2824, %v8154, 0
      %v8185 = vsel %vm2824, %v8155, 0
      %v8188 = vsel %vm2824, %v8156, 0
      %8190 = vmatprep.subr.mxu0 0.0
      %8191 = vmatpush1.msra.mxu0 %v8157
      %8192 = vmatprep.subr.mxu0 0.0
      %8193 = vmatpush1.msra.mxu0 %v8158
      %8194 = vmatprep.subr.mxu0 0.0
      %8195 = vmatpush1.msra.mxu0 0.0
      %8196 = vmatprep.subr.mxu0 0.0
      %8197 = vmatpush1.msra.mxu0 0.0
      %8198 = vmatprep.subr.mxu0 0.0
      %8199 = vmatpush1.msra.mxu0 0.0
      %8200 = vmatprep.subr.mxu0 0.0
      %8201 = vmatpush1.msra.mxu0 0.0
      %8202 = vmatprep.subr.mxu0 0.0
      %8203 = vmatpush1.msra.mxu0 0.0
      %8204 = vmatprep.subr.mxu0 0.0
      %8205 = vmatpush1.msra.mxu0 0.0
      %8206 = vmatprep.subr.mxu0 0.0
      %8207 = vmatpush1.msra.mxu0 0.0
      %8208 = vmatprep.subr.mxu0 0.0
      %8209 = vmatpush1.msra.mxu0 0.0
      %8210 = vmatprep.subr.mxu0 0.0
      %8211 = vmatpush1.msra.mxu0 0.0
      %8212 = vmatprep.subr.mxu0 0.0
      %8213 = vmatpush1.msra.mxu0 0.0
      %8214 = vmatprep.subr.mxu0 0.0
      %8215 = vmatpush1.msra.mxu0 0.0
      %8216 = vmatprep.subr.mxu0 0.0
      %8217 = vmatpush1.msra.mxu0 0.0
      %8218 = vmatprep.subr.mxu0 0.0
      %8219 = vmatpush1.msra.mxu0 0.0
      %8220 = vmatprep.subr.mxu0 0.0
      %8221 = vmatpush1.msra.mxu0 0.0
      %8222 = vmatprep.subr.mxu0 0.0
      %8223 = vmatpush1.msra.mxu0 0.0
      %8224 = vmatprep.subr.mxu0 0.0
      %8225 = vmatpush1.msra.mxu0 0.0
      %8226 = vmatprep.subr.mxu0 0.0
      %8227 = vmatpush1.msra.mxu0 0.0
      %8228 = vmatprep.subr.mxu0 0.0
      %8229 = vmatpush1.msra.mxu0 0.0
      %8230 = vmatprep.subr.mxu0 0.0
      %8231 = vmatpush1.msra.mxu0 0.0
      %8232 = vmatprep.subr.mxu0 0.0
      %8233 = vmatpush1.msra.mxu0 0.0
      %8234 = vmatprep.subr.mxu0 0.0
      %8235 = vmatpush1.msra.mxu0 0.0
      %8236 = vmatprep.subr.mxu0 0.0
      %8237 = vmatpush1.msra.mxu0 0.0
      %8238 = vmatprep.subr.mxu0 0.0
      %8239 = vmatpush1.msra.mxu0 0.0
      %8240 = vmatprep.subr.mxu0 0.0
      %8241 = vmatpush1.msra.mxu0 0.0
      %8242 = vmatprep.subr.mxu0 0.0
      %8243 = vmatpush1.msra.mxu0 0.0
      %8244 = vmatprep.subr.mxu0 0.0
      %8245 = vmatpush1.msra.mxu0 0.0
      %8246 = vmatprep.subr.mxu0 0.0
      %8247 = vmatpush1.msra.mxu0 0.0
      %8248 = vmatprep.subr.mxu0 0.0
      %8249 = vmatpush1.msra.mxu0 0.0
      %8250 = vmatprep.subr.mxu0 0.0
      %8251 = vmatpush1.msra.mxu0 0.0
      %8252 = vmatprep.subr.mxu0 0.0
      %8253 = vmatpush1.msra.mxu0 0.0
      %8254 = vmatprep.mubr.f32.mxu0 0.0
      %8255 = vmatmul.mubr.f32.gmra.mrb[0].mxu0 %v8167
      %v8256 = vpop.f32.mrb[0].mxu0
      %v8257 = vadd.f32 %v8164, %v8256
      %v8258 = vpop.f32.mrb[0].mxu0
      %8259 = vmatprep.mubr.f32.mxu0 0.0
      %8260 = vmatmul.mubr.f32.gmra.mrb[0].mxu0 %v8170
      %v8261 = vpop.f32.mrb[0].mxu0
      %v8262 = vadd.f32 %v8164, %v8261
      %v8263 = vpop.f32.mrb[0].mxu0
      %8264 = vmatprep.mubr.f32.mxu0 0.0
      %8265 = vmatmul.mubr.f32.gmra.mrb[0].mxu0 %v8173
      %v8266 = vpop.f32.mrb[0].mxu0
      %v8267 = vadd.f32 %v8164, %v8266
      %v8268 = vpop.f32.mrb[0].mxu0
      %8269 = vmatprep.mubr.f32.mxu0 0.0
      %8270 = vmatmul.mubr.f32.gmra.mrb[0].mxu0 %v8176
      %v8271 = vpop.f32.mrb[0].mxu0
      %v8272 = vadd.f32 %v8164, %v8271
      %v8273 = vpop.f32.mrb[0].mxu0
      %8274 = vmatprep.mubr.f32.mxu0 0.0
      %8275 = vmatmul.mubr.f32.gmra.mrb[0].mxu0 %v8179
      %v8276 = vpop.f32.mrb[0].mxu0
      %v8277 = vadd.f32 %v8164, %v8276
      %v8278 = vpop.f32.mrb[0].mxu0
      %8279 = vmatprep.mubr.f32.mxu0 0.0
      %8280 = vmatmul.mubr.f32.gmra.mrb[0].mxu0 %v8182
      %v8281 = vpop.f32.mrb[0].mxu0
      %v8282 = vadd.f32 %v8164, %v8281
      %v8283 = vpop.f32.mrb[0].mxu0
      %8284 = vmatprep.mubr.f32.mxu0 0.0
      %8285 = vmatmul.mubr.f32.gmra.mrb[0].mxu0 %v8185
      %v8286 = vpop.f32.mrb[0].mxu0
      %v8287 = vadd.f32 %v8164, %v8286
      %v8288 = vpop.f32.mrb[0].mxu0
      %8289 = vmatprep.mubr.f32.mxu0 0.0
      %8290 = vmatmul.mubr.f32.gmra.mrb[0].mxu0 %v8188
      %v8291 = vpop.f32.mrb[0].mxu0
      %v8292 = vadd.f32 %v8164, %v8291
      %v8293 = vpop.f32.mrb[0].mxu0
      %8294 = vdwg.mxu0
      %v8295 = vld [vmem:[%s16] sm:$0xff]
      %v8296 = vld [vmem:[%s16 + $0x8] sm:$0xff]
      %v8297 = vld [vmem:[%s16 + $0x10] sm:$0xff]
      %v8298 = vld [vmem:[%s16 + $0x18] sm:$0xff]
      %v8299 = vld [vmem:[%s16 + $0x20] sm:$0xff]
      %v8300 = vld [vmem:[%s16 + $0x28] sm:$0xff]
      %v8301 = vld [vmem:[%s16 + $0x30] sm:$0xff]
      %v8302 = vld [vmem:[%s16 + $0x38] sm:$0xff]
      %v8303 = vld [vmem:[%s16 + $0x40] sm:$0xff]
      %v8304 = vld [vmem:[%s16 + $0x48] sm:$0xff]
      %v8305 = vld [vmem:[%s16 + $0x50] sm:$0xff]
      %v8306 = vld [vmem:[%s16 + $0x58] sm:$0xff]
      %v8307 = vld [vmem:[%s16 + $0x60] sm:$0xff]
      %v8308 = vld [vmem:[%s16 + $0x68] sm:$0xff]
      %v8309 = vld [vmem:[%s16 + $0x70] sm:$0xff]
      %v8310 = vld [vmem:[%s16 + $0x78] sm:$0xff]
      %v8311 = vld [vmem:[%s16 + $0x80] sm:$0xff]
      %v8312 = vld [vmem:[%s16 + $0x88] sm:$0xff]
      %v8313 = vld [vmem:[%s16 + $0x90] sm:$0xff]
      %v8314 = vld [vmem:[%s16 + $0x98] sm:$0xff]
      %v8315 = vld [vmem:[%s16 + $0xa0] sm:$0xff]
      %v8316 = vld [vmem:[%s16 + $0xa8] sm:$0xff]
      %v8317 = vld [vmem:[%s16 + $0xb0] sm:$0xff]
      %v8318 = vld [vmem:[%s16 + $0xb8] sm:$0xff]
      %v8319 = vld [vmem:[%s16 + $0xc0] sm:$0xff]
      %v8320 = vld [vmem:[%s16 + $0xc8] sm:$0xff]
      %v8321 = vld [vmem:[%s16 + $0xd0] sm:$0xff]
      %v8322 = vld [vmem:[%s16 + $0xd8] sm:$0xff]
      %v8323 = vld [vmem:[%s16 + $0xe0] sm:$0xff]
      %v8324 = vld [vmem:[%s16 + $0xe8] sm:$0xff]
      %v8325 = vld [vmem:[%s16 + $0xf0] sm:$0xff]
      %v8326 = vld [vmem:[%s16 + $0xf8] sm:$0xff]
      %v8327 = vld [vmem:[%s16 + $0x100] sm:$0xff]
      %v8328 = vld [vmem:[%s16 + $0x108] sm:$0xff]
      %v8329 = vld [vmem:[%s16 + $0x110] sm:$0xff]
      %v8330 = vld [vmem:[%s16 + $0x118] sm:$0xff]
      %v8331 = vld [vmem:[%s16 + $0x120] sm:$0xff]
      %v8332 = vld [vmem:[%s16 + $0x128] sm:$0xff]
      %v8333 = vld [vmem:[%s16 + $0x130] sm:$0xff]
      %v8334 = vld [vmem:[%s16 + $0x138] sm:$0xff]
      %v8335 = vld [vmem:[%s16 + $0x140] sm:$0xff]
      %v8336 = vld [vmem:[%s16 + $0x148] sm:$0xff]
      %v8337 = vld [vmem:[%s16 + $0x150] sm:$0xff]
      %v8338 = vld [vmem:[%s16 + $0x158] sm:$0xff]
      %v8339 = vld [vmem:[%s16 + $0x160] sm:$0xff]
      %v8340 = vld [vmem:[%s16 + $0x168] sm:$0xff]
      %v8341 = vld [vmem:[%s16 + $0x170] sm:$0xff]
      %v8342 = vld [vmem:[%s16 + $0x178] sm:$0xff]
      %v8343 = vld [vmem:[%s16 + $0x180] sm:$0xff]
      %v8344 = vld [vmem:[%s16 + $0x188] sm:$0xff]
      %v8345 = vld [vmem:[%s16 + $0x190] sm:$0xff]
      %v8346 = vld [vmem:[%s16 + $0x198] sm:$0xff]
      %v8347 = vld [vmem:[%s16 + $0x1a0] sm:$0xff]
      %v8348 = vld [vmem:[%s16 + $0x1a8] sm:$0xff]
      %v8349 = vld [vmem:[%s16 + $0x1b0] sm:$0xff]
      %v8350 = vld [vmem:[%s16 + $0x1b8] sm:$0xff]
      %v8351 = vld [vmem:[%s16 + $0x1c0] sm:$0xff]
      %v8352 = vld [vmem:[%s16 + $0x1c8] sm:$0xff]
      %v8353 = vld [vmem:[%s16 + $0x1d0] sm:$0xff]
      %v8354 = vld [vmem:[%s16 + $0x1d8] sm:$0xff]
      %v8355 = vld [vmem:[%s16 + $0x1e0] sm:$0xff]
      %v8356 = vld [vmem:[%s16 + $0x1e8] sm:$0xff]
      %v8357 = vld [vmem:[%s16 + $0x1f0] sm:$0xff]
      %v8358 = vld [vmem:[%s16 + $0x1f8] sm:$0xff]
      %v8359 = vld [vmem:[%s16 + $0x200] sm:$0xff]
      %v8360 = vld [vmem:[%s16 + $0x208] sm:$0xff]
      %v8361 = vld [vmem:[%s16 + $0x210] sm:$0xff]
      %v8362 = vld [vmem:[%s16 + $0x218] sm:$0xff]
      %v8363 = vld [vmem:[%s16 + $0x220] sm:$0xff]
      %v8364 = vld [vmem:[%s16 + $0x228] sm:$0xff]
      %v8365 = vld [vmem:[%s16 + $0x230] sm:$0xff]
      %v8366 = vld [vmem:[%s16 + $0x238] sm:$0xff]
      %v8367 = vld [vmem:[%s16 + $0x240] sm:$0xff]
      %v8368 = vld [vmem:[%s16 + $0x248] sm:$0xff]
      %v8369 = vld [vmem:[%s16 + $0x250] sm:$0xff]
      %v8370 = vld [vmem:[%s16 + $0x258] sm:$0xff]
      %v8371 = vld [vmem:[%s16 + $0x260] sm:$0xff]
      %v8372 = vld [vmem:[%s16 + $0x268] sm:$0xff]
      %v8373 = vld [vmem:[%s16 + $0x270] sm:$0xff]
      %v8374 = vld [vmem:[%s16 + $0x278] sm:$0xff]
      %v8375 = vld [vmem:[%s16 + $0x280] sm:$0xff]
      %v8376 = vld [vmem:[%s16 + $0x288] sm:$0xff]
      %v8377 = vld [vmem:[%s16 + $0x290] sm:$0xff]
      %v8378 = vld [vmem:[%s16 + $0x298] sm:$0xff]
      %v8379 = vld [vmem:[%s16 + $0x2a0] sm:$0xff]
      %v8380 = vld [vmem:[%s16 + $0x2a8] sm:$0xff]
      %v8381 = vld [vmem:[%s16 + $0x2b0] sm:$0xff]
      %v8382 = vld [vmem:[%s16 + $0x2b8] sm:$0xff]
      %v8383 = vld [vmem:[%s16 + $0x2c0] sm:$0xff]
      %v8384 = vld [vmem:[%s16 + $0x2c8] sm:$0xff]
      %v8385 = vld [vmem:[%s16 + $0x2d0] sm:$0xff]
      %v8386 = vld [vmem:[%s16 + $0x2d8] sm:$0xff]
      %v8387 = vld [vmem:[%s16 + $0x2e0] sm:$0xff]
      %v8388 = vld [vmem:[%s16 + $0x2e8] sm:$0xff]
      %v8389 = vld [vmem:[%s16 + $0x2f0] sm:$0xff]
      %v8390 = vld [vmem:[%s16 + $0x2f8] sm:$0xff]
      %v8391 = vld [vmem:[%s16 + $0x300] sm:$0xff]
      %v8392 = vld [vmem:[%s16 + $0x308] sm:$0xff]
      %v8393 = vld [vmem:[%s16 + $0x310] sm:$0xff]
      %v8394 = vld [vmem:[%s16 + $0x318] sm:$0xff]
      %v8395 = vld [vmem:[%s16 + $0x320] sm:$0xff]
      %v8396 = vld [vmem:[%s16 + $0x328] sm:$0xff]
      %v8397 = vld [vmem:[%s16 + $0x330] sm:$0xff]
      %v8398 = vld [vmem:[%s16 + $0x338] sm:$0xff]
      %v8399 = vld [vmem:[%s16 + $0x340] sm:$0xff]
      %v8400 = vld [vmem:[%s16 + $0x348] sm:$0xff]
      %v8401 = vld [vmem:[%s16 + $0x350] sm:$0xff]
      %v8402 = vld [vmem:[%s16 + $0x358] sm:$0xff]
      %v8403 = vld [vmem:[%s16 + $0x360] sm:$0xff]
      %v8404 = vld [vmem:[%s16 + $0x368] sm:$0xff]
      %v8405 = vld [vmem:[%s16 + $0x370] sm:$0xff]
      %v8406 = vld [vmem:[%s16 + $0x378] sm:$0xff]
      %v8407 = vld [vmem:[%s16 + $0x380] sm:$0xff]
      %v8408 = vld [vmem:[%s16 + $0x388] sm:$0xff]
      %v8409 = vld [vmem:[%s16 + $0x390] sm:$0xff]
      %v8410 = vld [vmem:[%s16 + $0x398] sm:$0xff]
      %v8411 = vld [vmem:[%s16 + $0x3a0] sm:$0xff]
      %v8412 = vld [vmem:[%s16 + $0x3a8] sm:$0xff]
      %v8413 = vld [vmem:[%s16 + $0x3b0] sm:$0xff]
      %v8414 = vld [vmem:[%s16 + $0x3b8] sm:$0xff]
      %v8415 = vld [vmem:[%s16 + $0x3c0] sm:$0xff]
      %v8416 = vld [vmem:[%s16 + $0x3c8] sm:$0xff]
      %v8417 = vld [vmem:[%s16 + $0x3d0] sm:$0xff]
      %v8418 = vld [vmem:[%s16 + $0x3d8] sm:$0xff]
      %v8419 = vld [vmem:[%s16 + $0x3e0] sm:$0xff]
      %v8420 = vld [vmem:[%s16 + $0x3e8] sm:$0xff]
      %v8421 = vld [vmem:[%s16 + $0x3f0] sm:$0xff]
      %v8422 = vld [vmem:[%s16 + $0x3f8] sm:$0xff]
      %v8423 = vld [vmem:[%s16 + $0x400] sm:$0xff]
      %v8424 = vld [vmem:[%s16 + $0x408] sm:$0xff]
      %v8425 = vld [vmem:[%s16 + $0x410] sm:$0xff]
      %v8426 = vld [vmem:[%s16 + $0x418] sm:$0xff]
      %v8427 = vld [vmem:[%s16 + $0x420] sm:$0xff]
      %v8428 = vld [vmem:[%s16 + $0x428] sm:$0xff]
      %v8429 = vld [vmem:[%s16 + $0x430] sm:$0xff]
      %v8430 = vld [vmem:[%s16 + $0x438] sm:$0xff]
      %v8431 = vld [vmem:[%s16 + $0x440] sm:$0xff]
      %v8432 = vld [vmem:[%s16 + $0x448] sm:$0xff]
      %v8433 = vld [vmem:[%s16 + $0x450] sm:$0xff]
      %v8434 = vld [vmem:[%s16 + $0x458] sm:$0xff]
      %v8435 = vld [vmem:[%s16 + $0x460] sm:$0xff]
      %v8436 = vld [vmem:[%s16 + $0x468] sm:$0xff]
      %v8437 = vld [vmem:[%s16 + $0x470] sm:$0xff]
      %v8438 = vld [vmem:[%s16 + $0x478] sm:$0xff]
      %v8439 = vld [vmem:[%s16 + $0x480] sm:$0xff]
      %v8440 = vld [vmem:[%s16 + $0x488] sm:$0xff]
      %v8441 = vld [vmem:[%s16 + $0x490] sm:$0xff]
      %v8442 = vld [vmem:[%s16 + $0x498] sm:$0xff]
      %v8443 = vld [vmem:[%s16 + $0x4a0] sm:$0xff]
      %v8444 = vld [vmem:[%s16 + $0x4a8] sm:$0xff]
      %v8445 = vld [vmem:[%s16 + $0x4b0] sm:$0xff]
      %v8446 = vld [vmem:[%s16 + $0x4b8] sm:$0xff]
      %v8447 = vld [vmem:[%s16 + $0x4c0] sm:$0xff]
      %v8448 = vld [vmem:[%s16 + $0x4c8] sm:$0xff]
      %v8449 = vld [vmem:[%s16 + $0x4d0] sm:$0xff]
      %v8450 = vld [vmem:[%s16 + $0x4d8] sm:$0xff]
      %v8451 = vld [vmem:[%s16 + $0x4e0] sm:$0xff]
      %v8452 = vld [vmem:[%s16 + $0x4e8] sm:$0xff]
      %v8453 = vld [vmem:[%s16 + $0x4f0] sm:$0xff]
      %v8454 = vld [vmem:[%s16 + $0x4f8] sm:$0xff]
      %v8455 = vld [vmem:[%s16 + $0x500] sm:$0xff]
      %v8456 = vld [vmem:[%s16 + $0x508] sm:$0xff]
      %v8457 = vld [vmem:[%s16 + $0x510] sm:$0xff]
      %v8458 = vld [vmem:[%s16 + $0x518] sm:$0xff]
      %v8459 = vld [vmem:[%s16 + $0x520] sm:$0xff]
      %v8460 = vld [vmem:[%s16 + $0x528] sm:$0xff]
      %v8461 = vld [vmem:[%s16 + $0x530] sm:$0xff]
      %v8462 = vld [vmem:[%s16 + $0x538] sm:$0xff]
      %v8463 = vld [vmem:[%s16 + $0x540] sm:$0xff]
      %v8464 = vld [vmem:[%s16 + $0x548] sm:$0xff]
      %v8465 = vld [vmem:[%s16 + $0x550] sm:$0xff]
      %v8466 = vld [vmem:[%s16 + $0x558] sm:$0xff]
      %v8467 = vld [vmem:[%s16 + $0x560] sm:$0xff]
      %v8468 = vld [vmem:[%s16 + $0x568] sm:$0xff]
      %v8469 = vld [vmem:[%s16 + $0x570] sm:$0xff]
      %v8470 = vld [vmem:[%s16 + $0x578] sm:$0xff]
      %v8471 = vld [vmem:[%s16 + $0x580] sm:$0xff]
      %v8472 = vld [vmem:[%s16 + $0x588] sm:$0xff]
      %v8473 = vld [vmem:[%s16 + $0x590] sm:$0xff]
      %v8474 = vld [vmem:[%s16 + $0x598] sm:$0xff]
      %v8475 = vld [vmem:[%s16 + $0x5a0] sm:$0xff]
      %v8476 = vld [vmem:[%s16 + $0x5a8] sm:$0xff]
      %v8477 = vld [vmem:[%s16 + $0x5b0] sm:$0xff]
      %v8478 = vld [vmem:[%s16 + $0x5b8] sm:$0xff]
      %v8479 = vld [vmem:[%s16 + $0x5c0] sm:$0xff]
      %v8480 = vld [vmem:[%s16 + $0x5c8] sm:$0xff]
      %v8481 = vld [vmem:[%s16 + $0x5d0] sm:$0xff]
      %v8482 = vld [vmem:[%s16 + $0x5d8] sm:$0xff]
      %v8483 = vld [vmem:[%s16 + $0x5e0] sm:$0xff]
      %v8484 = vld [vmem:[%s16 + $0x5e8] sm:$0xff]
      %v8485 = vld [vmem:[%s16 + $0x5f0] sm:$0xff]
      %v8486 = vld [vmem:[%s16 + $0x5f8] sm:$0xff]
      %v8487 = vld [vmem:[%s16 + $0x600] sm:$0xff]
      %v8488 = vld [vmem:[%s16 + $0x608] sm:$0xff]
      %v8489 = vld [vmem:[%s16 + $0x610] sm:$0xff]
      %v8490 = vld [vmem:[%s16 + $0x618] sm:$0xff]
      %v8491 = vld [vmem:[%s16 + $0x620] sm:$0xff]
      %v8492 = vld [vmem:[%s16 + $0x628] sm:$0xff]
      %v8493 = vld [vmem:[%s16 + $0x630] sm:$0xff]
      %v8494 = vld [vmem:[%s16 + $0x638] sm:$0xff]
      %v8495 = vld [vmem:[%s16 + $0x640] sm:$0xff]
      %v8496 = vld [vmem:[%s16 + $0x648] sm:$0xff]
      %v8497 = vld [vmem:[%s16 + $0x650] sm:$0xff]
      %v8498 = vld [vmem:[%s16 + $0x658] sm:$0xff]
      %v8499 = vld [vmem:[%s16 + $0x660] sm:$0xff]
      %v8500 = vld [vmem:[%s16 + $0x668] sm:$0xff]
      %v8501 = vld [vmem:[%s16 + $0x670] sm:$0xff]
      %v8502 = vld [vmem:[%s16 + $0x678] sm:$0xff]
      %v8503 = vld [vmem:[%s16 + $0x680] sm:$0xff]
      %v8504 = vld [vmem:[%s16 + $0x688] sm:$0xff]
      %v8505 = vld [vmem:[%s16 + $0x690] sm:$0xff]
      %v8506 = vld [vmem:[%s16 + $0x698] sm:$0xff]
      %v8507 = vld [vmem:[%s16 + $0x6a0] sm:$0xff]
      %v8508 = vld [vmem:[%s16 + $0x6a8] sm:$0xff]
      %v8509 = vld [vmem:[%s16 + $0x6b0] sm:$0xff]
      %v8510 = vld [vmem:[%s16 + $0x6b8] sm:$0xff]
      %v8511 = vld [vmem:[%s16 + $0x6c0] sm:$0xff]
      %v8512 = vld [vmem:[%s16 + $0x6c8] sm:$0xff]
      %v8513 = vld [vmem:[%s16 + $0x6d0] sm:$0xff]
      %v8514 = vld [vmem:[%s16 + $0x6d8] sm:$0xff]
      %v8515 = vld [vmem:[%s16 + $0x6e0] sm:$0xff]
      %v8516 = vld [vmem:[%s16 + $0x6e8] sm:$0xff]
      %v8517 = vld [vmem:[%s16 + $0x6f0] sm:$0xff]
      %v8518 = vld [vmem:[%s16 + $0x6f8] sm:$0xff]
      %v8519 = vld [vmem:[%s16 + $0x700] sm:$0xff]
      %v8520 = vld [vmem:[%s16 + $0x708] sm:$0xff]
      %v8521 = vld [vmem:[%s16 + $0x710] sm:$0xff]
      %v8522 = vld [vmem:[%s16 + $0x718] sm:$0xff]
      %v8523 = vld [vmem:[%s16 + $0x720] sm:$0xff]
      %v8524 = vld [vmem:[%s16 + $0x728] sm:$0xff]
      %v8525 = vld [vmem:[%s16 + $0x730] sm:$0xff]
      %v8526 = vld [vmem:[%s16 + $0x738] sm:$0xff]
      %v8527 = vld [vmem:[%s16 + $0x740] sm:$0xff]
      %v8528 = vld [vmem:[%s16 + $0x748] sm:$0xff]
      %v8529 = vld [vmem:[%s16 + $0x750] sm:$0xff]
      %v8530 = vld [vmem:[%s16 + $0x758] sm:$0xff]
      %v8531 = vld [vmem:[%s16 + $0x760] sm:$0xff]
      %v8532 = vld [vmem:[%s16 + $0x768] sm:$0xff]
      %v8533 = vld [vmem:[%s16 + $0x770] sm:$0xff]
      %v8534 = vld [vmem:[%s16 + $0x778] sm:$0xff]
      %v8535 = vld [vmem:[%s16 + $0x780] sm:$0xff]
      %v8536 = vld [vmem:[%s16 + $0x788] sm:$0xff]
      %v8537 = vld [vmem:[%s16 + $0x790] sm:$0xff]
      %v8538 = vld [vmem:[%s16 + $0x798] sm:$0xff]
      %v8539 = vld [vmem:[%s16 + $0x7a0] sm:$0xff]
      %v8540 = vld [vmem:[%s16 + $0x7a8] sm:$0xff]
      %v8541 = vld [vmem:[%s16 + $0x7b0] sm:$0xff]
      %v8542 = vld [vmem:[%s16 + $0x7b8] sm:$0xff]
      %v8543 = vld [vmem:[%s16 + $0x7c0] sm:$0xff]
      %v8544 = vld [vmem:[%s16 + $0x7c8] sm:$0xff]
      %v8545 = vld [vmem:[%s16 + $0x7d0] sm:$0xff]
      %v8546 = vld [vmem:[%s16 + $0x7d8] sm:$0xff]
      %v8547 = vld [vmem:[%s16 + $0x7e0] sm:$0xff]
      %v8548 = vld [vmem:[%s16 + $0x7e8] sm:$0xff]
      %v8549 = vld [vmem:[%s16 + $0x7f0] sm:$0xff]
      %v8550 = vld [vmem:[%s16 + $0x7f8] sm:$0xff]
      %8551 = vxpose.xlu0.b32.start [1/16] %v8257, 128
      %8552 = vxpose.xlu0.b32.cont [2/16] %v8262, 128
      %8553 = vxpose.xlu0.b32.cont [3/16] %v8267, 128
      %8554 = vxpose.xlu0.b32.cont [4/16] %v8272, 128
      %8555 = vxpose.xlu0.b32.cont [5/16] %v8277, 128
      %8556 = vxpose.xlu0.b32.cont [6/16] %v8282, 128
      %8557 = vxpose.xlu0.b32.cont [7/16] %v8287, 128
      %8558 = vxpose.xlu0.b32.cont [8/16] %v8292, 128
      %8559 = vxpose.xlu0.b32.cont [9/16] 0.0, 128
      %8560 = vxpose.xlu0.b32.cont [10/16] 0.0, 128
      %8561 = vxpose.xlu0.b32.cont [11/16] 0.0, 128
      %8562 = vxpose.xlu0.b32.cont [12/16] 0.0, 128
      %8563 = vxpose.xlu0.b32.cont [13/16] 0.0, 128
      %8564 = vxpose.xlu0.b32.cont [14/16] 0.0, 128
      %8565 = vxpose.xlu0.b32.cont [15/16] 0.0, 128
      %8566 = vxpose.xlu0.b32.end [16/16] 0.0, 128
      %v8567 = vpop.trf.xlu0
      %v8568 = vpop.trf.xlu0
      %v8569 = vpop.trf.xlu0
      %v8570 = vpop.trf.xlu0
      %v8571 = vpop.trf.xlu0
      %v8572 = vpop.trf.xlu0
      %v8573 = vpop.trf.xlu0
      %v8574 = vpop.trf.xlu0
      %v8575 = vpop.trf.xlu0
      %v8576 = vpop.trf.xlu0
      %v8577 = vpop.trf.xlu0
      %v8578 = vpop.trf.xlu0
      %v8579 = vpop.trf.xlu0
      %v8580 = vpop.trf.xlu0
      %v8581 = vpop.trf.xlu0
      %v8582 = vpop.trf.xlu0
      %v8584 = vsel %vm652, %v8567, 0
      %8586 = vmatprep.subr.mxu0 %v8296
      %8587 = vmatpush1.msra.mxu0 %v8295
      %8588 = vmatprep.subr.mxu0 %v8328
      %8589 = vmatpush1.msra.mxu0 %v8327
      %8590 = vmatprep.subr.mxu0 %v8360
      %8591 = vmatpush1.msra.mxu0 %v8359
      %8592 = vmatprep.subr.mxu0 %v8392
      %8593 = vmatpush1.msra.mxu0 %v8391
      %8594 = vmatprep.subr.mxu0 %v8424
      %8595 = vmatpush1.msra.mxu0 %v8423
      %8596 = vmatprep.subr.mxu0 %v8456
      %8597 = vmatpush1.msra.mxu0 %v8455
      %8598 = vmatprep.subr.mxu0 %v8488
      %8599 = vmatpush1.msra.mxu0 %v8487
      %8600 = vmatprep.subr.mxu0 %v8520
      %8601 = vmatpush1.msra.mxu0 %v8519
      %8602 = vmatprep.subr.mxu0 0.0
      %8603 = vmatpush1.msra.mxu0 0.0
      %8604 = vmatprep.subr.mxu0 0.0
      %8605 = vmatpush1.msra.mxu0 0.0
      %8606 = vmatprep.subr.mxu0 0.0
      %8607 = vmatpush1.msra.mxu0 0.0
      %8608 = vmatprep.subr.mxu0 0.0
      %8609 = vmatpush1.msra.mxu0 0.0
      %8610 = vmatprep.subr.mxu0 0.0
      %8611 = vmatpush1.msra.mxu0 0.0
      %8612 = vmatprep.subr.mxu0 0.0
      %8613 = vmatpush1.msra.mxu0 0.0
      %8614 = vmatprep.subr.mxu0 0.0
      %8615 = vmatpush1.msra.mxu0 0.0
      %8616 = vmatprep.subr.mxu0 0.0
      %8617 = vmatpush1.msra.mxu0 0.0
      %8618 = vmatprep.subr.mxu0 0.0
      %8619 = vmatpush1.msra.mxu0 0.0
      %8620 = vmatprep.subr.mxu0 0.0
      %8621 = vmatpush1.msra.mxu0 0.0
      %8622 = vmatprep.subr.mxu0 0.0
      %8623 = vmatpush1.msra.mxu0 0.0
      %8624 = vmatprep.subr.mxu0 0.0
      %8625 = vmatpush1.msra.mxu0 0.0
      %8626 = vmatprep.subr.mxu0 0.0
      %8627 = vmatpush1.msra.mxu0 0.0
      %8628 = vmatprep.subr.mxu0 0.0
      %8629 = vmatpush1.msra.mxu0 0.0
      %8630 = vmatprep.subr.mxu0 0.0
      %8631 = vmatpush1.msra.mxu0 0.0
      %8632 = vmatprep.subr.mxu0 0.0
      %8633 = vmatpush1.msra.mxu0 0.0
      %8634 = vmatprep.subr.mxu0 0.0
      %8635 = vmatpush1.msra.mxu0 0.0
      %8636 = vmatprep.subr.mxu0 0.0
      %8637 = vmatpush1.msra.mxu0 0.0
      %8638 = vmatprep.subr.mxu0 0.0
      %8639 = vmatpush1.msra.mxu0 0.0
      %8640 = vmatprep.subr.mxu0 0.0
      %8641 = vmatpush1.msra.mxu0 0.0
      %8642 = vmatprep.subr.mxu0 0.0
      %8643 = vmatpush1.msra.mxu0 0.0
      %8644 = vmatprep.subr.mxu0 0.0
      %8645 = vmatpush1.msra.mxu0 0.0
      %8646 = vmatprep.subr.mxu0 0.0
      %8647 = vmatpush1.msra.mxu0 0.0
      %8648 = vmatprep.subr.mxu0 0.0
      %8649 = vmatpush1.msra.mxu0 0.0
      %8650 = vmatprep.mubr.f32.mxu0 0.0
      %8651 = vmatmul.mubr.f32.gmra.mrb[0].mxu0 %v8584
      %v8652 = vpop.f32.mrb[0].mxu0
      %v8653 = vadd.f32 0.0, %v8652
      %v8654 = vpop.f32.mrb[0].mxu0
      %v8655 = vadd.f32 0.0, %v8654
      %8656 = vdwg.mxu0
      %8657 = vmatprep.subr.mxu0 %v8298
      %8658 = vmatpush1.msra.mxu0 %v8297
      %8659 = vmatprep.subr.mxu0 %v8330
      %8660 = vmatpush1.msra.mxu0 %v8329
      %8661 = vmatprep.subr.mxu0 %v8362
      %8662 = vmatpush1.msra.mxu0 %v8361
      %8663 = vmatprep.subr.mxu0 %v8394
      %8664 = vmatpush1.msra.mxu0 %v8393
      %8665 = vmatprep.subr.mxu0 %v8426
      %8666 = vmatpush1.msra.mxu0 %v8425
      %8667 = vmatprep.subr.mxu0 %v8458
      %8668 = vmatpush1.msra.mxu0 %v8457
      %8669 = vmatprep.subr.mxu0 %v8490
      %8670 = vmatpush1.msra.mxu0 %v8489
      %8671 = vmatprep.subr.mxu0 %v8522
      %8672 = vmatpush1.msra.mxu0 %v8521
      %8673 = vmatprep.subr.mxu0 0.0
      %8674 = vmatpush1.msra.mxu0 0.0
      %8675 = vmatprep.subr.mxu0 0.0
      %8676 = vmatpush1.msra.mxu0 0.0
      %8677 = vmatprep.subr.mxu0 0.0
      %8678 = vmatpush1.msra.mxu0 0.0
      %8679 = vmatprep.subr.mxu0 0.0
      %8680 = vmatpush1.msra.mxu0 0.0
      %8681 = vmatprep.subr.mxu0 0.0
      %8682 = vmatpush1.msra.mxu0 0.0
      %8683 = vmatprep.subr.mxu0 0.0
      %8684 = vmatpush1.msra.mxu0 0.0
      %8685 = vmatprep.subr.mxu0 0.0
      %8686 = vmatpush1.msra.mxu0 0.0
      %8687 = vmatprep.subr.mxu0 0.0
      %8688 = vmatpush1.msra.mxu0 0.0
      %8689 = vmatprep.subr.mxu0 0.0
      %8690 = vmatpush1.msra.mxu0 0.0
      %8691 = vmatprep.subr.mxu0 0.0
      %8692 = vmatpush1.msra.mxu0 0.0
      %8693 = vmatprep.subr.mxu0 0.0
      %8694 = vmatpush1.msra.mxu0 0.0
      %8695 = vmatprep.subr.mxu0 0.0
      %8696 = vmatpush1.msra.mxu0 0.0
      %8697 = vmatprep.subr.mxu0 0.0
      %8698 = vmatpush1.msra.mxu0 0.0
      %8699 = vmatprep.subr.mxu0 0.0
      %8700 = vmatpush1.msra.mxu0 0.0
      %8701 = vmatprep.subr.mxu0 0.0
      %8702 = vmatpush1.msra.mxu0 0.0
      %8703 = vmatprep.subr.mxu0 0.0
      %8704 = vmatpush1.msra.mxu0 0.0
      %8705 = vmatprep.subr.mxu0 0.0
      %8706 = vmatpush1.msra.mxu0 0.0
      %8707 = vmatprep.subr.mxu0 0.0
      %8708 = vmatpush1.msra.mxu0 0.0
      %8709 = vmatprep.subr.mxu0 0.0
      %8710 = vmatpush1.msra.mxu0 0.0
      %8711 = vmatprep.subr.mxu0 0.0
      %8712 = vmatpush1.msra.mxu0 0.0
      %8713 = vmatprep.subr.mxu0 0.0
      %8714 = vmatpush1.msra.mxu0 0.0
      %8715 = vmatprep.subr.mxu0 0.0
      %8716 = vmatpush1.msra.mxu0 0.0
      %8717 = vmatprep.subr.mxu0 0.0
      %8718 = vmatpush1.msra.mxu0 0.0
      %8719 = vmatprep.subr.mxu0 0.0
      %8720 = vmatpush1.msra.mxu0 0.0
      %8721 = vmatprep.mubr.f32.mxu0 0.0
      %8722 = vmatmul.mubr.f32.gmra.mrb[0].mxu0 %v8584
      %v8723 = vpop.f32.mrb[0].mxu0
      %v8724 = vadd.f32 0.0, %v8723
      %v8725 = vpop.f32.mrb[0].mxu0
      %v8726 = vadd.f32 0.0, %v8725
      %8727 = vdwg.mxu0
      %8728 = vmatprep.subr.mxu0 %v8300
      %8729 = vmatpush1.msra.mxu0 %v8299
      %8730 = vmatprep.subr.mxu0 %v8332
      %8731 = vmatpush1.msra.mxu0 %v8331
      %8732 = vmatprep.subr.mxu0 %v8364
      %8733 = vmatpush1.msra.mxu0 %v8363
      %8734 = vmatprep.subr.mxu0 %v8396
      %8735 = vmatpush1.msra.mxu0 %v8395
      %8736 = vmatprep.subr.mxu0 %v8428
      %8737 = vmatpush1.msra.mxu0 %v8427
      %8738 = vmatprep.subr.mxu0 %v8460
      %8739 = vmatpush1.msra.mxu0 %v8459
      %8740 = vmatprep.subr.mxu0 %v8492
      %8741 = vmatpush1.msra.mxu0 %v8491
      %8742 = vmatprep.subr.mxu0 %v8524
      %8743 = vmatpush1.msra.mxu0 %v8523
      %8744 = vmatprep.subr.mxu0 0.0
      %8745 = vmatpush1.msra.mxu0 0.0
      %8746 = vmatprep.subr.mxu0 0.0
      %8747 = vmatpush1.msra.mxu0 0.0
      %8748 = vmatprep.subr.mxu0 0.0
      %8749 = vmatpush1.msra.mxu0 0.0
      %8750 = vmatprep.subr.mxu0 0.0
      %8751 = vmatpush1.msra.mxu0 0.0
      %8752 = vmatprep.subr.mxu0 0.0
      %8753 = vmatpush1.msra.mxu0 0.0
      %8754 = vmatprep.subr.mxu0 0.0
      %8755 = vmatpush1.msra.mxu0 0.0
      %8756 = vmatprep.subr.mxu0 0.0
      %8757 = vmatpush1.msra.mxu0 0.0
      %8758 = vmatprep.subr.mxu0 0.0
      %8759 = vmatpush1.msra.mxu0 0.0
      %8760 = vmatprep.subr.mxu0 0.0
      %8761 = vmatpush1.msra.mxu0 0.0
      %8762 = vmatprep.subr.mxu0 0.0
      %8763 = vmatpush1.msra.mxu0 0.0
      %8764 = vmatprep.subr.mxu0 0.0
      %8765 = vmatpush1.msra.mxu0 0.0
      %8766 = vmatprep.subr.mxu0 0.0
      %8767 = vmatpush1.msra.mxu0 0.0
      %8768 = vmatprep.subr.mxu0 0.0
      %8769 = vmatpush1.msra.mxu0 0.0
      %8770 = vmatprep.subr.mxu0 0.0
      %8771 = vmatpush1.msra.mxu0 0.0
      %8772 = vmatprep.subr.mxu0 0.0
      %8773 = vmatpush1.msra.mxu0 0.0
      %8774 = vmatprep.subr.mxu0 0.0
      %8775 = vmatpush1.msra.mxu0 0.0
      %8776 = vmatprep.subr.mxu0 0.0
      %8777 = vmatpush1.msra.mxu0 0.0
      %8778 = vmatprep.subr.mxu0 0.0
      %8779 = vmatpush1.msra.mxu0 0.0
      %8780 = vmatprep.subr.mxu0 0.0
      %8781 = vmatpush1.msra.mxu0 0.0
      %8782 = vmatprep.subr.mxu0 0.0
      %8783 = vmatpush1.msra.mxu0 0.0
      %8784 = vmatprep.subr.mxu0 0.0
      %8785 = vmatpush1.msra.mxu0 0.0
      %8786 = vmatprep.subr.mxu0 0.0
      %8787 = vmatpush1.msra.mxu0 0.0
      %8788 = vmatprep.subr.mxu0 0.0
      %8789 = vmatpush1.msra.mxu0 0.0
      %8790 = vmatprep.subr.mxu0 0.0
      %8791 = vmatpush1.msra.mxu0 0.0
      %8792 = vmatprep.mubr.f32.mxu0 0.0
      %8793 = vmatmul.mubr.f32.gmra.mrb[0].mxu0 %v8584
      %v8794 = vpop.f32.mrb[0].mxu0
      %v8795 = vadd.f32 0.0, %v8794
      %v8796 = vpop.f32.mrb[0].mxu0
      %v8797 = vadd.f32 0.0, %v8796
      %8798 = vdwg.mxu0
      %8799 = vmatprep.subr.mxu0 %v8302
      %8800 = vmatpush1.msra.mxu0 %v8301
      %8801 = vmatprep.subr.mxu0 %v8334
      %8802 = vmatpush1.msra.mxu0 %v8333
      %8803 = vmatprep.subr.mxu0 %v8366
      %8804 = vmatpush1.msra.mxu0 %v8365
      %8805 = vmatprep.subr.mxu0 %v8398
      %8806 = vmatpush1.msra.mxu0 %v8397
      %8807 = vmatprep.subr.mxu0 %v8430
      %8808 = vmatpush1.msra.mxu0 %v8429
      %8809 = vmatprep.subr.mxu0 %v8462
      %8810 = vmatpush1.msra.mxu0 %v8461
      %8811 = vmatprep.subr.mxu0 %v8494
      %8812 = vmatpush1.msra.mxu0 %v8493
      %8813 = vmatprep.subr.mxu0 %v8526
      %8814 = vmatpush1.msra.mxu0 %v8525
      %8815 = vmatprep.subr.mxu0 0.0
      %8816 = vmatpush1.msra.mxu0 0.0
      %8817 = vmatprep.subr.mxu0 0.0
      %8818 = vmatpush1.msra.mxu0 0.0
      %8819 = vmatprep.subr.mxu0 0.0
      %8820 = vmatpush1.msra.mxu0 0.0
      %8821 = vmatprep.subr.mxu0 0.0
      %8822 = vmatpush1.msra.mxu0 0.0
      %8823 = vmatprep.subr.mxu0 0.0
      %8824 = vmatpush1.msra.mxu0 0.0
      %8825 = vmatprep.subr.mxu0 0.0
      %8826 = vmatpush1.msra.mxu0 0.0
      %8827 = vmatprep.subr.mxu0 0.0
      %8828 = vmatpush1.msra.mxu0 0.0
      %8829 = vmatprep.subr.mxu0 0.0
      %8830 = vmatpush1.msra.mxu0 0.0
      %8831 = vmatprep.subr.mxu0 0.0
      %8832 = vmatpush1.msra.mxu0 0.0
      %8833 = vmatprep.subr.mxu0 0.0
      %8834 = vmatpush1.msra.mxu0 0.0
      %8835 = vmatprep.subr.mxu0 0.0
      %8836 = vmatpush1.msra.mxu0 0.0
      %8837 = vmatprep.subr.mxu0 0.0
      %8838 = vmatpush1.msra.mxu0 0.0
      %8839 = vmatprep.subr.mxu0 0.0
      %8840 = vmatpush1.msra.mxu0 0.0
      %8841 = vmatprep.subr.mxu0 0.0
      %8842 = vmatpush1.msra.mxu0 0.0
      %8843 = vmatprep.subr.mxu0 0.0
      %8844 = vmatpush1.msra.mxu0 0.0
      %8845 = vmatprep.subr.mxu0 0.0
      %8846 = vmatpush1.msra.mxu0 0.0
      %8847 = vmatprep.subr.mxu0 0.0
      %8848 = vmatpush1.msra.mxu0 0.0
      %8849 = vmatprep.subr.mxu0 0.0
      %8850 = vmatpush1.msra.mxu0 0.0
      %8851 = vmatprep.subr.mxu0 0.0
      %8852 = vmatpush1.msra.mxu0 0.0
      %8853 = vmatprep.subr.mxu0 0.0
      %8854 = vmatpush1.msra.mxu0 0.0
      %8855 = vmatprep.subr.mxu0 0.0
      %8856 = vmatpush1.msra.mxu0 0.0
      %8857 = vmatprep.subr.mxu0 0.0
      %8858 = vmatpush1.msra.mxu0 0.0
      %8859 = vmatprep.subr.mxu0 0.0
      %8860 = vmatpush1.msra.mxu0 0.0
      %8861 = vmatprep.subr.mxu0 0.0
      %8862 = vmatpush1.msra.mxu0 0.0
      %8863 = vmatprep.mubr.f32.mxu0 0.0
      %8864 = vmatmul.mubr.f32.gmra.mrb[0].mxu0 %v8584
      %v8865 = vpop.f32.mrb[0].mxu0
      %v8866 = vadd.f32 0.0, %v8865
      %v8867 = vpop.f32.mrb[0].mxu0
      %v8868 = vadd.f32 0.0, %v8867
      %8869 = vdwg.mxu0
      %8870 = vmatprep.subr.mxu0 %v8304
      %8871 = vmatpush1.msra.mxu0 %v8303
      %8872 = vmatprep.subr.mxu0 %v8336
      %8873 = vmatpush1.msra.mxu0 %v8335
      %8874 = vmatprep.subr.mxu0 %v8368
      %8875 = vmatpush1.msra.mxu0 %v8367
      %8876 = vmatprep.subr.mxu0 %v8400
      %8877 = vmatpush1.msra.mxu0 %v8399
      %8878 = vmatprep.subr.mxu0 %v8432
      %8879 = vmatpush1.msra.mxu0 %v8431
      %8880 = vmatprep.subr.mxu0 %v8464
      %8881 = vmatpush1.msra.mxu0 %v8463
      %8882 = vmatprep.subr.mxu0 %v8496
      %8883 = vmatpush1.msra.mxu0 %v8495
      %8884 = vmatprep.subr.mxu0 %v8528
      %8885 = vmatpush1.msra.mxu0 %v8527
      %8886 = vmatprep.subr.mxu0 0.0
      %8887 = vmatpush1.msra.mxu0 0.0
      %8888 = vmatprep.subr.mxu0 0.0
      %8889 = vmatpush1.msra.mxu0 0.0
      %8890 = vmatprep.subr.mxu0 0.0
      %8891 = vmatpush1.msra.mxu0 0.0
      %8892 = vmatprep.subr.mxu0 0.0
      %8893 = vmatpush1.msra.mxu0 0.0
      %8894 = vmatprep.subr.mxu0 0.0
      %8895 = vmatpush1.msra.mxu0 0.0
      %8896 = vmatprep.subr.mxu0 0.0
      %8897 = vmatpush1.msra.mxu0 0.0
      %8898 = vmatprep.subr.mxu0 0.0
      %8899 = vmatpush1.msra.mxu0 0.0
      %8900 = vmatprep.subr.mxu0 0.0
      %8901 = vmatpush1.msra.mxu0 0.0
      %8902 = vmatprep.subr.mxu0 0.0
      %8903 = vmatpush1.msra.mxu0 0.0
      %8904 = vmatprep.subr.mxu0 0.0
      %8905 = vmatpush1.msra.mxu0 0.0
      %8906 = vmatprep.subr.mxu0 0.0
      %8907 = vmatpush1.msra.mxu0 0.0
      %8908 = vmatprep.subr.mxu0 0.0
      %8909 = vmatpush1.msra.mxu0 0.0
      %8910 = vmatprep.subr.mxu0 0.0
      %8911 = vmatpush1.msra.mxu0 0.0
      %8912 = vmatprep.subr.mxu0 0.0
      %8913 = vmatpush1.msra.mxu0 0.0
      %8914 = vmatprep.subr.mxu0 0.0
      %8915 = vmatpush1.msra.mxu0 0.0
      %8916 = vmatprep.subr.mxu0 0.0
      %8917 = vmatpush1.msra.mxu0 0.0
      %8918 = vmatprep.subr.mxu0 0.0
      %8919 = vmatpush1.msra.mxu0 0.0
      %8920 = vmatprep.subr.mxu0 0.0
      %8921 = vmatpush1.msra.mxu0 0.0
      %8922 = vmatprep.subr.mxu0 0.0
      %8923 = vmatpush1.msra.mxu0 0.0
      %8924 = vmatprep.subr.mxu0 0.0
      %8925 = vmatpush1.msra.mxu0 0.0
      %8926 = vmatprep.subr.mxu0 0.0
      %8927 = vmatpush1.msra.mxu0 0.0
      %8928 = vmatprep.subr.mxu0 0.0
      %8929 = vmatpush1.msra.mxu0 0.0
      %8930 = vmatprep.subr.mxu0 0.0
      %8931 = vmatpush1.msra.mxu0 0.0
      %8932 = vmatprep.subr.mxu0 0.0
      %8933 = vmatpush1.msra.mxu0 0.0
      %8934 = vmatprep.mubr.f32.mxu0 0.0
      %8935 = vmatmul.mubr.f32.gmra.mrb[0].mxu0 %v8584
      %v8936 = vpop.f32.mrb[0].mxu0
      %v8937 = vadd.f32 0.0, %v8936
      %v8938 = vpop.f32.mrb[0].mxu0
      %v8939 = vadd.f32 0.0, %v8938
      %8940 = vdwg.mxu0
      %8941 = vmatprep.subr.mxu0 %v8306
      %8942 = vmatpush1.msra.mxu0 %v8305
      %8943 = vmatprep.subr.mxu0 %v8338
      %8944 = vmatpush1.msra.mxu0 %v8337
      %8945 = vmatprep.subr.mxu0 %v8370
      %8946 = vmatpush1.msra.mxu0 %v8369
      %8947 = vmatprep.subr.mxu0 %v8402
      %8948 = vmatpush1.msra.mxu0 %v8401
      %8949 = vmatprep.subr.mxu0 %v8434
      %8950 = vmatpush1.msra.mxu0 %v8433
      %8951 = vmatprep.subr.mxu0 %v8466
      %8952 = vmatpush1.msra.mxu0 %v8465
      %8953 = vmatprep.subr.mxu0 %v8498
      %8954 = vmatpush1.msra.mxu0 %v8497
      %8955 = vmatprep.subr.mxu0 %v8530
      %8956 = vmatpush1.msra.mxu0 %v8529
      %8957 = vmatprep.subr.mxu0 0.0
      %8958 = vmatpush1.msra.mxu0 0.0
      %8959 = vmatprep.subr.mxu0 0.0
      %8960 = vmatpush1.msra.mxu0 0.0
      %8961 = vmatprep.subr.mxu0 0.0
      %8962 = vmatpush1.msra.mxu0 0.0
      %8963 = vmatprep.subr.mxu0 0.0
      %8964 = vmatpush1.msra.mxu0 0.0
      %8965 = vmatprep.subr.mxu0 0.0
      %8966 = vmatpush1.msra.mxu0 0.0
      %8967 = vmatprep.subr.mxu0 0.0
      %8968 = vmatpush1.msra.mxu0 0.0
      %8969 = vmatprep.subr.mxu0 0.0
      %8970 = vmatpush1.msra.mxu0 0.0
      %8971 = vmatprep.subr.mxu0 0.0
      %8972 = vmatpush1.msra.mxu0 0.0
      %8973 = vmatprep.subr.mxu0 0.0
      %8974 = vmatpush1.msra.mxu0 0.0
      %8975 = vmatprep.subr.mxu0 0.0
      %8976 = vmatpush1.msra.mxu0 0.0
      %8977 = vmatprep.subr.mxu0 0.0
      %8978 = vmatpush1.msra.mxu0 0.0
      %8979 = vmatprep.subr.mxu0 0.0
      %8980 = vmatpush1.msra.mxu0 0.0
      %8981 = vmatprep.subr.mxu0 0.0
      %8982 = vmatpush1.msra.mxu0 0.0
      %8983 = vmatprep.subr.mxu0 0.0
      %8984 = vmatpush1.msra.mxu0 0.0
      %8985 = vmatprep.subr.mxu0 0.0
      %8986 = vmatpush1.msra.mxu0 0.0
      %8987 = vmatprep.subr.mxu0 0.0
      %8988 = vmatpush1.msra.mxu0 0.0
      %8989 = vmatprep.subr.mxu0 0.0
      %8990 = vmatpush1.msra.mxu0 0.0
      %8991 = vmatprep.subr.mxu0 0.0
      %8992 = vmatpush1.msra.mxu0 0.0
      %8993 = vmatprep.subr.mxu0 0.0
      %8994 = vmatpush1.msra.mxu0 0.0
      %8995 = vmatprep.subr.mxu0 0.0
      %8996 = vmatpush1.msra.mxu0 0.0
      %8997 = vmatprep.subr.mxu0 0.0
      %8998 = vmatpush1.msra.mxu0 0.0
      %8999 = vmatprep.subr.mxu0 0.0
      %9000 = vmatpush1.msra.mxu0 0.0
      %9001 = vmatprep.subr.mxu0 0.0
      %9002 = vmatpush1.msra.mxu0 0.0
      %9003 = vmatprep.subr.mxu0 0.0
      %9004 = vmatpush1.msra.mxu0 0.0
      %9005 = vmatprep.mubr.f32.mxu0 0.0
      %9006 = vmatmul.mubr.f32.gmra.mrb[0].mxu0 %v8584
      %v9007 = vpop.f32.mrb[0].mxu0
      %v9008 = vadd.f32 0.0, %v9007
      %v9009 = vpop.f32.mrb[0].mxu0
      %v9010 = vadd.f32 0.0, %v9009
      %9011 = vdwg.mxu0
      %9012 = vmatprep.subr.mxu0 %v8308
      %9013 = vmatpush1.msra.mxu0 %v8307
      %9014 = vmatprep.subr.mxu0 %v8340
      %9015 = vmatpush1.msra.mxu0 %v8339
      %9016 = vmatprep.subr.mxu0 %v8372
      %9017 = vmatpush1.msra.mxu0 %v8371
      %9018 = vmatprep.subr.mxu0 %v8404
      %9019 = vmatpush1.msra.mxu0 %v8403
      %9020 = vmatprep.subr.mxu0 %v8436
      %9021 = vmatpush1.msra.mxu0 %v8435
      %9022 = vmatprep.subr.mxu0 %v8468
      %9023 = vmatpush1.msra.mxu0 %v8467
      %9024 = vmatprep.subr.mxu0 %v8500
      %9025 = vmatpush1.msra.mxu0 %v8499
      %9026 = vmatprep.subr.mxu0 %v8532
      %9027 = vmatpush1.msra.mxu0 %v8531
      %9028 = vmatprep.subr.mxu0 0.0
      %9029 = vmatpush1.msra.mxu0 0.0
      %9030 = vmatprep.subr.mxu0 0.0
      %9031 = vmatpush1.msra.mxu0 0.0
      %9032 = vmatprep.subr.mxu0 0.0
      %9033 = vmatpush1.msra.mxu0 0.0
      %9034 = vmatprep.subr.mxu0 0.0
      %9035 = vmatpush1.msra.mxu0 0.0
      %9036 = vmatprep.subr.mxu0 0.0
      %9037 = vmatpush1.msra.mxu0 0.0
      %9038 = vmatprep.subr.mxu0 0.0
      %9039 = vmatpush1.msra.mxu0 0.0
      %9040 = vmatprep.subr.mxu0 0.0
      %9041 = vmatpush1.msra.mxu0 0.0
      %9042 = vmatprep.subr.mxu0 0.0
      %9043 = vmatpush1.msra.mxu0 0.0
      %9044 = vmatprep.subr.mxu0 0.0
      %9045 = vmatpush1.msra.mxu0 0.0
      %9046 = vmatprep.subr.mxu0 0.0
      %9047 = vmatpush1.msra.mxu0 0.0
      %9048 = vmatprep.subr.mxu0 0.0
      %9049 = vmatpush1.msra.mxu0 0.0
      %9050 = vmatprep.subr.mxu0 0.0
      %9051 = vmatpush1.msra.mxu0 0.0
      %9052 = vmatprep.subr.mxu0 0.0
      %9053 = vmatpush1.msra.mxu0 0.0
      %9054 = vmatprep.subr.mxu0 0.0
      %9055 = vmatpush1.msra.mxu0 0.0
      %9056 = vmatprep.subr.mxu0 0.0
      %9057 = vmatpush1.msra.mxu0 0.0
      %9058 = vmatprep.subr.mxu0 0.0
      %9059 = vmatpush1.msra.mxu0 0.0
      %9060 = vmatprep.subr.mxu0 0.0
      %9061 = vmatpush1.msra.mxu0 0.0
      %9062 = vmatprep.subr.mxu0 0.0
      %9063 = vmatpush1.msra.mxu0 0.0
      %9064 = vmatprep.subr.mxu0 0.0
      %9065 = vmatpush1.msra.mxu0 0.0
      %9066 = vmatprep.subr.mxu0 0.0
      %9067 = vmatpush1.msra.mxu0 0.0
      %9068 = vmatprep.subr.mxu0 0.0
      %9069 = vmatpush1.msra.mxu0 0.0
      %9070 = vmatprep.subr.mxu0 0.0
      %9071 = vmatpush1.msra.mxu0 0.0
      %9072 = vmatprep.subr.mxu0 0.0
      %9073 = vmatpush1.msra.mxu0 0.0
      %9074 = vmatprep.subr.mxu0 0.0
      %9075 = vmatpush1.msra.mxu0 0.0
      %9076 = vmatprep.mubr.f32.mxu0 0.0
      %9077 = vmatmul.mubr.f32.gmra.mrb[0].mxu0 %v8584
      %v9078 = vpop.f32.mrb[0].mxu0
      %v9079 = vadd.f32 0.0, %v9078
      %v9080 = vpop.f32.mrb[0].mxu0
      %v9081 = vadd.f32 0.0, %v9080
      %9082 = vdwg.mxu0
      %9083 = vmatprep.subr.mxu0 %v8310
      %9084 = vmatpush1.msra.mxu0 %v8309
      %9085 = vmatprep.subr.mxu0 %v8342
      %9086 = vmatpush1.msra.mxu0 %v8341
      %9087 = vmatprep.subr.mxu0 %v8374
      %9088 = vmatpush1.msra.mxu0 %v8373
      %9089 = vmatprep.subr.mxu0 %v8406
      %9090 = vmatpush1.msra.mxu0 %v8405
      %9091 = vmatprep.subr.mxu0 %v8438
      %9092 = vmatpush1.msra.mxu0 %v8437
      %9093 = vmatprep.subr.mxu0 %v8470
      %9094 = vmatpush1.msra.mxu0 %v8469
      %9095 = vmatprep.subr.mxu0 %v8502
      %9096 = vmatpush1.msra.mxu0 %v8501
      %9097 = vmatprep.subr.mxu0 %v8534
      %9098 = vmatpush1.msra.mxu0 %v8533
      %9099 = vmatprep.subr.mxu0 0.0
      %9100 = vmatpush1.msra.mxu0 0.0
      %9101 = vmatprep.subr.mxu0 0.0
      %9102 = vmatpush1.msra.mxu0 0.0
      %9103 = vmatprep.subr.mxu0 0.0
      %9104 = vmatpush1.msra.mxu0 0.0
      %9105 = vmatprep.subr.mxu0 0.0
      %9106 = vmatpush1.msra.mxu0 0.0
      %9107 = vmatprep.subr.mxu0 0.0
      %9108 = vmatpush1.msra.mxu0 0.0
      %9109 = vmatprep.subr.mxu0 0.0
      %9110 = vmatpush1.msra.mxu0 0.0
      %9111 = vmatprep.subr.mxu0 0.0
      %9112 = vmatpush1.msra.mxu0 0.0
      %9113 = vmatprep.subr.mxu0 0.0
      %9114 = vmatpush1.msra.mxu0 0.0
      %9115 = vmatprep.subr.mxu0 0.0
      %9116 = vmatpush1.msra.mxu0 0.0
      %9117 = vmatprep.subr.mxu0 0.0
      %9118 = vmatpush1.msra.mxu0 0.0
      %9119 = vmatprep.subr.mxu0 0.0
      %9120 = vmatpush1.msra.mxu0 0.0
      %9121 = vmatprep.subr.mxu0 0.0
      %9122 = vmatpush1.msra.mxu0 0.0
      %9123 = vmatprep.subr.mxu0 0.0
      %9124 = vmatpush1.msra.mxu0 0.0
      %9125 = vmatprep.subr.mxu0 0.0
      %9126 = vmatpush1.msra.mxu0 0.0
      %9127 = vmatprep.subr.mxu0 0.0
      %9128 = vmatpush1.msra.mxu0 0.0
      %9129 = vmatprep.subr.mxu0 0.0
      %9130 = vmatpush1.msra.mxu0 0.0
      %9131 = vmatprep.subr.mxu0 0.0
      %9132 = vmatpush1.msra.mxu0 0.0
      %9133 = vmatprep.subr.mxu0 0.0
      %9134 = vmatpush1.msra.mxu0 0.0
      %9135 = vmatprep.subr.mxu0 0.0
      %9136 = vmatpush1.msra.mxu0 0.0
      %9137 = vmatprep.subr.mxu0 0.0
      %9138 = vmatpush1.msra.mxu0 0.0
      %9139 = vmatprep.subr.mxu0 0.0
      %9140 = vmatpush1.msra.mxu0 0.0
      %9141 = vmatprep.subr.mxu0 0.0
      %9142 = vmatpush1.msra.mxu0 0.0
      %9143 = vmatprep.subr.mxu0 0.0
      %9144 = vmatpush1.msra.mxu0 0.0
      %9145 = vmatprep.subr.mxu0 0.0
      %9146 = vmatpush1.msra.mxu0 0.0
      %9147 = vmatprep.mubr.f32.mxu0 0.0
      %9148 = vmatmul.mubr.f32.gmra.mrb[0].mxu0 %v8584
      %v9149 = vpop.f32.mrb[0].mxu0
      %v9150 = vadd.f32 0.0, %v9149
      %v9151 = vpop.f32.mrb[0].mxu0
      %v9152 = vadd.f32 0.0, %v9151
      %9153 = vdwg.mxu0
      %9154 = vmatprep.subr.mxu0 %v8312
      %9155 = vmatpush1.msra.mxu0 %v8311
      %9156 = vmatprep.subr.mxu0 %v8344
      %9157 = vmatpush1.msra.mxu0 %v8343
      %9158 = vmatprep.subr.mxu0 %v8376
      %9159 = vmatpush1.msra.mxu0 %v8375
      %9160 = vmatprep.subr.mxu0 %v8408
      %9161 = vmatpush1.msra.mxu0 %v8407
      %9162 = vmatprep.subr.mxu0 %v8440
      %9163 = vmatpush1.msra.mxu0 %v8439
      %9164 = vmatprep.subr.mxu0 %v8472
      %9165 = vmatpush1.msra.mxu0 %v8471
      %9166 = vmatprep.subr.mxu0 %v8504
      %9167 = vmatpush1.msra.mxu0 %v8503
      %9168 = vmatprep.subr.mxu0 %v8536
      %9169 = vmatpush1.msra.mxu0 %v8535
      %9170 = vmatprep.subr.mxu0 0.0
      %9171 = vmatpush1.msra.mxu0 0.0
      %9172 = vmatprep.subr.mxu0 0.0
      %9173 = vmatpush1.msra.mxu0 0.0
      %9174 = vmatprep.subr.mxu0 0.0
      %9175 = vmatpush1.msra.mxu0 0.0
      %9176 = vmatprep.subr.mxu0 0.0
      %9177 = vmatpush1.msra.mxu0 0.0
      %9178 = vmatprep.subr.mxu0 0.0
      %9179 = vmatpush1.msra.mxu0 0.0
      %9180 = vmatprep.subr.mxu0 0.0
      %9181 = vmatpush1.msra.mxu0 0.0
      %9182 = vmatprep.subr.mxu0 0.0
      %9183 = vmatpush1.msra.mxu0 0.0
      %9184 = vmatprep.subr.mxu0 0.0
      %9185 = vmatpush1.msra.mxu0 0.0
      %9186 = vmatprep.subr.mxu0 0.0
      %9187 = vmatpush1.msra.mxu0 0.0
      %9188 = vmatprep.subr.mxu0 0.0
      %9189 = vmatpush1.msra.mxu0 0.0
      %9190 = vmatprep.subr.mxu0 0.0
      %9191 = vmatpush1.msra.mxu0 0.0
      %9192 = vmatprep.subr.mxu0 0.0
      %9193 = vmatpush1.msra.mxu0 0.0
      %9194 = vmatprep.subr.mxu0 0.0
      %9195 = vmatpush1.msra.mxu0 0.0
      %9196 = vmatprep.subr.mxu0 0.0
      %9197 = vmatpush1.msra.mxu0 0.0
      %9198 = vmatprep.subr.mxu0 0.0
      %9199 = vmatpush1.msra.mxu0 0.0
      %9200 = vmatprep.subr.mxu0 0.0
      %9201 = vmatpush1.msra.mxu0 0.0
      %9202 = vmatprep.subr.mxu0 0.0
      %9203 = vmatpush1.msra.mxu0 0.0
      %9204 = vmatprep.subr.mxu0 0.0
      %9205 = vmatpush1.msra.mxu0 0.0
      %9206 = vmatprep.subr.mxu0 0.0
      %9207 = vmatpush1.msra.mxu0 0.0
      %9208 = vmatprep.subr.mxu0 0.0
      %9209 = vmatpush1.msra.mxu0 0.0
      %9210 = vmatprep.subr.mxu0 0.0
      %9211 = vmatpush1.msra.mxu0 0.0
      %9212 = vmatprep.subr.mxu0 0.0
      %9213 = vmatpush1.msra.mxu0 0.0
      %9214 = vmatprep.subr.mxu0 0.0
      %9215 = vmatpush1.msra.mxu0 0.0
      %9216 = vmatprep.subr.mxu0 0.0
      %9217 = vmatpush1.msra.mxu0 0.0
      %9218 = vmatprep.mubr.f32.mxu0 0.0
      %9219 = vmatmul.mubr.f32.gmra.mrb[0].mxu0 %v8584
      %v9220 = vpop.f32.mrb[0].mxu0
      %v9221 = vadd.f32 0.0, %v9220
      %v9222 = vpop.f32.mrb[0].mxu0
      %v9223 = vadd.f32 0.0, %v9222
      %9224 = vdwg.mxu0
      %9225 = vmatprep.subr.mxu0 %v8314
      %9226 = vmatpush1.msra.mxu0 %v8313
      %9227 = vmatprep.subr.mxu0 %v8346
      %9228 = vmatpush1.msra.mxu0 %v8345
      %9229 = vmatprep.subr.mxu0 %v8378
      %9230 = vmatpush1.msra.mxu0 %v8377
      %9231 = vmatprep.subr.mxu0 %v8410
      %9232 = vmatpush1.msra.mxu0 %v8409
      %9233 = vmatprep.subr.mxu0 %v8442
      %9234 = vmatpush1.msra.mxu0 %v8441
      %9235 = vmatprep.subr.mxu0 %v8474
      %9236 = vmatpush1.msra.mxu0 %v8473
      %9237 = vmatprep.subr.mxu0 %v8506
      %9238 = vmatpush1.msra.mxu0 %v8505
      %9239 = vmatprep.subr.mxu0 %v8538
      %9240 = vmatpush1.msra.mxu0 %v8537
      %9241 = vmatprep.subr.mxu0 0.0
      %9242 = vmatpush1.msra.mxu0 0.0
      %9243 = vmatprep.subr.mxu0 0.0
      %9244 = vmatpush1.msra.mxu0 0.0
      %9245 = vmatprep.subr.mxu0 0.0
      %9246 = vmatpush1.msra.mxu0 0.0
      %9247 = vmatprep.subr.mxu0 0.0
      %9248 = vmatpush1.msra.mxu0 0.0
      %9249 = vmatprep.subr.mxu0 0.0
      %9250 = vmatpush1.msra.mxu0 0.0
      %9251 = vmatprep.subr.mxu0 0.0
      %9252 = vmatpush1.msra.mxu0 0.0
      %9253 = vmatprep.subr.mxu0 0.0
      %9254 = vmatpush1.msra.mxu0 0.0
      %9255 = vmatprep.subr.mxu0 0.0
      %9256 = vmatpush1.msra.mxu0 0.0
      %9257 = vmatprep.subr.mxu0 0.0
      %9258 = vmatpush1.msra.mxu0 0.0
      %9259 = vmatprep.subr.mxu0 0.0
      %9260 = vmatpush1.msra.mxu0 0.0
      %9261 = vmatprep.subr.mxu0 0.0
      %9262 = vmatpush1.msra.mxu0 0.0
      %9263 = vmatprep.subr.mxu0 0.0
      %9264 = vmatpush1.msra.mxu0 0.0
      %9265 = vmatprep.subr.mxu0 0.0
      %9266 = vmatpush1.msra.mxu0 0.0
      %9267 = vmatprep.subr.mxu0 0.0
      %9268 = vmatpush1.msra.mxu0 0.0
      %9269 = vmatprep.subr.mxu0 0.0
      %9270 = vmatpush1.msra.mxu0 0.0
      %9271 = vmatprep.subr.mxu0 0.0
      %9272 = vmatpush1.msra.mxu0 0.0
      %9273 = vmatprep.subr.mxu0 0.0
      %9274 = vmatpush1.msra.mxu0 0.0
      %9275 = vmatprep.subr.mxu0 0.0
      %9276 = vmatpush1.msra.mxu0 0.0
      %9277 = vmatprep.subr.mxu0 0.0
      %9278 = vmatpush1.msra.mxu0 0.0
      %9279 = vmatprep.subr.mxu0 0.0
      %9280 = vmatpush1.msra.mxu0 0.0
      %9281 = vmatprep.subr.mxu0 0.0
      %9282 = vmatpush1.msra.mxu0 0.0
      %9283 = vmatprep.subr.mxu0 0.0
      %9284 = vmatpush1.msra.mxu0 0.0
      %9285 = vmatprep.subr.mxu0 0.0
      %9286 = vmatpush1.msra.mxu0 0.0
      %9287 = vmatprep.subr.mxu0 0.0
      %9288 = vmatpush1.msra.mxu0 0.0
      %9289 = vmatprep.mubr.f32.mxu0 0.0
      %9290 = vmatmul.mubr.f32.gmra.mrb[0].mxu0 %v8584
      %v9291 = vpop.f32.mrb[0].mxu0
      %v9292 = vadd.f32 0.0, %v9291
      %v9293 = vpop.f32.mrb[0].mxu0
      %v9294 = vadd.f32 0.0, %v9293
      %9295 = vdwg.mxu0
      %9296 = vmatprep.subr.mxu0 %v8316
      %9297 = vmatpush1.msra.mxu0 %v8315
      %9298 = vmatprep.subr.mxu0 %v8348
      %9299 = vmatpush1.msra.mxu0 %v8347
      %9300 = vmatprep.subr.mxu0 %v8380
      %9301 = vmatpush1.msra.mxu0 %v8379
      %9302 = vmatprep.subr.mxu0 %v8412
      %9303 = vmatpush1.msra.mxu0 %v8411
      %9304 = vmatprep.subr.mxu0 %v8444
      %9305 = vmatpush1.msra.mxu0 %v8443
      %9306 = vmatprep.subr.mxu0 %v8476
      %9307 = vmatpush1.msra.mxu0 %v8475
      %9308 = vmatprep.subr.mxu0 %v8508
      %9309 = vmatpush1.msra.mxu0 %v8507
      %9310 = vmatprep.subr.mxu0 %v8540
      %9311 = vmatpush1.msra.mxu0 %v8539
      %9312 = vmatprep.subr.mxu0 0.0
      %9313 = vmatpush1.msra.mxu0 0.0
      %9314 = vmatprep.subr.mxu0 0.0
      %9315 = vmatpush1.msra.mxu0 0.0
      %9316 = vmatprep.subr.mxu0 0.0
      %9317 = vmatpush1.msra.mxu0 0.0
      %9318 = vmatprep.subr.mxu0 0.0
      %9319 = vmatpush1.msra.mxu0 0.0
      %9320 = vmatprep.subr.mxu0 0.0
      %9321 = vmatpush1.msra.mxu0 0.0
      %9322 = vmatprep.subr.mxu0 0.0
      %9323 = vmatpush1.msra.mxu0 0.0
      %9324 = vmatprep.subr.mxu0 0.0
      %9325 = vmatpush1.msra.mxu0 0.0
      %9326 = vmatprep.subr.mxu0 0.0
      %9327 = vmatpush1.msra.mxu0 0.0
      %9328 = vmatprep.subr.mxu0 0.0
      %9329 = vmatpush1.msra.mxu0 0.0
      %9330 = vmatprep.subr.mxu0 0.0
      %9331 = vmatpush1.msra.mxu0 0.0
      %9332 = vmatprep.subr.mxu0 0.0
      %9333 = vmatpush1.msra.mxu0 0.0
      %9334 = vmatprep.subr.mxu0 0.0
      %9335 = vmatpush1.msra.mxu0 0.0
      %9336 = vmatprep.subr.mxu0 0.0
      %9337 = vmatpush1.msra.mxu0 0.0
      %9338 = vmatprep.subr.mxu0 0.0
      %9339 = vmatpush1.msra.mxu0 0.0
      %9340 = vmatprep.subr.mxu0 0.0
      %9341 = vmatpush1.msra.mxu0 0.0
      %9342 = vmatprep.subr.mxu0 0.0
      %9343 = vmatpush1.msra.mxu0 0.0
      %9344 = vmatprep.subr.mxu0 0.0
      %9345 = vmatpush1.msra.mxu0 0.0
      %9346 = vmatprep.subr.mxu0 0.0
      %9347 = vmatpush1.msra.mxu0 0.0
      %9348 = vmatprep.subr.mxu0 0.0
      %9349 = vmatpush1.msra.mxu0 0.0
      %9350 = vmatprep.subr.mxu0 0.0
      %9351 = vmatpush1.msra.mxu0 0.0
      %9352 = vmatprep.subr.mxu0 0.0
      %9353 = vmatpush1.msra.mxu0 0.0
      %9354 = vmatprep.subr.mxu0 0.0
      %9355 = vmatpush1.msra.mxu0 0.0
      %9356 = vmatprep.subr.mxu0 0.0
      %9357 = vmatpush1.msra.mxu0 0.0
      %9358 = vmatprep.subr.mxu0 0.0
      %9359 = vmatpush1.msra.mxu0 0.0
      %9360 = vmatprep.mubr.f32.mxu0 0.0
      %9361 = vmatmul.mubr.f32.gmra.mrb[0].mxu0 %v8584
      %v9362 = vpop.f32.mrb[0].mxu0
      %v9363 = vadd.f32 0.0, %v9362
      %v9364 = vpop.f32.mrb[0].mxu0
      %v9365 = vadd.f32 0.0, %v9364
      %9366 = vdwg.mxu0
      %9367 = vmatprep.subr.mxu0 %v8318
      %9368 = vmatpush1.msra.mxu0 %v8317
      %9369 = vmatprep.subr.mxu0 %v8350
      %9370 = vmatpush1.msra.mxu0 %v8349
      %9371 = vmatprep.subr.mxu0 %v8382
      %9372 = vmatpush1.msra.mxu0 %v8381
      %9373 = vmatprep.subr.mxu0 %v8414
      %9374 = vmatpush1.msra.mxu0 %v8413
      %9375 = vmatprep.subr.mxu0 %v8446
      %9376 = vmatpush1.msra.mxu0 %v8445
      %9377 = vmatprep.subr.mxu0 %v8478
      %9378 = vmatpush1.msra.mxu0 %v8477
      %9379 = vmatprep.subr.mxu0 %v8510
      %9380 = vmatpush1.msra.mxu0 %v8509
      %9381 = vmatprep.subr.mxu0 %v8542
      %9382 = vmatpush1.msra.mxu0 %v8541
      %9383 = vmatprep.subr.mxu0 0.0
      %9384 = vmatpush1.msra.mxu0 0.0
      %9385 = vmatprep.subr.mxu0 0.0
      %9386 = vmatpush1.msra.mxu0 0.0
      %9387 = vmatprep.subr.mxu0 0.0
      %9388 = vmatpush1.msra.mxu0 0.0
      %9389 = vmatprep.subr.mxu0 0.0
      %9390 = vmatpush1.msra.mxu0 0.0
      %9391 = vmatprep.subr.mxu0 0.0
      %9392 = vmatpush1.msra.mxu0 0.0
      %9393 = vmatprep.subr.mxu0 0.0
      %9394 = vmatpush1.msra.mxu0 0.0
      %9395 = vmatprep.subr.mxu0 0.0
      %9396 = vmatpush1.msra.mxu0 0.0
      %9397 = vmatprep.subr.mxu0 0.0
      %9398 = vmatpush1.msra.mxu0 0.0
      %9399 = vmatprep.subr.mxu0 0.0
      %9400 = vmatpush1.msra.mxu0 0.0
      %9401 = vmatprep.subr.mxu0 0.0
      %9402 = vmatpush1.msra.mxu0 0.0
      %9403 = vmatprep.subr.mxu0 0.0
      %9404 = vmatpush1.msra.mxu0 0.0
      %9405 = vmatprep.subr.mxu0 0.0
      %9406 = vmatpush1.msra.mxu0 0.0
      %9407 = vmatprep.subr.mxu0 0.0
      %9408 = vmatpush1.msra.mxu0 0.0
      %9409 = vmatprep.subr.mxu0 0.0
      %9410 = vmatpush1.msra.mxu0 0.0
      %9411 = vmatprep.subr.mxu0 0.0
      %9412 = vmatpush1.msra.mxu0 0.0
      %9413 = vmatprep.subr.mxu0 0.0
      %9414 = vmatpush1.msra.mxu0 0.0
      %9415 = vmatprep.subr.mxu0 0.0
      %9416 = vmatpush1.msra.mxu0 0.0
      %9417 = vmatprep.subr.mxu0 0.0
      %9418 = vmatpush1.msra.mxu0 0.0
      %9419 = vmatprep.subr.mxu0 0.0
      %9420 = vmatpush1.msra.mxu0 0.0
      %9421 = vmatprep.subr.mxu0 0.0
      %9422 = vmatpush1.msra.mxu0 0.0
      %9423 = vmatprep.subr.mxu0 0.0
      %9424 = vmatpush1.msra.mxu0 0.0
      %9425 = vmatprep.subr.mxu0 0.0
      %9426 = vmatpush1.msra.mxu0 0.0
      %9427 = vmatprep.subr.mxu0 0.0
      %9428 = vmatpush1.msra.mxu0 0.0
      %9429 = vmatprep.subr.mxu0 0.0
      %9430 = vmatpush1.msra.mxu0 0.0
      %9431 = vmatprep.mubr.f32.mxu0 0.0
      %9432 = vmatmul.mubr.f32.gmra.mrb[0].mxu0 %v8584
      %v9433 = vpop.f32.mrb[0].mxu0
      %v9434 = vadd.f32 0.0, %v9433
      %v9435 = vpop.f32.mrb[0].mxu0
      %v9436 = vadd.f32 0.0, %v9435
      %9437 = vdwg.mxu0
      %9438 = vmatprep.subr.mxu0 %v8320
      %9439 = vmatpush1.msra.mxu0 %v8319
      %9440 = vmatprep.subr.mxu0 %v8352
      %9441 = vmatpush1.msra.mxu0 %v8351
      %9442 = vmatprep.subr.mxu0 %v8384
      %9443 = vmatpush1.msra.mxu0 %v8383
      %9444 = vmatprep.subr.mxu0 %v8416
      %9445 = vmatpush1.msra.mxu0 %v8415
      %9446 = vmatprep.subr.mxu0 %v8448
      %9447 = vmatpush1.msra.mxu0 %v8447
      %9448 = vmatprep.subr.mxu0 %v8480
      %9449 = vmatpush1.msra.mxu0 %v8479
      %9450 = vmatprep.subr.mxu0 %v8512
      %9451 = vmatpush1.msra.mxu0 %v8511
      %9452 = vmatprep.subr.mxu0 %v8544
      %9453 = vmatpush1.msra.mxu0 %v8543
      %9454 = vmatprep.subr.mxu0 0.0
      %9455 = vmatpush1.msra.mxu0 0.0
      %9456 = vmatprep.subr.mxu0 0.0
      %9457 = vmatpush1.msra.mxu0 0.0
      %9458 = vmatprep.subr.mxu0 0.0
      %9459 = vmatpush1.msra.mxu0 0.0
      %9460 = vmatprep.subr.mxu0 0.0
      %9461 = vmatpush1.msra.mxu0 0.0
      %9462 = vmatprep.subr.mxu0 0.0
      %9463 = vmatpush1.msra.mxu0 0.0
      %9464 = vmatprep.subr.mxu0 0.0
      %9465 = vmatpush1.msra.mxu0 0.0
      %9466 = vmatprep.subr.mxu0 0.0
      %9467 = vmatpush1.msra.mxu0 0.0
      %9468 = vmatprep.subr.mxu0 0.0
      %9469 = vmatpush1.msra.mxu0 0.0
      %9470 = vmatprep.subr.mxu0 0.0
      %9471 = vmatpush1.msra.mxu0 0.0
      %9472 = vmatprep.subr.mxu0 0.0
      %9473 = vmatpush1.msra.mxu0 0.0
      %9474 = vmatprep.subr.mxu0 0.0
      %9475 = vmatpush1.msra.mxu0 0.0
      %9476 = vmatprep.subr.mxu0 0.0
      %9477 = vmatpush1.msra.mxu0 0.0
      %9478 = vmatprep.subr.mxu0 0.0
      %9479 = vmatpush1.msra.mxu0 0.0
      %9480 = vmatprep.subr.mxu0 0.0
      %9481 = vmatpush1.msra.mxu0 0.0
      %9482 = vmatprep.subr.mxu0 0.0
      %9483 = vmatpush1.msra.mxu0 0.0
      %9484 = vmatprep.subr.mxu0 0.0
      %9485 = vmatpush1.msra.mxu0 0.0
      %9486 = vmatprep.subr.mxu0 0.0
      %9487 = vmatpush1.msra.mxu0 0.0
      %9488 = vmatprep.subr.mxu0 0.0
      %9489 = vmatpush1.msra.mxu0 0.0
      %9490 = vmatprep.subr.mxu0 0.0
      %9491 = vmatpush1.msra.mxu0 0.0
      %9492 = vmatprep.subr.mxu0 0.0
      %9493 = vmatpush1.msra.mxu0 0.0
      %9494 = vmatprep.subr.mxu0 0.0
      %9495 = vmatpush1.msra.mxu0 0.0
      %9496 = vmatprep.subr.mxu0 0.0
      %9497 = vmatpush1.msra.mxu0 0.0
      %9498 = vmatprep.subr.mxu0 0.0
      %9499 = vmatpush1.msra.mxu0 0.0
      %9500 = vmatprep.subr.mxu0 0.0
      %9501 = vmatpush1.msra.mxu0 0.0
      %9502 = vmatprep.mubr.f32.mxu0 0.0
      %9503 = vmatmul.mubr.f32.gmra.mrb[0].mxu0 %v8584
      %v9504 = vpop.f32.mrb[0].mxu0
      %v9505 = vadd.f32 0.0, %v9504
      %v9506 = vpop.f32.mrb[0].mxu0
      %v9507 = vadd.f32 0.0, %v9506
      %9508 = vdwg.mxu0
      %9509 = vmatprep.subr.mxu0 %v8322
      %9510 = vmatpush1.msra.mxu0 %v8321
      %9511 = vmatprep.subr.mxu0 %v8354
      %9512 = vmatpush1.msra.mxu0 %v8353
      %9513 = vmatprep.subr.mxu0 %v8386
      %9514 = vmatpush1.msra.mxu0 %v8385
      %9515 = vmatprep.subr.mxu0 %v8418
      %9516 = vmatpush1.msra.mxu0 %v8417
      %9517 = vmatprep.subr.mxu0 %v8450
      %9518 = vmatpush1.msra.mxu0 %v8449
      %9519 = vmatprep.subr.mxu0 %v8482
      %9520 = vmatpush1.msra.mxu0 %v8481
      %9521 = vmatprep.subr.mxu0 %v8514
      %9522 = vmatpush1.msra.mxu0 %v8513
      %9523 = vmatprep.subr.mxu0 %v8546
      %9524 = vmatpush1.msra.mxu0 %v8545
      %9525 = vmatprep.subr.mxu0 0.0
      %9526 = vmatpush1.msra.mxu0 0.0
      %9527 = vmatprep.subr.mxu0 0.0
      %9528 = vmatpush1.msra.mxu0 0.0
      %9529 = vmatprep.subr.mxu0 0.0
      %9530 = vmatpush1.msra.mxu0 0.0
      %9531 = vmatprep.subr.mxu0 0.0
      %9532 = vmatpush1.msra.mxu0 0.0
      %9533 = vmatprep.subr.mxu0 0.0
      %9534 = vmatpush1.msra.mxu0 0.0
      %9535 = vmatprep.subr.mxu0 0.0
      %9536 = vmatpush1.msra.mxu0 0.0
      %9537 = vmatprep.subr.mxu0 0.0
      %9538 = vmatpush1.msra.mxu0 0.0
      %9539 = vmatprep.subr.mxu0 0.0
      %9540 = vmatpush1.msra.mxu0 0.0
      %9541 = vmatprep.subr.mxu0 0.0
      %9542 = vmatpush1.msra.mxu0 0.0
      %9543 = vmatprep.subr.mxu0 0.0
      %9544 = vmatpush1.msra.mxu0 0.0
      %9545 = vmatprep.subr.mxu0 0.0
      %9546 = vmatpush1.msra.mxu0 0.0
      %9547 = vmatprep.subr.mxu0 0.0
      %9548 = vmatpush1.msra.mxu0 0.0
      %9549 = vmatprep.subr.mxu0 0.0
      %9550 = vmatpush1.msra.mxu0 0.0
      %9551 = vmatprep.subr.mxu0 0.0
      %9552 = vmatpush1.msra.mxu0 0.0
      %9553 = vmatprep.subr.mxu0 0.0
      %9554 = vmatpush1.msra.mxu0 0.0
      %9555 = vmatprep.subr.mxu0 0.0
      %9556 = vmatpush1.msra.mxu0 0.0
      %9557 = vmatprep.subr.mxu0 0.0
      %9558 = vmatpush1.msra.mxu0 0.0
      %9559 = vmatprep.subr.mxu0 0.0
      %9560 = vmatpush1.msra.mxu0 0.0
      %9561 = vmatprep.subr.mxu0 0.0
      %9562 = vmatpush1.msra.mxu0 0.0
      %9563 = vmatprep.subr.mxu0 0.0
      %9564 = vmatpush1.msra.mxu0 0.0
      %9565 = vmatprep.subr.mxu0 0.0
      %9566 = vmatpush1.msra.mxu0 0.0
      %9567 = vmatprep.subr.mxu0 0.0
      %9568 = vmatpush1.msra.mxu0 0.0
      %9569 = vmatprep.subr.mxu0 0.0
      %9570 = vmatpush1.msra.mxu0 0.0
      %9571 = vmatprep.subr.mxu0 0.0
      %9572 = vmatpush1.msra.mxu0 0.0
      %9573 = vmatprep.mubr.f32.mxu0 0.0
      %9574 = vmatmul.mubr.f32.gmra.mrb[0].mxu0 %v8584
      %v9575 = vpop.f32.mrb[0].mxu0
      %v9576 = vadd.f32 0.0, %v9575
      %v9577 = vpop.f32.mrb[0].mxu0
      %v9578 = vadd.f32 0.0, %v9577
      %9579 = vdwg.mxu0
      %9580 = vmatprep.subr.mxu0 %v8324
      %9581 = vmatpush1.msra.mxu0 %v8323
      %9582 = vmatprep.subr.mxu0 %v8356
      %9583 = vmatpush1.msra.mxu0 %v8355
      %9584 = vmatprep.subr.mxu0 %v8388
      %9585 = vmatpush1.msra.mxu0 %v8387
      %9586 = vmatprep.subr.mxu0 %v8420
      %9587 = vmatpush1.msra.mxu0 %v8419
      %9588 = vmatprep.subr.mxu0 %v8452
      %9589 = vmatpush1.msra.mxu0 %v8451
      %9590 = vmatprep.subr.mxu0 %v8484
      %9591 = vmatpush1.msra.mxu0 %v8483
      %9592 = vmatprep.subr.mxu0 %v8516
      %9593 = vmatpush1.msra.mxu0 %v8515
      %9594 = vmatprep.subr.mxu0 %v8548
      %9595 = vmatpush1.msra.mxu0 %v8547
      %9596 = vmatprep.subr.mxu0 0.0
      %9597 = vmatpush1.msra.mxu0 0.0
      %9598 = vmatprep.subr.mxu0 0.0
      %9599 = vmatpush1.msra.mxu0 0.0
      %9600 = vmatprep.subr.mxu0 0.0
      %9601 = vmatpush1.msra.mxu0 0.0
      %9602 = vmatprep.subr.mxu0 0.0
      %9603 = vmatpush1.msra.mxu0 0.0
      %9604 = vmatprep.subr.mxu0 0.0
      %9605 = vmatpush1.msra.mxu0 0.0
      %9606 = vmatprep.subr.mxu0 0.0
      %9607 = vmatpush1.msra.mxu0 0.0
      %9608 = vmatprep.subr.mxu0 0.0
      %9609 = vmatpush1.msra.mxu0 0.0
      %9610 = vmatprep.subr.mxu0 0.0
      %9611 = vmatpush1.msra.mxu0 0.0
      %9612 = vmatprep.subr.mxu0 0.0
      %9613 = vmatpush1.msra.mxu0 0.0
      %9614 = vmatprep.subr.mxu0 0.0
      %9615 = vmatpush1.msra.mxu0 0.0
      %9616 = vmatprep.subr.mxu0 0.0
      %9617 = vmatpush1.msra.mxu0 0.0
      %9618 = vmatprep.subr.mxu0 0.0
      %9619 = vmatpush1.msra.mxu0 0.0
      %9620 = vmatprep.subr.mxu0 0.0
      %9621 = vmatpush1.msra.mxu0 0.0
      %9622 = vmatprep.subr.mxu0 0.0
      %9623 = vmatpush1.msra.mxu0 0.0
      %9624 = vmatprep.subr.mxu0 0.0
      %9625 = vmatpush1.msra.mxu0 0.0
      %9626 = vmatprep.subr.mxu0 0.0
      %9627 = vmatpush1.msra.mxu0 0.0
      %9628 = vmatprep.subr.mxu0 0.0
      %9629 = vmatpush1.msra.mxu0 0.0
      %9630 = vmatprep.subr.mxu0 0.0
      %9631 = vmatpush1.msra.mxu0 0.0
      %9632 = vmatprep.subr.mxu0 0.0
      %9633 = vmatpush1.msra.mxu0 0.0
      %9634 = vmatprep.subr.mxu0 0.0
      %9635 = vmatpush1.msra.mxu0 0.0
      %9636 = vmatprep.subr.mxu0 0.0
      %9637 = vmatpush1.msra.mxu0 0.0
      %9638 = vmatprep.subr.mxu0 0.0
      %9639 = vmatpush1.msra.mxu0 0.0
      %9640 = vmatprep.subr.mxu0 0.0
      %9641 = vmatpush1.msra.mxu0 0.0
      %9642 = vmatprep.subr.mxu0 0.0
      %9643 = vmatpush1.msra.mxu0 0.0
      %9644 = vmatprep.mubr.f32.mxu0 0.0
      %9645 = vmatmul.mubr.f32.gmra.mrb[0].mxu0 %v8584
      %v9646 = vpop.f32.mrb[0].mxu0
      %v9647 = vadd.f32 0.0, %v9646
      %v9648 = vpop.f32.mrb[0].mxu0
      %v9649 = vadd.f32 0.0, %v9648
      %9650 = vdwg.mxu0
      %9651 = vmatprep.subr.mxu0 %v8326
      %9652 = vmatpush1.msra.mxu0 %v8325
      %9653 = vmatprep.subr.mxu0 %v8358
      %9654 = vmatpush1.msra.mxu0 %v8357
      %9655 = vmatprep.subr.mxu0 %v8390
      %9656 = vmatpush1.msra.mxu0 %v8389
      %9657 = vmatprep.subr.mxu0 %v8422
      %9658 = vmatpush1.msra.mxu0 %v8421
      %9659 = vmatprep.subr.mxu0 %v8454
      %9660 = vmatpush1.msra.mxu0 %v8453
      %9661 = vmatprep.subr.mxu0 %v8486
      %9662 = vmatpush1.msra.mxu0 %v8485
      %9663 = vmatprep.subr.mxu0 %v8518
      %9664 = vmatpush1.msra.mxu0 %v8517
      %9665 = vmatprep.subr.mxu0 %v8550
      %9666 = vmatpush1.msra.mxu0 %v8549
      %9667 = vmatprep.subr.mxu0 0.0
      %9668 = vmatpush1.msra.mxu0 0.0
      %9669 = vmatprep.subr.mxu0 0.0
      %9670 = vmatpush1.msra.mxu0 0.0
      %9671 = vmatprep.subr.mxu0 0.0
      %9672 = vmatpush1.msra.mxu0 0.0
      %9673 = vmatprep.subr.mxu0 0.0
      %9674 = vmatpush1.msra.mxu0 0.0
      %9675 = vmatprep.subr.mxu0 0.0
      %9676 = vmatpush1.msra.mxu0 0.0
      %9677 = vmatprep.subr.mxu0 0.0
      %9678 = vmatpush1.msra.mxu0 0.0
      %9679 = vmatprep.subr.mxu0 0.0
      %9680 = vmatpush1.msra.mxu0 0.0
      %9681 = vmatprep.subr.mxu0 0.0
      %9682 = vmatpush1.msra.mxu0 0.0
      %9683 = vmatprep.subr.mxu0 0.0
      %9684 = vmatpush1.msra.mxu0 0.0
      %9685 = vmatprep.subr.mxu0 0.0
      %9686 = vmatpush1.msra.mxu0 0.0
      %9687 = vmatprep.subr.mxu0 0.0
      %9688 = vmatpush1.msra.mxu0 0.0
      %9689 = vmatprep.subr.mxu0 0.0
      %9690 = vmatpush1.msra.mxu0 0.0
      %9691 = vmatprep.subr.mxu0 0.0
      %9692 = vmatpush1.msra.mxu0 0.0
      %9693 = vmatprep.subr.mxu0 0.0
      %9694 = vmatpush1.msra.mxu0 0.0
      %9695 = vmatprep.subr.mxu0 0.0
      %9696 = vmatpush1.msra.mxu0 0.0
      %9697 = vmatprep.subr.mxu0 0.0
      %9698 = vmatpush1.msra.mxu0 0.0
      %9699 = vmatprep.subr.mxu0 0.0
      %9700 = vmatpush1.msra.mxu0 0.0
      %9701 = vmatprep.subr.mxu0 0.0
      %9702 = vmatpush1.msra.mxu0 0.0
      %9703 = vmatprep.subr.mxu0 0.0
      %9704 = vmatpush1.msra.mxu0 0.0
      %9705 = vmatprep.subr.mxu0 0.0
      %9706 = vmatpush1.msra.mxu0 0.0
      %9707 = vmatprep.subr.mxu0 0.0
      %9708 = vmatpush1.msra.mxu0 0.0
      %9709 = vmatprep.subr.mxu0 0.0
      %9710 = vmatpush1.msra.mxu0 0.0
      %9711 = vmatprep.subr.mxu0 0.0
      %9712 = vmatpush1.msra.mxu0 0.0
      %9713 = vmatprep.subr.mxu0 0.0
      %9714 = vmatpush1.msra.mxu0 0.0
      %9715 = vmatprep.mubr.f32.mxu0 0.0
      %9716 = vmatmul.mubr.f32.gmra.mrb[0].mxu0 %v8584
      %v9717 = vpop.f32.mrb[0].mxu0
      %v9718 = vadd.f32 0.0, %v9717
      %v9719 = vpop.f32.mrb[0].mxu0
      %v9720 = vadd.f32 0.0, %v9719
      %9721 = vdwg.mxu0
      %9722 = vst [vmem:[%s604] sm:$0xff] %v8653
      %9723 = vst [vmem:[%s604 + $0x8] sm:$0xff] %v8655
      %9724 = vst [vmem:[%s604 + $0x10] sm:$0xff] %v8724
      %9725 = vst [vmem:[%s604 + $0x18] sm:$0xff] %v8726
      %9726 = vst [vmem:[%s604 + $0x20] sm:$0xff] %v8795
      %9727 = vst [vmem:[%s604 + $0x28] sm:$0xff] %v8797
      %9728 = vst [vmem:[%s604 + $0x30] sm:$0xff] %v8866
      %9729 = vst [vmem:[%s604 + $0x38] sm:$0xff] %v8868
      %9730 = vst [vmem:[%s604 + $0x40] sm:$0xff] %v8937
      %9731 = vst [vmem:[%s604 + $0x48] sm:$0xff] %v8939
      %9732 = vst [vmem:[%s604 + $0x50] sm:$0xff] %v9008
      %9733 = vst [vmem:[%s604 + $0x58] sm:$0xff] %v9010
      %9734 = vst [vmem:[%s604 + $0x60] sm:$0xff] %v9079
      %9735 = vst [vmem:[%s604 + $0x68] sm:$0xff] %v9081
      %9736 = vst [vmem:[%s604 + $0x70] sm:$0xff] %v9150
      %9737 = vst [vmem:[%s604 + $0x78] sm:$0xff] %v9152
      %9738 = vst [vmem:[%s604 + $0x80] sm:$0xff] %v9221
      %9739 = vst [vmem:[%s604 + $0x88] sm:$0xff] %v9223
      %9740 = vst [vmem:[%s604 + $0x90] sm:$0xff] %v9292
      %9741 = vst [vmem:[%s604 + $0x98] sm:$0xff] %v9294
      %9742 = vst [vmem:[%s604 + $0xa0] sm:$0xff] %v9363
      %9743 = vst [vmem:[%s604 + $0xa8] sm:$0xff] %v9365
      %9744 = vst [vmem:[%s604 + $0xb0] sm:$0xff] %v9434
      %9745 = vst [vmem:[%s604 + $0xb8] sm:$0xff] %v9436
      %9746 = vst [vmem:[%s604 + $0xc0] sm:$0xff] %v9505
      %9747 = vst [vmem:[%s604 + $0xc8] sm:$0xff] %v9507
      %9748 = vst [vmem:[%s604 + $0xd0] sm:$0xff] %v9576
      %9749 = vst [vmem:[%s604 + $0xd8] sm:$0xff] %v9578
      %9750 = vst [vmem:[%s604 + $0xe0] sm:$0xff] %v9647
      %9751 = vst [vmem:[%s604 + $0xe8] sm:$0xff] %v9649
      %9752 = vst [vmem:[%s604 + $0xf0] sm:$0xff] %v9718
      %9753 = vst [vmem:[%s604 + $0xf8] sm:$0xff] %v9720
      %p9754 = scmp.lt.s32.totalorder %s32, 1
      %s9755 = scalar_select %p9754, %s32, 1
      %s9756 = smul.addr %s9755, 32
      %s9757 = smul.addr %s9756, 8
      %s9758 = scalar_lea.vmem %s19, %s9757
      // Predicated region
      $region97: #{sedanet_forward.1} parent=95 // pred_check
        %p9759 = pneg %p454
      $region98: #{sedanet_forward.1} parent=95 // pred_check_branch
        %9761 = sbr.rel (%p9759) target = $region100
      $region99: #{sedanet_forward.1} parent=95 // pred_region
        _
      $region100: #{sedanet_forward.1} parent=95 // pred_fallthru
        _
    $region96: #{sedanet_forward.1} parent=5 // pred_fallthru
      _
    %p9762 = scmp.le.s32.totalorder 2, %s27
    // Predicated region
    $region101: #{sedanet_forward.1} parent=5 // pred_check
      %p9763 = pneg %p9762
    $region102: #{sedanet_forward.1} parent=5 // pred_check_branch
      %9765 = sbr.rel (%p9763) target = $region104
    $region103: #{sedanet_forward.1} parent=5 // pred_region
      %s9766 = ssub.s32 %s27, 2
      // Predicated region
      $region105: #{sedanet_forward.1} parent=103 // pred_check
        %p9767 = pneg %p460
      $region106: #{sedanet_forward.1} parent=103 // pred_check_branch
        %9769 = sbr.rel (%p9767) target = $region108
      $region107: #{sedanet_forward.1} parent=103 // pred_region
        %p9770 = scmp.lt.s32.totalorder %s33, 1
        %s9771 = scalar_select %p9770, %s33, 1
        %s9772 = smul.addr %s9771, 32
        %s9773 = smul.addr %s9772, 8
        %s9774 = scalar_lea.vmem %s19, %s9773
      $region108: #{sedanet_forward.1} parent=103 // pred_fallthru
        _
    $region104: #{sedanet_forward.1} parent=5 // pred_fallthru
      _
  $region6: #{sedanet_forward.1} parent=0 // loop_footer
    %s31 = sadd.s32 1, %s27
  $region7: #{sedanet_forward.1} parent=0 // loop_footer_branch
    %26 = sbr.rel target = $region3
  $region8: #{sedanet_forward.1} parent=0 // loop_exit
    _

</llo_original>
